<compile_context>
chip_gen: v5e
topology: v5e:2x2
jax: 0.10.0
libtpu: 0.0.40
codegen_flags: <defaults>
</compile_context>

<pallas_src>
import jax
import jax.numpy as jnp
from jax.experimental import pallas as pl
from jax.experimental.pallas import tpu as pltpu

BN_EPS = 1e-3
_VMEM_LIMIT = 48 * 1024 * 1024


def _round_up(x, m):
    return (x + m - 1) // m * m


# ----------------------------------------------------------------------------
# Kernel 1: fused matmul + folded-BN bias + ReLU (used for the 1x1 conv)
# ----------------------------------------------------------------------------
def _matmul_bias_relu_kernel(a_ref, w_ref, b_ref, o_ref):
    acc = jnp.dot(a_ref[...], w_ref[...], preferred_element_type=jnp.float32)
    o_ref[...] = jnp.maximum(acc + b_ref[...], 0.0).astype(o_ref.dtype)


def matmul_bias_relu(a, w, bias):
    """relu(a @ w + bias); bf16 in/out, f32 accumulation, lane-dense N."""
    M, K = a.shape
    K2, Np = w.shape
    assert K == K2 and Np % 128 == 0
    a = a.astype(jnp.bfloat16)
    w = w.astype(jnp.bfloat16)
    bias = jnp.asarray(bias, jnp.float32).reshape(1, Np)

    # M tile: prefer a divisor of M (no wrapper-side pad of A); cap at 256 so
    # there are >=2 blocks along a parallel axis when M is large enough.
    cap = min(256, M)
    cap -= cap % 8
    tm = None
    for t in range(cap, 7, -8):
        if M % t == 0:
            tm = t
            break
    if tm is None:                      # fallback only (ragged M)
        tm = min(256, _round_up(M, 8))
    Mp = _round_up(M, tm)
    if Mp != M:
        a = jnp.pad(a, ((0, Mp - M), (0, 0)))

    tn = 256 if Np % 256 == 0 else 128
    grid = (Mp // tm, Np // tn)
    out = pl.pallas_call(
        _matmul_bias_relu_kernel,
        out_shape=jax.ShapeDtypeStruct((Mp, Np), jnp.bfloat16),
        grid_spec=pltpu.PrefetchScalarGridSpec(
            num_scalar_prefetch=0,
            grid=grid,
            in_specs=[
                pl.BlockSpec((tm, K), lambda i, j: (i, 0)),   # full (small) K
                pl.BlockSpec((K, tn), lambda i, j: (0, j)),
                pl.BlockSpec((1, tn), lambda i, j: (0, j)),
            ],
            out_specs=pl.BlockSpec((tm, tn), lambda i, j: (i, j)),
        ),
        compiler_params=pltpu.CompilerParams(
            dimension_semantics=("parallel", "parallel"),
            vmem_limit_bytes=_VMEM_LIMIT),
    )(a, w, bias)
    if Mp != M:
        out = out[:M]
    return out


# ----------------------------------------------------------------------------
# Kernel 2: direct 3x3 conv (tap accumulation in-kernel, no im2col in HBM)
# ----------------------------------------------------------------------------
def _make_conv3x3_kernel(tap_plan, n_phases, nrows):
    """tap_plan: tuple of (phase_idx, flat_row_start) per tap."""

    def kernel(*refs):
        phase_refs = refs[:n_phases]
        w_ref, b_ref, o_ref = refs[n_phases:n_phases + 3]
        acc = jnp.zeros((nrows, o_ref.shape[-1]), jnp.float32)
        for t, (p, start) in enumerate(tap_plan):
            a = phase_refs[p][pl.ds(start, nrows), :]          # contiguous rows
            acc = acc + jnp.dot(a, w_ref[t],
                                preferred_element_type=jnp.float32)
        o_ref[...] = jnp.maximum(acc + b_ref[...], 0.0).astype(o_ref.dtype)

    return kernel


def conv3x3_bn_relu(x, w_folded, bias, *, stride, padding):
    """3x3 Conv(bias=False) + folded BatchNorm + ReLU, direct (no im2col).

    x: (N, H, W, Cin) bf16 NHWC.  w_folded: (3, 3, Cin, Cout_p) f32 with
    Cout_p a multiple of 128.  Returns (N, oh, ow, Cout_p) bf16.
    """
    k = 3
    N, H, W, Cin = x.shape
    assert w_folded.shape[:3] == (k, k, Cin)
    Cout_p = w_folded.shape[-1]
    assert Cout_p % 128 == 0

    if padding:
        x = jnp.pad(x, ((0, 0), (padding, padding), (padding, padding), (0, 0)))
        H += 2 * padding
        W += 2 * padding

    oh = (H - k) // stride + 1
    ow = (W - k) // stride + 1
    ow_r = _round_up(ow, 8)            # sublane-aligned window width (over-compute)

    # Zero-pad width so every tap window of width ow_r stays in bounds and,
    # for stride 2, both column phases share one pitch. Pads only feed columns
    # that are discarded after the kernel.
    if stride == 1:
        w_need = ow_r + k - 1
    else:
        w_need = _round_up(max(2 * ow_r + 2, W), 2)
    if w_need > W:
        x = jnp.pad(x, ((0, 0), (0, 0), (0, w_need - W), (0, 0)))
        W = w_need

    if stride == 1:
        pitch = W
        phases = [x]
        taps = [(0, i * pitch + j) for i in range(k) for j in range(k)]
    else:
        pitch = W // 2
        phases = [x[:, a::2, b::2, :] for a in (0, 1) for b in (0, 1)]
        taps = [((i % 2) * 2 + (j % 2), (i // 2) * pitch + (j // 2))
                for i in range(k) for j in range(k)]

    # Flatten spatial dims (free, contiguous). Each tap window is then a
    # contiguous row range and output (oy, ox) lives at row q = oy*pitch + ox.
    phases = [p.reshape(N, p.shape[1] * p.shape[2], Cin) for p in phases]
    nrows = (oh - 1) * pitch + ow_r

    w_mat = w_folded.reshape(k * k, Cin, Cout_p).astype(jnp.bfloat16)
    bias = jnp.asarray(bias, jnp.float32).reshape(1, Cout_p)

    tco = 256 if Cout_p % 256 == 0 else 128
    grid = (N, Cout_p // tco)

    phase_specs = [
        pl.BlockSpec((None,) + p.shape[1:], lambda n, co: (n, 0, 0))
        for p in phases
    ]
    out = pl.pallas_call(
        _make_conv3x3_kernel(tuple(taps), len(phases), nrows),
        out_shape=jax.ShapeDtypeStruct((N, nrows, Cout_p), jnp.bfloat16),
        grid_spec=pltpu.PrefetchScalarGridSpec(
            num_scalar_prefetch=0,
            grid=grid,
            in_specs=phase_specs + [
                pl.BlockSpec((k * k, Cin, tco), lambda n, co: (0, 0, co)),
                pl.BlockSpec((1, tco), lambda n, co: (0, co)),
            ],
            out_specs=pl.BlockSpec((None, nrows, tco), lambda n, co: (n, 0, co)),
        ),
        compiler_params=pltpu.CompilerParams(
            dimension_semantics=("parallel", "parallel"),
            vmem_limit_bytes=_VMEM_LIMIT),
    )(*phases, w_mat, bias)

    # Un-flatten: row oy*pitch + ox -> (oy, ox); drop over-computed columns.
    out = jnp.pad(out, ((0, 0), (0, oh * pitch - nrows), (0, 0)))
    out = out.reshape(N, oh, pitch, Cout_p)[:, :, :ow, :]
    return out


# ----------------------------------------------------------------------------
# Kernel 3: 3x3 / stride-2 max pool (running max over contiguous phase windows)
# ----------------------------------------------------------------------------
def _make_maxpool_kernel(tap_plan, n_phases, oh, ow):
    def kernel(*refs):
        phase_refs = refs[:n_phases]
        o_ref = refs[n_phases]
        m = None
        for (p, di, dj) in tap_plan:
            win = phase_refs[p][pl.ds(di, oh), pl.ds(dj, ow), :]
            m = win if m is None else jnp.maximum(m, win)
        o_ref[...] = m

    return kernel


def max_pool2d_3x3_s2(x):
    """x: (N, H, W, C) bf16; valid 3x3 stride-2 max pool."""
    N, H, W, C = x.shape
    k = 3
    oh = (H - k) // 2 + 1
    ow = (W - k) // 2 + 1
    phases = [x[:, a::2, b::2, :] for a in (0, 1) for b in (0, 1)]
    taps = [((i % 2) * 2 + (j % 2), i // 2, j // 2)
            for i in range(k) for j in range(k)]
    phase_specs = [
        pl.BlockSpec((None,) + p.shape[1:], lambda n: (n, 0, 0, 0))
        for p in phases
    ]
    return pl.pallas_call(
        _make_maxpool_kernel(tuple(taps), len(phases), oh, ow),
        out_shape=jax.ShapeDtypeStruct((N, oh, ow, C), x.dtype),
        grid_spec=pltpu.PrefetchScalarGridSpec(
            num_scalar_prefetch=0,
            grid=(N,),
            in_specs=phase_specs,
            out_specs=pl.BlockSpec((None, oh, ow, C), lambda n: (n, 0, 0, 0)),
        ),
        compiler_params=pltpu.CompilerParams(
            dimension_semantics=("parallel",),
            vmem_limit_bytes=_VMEM_LIMIT),
    )(*phases)


# ----------------------------------------------------------------------------
# Glue: BN folding + InceptionB
# ----------------------------------------------------------------------------
def _fold_bn(params, cin_pad=None, cout_pad=None):
    """Fold inference BatchNorm into conv weights; optionally zero-pad channels."""
    w = params["w"].astype(jnp.float32)                  # (kh, kw, cin, cout)
    scale = params["gamma"] / jnp.sqrt(params["var"] + BN_EPS)
    bias = params["beta"] - params["mean"] * scale
    w = w * scale[None, None, None, :]
    kh, kw, cin, cout = w.shape
    if cin_pad is not None and cin_pad > cin:
        w = jnp.pad(w, ((0, 0), (0, 0), (0, cin_pad - cin), (0, 0)))
    if cout_pad is not None and cout_pad > cout:
        w = jnp.pad(w, ((0, 0), (0, 0), (0, 0), (0, cout_pad - cout)))
        bias = jnp.pad(bias, ((0, cout_pad - cout),))
    return w, bias


def inception_b(x_nchw, params):
    # NCHW -> NHWC once; bf16 activation chain from here on.
    x = jnp.transpose(x_nchw, (0, 2, 3, 1)).astype(jnp.bfloat16)
    N, H, W, Cin = x.shape

    # branch3x3: 3x3, stride 2 (Cout=384 already lane-aligned).
    w_b3, b_b3 = _fold_bn(params["branch3x3"])
    branch3x3 = conv3x3_bn_relu(x, w_b3, b_b3, stride=2, padding=0)

    # double-3x3 branch: channels carried zero-padded to 128 through the chain.
    w1, b1 = _fold_bn(params["dbl_1"], cout_pad=128)           # 1x1: 64 -> 128
    d = matmul_bias_relu(x.reshape(N * H * W, Cin),
                         w1.reshape(Cin, -1), b1)
    d = d.reshape(N, H, W, -1)

    w2, b2 = _fold_bn(params["dbl_2"], cin_pad=128, cout_pad=128)
    d = conv3x3_bn_relu(d, w2, b2, stride=1, padding=1)

    w3, b3 = _fold_bn(params["dbl_3"], cin_pad=128, cout_pad=128)
    d = conv3x3_bn_relu(d, w3, b3, stride=2, padding=0)
    d = d[..., :params["dbl_3"]["w"].shape[-1]]                # drop pad (96)

    branch_pool = max_pool2d_3x3_s2(x)

    out = jnp.concatenate([branch3x3, d, branch_pool], axis=-1)
    return jnp.transpose(out, (0, 3, 1, 2)).astype(jnp.float32)


def init_basic_conv(key, cin, cout, k):
    kw_, kg, kb, km, kv = jax.random.split(key, 5)
    return dict(
        w=jax.random.normal(kw_, (k, k, cin, cout), jnp.float32) * 0.1,
        gamma=jax.random.uniform(kg, (cout,), jnp.float32, 0.5, 1.5),
        beta=jax.random.normal(kb, (cout,), jnp.float32) * 0.1,
        mean=jax.random.normal(km, (cout,), jnp.float32) * 0.1,
        var=jax.random.uniform(kv, (cout,), jnp.float32, 0.5, 1.5),
    )


if __name__ == "__main__":
    key = jax.random.PRNGKey(0)
    kx, k1, k2, k3, k4 = jax.random.split(key, 5)

    in_channels = 8
    x = jax.random.normal(kx, (2, in_channels, 16, 16), jnp.float32)

    params = {
        "branch3x3": init_basic_conv(k1, in_channels, 384, 3),
        "dbl_1": init_basic_conv(k2, in_channels, 64, 1),
        "dbl_2": init_basic_conv(k3, 64, 96, 3),
        "dbl_3": init_basic_conv(k4, 96, 96, 3),
    }

    out = jax.jit(inception_b)(x, params)
    out = jax.block_until_ready(out)
    assert out.shape == (2, 384 + 96 + in_channels, 7, 7), out.shape
    print("KERNEL_OK")
</pallas_src>

<mosaic_0001>
module attributes {stable_mosaic.version = 11 : i64} {
  func.func @_matmul_bias_relu_kernel(%arg0: i32, %arg1: i32, %arg2: memref<256x8xbf16, #tpu.memory_space<vmem>>, %arg3: memref<8x128xbf16, #tpu.memory_space<vmem>>, %arg4: memref<1x128xf32, #tpu.memory_space<vmem>>, %arg5: memref<256x128xbf16, #tpu.memory_space<vmem>>) attributes {dimension_semantics = [#tpu.dimension_semantics<parallel>, #tpu.dimension_semantics<parallel>], iteration_bounds = array<i64: 2, 1>, scalar_prefetch = 0 : i64, scratch_operands = 0 : i64, tpu.core_type = #tpu.core_type<tc>, window_params = [{transform_indices = @transform_0, window_bounds = array<i64: 256, 8>}, {transform_indices = @transform_1, window_bounds = array<i64: 8, 128>}, {transform_indices = @transform_2, window_bounds = array<i64: 1, 128>}, {transform_indices = @transform_3, window_bounds = array<i64: 256, 128>}]} {
    %c0 = arith.constant 0 : index
    %c0_0 = arith.constant 0 : index
    %0 = vector.load %arg2[%c0, %c0_0] : memref<256x8xbf16, #tpu.memory_space<vmem>>, vector<256x8xbf16>
    %c0_1 = arith.constant 0 : index
    %c0_2 = arith.constant 0 : index
    %1 = vector.load %arg3[%c0_1, %c0_2] : memref<8x128xbf16, #tpu.memory_space<vmem>>, vector<8x128xbf16>
    %cst = arith.constant dense<0.000000e+00> : vector<256x128xf32>
    %2 = tpu.matmul %0, %1, %cst {dimension_numbers = #tpu.dot_dimension_numbers<[1], [0], [0], [1], [0, 0, 1, 1], [], []>} : vector<256x8xbf16>, vector<8x128xbf16>, vector<256x128xf32> -> vector<256x128xf32>
    %c0_3 = arith.constant 0 : index
    %c0_4 = arith.constant 0 : index
    %3 = vector.load %arg4[%c0_3, %c0_4] : memref<1x128xf32, #tpu.memory_space<vmem>>, vector<1x128xf32>
    %4 = vector.broadcast %3 : vector<1x128xf32> to vector<256x128xf32>
    %5 = arith.addf %2, %4 : vector<256x128xf32>
    %cst_5 = arith.constant 0.000000e+00 : f32
    %6 = vector.broadcast %cst_5 : f32 to vector<256x128xf32>
    %7 = arith.maximumf %5, %6 : vector<256x128xf32>
    %8 = arith.truncf %7 : vector<256x128xf32> to vector<256x128xbf16>
    %c0_6 = arith.constant 0 : index
    %c0_7 = arith.constant 0 : index
    %9 = vector.load %arg5[%c0_6, %c0_7] : memref<256x128xbf16, #tpu.memory_space<vmem>>, vector<256x128xbf16>
    tpu.vector_store %arg5[%c0_6, %c0_7], %8 {strides = array<i32>} : memref<256x128xbf16, #tpu.memory_space<vmem>>, vector<256x128xbf16>,
    return
  }
  func.func @transform_0(%arg0: i32, %arg1: i32) -> (i32, i32) {
    %c0_i32 = arith.constant 0 : i32
    %c0_i32_0 = arith.constant 0 : i32
    return %arg0, %c0_i32 : i32, i32
  }
  func.func @transform_1(%arg0: i32, %arg1: i32) -> (i32, i32) {
    %c0_i32 = arith.constant 0 : i32
    %c0_i32_0 = arith.constant 0 : i32
    return %c0_i32, %arg1 : i32, i32
  }
  func.func @transform_2(%arg0: i32, %arg1: i32) -> (i32, i32) {
    %c0_i32 = arith.constant 0 : i32
    %c0_i32_0 = arith.constant 0 : i32
    return %c0_i32, %arg1 : i32, i32
  }
  func.func @transform_3(%arg0: i32, %arg1: i32) -> (i32, i32) {
    %c0_i32 = arith.constant 0 : i32
    return %arg0, %arg1 : i32, i32
  }
}

module attributes {stable_mosaic.version = 11 : i64} {
  func.func @kernel(%arg0: i32, %arg1: i32, %arg2: memref<1x324x128xbf16, #tpu.memory_space<vmem>>, %arg3: memref<9x128x128xbf16, #tpu.memory_space<vmem>>, %arg4: memref<1x128xf32, #tpu.memory_space<vmem>>, %arg5: memref<1x286x128xbf16, #tpu.memory_space<vmem>>) attributes {dimension_semantics = [#tpu.dimension_semantics<parallel>, #tpu.dimension_semantics<parallel>], iteration_bounds = array<i64: 2, 1>, scalar_prefetch = 0 : i64, scratch_operands = 0 : i64, tpu.core_type = #tpu.core_type<tc>, window_params = [{transform_indices = @transform_0, window_bounds = array<i64: 1, 324, 128>}, {transform_indices = @transform_1, window_bounds = array<i64: 9, 128, 128>}, {transform_indices = @transform_2, window_bounds = array<i64: 1, 128>}, {transform_indices = @transform_3, window_bounds = array<i64: 1, 286, 128>}]} {
    %cst = arith.constant 0.000000e+00 : f32
    %0 = vector.broadcast %cst : f32 to vector<286x128xf32>
    %c0 = arith.constant 0 : index
    %c0_0 = arith.constant 0 : index
    %c0_1 = arith.constant 0 : index
    %1 = vector.load %arg2[%c0, %c0_0, %c0_1] : memref<1x324x128xbf16, #tpu.memory_space<vmem>>, vector<1x286x128xbf16>
    %2 = vector.shape_cast %1 : vector<1x286x128xbf16> to vector<286x128xbf16>
    %c0_2 = arith.constant 0 : index
    %c0_3 = arith.constant 0 : index
    %c0_4 = arith.constant 0 : index
    %3 = vector.load %arg3[%c0_2, %c0_3, %c0_4] : memref<9x128x128xbf16, #tpu.memory_space<vmem>>, vector<1x128x128xbf16>
    %4 = vector.shape_cast %3 : vector<1x128x128xbf16> to vector<128x128xbf16>
    %cst_5 = arith.constant dense<0.000000e+00> : vector<286x128xf32>
    %5 = tpu.matmul %2, %4, %cst_5 {dimension_numbers = #tpu.dot_dimension_numbers<[1], [0], [0], [1], [0, 0, 1, 1], [], []>} : vector<286x128xbf16>, vector<128x128xbf16>, vector<286x128xf32> -> vector<286x128xf32>
    %6 = arith.addf %0, %5 : vector<286x128xf32>
    %c0_6 = arith.constant 0 : index
    %c1 = arith.constant 1 : index
    %c0_7 = arith.constant 0 : index
    %7 = vector.load %arg2[%c0_6, %c1, %c0_7] : memref<1x324x128xbf16, #tpu.memory_space<vmem>>, vector<1x286x128xbf16>
    %8 = vector.shape_cast %7 : vector<1x286x128xbf16> to vector<286x128xbf16>
    %c1_8 = arith.constant 1 : index
    %c0_9 = arith.constant 0 : index
    %c0_10 = arith.constant 0 : index
    %9 = vector.load %arg3[%c1_8, %c0_9, %c0_10] : memref<9x128x128xbf16, #tpu.memory_space<vmem>>, vector<1x128x128xbf16>
    %10 = vector.shape_cast %9 : vector<1x128x128xbf16> to vector<128x128xbf16>
    %cst_11 = arith.constant dense<0.000000e+00> : vector<286x128xf32>
    %11 = tpu.matmul %8, %10, %cst_11 {dimension_numbers = #tpu.dot_dimension_numbers<[1], [0], [0], [1], [0, 0, 1, 1], [], []>} : vector<286x128xbf16>, vector<128x128xbf16>, vector<286x128xf32> -> vector<286x128xf32>
    %12 = arith.addf %6, %11 : vector<286x128xf32>
    %c0_12 = arith.constant 0 : index
    %c2 = arith.constant 2 : index
    %c0_13 = arith.constant 0 : index
    %13 = vector.load %arg2[%c0_12, %c2, %c0_13] : memref<1x324x128xbf16, #tpu.memory_space<vmem>>, vector<1x286x128xbf16>
    %14 = vector.shape_cast %13 : vector<1x286x128xbf16> to vector<286x128xbf16>
    %c2_14 = arith.constant 2 : index
    %c0_15 = arith.constant 0 : index
    %c0_16 = arith.constant 0 : index
    %15 = vector.load %arg3[%c2_14, %c0_15, %c0_16] : memref<9x128x128xbf16, #tpu.memory_space<vmem>>, vector<1x128x128xbf16>
    %16 = vector.shape_cast %15 : vector<1x128x128xbf16> to vector<128x128xbf16>
    %cst_17 = arith.constant dense<0.000000e+00> : vector<286x128xf32>
    %17 = tpu.matmul %14, %16, %cst_17 {dimension_numbers = #tpu.dot_dimension_numbers<[1], [0], [0], [1], [0, 0, 1, 1], [], []>} : vector<286x128xbf16>, vector<128x128xbf16>, vector<286x128xf32> -> vector<286x128xf32>
    %18 = arith.addf %12, %17 : vector<286x128xf32>
    %c0_18 = arith.constant 0 : index
    %c18 = arith.constant 18 : index
    %c0_19 = arith.constant 0 : index
    %19 = vector.load %arg2[%c0_18, %c18, %c0_19] : memref<1x324x128xbf16, #tpu.memory_space<vmem>>, vector<1x286x128xbf16>
    %20 = vector.shape_cast %19 : vector<1x286x128xbf16> to vector<286x128xbf16>
    %c3 = arith.constant 3 : index
    %c0_20 = arith.constant 0 : index
    %c0_21 = arith.constant 0 : index
    %21 = vector.load %arg3[%c3, %c0_20, %c0_21] : memref<9x128x128xbf16, #tpu.memory_space<vmem>>, vector<1x128x128xbf16>
    %22 = vector.shape_cast %21 : vector<1x128x128xbf16> to vector<128x128xbf16>
    %cst_22 = arith.constant dense<0.000000e+00> : vector<286x128xf32>
    %23 = tpu.matmul %20, %22, %cst_22 {dimension_numbers = #tpu.dot_dimension_numbers<[1], [0], [0], [1], [0, 0, 1, 1], [], []>} : vector<286x128xbf16>, vector<128x128xbf16>, vector<286x128xf32> -> vector<286x128xf32>
    %24 = arith.addf %18, %23 : vector<286x128xf32>
    %c0_23 = arith.constant 0 : index
    %c19 = arith.constant 19 : index
    %c0_24 = arith.constant 0 : index
    %25 = vector.load %arg2[%c0_23, %c19, %c0_24] : memref<1x324x128xbf16, #tpu.memory_space<vmem>>, vector<1x286x128xbf16>
    %26 = vector.shape_cast %25 : vector<1x286x128xbf16> to vector<286x128xbf16>
    %c4 = arith.constant 4 : index
    %c0_25 = arith.constant 0 : index
    %c0_26 = arith.constant 0 : index
    %27 = vector.load %arg3[%c4, %c0_25, %c0_26] : memref<9x128x128xbf16, #tpu.memory_space<vmem>>, vector<1x128x128xbf16>
    %28 = vector.shape_cast %27 : vector<1x128x128xbf16> to vector<128x128xbf16>
    %cst_27 = arith.constant dense<0.000000e+00> : vector<286x128xf32>
    %29 = tpu.matmul %26, %28, %cst_27 {dimension_numbers = #tpu.dot_dimension_numbers<[1], [0], [0], [1], [0, 0, 1, 1], [], []>} : vector<286x128xbf16>, vector<128x128xbf16>, vector<286x128xf32> -> vector<286x128xf32>
    %30 = arith.addf %24, %29 : vector<286x128xf32>
    %c0_28 = arith.constant 0 : index
    %c20 = arith.constant 20 : index
    %c0_29 = arith.constant 0 : index
    %31 = vector.load %arg2[%c0_28, %c20, %c0_29] : memref<1x324x128xbf16, #tpu.memory_space<vmem>>, vector<1x286x128xbf16>
    %32 = vector.shape_cast %31 : vector<1x286x128xbf16> to vector<286x128xbf16>
    %c5 = arith.constant 5 : index
    %c0_30 = arith.constant 0 : index
    %c0_31 = arith.constant 0 : index
    %33 = vector.load %arg3[%c5, %c0_30, %c0_31] : memref<9x128x128xbf16, #tpu.memory_space<vmem>>, vector<1x128x128xbf16>
    %34 = vector.shape_cast %33 : vector<1x128x128xbf16> to vector<128x128xbf16>
    %cst_32 = arith.constant dense<0.000000e+00> : vector<286x128xf32>
    %35 = tpu.matmul %32, %34, %cst_32 {dimension_numbers = #tpu.dot_dimension_numbers<[1], [0], [0], [1], [0, 0, 1, 1], [], []>} : vector<286x128xbf16>, vector<128x128xbf16>, vector<286x128xf32> -> vector<286x128xf32>
    %36 = arith.addf %30, %35 : vector<286x128xf32>
    %c0_33 = arith.constant 0 : index
    %c36 = arith.constant 36 : index
    %c0_34 = arith.constant 0 : index
    %37 = vector.load %arg2[%c0_33, %c36, %c0_34] : memref<1x324x128xbf16, #tpu.memory_space<vmem>>, vector<1x286x128xbf16>
    %38 = vector.shape_cast %37 : vector<1x286x128xbf16> to vector<286x128xbf16>
    %c6 = arith.constant 6 : index
    %c0_35 = arith.constant 0 : index
    %c0_36 = arith.constant 0 : index
    %39 = vector.load %arg3[%c6, %c0_35, %c0_36] : memref<9x128x128xbf16, #tpu.memory_space<vmem>>, vector<1x128x128xbf16>
    %40 = vector.shape_cast %39 : vector<1x128x128xbf16> to vector<128x128xbf16>
    %cst_37 = arith.constant dense<0.000000e+00> : vector<286x128xf32>
    %41 = tpu.matmul %38, %40, %cst_37 {dimension_numbers = #tpu.dot_dimension_numbers<[1], [0], [0], [1], [0, 0, 1, 1], [], []>} : vector<286x128xbf16>, vector<128x128xbf16>, vector<286x128xf32> -> vector<286x128xf32>
    %42 = arith.addf %36, %41 : vector<286x128xf32>
    %c0_38 = arith.constant 0 : index
    %c37 = arith.constant 37 : index
    %c0_39 = arith.constant 0 : index
    %43 = vector.load %arg2[%c0_38, %c37, %c0_39] : memref<1x324x128xbf16, #tpu.memory_space<vmem>>, vector<1x286x128xbf16>
    %44 = vector.shape_cast %43 : vector<1x286x128xbf16> to vector<286x128xbf16>
    %c7 = arith.constant 7 : index
    %c0_40 = arith.constant 0 : index
    %c0_41 = arith.constant 0 : index
    %45 = vector.load %arg3[%c7, %c0_40, %c0_41] : memref<9x128x128xbf16, #tpu.memory_space<vmem>>, vector<1x128x128xbf16>
    %46 = vector.shape_cast %45 : vector<1x128x128xbf16> to vector<128x128xbf16>
    %cst_42 = arith.constant dense<0.000000e+00> : vector<286x128xf32>
    %47 = tpu.matmul %44, %46, %cst_42 {dimension_numbers = #tpu.dot_dimension_numbers<[1], [0], [0], [1], [0, 0, 1, 1], [], []>} : vector<286x128xbf16>, vector<128x128xbf16>, vector<286x128xf32> -> vector<286x128xf32>
    %48 = arith.addf %42, %47 : vector<286x128xf32>
    %c0_43 = arith.constant 0 : index
    %c38 = arith.constant 38 : index
    %c0_44 = arith.constant 0 : index
    %49 = vector.load %arg2[%c0_43, %c38, %c0_44] : memref<1x324x128xbf16, #tpu.memory_space<vmem>>, vector<1x286x128xbf16>
    %50 = vector.shape_cast %49 : vector<1x286x128xbf16> to vector<286x128xbf16>
    %c8 = arith.constant 8 : index
    %c0_45 = arith.constant 0 : index
    %c0_46 = arith.constant 0 : index
    %51 = vector.load %arg3[%c8, %c0_45, %c0_46] : memref<9x128x128xbf16, #tpu.memory_space<vmem>>, vector<1x128x128xbf16>
    %52 = vector.shape_cast %51 : vector<1x128x128xbf16> to vector<128x128xbf16>
    %cst_47 = arith.constant dense<0.000000e+00> : vector<286x128xf32>
    %53 = tpu.matmul %50, %52, %cst_47 {dimension_numbers = #tpu.dot_dimension_numbers<[1], [0], [0], [1], [0, 0, 1, 1], [], []>} : vector<286x128xbf16>, vector<128x128xbf16>, vector<286x128xf32> -> vector<286x128xf32>
    %54 = arith.addf %48, %53 : vector<286x128xf32>
    %c0_48 = arith.constant 0 : index
    %c0_49 = arith.constant 0 : index
    %55 = vector.load %arg4[%c0_48, %c0_49] : memref<1x128xf32, #tpu.memory_space<vmem>>, vector<1x128xf32>
    %56 = vector.broadcast %55 : vector<1x128xf32> to vector<286x128xf32>
    %57 = arith.addf %54, %56 : vector<286x128xf32>
    %cst_50 = arith.constant 0.000000e+00 : f32
    %58 = vector.broadcast %cst_50 : f32 to vector<286x128xf32>
    %59 = arith.maximumf %57, %58 : vector<286x128xf32>
    %60 = arith.truncf %59 : vector<286x128xf32> to vector<286x128xbf16>
    %c0_51 = arith.constant 0 : index
    %c0_52 = arith.constant 0 : index
    %c0_53 = arith.constant 0 : index
    %61 = vector.load %arg5[%c0_51, %c0_52, %c0_53] : memref<1x286x128xbf16, #tpu.memory_space<vmem>>, vector<1x286x128xbf16>
    %62 = vector.shape_cast %61 : vector<1x286x128xbf16> to vector<286x128xbf16>
    %63 = vector.shape_cast %60 : vector<286x128xbf16> to vector<1x286x128xbf16>
    tpu.vector_store %arg5[%c0_51, %c0_52, %c0_53], %63 {strides = array<i32>} : memref<1x286x128xbf16, #tpu.memory_space<vmem>>, vector<1x286x128xbf16>,
    return
  }
  func.func @transform_0(%arg0: i32, %arg1: i32) -> (i32, i32, i32) {
    %c0_i32 = arith.constant 0 : i32
    %c0_i32_0 = arith.constant 0 : i32
    %c0_i32_1 = arith.constant 0 : i32
    return %arg0, %c0_i32, %c0_i32_0 : i32, i32, i32
  }
  func.func @transform_1(%arg0: i32, %arg1: i32) -> (i32, i32, i32) {
    %c0_i32 = arith.constant 0 : i32
    %c0_i32_0 = arith.constant 0 : i32
    %c0_i32_1 = arith.constant 0 : i32
    return %c0_i32, %c0_i32_0, %arg1 : i32, i32, i32
  }
  func.func @transform_2(%arg0: i32, %arg1: i32) -> (i32, i32) {
    %c0_i32 = arith.constant 0 : i32
    %c0_i32_0 = arith.constant 0 : i32
    return %c0_i32, %arg1 : i32, i32
  }
  func.func @transform_3(%arg0: i32, %arg1: i32) -> (i32, i32, i32) {
    %c0_i32 = arith.constant 0 : i32
    %c0_i32_0 = arith.constant 0 : i32
    return %arg0, %c0_i32, %arg1 : i32, i32, i32
  }
}

module attributes {stable_mosaic.version = 11 : i64} {
  func.func @kernel(%arg0: i32, %arg1: i32, %arg2: memref<1x72x128xbf16, #tpu.memory_space<vmem>>, %arg3: memref<1x72x128xbf16, #tpu.memory_space<vmem>>, %arg4: memref<1x72x128xbf16, #tpu.memory_space<vmem>>, %arg5: memref<1x72x128xbf16, #tpu.memory_space<vmem>>, %arg6: memref<9x128x128xbf16, #tpu.memory_space<vmem>>, %arg7: memref<1x128xf32, #tpu.memory_space<vmem>>, %arg8: memref<1x62x128xbf16, #tpu.memory_space<vmem>>) attributes {dimension_semantics = [#tpu.dimension_semantics<parallel>, #tpu.dimension_semantics<parallel>], iteration_bounds = array<i64: 2, 1>, scalar_prefetch = 0 : i64, scratch_operands = 0 : i64, tpu.core_type = #tpu.core_type<tc>, window_params = [{transform_indices = @transform_0, window_bounds = array<i64: 1, 72, 128>}, {transform_indices = @transform_1, window_bounds = array<i64: 1, 72, 128>}, {transform_indices = @transform_2, window_bounds = array<i64: 1, 72, 128>}, {transform_indices = @transform_3, window_bounds = array<i64: 1, 72, 128>}, {transform_indices = @transform_4, window_bounds = array<i64: 9, 128, 128>}, {transform_indices = @transform_5, window_bounds = array<i64: 1, 128>}, {transform_indices = @transform_6, window_bounds = array<i64: 1, 62, 128>}]} {
    %cst = arith.constant 0.000000e+00 : f32
    %0 = vector.broadcast %cst : f32 to vector<62x128xf32>
    %c0 = arith.constant 0 : index
    %c0_0 = arith.constant 0 : index
    %c0_1 = arith.constant 0 : index
    %1 = vector.load %arg2[%c0, %c0_0, %c0_1] : memref<1x72x128xbf16, #tpu.memory_space<vmem>>, vector<1x62x128xbf16>
    %2 = vector.shape_cast %1 : vector<1x62x128xbf16> to vector<62x128xbf16>
    %c0_2 = arith.constant 0 : index
    %c0_3 = arith.constant 0 : index
    %c0_4 = arith.constant 0 : index
    %3 = vector.load %arg6[%c0_2, %c0_3, %c0_4] : memref<9x128x128xbf16, #tpu.memory_space<vmem>>, vector<1x128x128xbf16>
    %4 = vector.shape_cast %3 : vector<1x128x128xbf16> to vector<128x128xbf16>
    %cst_5 = arith.constant dense<0.000000e+00> : vector<62x128xf32>
    %5 = tpu.matmul %2, %4, %cst_5 {dimension_numbers = #tpu.dot_dimension_numbers<[1], [0], [0], [1], [0, 0, 1, 1], [], []>} : vector<62x128xbf16>, vector<128x128xbf16>, vector<62x128xf32> -> vector<62x128xf32>
    %6 = arith.addf %0, %5 : vector<62x128xf32>
    %c0_6 = arith.constant 0 : index
    %c0_7 = arith.constant 0 : index
    %c0_8 = arith.constant 0 : index
    %7 = vector.load %arg3[%c0_6, %c0_7, %c0_8] : memref<1x72x128xbf16, #tpu.memory_space<vmem>>, vector<1x62x128xbf16>
    %8 = vector.shape_cast %7 : vector<1x62x128xbf16> to vector<62x128xbf16>
    %c1 = arith.constant 1 : index
    %c0_9 = arith.constant 0 : index
    %c0_10 = arith.constant 0 : index
    %9 = vector.load %arg6[%c1, %c0_9, %c0_10] : memref<9x128x128xbf16, #tpu.memory_space<vmem>>, vector<1x128x128xbf16>
    %10 = vector.shape_cast %9 : vector<1x128x128xbf16> to vector<128x128xbf16>
    %cst_11 = arith.constant dense<0.000000e+00> : vector<62x128xf32>
    %11 = tpu.matmul %8, %10, %cst_11 {dimension_numbers = #tpu.dot_dimension_numbers<[1], [0], [0], [1], [0, 0, 1, 1], [], []>} : vector<62x128xbf16>, vector<128x128xbf16>, vector<62x128xf32> -> vector<62x128xf32>
    %12 = arith.addf %6, %11 : vector<62x128xf32>
    %c0_12 = arith.constant 0 : index
    %c1_13 = arith.constant 1 : index
    %c0_14 = arith.constant 0 : index
    %13 = vector.load %arg2[%c0_12, %c1_13, %c0_14] : memref<1x72x128xbf16, #tpu.memory_space<vmem>>, vector<1x62x128xbf16>
    %14 = vector.shape_cast %13 : vector<1x62x128xbf16> to vector<62x128xbf16>
    %c2 = arith.constant 2 : index
    %c0_15 = arith.constant 0 : index
    %c0_16 = arith.constant 0 : index
    %15 = vector.load %arg6[%c2, %c0_15, %c0_16] : memref<9x128x128xbf16, #tpu.memory_space<vmem>>, vector<1x128x128xbf16>
    %16 = vector.shape_cast %15 : vector<1x128x128xbf16> to vector<128x128xbf16>
    %cst_17 = arith.constant dense<0.000000e+00> : vector<62x128xf32>
    %17 = tpu.matmul %14, %16, %cst_17 {dimension_numbers = #tpu.dot_dimension_numbers<[1], [0], [0], [1], [0, 0, 1, 1], [], []>} : vector<62x128xbf16>, vector<128x128xbf16>, vector<62x128xf32> -> vector<62x128xf32>
    %18 = arith.addf %12, %17 : vector<62x128xf32>
    %c0_18 = arith.constant 0 : index
    %c0_19 = arith.constant 0 : index
    %c0_20 = arith.constant 0 : index
    %19 = vector.load %arg4[%c0_18, %c0_19, %c0_20] : memref<1x72x128xbf16, #tpu.memory_space<vmem>>, vector<1x62x128xbf16>
    %20 = vector.shape_cast %19 : vector<1x62x128xbf16> to vector<62x128xbf16>
    %c3 = arith.constant 3 : index
    %c0_21 = arith.constant 0 : index
    %c0_22 = arith.constant 0 : index
    %21 = vector.load %arg6[%c3, %c0_21, %c0_22] : memref<9x128x128xbf16, #tpu.memory_space<vmem>>, vector<1x128x128xbf16>
    %22 = vector.shape_cast %21 : vector<1x128x128xbf16> to vector<128x128xbf16>
    %cst_23 = arith.constant dense<0.000000e+00> : vector<62x128xf32>
    %23 = tpu.matmul %20, %22, %cst_23 {dimension_numbers = #tpu.dot_dimension_numbers<[1], [0], [0], [1], [0, 0, 1, 1], [], []>} : vector<62x128xbf16>, vector<128x128xbf16>, vector<62x128xf32> -> vector<62x128xf32>
    %24 = arith.addf %18, %23 : vector<62x128xf32>
    %c0_24 = arith.constant 0 : index
    %c0_25 = arith.constant 0 : index
    %c0_26 = arith.constant 0 : index
    %25 = vector.load %arg5[%c0_24, %c0_25, %c0_26] : memref<1x72x128xbf16, #tpu.memory_space<vmem>>, vector<1x62x128xbf16>
    %26 = vector.shape_cast %25 : vector<1x62x128xbf16> to vector<62x128xbf16>
    %c4 = arith.constant 4 : index
    %c0_27 = arith.constant 0 : index
    %c0_28 = arith.constant 0 : index
    %27 = vector.load %arg6[%c4, %c0_27, %c0_28] : memref<9x128x128xbf16, #tpu.memory_space<vmem>>, vector<1x128x128xbf16>
    %28 = vector.shape_cast %27 : vector<1x128x128xbf16> to vector<128x128xbf16>
    %cst_29 = arith.constant dense<0.000000e+00> : vector<62x128xf32>
    %29 = tpu.matmul %26, %28, %cst_29 {dimension_numbers = #tpu.dot_dimension_numbers<[1], [0], [0], [1], [0, 0, 1, 1], [], []>} : vector<62x128xbf16>, vector<128x128xbf16>, vector<62x128xf32> -> vector<62x128xf32>
    %30 = arith.addf %24, %29 : vector<62x128xf32>
    %c0_30 = arith.constant 0 : index
    %c1_31 = arith.constant 1 : index
    %c0_32 = arith.constant 0 : index
    %31 = vector.load %arg4[%c0_30, %c1_31, %c0_32] : memref<1x72x128xbf16, #tpu.memory_space<vmem>>, vector<1x62x128xbf16>
    %32 = vector.shape_cast %31 : vector<1x62x128xbf16> to vector<62x128xbf16>
    %c5 = arith.constant 5 : index
    %c0_33 = arith.constant 0 : index
    %c0_34 = arith.constant 0 : index
    %33 = vector.load %arg6[%c5, %c0_33, %c0_34] : memref<9x128x128xbf16, #tpu.memory_space<vmem>>, vector<1x128x128xbf16>
    %34 = vector.shape_cast %33 : vector<1x128x128xbf16> to vector<128x128xbf16>
    %cst_35 = arith.constant dense<0.000000e+00> : vector<62x128xf32>
    %35 = tpu.matmul %32, %34, %cst_35 {dimension_numbers = #tpu.dot_dimension_numbers<[1], [0], [0], [1], [0, 0, 1, 1], [], []>} : vector<62x128xbf16>, vector<128x128xbf16>, vector<62x128xf32> -> vector<62x128xf32>
    %36 = arith.addf %30, %35 : vector<62x128xf32>
    %c0_36 = arith.constant 0 : index
    %c9 = arith.constant 9 : index
    %c0_37 = arith.constant 0 : index
    %37 = vector.load %arg2[%c0_36, %c9, %c0_37] : memref<1x72x128xbf16, #tpu.memory_space<vmem>>, vector<1x62x128xbf16>
    %38 = vector.shape_cast %37 : vector<1x62x128xbf16> to vector<62x128xbf16>
    %c6 = arith.constant 6 : index
    %c0_38 = arith.constant 0 : index
    %c0_39 = arith.constant 0 : index
    %39 = vector.load %arg6[%c6, %c0_38, %c0_39] : memref<9x128x128xbf16, #tpu.memory_space<vmem>>, vector<1x128x128xbf16>
    %40 = vector.shape_cast %39 : vector<1x128x128xbf16> to vector<128x128xbf16>
    %cst_40 = arith.constant dense<0.000000e+00> : vector<62x128xf32>
    %41 = tpu.matmul %38, %40, %cst_40 {dimension_numbers = #tpu.dot_dimension_numbers<[1], [0], [0], [1], [0, 0, 1, 1], [], []>} : vector<62x128xbf16>, vector<128x128xbf16>, vector<62x128xf32> -> vector<62x128xf32>
    %42 = arith.addf %36, %41 : vector<62x128xf32>
    %c0_41 = arith.constant 0 : index
    %c9_42 = arith.constant 9 : index
    %c0_43 = arith.constant 0 : index
    %43 = vector.load %arg3[%c0_41, %c9_42, %c0_43] : memref<1x72x128xbf16, #tpu.memory_space<vmem>>, vector<1x62x128xbf16>
    %44 = vector.shape_cast %43 : vector<1x62x128xbf16> to vector<62x128xbf16>
    %c7 = arith.constant 7 : index
    %c0_44 = arith.constant 0 : index
    %c0_45 = arith.constant 0 : index
    %45 = vector.load %arg6[%c7, %c0_44, %c0_45] : memref<9x128x128xbf16, #tpu.memory_space<vmem>>, vector<1x128x128xbf16>
    %46 = vector.shape_cast %45 : vector<1x128x128xbf16> to vector<128x128xbf16>
    %cst_46 = arith.constant dense<0.000000e+00> : vector<62x128xf32>
    %47 = tpu.matmul %44, %46, %cst_46 {dimension_numbers = #tpu.dot_dimension_numbers<[1], [0], [0], [1], [0, 0, 1, 1], [], []>} : vector<62x128xbf16>, vector<128x128xbf16>, vector<62x128xf32> -> vector<62x128xf32>
    %48 = arith.addf %42, %47 : vector<62x128xf32>
    %c0_47 = arith.constant 0 : index
    %c10 = arith.constant 10 : index
    %c0_48 = arith.constant 0 : index
    %49 = vector.load %arg2[%c0_47, %c10, %c0_48] : memref<1x72x128xbf16, #tpu.memory_space<vmem>>, vector<1x62x128xbf16>
    %50 = vector.shape_cast %49 : vector<1x62x128xbf16> to vector<62x128xbf16>
    %c8 = arith.constant 8 : index
    %c0_49 = arith.constant 0 : index
    %c0_50 = arith.constant 0 : index
    %51 = vector.load %arg6[%c8, %c0_49, %c0_50] : memref<9x128x128xbf16, #tpu.memory_space<vmem>>, vector<1x128x128xbf16>
    %52 = vector.shape_cast %51 : vector<1x128x128xbf16> to vector<128x128xbf16>
    %cst_51 = arith.constant dense<0.000000e+00> : vector<62x128xf32>
    %53 = tpu.matmul %50, %52, %cst_51 {dimension_numbers = #tpu.dot_dimension_numbers<[1], [0], [0], [1], [0, 0, 1, 1], [], []>} : vector<62x128xbf16>, vector<128x128xbf16>, vector<62x128xf32> -> vector<62x128xf32>
    %54 = arith.addf %48, %53 : vector<62x128xf32>
    %c0_52 = arith.constant 0 : index
    %c0_53 = arith.constant 0 : index
    %55 = vector.load %arg7[%c0_52, %c0_53] : memref<1x128xf32, #tpu.memory_space<vmem>>, vector<1x128xf32>
    %56 = vector.broadcast %55 : vector<1x128xf32> to vector<62x128xf32>
    %57 = arith.addf %54, %56 : vector<62x128xf32>
    %cst_54 = arith.constant 0.000000e+00 : f32
    %58 = vector.broadcast %cst_54 : f32 to vector<62x128xf32>
    %59 = arith.maximumf %57, %58 : vector<62x128xf32>
    %60 = arith.truncf %59 : vector<62x128xf32> to vector<62x128xbf16>
    %c0_55 = arith.constant 0 : index
    %c0_56 = arith.constant 0 : index
    %c0_57 = arith.constant 0 : index
    %61 = vector.load %arg8[%c0_55, %c0_56, %c0_57] : memref<1x62x128xbf16, #tpu.memory_space<vmem>>, vector<1x62x128xbf16>
    %62 = vector.shape_cast %61 : vector<1x62x128xbf16> to vector<62x128xbf16>
    %63 = vector.shape_cast %60 : vector<62x128xbf16> to vector<1x62x128xbf16>
    tpu.vector_store %arg8[%c0_55, %c0_56, %c0_57], %63 {strides = array<i32>} : memref<1x62x128xbf16, #tpu.memory_space<vmem>>, vector<1x62x128xbf16>,
    return
  }
  func.func @transform_0(%arg0: i32, %arg1: i32) -> (i32, i32, i32) {
    %c0_i32 = arith.constant 0 : i32
    %c0_i32_0 = arith.constant 0 : i32
    %c0_i32_1 = arith.constant 0 : i32
    return %arg0, %c0_i32, %c0_i32_0 : i32, i32, i32
  }
  func.func @transform_1(%arg0: i32, %arg1: i32) -> (i32, i32, i32) {
    %c0_i32 = arith.constant 0 : i32
    %c0_i32_0 = arith.constant 0 : i32
    %c0_i32_1 = arith.constant 0 : i32
    return %arg0, %c0_i32, %c0_i32_0 : i32, i32, i32
  }
  func.func @transform_2(%arg0: i32, %arg1: i32) -> (i32, i32, i32) {
    %c0_i32 = arith.constant 0 : i32
    %c0_i32_0 = arith.constant 0 : i32
    %c0_i32_1 = arith.constant 0 : i32
    return %arg0, %c0_i32, %c0_i32_0 : i32, i32, i32
  }
  func.func @transform_3(%arg0: i32, %arg1: i32) -> (i32, i32, i32) {
    %c0_i32 = arith.constant 0 : i32
    %c0_i32_0 = arith.constant 0 : i32
    %c0_i32_1 = arith.constant 0 : i32
    return %arg0, %c0_i32, %c0_i32_0 : i32, i32, i32
  }
  func.func @transform_4(%arg0: i32, %arg1: i32) -> (i32, i32, i32) {
    %c0_i32 = arith.constant 0 : i32
    %c0_i32_0 = arith.constant 0 : i32
    %c0_i32_1 = arith.constant 0 : i32
    return %c0_i32, %c0_i32_0, %arg1 : i32, i32, i32
  }
  func.func @transform_5(%arg0: i32, %arg1: i32) -> (i32, i32) {
    %c0_i32 = arith.constant 0 : i32
    %c0_i32_0 = arith.constant 0 : i32
    return %c0_i32, %arg1 : i32, i32
  }
  func.func @transform_6(%arg0: i32, %arg1: i32) -> (i32, i32, i32) {
    %c0_i32 = arith.constant 0 : i32
    %c0_i32_0 = arith.constant 0 : i32
    return %arg0, %c0_i32, %arg1 : i32, i32, i32
  }
}

module attributes {stable_mosaic.version = 11 : i64} {
  func.func @kernel(%arg0: i32, %arg1: i32, %arg2: memref<1x72x8xbf16, #tpu.memory_space<vmem>>, %arg3: memref<1x72x8xbf16, #tpu.memory_space<vmem>>, %arg4: memref<1x72x8xbf16, #tpu.memory_space<vmem>>, %arg5: memref<1x72x8xbf16, #tpu.memory_space<vmem>>, %arg6: memref<9x8x128xbf16, #tpu.memory_space<vmem>>, %arg7: memref<1x128xf32, #tpu.memory_space<vmem>>, %arg8: memref<1x62x128xbf16, #tpu.memory_space<vmem>>) attributes {dimension_semantics = [#tpu.dimension_semantics<parallel>, #tpu.dimension_semantics<parallel>], iteration_bounds = array<i64: 2, 3>, scalar_prefetch = 0 : i64, scratch_operands = 0 : i64, tpu.core_type = #tpu.core_type<tc>, window_params = [{transform_indices = @transform_0, window_bounds = array<i64: 1, 72, 8>}, {transform_indices = @transform_1, window_bounds = array<i64: 1, 72, 8>}, {transform_indices = @transform_2, window_bounds = array<i64: 1, 72, 8>}, {transform_indices = @transform_3, window_bounds = array<i64: 1, 72, 8>}, {transform_indices = @transform_4, window_bounds = array<i64: 9, 8, 128>}, {transform_indices = @transform_5, window_bounds = array<i64: 1, 128>}, {transform_indices = @transform_6, window_bounds = array<i64: 1, 62, 128>}]} {
    %cst = arith.constant 0.000000e+00 : f32
    %0 = vector.broadcast %cst : f32 to vector<62x128xf32>
    %c0 = arith.constant 0 : index
    %c0_0 = arith.constant 0 : index
    %c0_1 = arith.constant 0 : index
    %1 = vector.load %arg2[%c0, %c0_0, %c0_1] : memref<1x72x8xbf16, #tpu.memory_space<vmem>>, vector<1x62x8xbf16>
    %2 = vector.shape_cast %1 : vector<1x62x8xbf16> to vector<62x8xbf16>
    %c0_2 = arith.constant 0 : index
    %c0_3 = arith.constant 0 : index
    %c0_4 = arith.constant 0 : index
    %3 = vector.load %arg6[%c0_2, %c0_3, %c0_4] : memref<9x8x128xbf16, #tpu.memory_space<vmem>>, vector<1x8x128xbf16>
    %4 = vector.shape_cast %3 : vector<1x8x128xbf16> to vector<8x128xbf16>
    %cst_5 = arith.constant dense<0.000000e+00> : vector<62x128xf32>
    %5 = tpu.matmul %2, %4, %cst_5 {dimension_numbers = #tpu.dot_dimension_numbers<[1], [0], [0], [1], [0, 0, 1, 1], [], []>} : vector<62x8xbf16>, vector<8x128xbf16>, vector<62x128xf32> -> vector<62x128xf32>
    %6 = arith.addf %0, %5 : vector<62x128xf32>
    %c0_6 = arith.constant 0 : index
    %c0_7 = arith.constant 0 : index
    %c0_8 = arith.constant 0 : index
    %7 = vector.load %arg3[%c0_6, %c0_7, %c0_8] : memref<1x72x8xbf16, #tpu.memory_space<vmem>>, vector<1x62x8xbf16>
    %8 = vector.shape_cast %7 : vector<1x62x8xbf16> to vector<62x8xbf16>
    %c1 = arith.constant 1 : index
    %c0_9 = arith.constant 0 : index
    %c0_10 = arith.constant 0 : index
    %9 = vector.load %arg6[%c1, %c0_9, %c0_10] : memref<9x8x128xbf16, #tpu.memory_space<vmem>>, vector<1x8x128xbf16>
    %10 = vector.shape_cast %9 : vector<1x8x128xbf16> to vector<8x128xbf16>
    %cst_11 = arith.constant dense<0.000000e+00> : vector<62x128xf32>
    %11 = tpu.matmul %8, %10, %cst_11 {dimension_numbers = #tpu.dot_dimension_numbers<[1], [0], [0], [1], [0, 0, 1, 1], [], []>} : vector<62x8xbf16>, vector<8x128xbf16>, vector<62x128xf32> -> vector<62x128xf32>
    %12 = arith.addf %6, %11 : vector<62x128xf32>
    %c0_12 = arith.constant 0 : index
    %c1_13 = arith.constant 1 : index
    %c0_14 = arith.constant 0 : index
    %13 = vector.load %arg2[%c0_12, %c1_13, %c0_14] : memref<1x72x8xbf16, #tpu.memory_space<vmem>>, vector<1x62x8xbf16>
    %14 = vector.shape_cast %13 : vector<1x62x8xbf16> to vector<62x8xbf16>
    %c2 = arith.constant 2 : index
    %c0_15 = arith.constant 0 : index
    %c0_16 = arith.constant 0 : index
    %15 = vector.load %arg6[%c2, %c0_15, %c0_16] : memref<9x8x128xbf16, #tpu.memory_space<vmem>>, vector<1x8x128xbf16>
    %16 = vector.shape_cast %15 : vector<1x8x128xbf16> to vector<8x128xbf16>
    %cst_17 = arith.constant dense<0.000000e+00> : vector<62x128xf32>
    %17 = tpu.matmul %14, %16, %cst_17 {dimension_numbers = #tpu.dot_dimension_numbers<[1], [0], [0], [1], [0, 0, 1, 1], [], []>} : vector<62x8xbf16>, vector<8x128xbf16>, vector<62x128xf32> -> vector<62x128xf32>
    %18 = arith.addf %12, %17 : vector<62x128xf32>
    %c0_18 = arith.constant 0 : index
    %c0_19 = arith.constant 0 : index
    %c0_20 = arith.constant 0 : index
    %19 = vector.load %arg4[%c0_18, %c0_19, %c0_20] : memref<1x72x8xbf16, #tpu.memory_space<vmem>>, vector<1x62x8xbf16>
    %20 = vector.shape_cast %19 : vector<1x62x8xbf16> to vector<62x8xbf16>
    %c3 = arith.constant 3 : index
    %c0_21 = arith.constant 0 : index
    %c0_22 = arith.constant 0 : index
    %21 = vector.load %arg6[%c3, %c0_21, %c0_22] : memref<9x8x128xbf16, #tpu.memory_space<vmem>>, vector<1x8x128xbf16>
    %22 = vector.shape_cast %21 : vector<1x8x128xbf16> to vector<8x128xbf16>
    %cst_23 = arith.constant dense<0.000000e+00> : vector<62x128xf32>
    %23 = tpu.matmul %20, %22, %cst_23 {dimension_numbers = #tpu.dot_dimension_numbers<[1], [0], [0], [1], [0, 0, 1, 1], [], []>} : vector<62x8xbf16>, vector<8x128xbf16>, vector<62x128xf32> -> vector<62x128xf32>
    %24 = arith.addf %18, %23 : vector<62x128xf32>
    %c0_24 = arith.constant 0 : index
    %c0_25 = arith.constant 0 : index
    %c0_26 = arith.constant 0 : index
    %25 = vector.load %arg5[%c0_24, %c0_25, %c0_26] : memref<1x72x8xbf16, #tpu.memory_space<vmem>>, vector<1x62x8xbf16>
    %26 = vector.shape_cast %25 : vector<1x62x8xbf16> to vector<62x8xbf16>
    %c4 = arith.constant 4 : index
    %c0_27 = arith.constant 0 : index
    %c0_28 = arith.constant 0 : index
    %27 = vector.load %arg6[%c4, %c0_27, %c0_28] : memref<9x8x128xbf16, #tpu.memory_space<vmem>>, vector<1x8x128xbf16>
    %28 = vector.shape_cast %27 : vector<1x8x128xbf16> to vector<8x128xbf16>
    %cst_29 = arith.constant dense<0.000000e+00> : vector<62x128xf32>
    %29 = tpu.matmul %26, %28, %cst_29 {dimension_numbers = #tpu.dot_dimension_numbers<[1], [0], [0], [1], [0, 0, 1, 1], [], []>} : vector<62x8xbf16>, vector<8x128xbf16>, vector<62x128xf32> -> vector<62x128xf32>
    %30 = arith.addf %24, %29 : vector<62x128xf32>
    %c0_30 = arith.constant 0 : index
    %c1_31 = arith.constant 1 : index
    %c0_32 = arith.constant 0 : index
    %31 = vector.load %arg4[%c0_30, %c1_31, %c0_32] : memref<1x72x8xbf16, #tpu.memory_space<vmem>>, vector<1x62x8xbf16>
    %32 = vector.shape_cast %31 : vector<1x62x8xbf16> to vector<62x8xbf16>
    %c5 = arith.constant 5 : index
    %c0_33 = arith.constant 0 : index
    %c0_34 = arith.constant 0 : index
    %33 = vector.load %arg6[%c5, %c0_33, %c0_34] : memref<9x8x128xbf16, #tpu.memory_space<vmem>>, vector<1x8x128xbf16>
    %34 = vector.shape_cast %33 : vector<1x8x128xbf16> to vector<8x128xbf16>
    %cst_35 = arith.constant dense<0.000000e+00> : vector<62x128xf32>
    %35 = tpu.matmul %32, %34, %cst_35 {dimension_numbers = #tpu.dot_dimension_numbers<[1], [0], [0], [1], [0, 0, 1, 1], [], []>} : vector<62x8xbf16>, vector<8x128xbf16>, vector<62x128xf32> -> vector<62x128xf32>
    %36 = arith.addf %30, %35 : vector<62x128xf32>
    %c0_36 = arith.constant 0 : index
    %c9 = arith.constant 9 : index
    %c0_37 = arith.constant 0 : index
    %37 = vector.load %arg2[%c0_36, %c9, %c0_37] : memref<1x72x8xbf16, #tpu.memory_space<vmem>>, vector<1x62x8xbf16>
    %38 = vector.shape_cast %37 : vector<1x62x8xbf16> to vector<62x8xbf16>
    %c6 = arith.constant 6 : index
    %c0_38 = arith.constant 0 : index
    %c0_39 = arith.constant 0 : index
    %39 = vector.load %arg6[%c6, %c0_38, %c0_39] : memref<9x8x128xbf16, #tpu.memory_space<vmem>>, vector<1x8x128xbf16>
    %40 = vector.shape_cast %39 : vector<1x8x128xbf16> to vector<8x128xbf16>
    %cst_40 = arith.constant dense<0.000000e+00> : vector<62x128xf32>
    %41 = tpu.matmul %38, %40, %cst_40 {dimension_numbers = #tpu.dot_dimension_numbers<[1], [0], [0], [1], [0, 0, 1, 1], [], []>} : vector<62x8xbf16>, vector<8x128xbf16>, vector<62x128xf32> -> vector<62x128xf32>
    %42 = arith.addf %36, %41 : vector<62x128xf32>
    %c0_41 = arith.constant 0 : index
    %c9_42 = arith.constant 9 : index
    %c0_43 = arith.constant 0 : index
    %43 = vector.load %arg3[%c0_41, %c9_42, %c0_43] : memref<1x72x8xbf16, #tpu.memory_space<vmem>>, vector<1x62x8xbf16>
    %44 = vector.shape_cast %43 : vector<1x62x8xbf16> to vector<62x8xbf16>
    %c7 = arith.constant 7 : index
    %c0_44 = arith.constant 0 : index
    %c0_45 = arith.constant 0 : index
    %45 = vector.load %arg6[%c7, %c0_44, %c0_45] : memref<9x8x128xbf16, #tpu.memory_space<vmem>>, vector<1x8x128xbf16>
    %46 = vector.shape_cast %45 : vector<1x8x128xbf16> to vector<8x128xbf16>
    %cst_46 = arith.constant dense<0.000000e+00> : vector<62x128xf32>
    %47 = tpu.matmul %44, %46, %cst_46 {dimension_numbers = #tpu.dot_dimension_numbers<[1], [0], [0], [1], [0, 0, 1, 1], [], []>} : vector<62x8xbf16>, vector<8x128xbf16>, vector<62x128xf32> -> vector<62x128xf32>
    %48 = arith.addf %42, %47 : vector<62x128xf32>
    %c0_47 = arith.constant 0 : index
    %c10 = arith.constant 10 : index
    %c0_48 = arith.constant 0 : index
    %49 = vector.load %arg2[%c0_47, %c10, %c0_48] : memref<1x72x8xbf16, #tpu.memory_space<vmem>>, vector<1x62x8xbf16>
    %50 = vector.shape_cast %49 : vector<1x62x8xbf16> to vector<62x8xbf16>
    %c8 = arith.constant 8 : index
    %c0_49 = arith.constant 0 : index
    %c0_50 = arith.constant 0 : index
    %51 = vector.load %arg6[%c8, %c0_49, %c0_50] : memref<9x8x128xbf16, #tpu.memory_space<vmem>>, vector<1x8x128xbf16>
    %52 = vector.shape_cast %51 : vector<1x8x128xbf16> to vector<8x128xbf16>
    %cst_51 = arith.constant dense<0.000000e+00> : vector<62x128xf32>
    %53 = tpu.matmul %50, %52, %cst_51 {dimension_numbers = #tpu.dot_dimension_numbers<[1], [0], [0], [1], [0, 0, 1, 1], [], []>} : vector<62x8xbf16>, vector<8x128xbf16>, vector<62x128xf32> -> vector<62x128xf32>
    %54 = arith.addf %48, %53 : vector<62x128xf32>
    %c0_52 = arith.constant 0 : index
    %c0_53 = arith.constant 0 : index
    %55 = vector.load %arg7[%c0_52, %c0_53] : memref<1x128xf32, #tpu.memory_space<vmem>>, vector<1x128xf32>
    %56 = vector.broadcast %55 : vector<1x128xf32> to vector<62x128xf32>
    %57 = arith.addf %54, %56 : vector<62x128xf32>
    %cst_54 = arith.constant 0.000000e+00 : f32
    %58 = vector.broadcast %cst_54 : f32 to vector<62x128xf32>
    %59 = arith.maximumf %57, %58 : vector<62x128xf32>
    %60 = arith.truncf %59 : vector<62x128xf32> to vector<62x128xbf16>
    %c0_55 = arith.constant 0 : index
    %c0_56 = arith.constant 0 : index
    %c0_57 = arith.constant 0 : index
    %61 = vector.load %arg8[%c0_55, %c0_56, %c0_57] : memref<1x62x128xbf16, #tpu.memory_space<vmem>>, vector<1x62x128xbf16>
    %62 = vector.shape_cast %61 : vector<1x62x128xbf16> to vector<62x128xbf16>
    %63 = vector.shape_cast %60 : vector<62x128xbf16> to vector<1x62x128xbf16>
    tpu.vector_store %arg8[%c0_55, %c0_56, %c0_57], %63 {strides = array<i32>} : memref<1x62x128xbf16, #tpu.memory_space<vmem>>, vector<1x62x128xbf16>,
    return
  }
  func.func @transform_0(%arg0: i32, %arg1: i32) -> (i32, i32, i32) {
    %c0_i32 = arith.constant 0 : i32
    %c0_i32_0 = arith.constant 0 : i32
    %c0_i32_1 = arith.constant 0 : i32
    return %arg0, %c0_i32, %c0_i32_0 : i32, i32, i32
  }
  func.func @transform_1(%arg0: i32, %arg1: i32) -> (i32, i32, i32) {
    %c0_i32 = arith.constant 0 : i32
    %c0_i32_0 = arith.constant 0 : i32
    %c0_i32_1 = arith.constant 0 : i32
    return %arg0, %c0_i32, %c0_i32_0 : i32, i32, i32
  }
  func.func @transform_2(%arg0: i32, %arg1: i32) -> (i32, i32, i32) {
    %c0_i32 = arith.constant 0 : i32
    %c0_i32_0 = arith.constant 0 : i32
    %c0_i32_1 = arith.constant 0 : i32
    return %arg0, %c0_i32, %c0_i32_0 : i32, i32, i32
  }
  func.func @transform_3(%arg0: i32, %arg1: i32) -> (i32, i32, i32) {
    %c0_i32 = arith.constant 0 : i32
    %c0_i32_0 = arith.constant 0 : i32
    %c0_i32_1 = arith.constant 0 : i32
    return %arg0, %c0_i32, %c0_i32_0 : i32, i32, i32
  }
  func.func @transform_4(%arg0: i32, %arg1: i32) -> (i32, i32, i32) {
    %c0_i32 = arith.constant 0 : i32
    %c0_i32_0 = arith.constant 0 : i32
    %c0_i32_1 = arith.constant 0 : i32
    return %c0_i32, %c0_i32_0, %arg1 : i32, i32, i32
  }
  func.func @transform_5(%arg0: i32, %arg1: i32) -> (i32, i32) {
    %c0_i32 = arith.constant 0 : i32
    %c0_i32_0 = arith.constant 0 : i32
    return %c0_i32, %arg1 : i32, i32
  }
  func.func @transform_6(%arg0: i32, %arg1: i32) -> (i32, i32, i32) {
    %c0_i32 = arith.constant 0 : i32
    %c0_i32_0 = arith.constant 0 : i32
    return %arg0, %c0_i32, %arg1 : i32, i32, i32
  }
}

module attributes {stable_mosaic.version = 11 : i64} {
  func.func @kernel(%arg0: i32, %arg1: memref<1x8x8x8xbf16, #tpu.memory_space<vmem>>, %arg2: memref<1x8x8x8xbf16, #tpu.memory_space<vmem>>, %arg3: memref<1x8x8x8xbf16, #tpu.memory_space<vmem>>, %arg4: memref<1x8x8x8xbf16, #tpu.memory_space<vmem>>, %arg5: memref<1x7x7x8xbf16, #tpu.memory_space<vmem>>) attributes {dimension_semantics = [#tpu.dimension_semantics<parallel>], iteration_bounds = array<i64: 2>, scalar_prefetch = 0 : i64, scratch_operands = 0 : i64, tpu.core_type = #tpu.core_type<tc>, window_params = [{transform_indices = @transform_0, window_bounds = array<i64: 1, 8, 8, 8>}, {transform_indices = @transform_1, window_bounds = array<i64: 1, 8, 8, 8>}, {transform_indices = @transform_2, window_bounds = array<i64: 1, 8, 8, 8>}, {transform_indices = @transform_3, window_bounds = array<i64: 1, 8, 8, 8>}, {transform_indices = @transform_4, window_bounds = array<i64: 1, 7, 7, 8>}]} {
    %c0 = arith.constant 0 : index
    %c0_0 = arith.constant 0 : index
    %c0_1 = arith.constant 0 : index
    %c0_2 = arith.constant 0 : index
    %0 = vector.load %arg1[%c0, %c0_0, %c0_1, %c0_2] : memref<1x8x8x8xbf16, #tpu.memory_space<vmem>>, vector<1x7x7x8xbf16>
    %1 = vector.shape_cast %0 : vector<1x7x7x8xbf16> to vector<7x7x8xbf16>
    %c0_3 = arith.constant 0 : index
    %c0_4 = arith.constant 0 : index
    %c0_5 = arith.constant 0 : index
    %c0_6 = arith.constant 0 : index
    %2 = vector.load %arg2[%c0_3, %c0_4, %c0_5, %c0_6] : memref<1x8x8x8xbf16, #tpu.memory_space<vmem>>, vector<1x7x7x8xbf16>
    %3 = vector.shape_cast %2 : vector<1x7x7x8xbf16> to vector<7x7x8xbf16>
    %4 = arith.maximumf %1, %3 : vector<7x7x8xbf16>
    %c0_7 = arith.constant 0 : index
    %c0_8 = arith.constant 0 : index
    %c1 = arith.constant 1 : index
    %c0_9 = arith.constant 0 : index
    %5 = vector.load %arg1[%c0_7, %c0_8, %c1, %c0_9] : memref<1x8x8x8xbf16, #tpu.memory_space<vmem>>, vector<1x7x7x8xbf16>
    %6 = vector.shape_cast %5 : vector<1x7x7x8xbf16> to vector<7x7x8xbf16>
    %7 = arith.maximumf %4, %6 : vector<7x7x8xbf16>
    %c0_10 = arith.constant 0 : index
    %c0_11 = arith.constant 0 : index
    %c0_12 = arith.constant 0 : index
    %c0_13 = arith.constant 0 : index
    %8 = vector.load %arg3[%c0_10, %c0_11, %c0_12, %c0_13] : memref<1x8x8x8xbf16, #tpu.memory_space<vmem>>, vector<1x7x7x8xbf16>
    %9 = vector.shape_cast %8 : vector<1x7x7x8xbf16> to vector<7x7x8xbf16>
    %10 = arith.maximumf %7, %9 : vector<7x7x8xbf16>
    %c0_14 = arith.constant 0 : index
    %c0_15 = arith.constant 0 : index
    %c0_16 = arith.constant 0 : index
    %c0_17 = arith.constant 0 : index
    %11 = vector.load %arg4[%c0_14, %c0_15, %c0_16, %c0_17] : memref<1x8x8x8xbf16, #tpu.memory_space<vmem>>, vector<1x7x7x8xbf16>
    %12 = vector.shape_cast %11 : vector<1x7x7x8xbf16> to vector<7x7x8xbf16>
    %13 = arith.maximumf %10, %12 : vector<7x7x8xbf16>
    %c0_18 = arith.constant 0 : index
    %c0_19 = arith.constant 0 : index
    %c1_20 = arith.constant 1 : index
    %c0_21 = arith.constant 0 : index
    %14 = vector.load %arg3[%c0_18, %c0_19, %c1_20, %c0_21] : memref<1x8x8x8xbf16, #tpu.memory_space<vmem>>, vector<1x7x7x8xbf16>
    %15 = vector.shape_cast %14 : vector<1x7x7x8xbf16> to vector<7x7x8xbf16>
    %16 = arith.maximumf %13, %15 : vector<7x7x8xbf16>
    %c0_22 = arith.constant 0 : index
    %c1_23 = arith.constant 1 : index
    %c0_24 = arith.constant 0 : index
    %c0_25 = arith.constant 0 : index
    %17 = vector.load %arg1[%c0_22, %c1_23, %c0_24, %c0_25] : memref<1x8x8x8xbf16, #tpu.memory_space<vmem>>, vector<1x7x7x8xbf16>
    %18 = vector.shape_cast %17 : vector<1x7x7x8xbf16> to vector<7x7x8xbf16>
    %19 = arith.maximumf %16, %18 : vector<7x7x8xbf16>
    %c0_26 = arith.constant 0 : index
    %c1_27 = arith.constant 1 : index
    %c0_28 = arith.constant 0 : index
    %c0_29 = arith.constant 0 : index
    %20 = vector.load %arg2[%c0_26, %c1_27, %c0_28, %c0_29] : memref<1x8x8x8xbf16, #tpu.memory_space<vmem>>, vector<1x7x7x8xbf16>
    %21 = vector.shape_cast %20 : vector<1x7x7x8xbf16> to vector<7x7x8xbf16>
    %22 = arith.maximumf %19, %21 : vector<7x7x8xbf16>
    %c0_30 = arith.constant 0 : index
    %c1_31 = arith.constant 1 : index
    %c1_32 = arith.constant 1 : index
    %c0_33 = arith.constant 0 : index
    %23 = vector.load %arg1[%c0_30, %c1_31, %c1_32, %c0_33] : memref<1x8x8x8xbf16, #tpu.memory_space<vmem>>, vector<1x7x7x8xbf16>
    %24 = vector.shape_cast %23 : vector<1x7x7x8xbf16> to vector<7x7x8xbf16>
    %25 = arith.maximumf %22, %24 : vector<7x7x8xbf16>
    %c0_34 = arith.constant 0 : index
    %c0_35 = arith.constant 0 : index
    %c0_36 = arith.constant 0 : index
    %c0_37 = arith.constant 0 : index
    %26 = vector.load %arg5[%c0_34, %c0_35, %c0_36, %c0_37] : memref<1x7x7x8xbf16, #tpu.memory_space<vmem>>, vector<1x7x7x8xbf16>
    %27 = vector.shape_cast %26 : vector<1x7x7x8xbf16> to vector<7x7x8xbf16>
    %28 = vector.shape_cast %25 : vector<7x7x8xbf16> to vector<1x7x7x8xbf16>
    tpu.vector_store %arg5[%c0_34, %c0_35, %c0_36, %c0_37], %28 {strides = array<i32>} : memref<1x7x7x8xbf16, #tpu.memory_space<vmem>>, vector<1x7x7x8xbf16>,
    return
  }
  func.func @transform_0(%arg0: i32) -> (i32, i32, i32, i32) {
    %c0_i32 = arith.constant 0 : i32
    %c0_i32_0 = arith.constant 0 : i32
    %c0_i32_1 = arith.constant 0 : i32
    %c0_i32_2 = arith.constant 0 : i32
    return %arg0, %c0_i32, %c0_i32_0, %c0_i32_1 : i32, i32, i32, i32
  }
  func.func @transform_1(%arg0: i32) -> (i32, i32, i32, i32) {
    %c0_i32 = arith.constant 0 : i32
    %c0_i32_0 = arith.constant 0 : i32
    %c0_i32_1 = arith.constant 0 : i32
    %c0_i32_2 = arith.constant 0 : i32
    return %arg0, %c0_i32, %c0_i32_0, %c0_i32_1 : i32, i32, i32, i32
  }
  func.func @transform_2(%arg0: i32) -> (i32, i32, i32, i32) {
    %c0_i32 = arith.constant 0 : i32
    %c0_i32_0 = arith.constant 0 : i32
    %c0_i32_1 = arith.constant 0 : i32
    %c0_i32_2 = arith.constant 0 : i32
    return %arg0, %c0_i32, %c0_i32_0, %c0_i32_1 : i32, i32, i32, i32
  }
  func.func @transform_3(%arg0: i32) -> (i32, i32, i32, i32) {
    %c0_i32 = arith.constant 0 : i32
    %c0_i32_0 = arith.constant 0 : i32
    %c0_i32_1 = arith.constant 0 : i32
    %c0_i32_2 = arith.constant 0 : i32
    return %arg0, %c0_i32, %c0_i32_0, %c0_i32_1 : i32, i32, i32, i32
  }
  func.func @transform_4(%arg0: i32) -> (i32, i32, i32, i32) {
    %c0_i32 = arith.constant 0 : i32
    %c0_i32_0 = arith.constant 0 : i32
    %c0_i32_1 = arith.constant 0 : i32
    %c0_i32_2 = arith.constant 0 : i32
    return %arg0, %c0_i32, %c0_i32_0, %c0_i32_1 : i32, i32, i32, i32
  }
}

</mosaic_0001>

<llo_original>
// kernel: inception_b.6
$region0: #{inception_b.6}
  #allocation0 [shape = 'u32[]', space=smem, size = 0x4, offset = 0x4, fixed_abs, tag = 'smem constant byte address 0x4 - core index']
  #allocation1 [shape = 'u32[72,128]{1,0:T(1,128)}', space=vmem, size = 0x9000, scoped, tag = 'internal scratch']
  %s0 = inlined_call_operand.vmem [shape: bf16[512,8], index: 0, kind: input, shape index: {}]
  %s1 = inlined_call_operand.vmem [shape: bf16[8,128], index: 1, kind: input, shape index: {}]
  %s2 = inlined_call_operand.vmem [shape: f32[1,128], index: 2, kind: input, shape index: {}]
  %s3 = inlined_call_operand.vmem [shape: bf16[512,128], index: 3, kind: output, shape index: {}]
  %s4 = sld [smem:[#allocation0]]
  $region45: #{inception_b.6} parent=0
    _
  %s6 = ssub.s32 1, %s4
  %s7 = scalar_select 0, %s6, %s4
  loop: start=0, step=1, limit=4
  $region2: #{inception_b.6} parent=0 // loop_pre_header
    _
  $region3: #{inception_b.6} parent=0 // loop_header
    %s9 = sphi 0, %s13
    %p10 = scmp.ge.s32.totalorder %s9, 4
    %s16 = sphi 0, %s28
    %s17 = sphi 0, %s24
    %s18 = sphi 0, %s16
    %s19 = sphi 0, %s17
    %s20 = sphi 0, %s18
    %s21 = sphi 0, %s19
    %s31 = sphi 0, %s33
    %s34 = sphi 0, %s31
    %s35 = sphi 0, %s34
    %s51 = sphi 0, %s35
    %s57 = sphi 0, %s59
    %s60 = sphi 0, %s57
    %s61 = sphi 0, %s60
    %s77 = sphi 0, %s61
    %s83 = sphi 0, %s85
    %s86 = sphi 0, %s83
    %s87 = sphi 0, %s86
    %s103 = sphi 0, %s87
    %s111 = sphi 0, %s113
    %s114 = sphi 0, %s111
    %s115 = sphi 0, %s114
    %s131 = sphi 0, %s115
  $region4: #{inception_b.6} parent=0 // loop_header_branch
    %12 = sbr.rel (%p10) target = $region8
  $region5: #{inception_b.6} parent=0 // loop_body
    %s14 = ssub.s32 %s9, 1
    %s15 = ssub.s32 %s9, 2
    %s22 = sadd.s32 1, %s17
    %p23 = scmp.ge.s32.totalorder %s22, 1
    %s24 = scalar_select %p23, 0, %s22
    %s25 = sadd.s32 1, %s16
    %s26 = scalar_select %p23, %s25, %s16
    %p27 = scmp.ge.s32.totalorder %s26, 2
    %s28 = scalar_select %p27, 0, %s26
    %s29 = ssub.s32 %s16, %s28
    %p30 = scmp.eq.s32.totalorder %s29, 0
    %s32 = sadd.s32 %s31, 1
    %s33 = scalar_select %p30, %s31, %s32
    %p36 = pneg %p30
    %p37 = scmp.eq.s32.totalorder %s9, 1
    %p38 = por %p36, %p37
    %p39 = scmp.ne.s32.totalorder %s31, %s34
    %p40 = scmp.eq.s32.totalorder %s9, 0
    %p41 = por %p39, %p40
    %p42 = scmp.ne.s32.totalorder %s31, %s34
    %p43 = scmp.eq.s32.totalorder %s14, 1
    %p44 = por %p42, %p43
    %p45 = scmp.ne.s32.totalorder %s34, %s35
    %p46 = scmp.eq.s32.totalorder %s14, 0
    %p47 = por %p45, %p46
    %p48 = scmp.ne.s32.totalorder %s34, %s35
    %p49 = scmp.eq.s32.totalorder %s15, 1
    %p50 = por %p48, %p49
    %p52 = scmp.ne.s32.totalorder %s35, %s51
    %p53 = scmp.eq.s32.totalorder %s15, 0
    %p54 = por %p52, %p53
    %s55 = ssub.s32 %s17, %s24
    %p56 = scmp.eq.s32.totalorder %s55, 0
    %s58 = sadd.s32 %s57, 1
    %s59 = scalar_select %p56, %s57, %s58
    %p62 = pneg %p56
    %p63 = scmp.eq.s32.totalorder %s9, 1
    %p64 = por %p62, %p63
    %p65 = scmp.ne.s32.totalorder %s57, %s60
    %p66 = scmp.eq.s32.totalorder %s9, 0
    %p67 = por %p65, %p66
    %p68 = scmp.ne.s32.totalorder %s57, %s60
    %p69 = scmp.eq.s32.totalorder %s14, 1
    %p70 = por %p68, %p69
    %p71 = scmp.ne.s32.totalorder %s60, %s61
    %p72 = scmp.eq.s32.totalorder %s14, 0
    %p73 = por %p71, %p72
    %p74 = scmp.ne.s32.totalorder %s60, %s61
    %p75 = scmp.eq.s32.totalorder %s15, 1
    %p76 = por %p74, %p75
    %p78 = scmp.ne.s32.totalorder %s61, %s77
    %p79 = scmp.eq.s32.totalorder %s15, 0
    %p80 = por %p78, %p79
    %s81 = ssub.s32 %s17, %s24
    %p82 = scmp.eq.s32.totalorder %s81, 0
    %s84 = sadd.s32 %s83, 1
    %s85 = scalar_select %p82, %s83, %s84
    %p88 = pneg %p82
    %p89 = scmp.eq.s32.totalorder %s9, 1
    %p90 = por %p88, %p89
    %p91 = scmp.ne.s32.totalorder %s83, %s86
    %p92 = scmp.eq.s32.totalorder %s9, 0
    %p93 = por %p91, %p92
    %p94 = scmp.ne.s32.totalorder %s83, %s86
    %p95 = scmp.eq.s32.totalorder %s14, 1
    %p96 = por %p94, %p95
    %p97 = scmp.ne.s32.totalorder %s86, %s87
    %p98 = scmp.eq.s32.totalorder %s14, 0
    %p99 = por %p97, %p98
    %p100 = scmp.ne.s32.totalorder %s86, %s87
    %p101 = scmp.eq.s32.totalorder %s15, 1
    %p102 = por %p100, %p101
    %p104 = scmp.ne.s32.totalorder %s87, %s103
    %p105 = scmp.eq.s32.totalorder %s15, 0
    %p106 = por %p104, %p105
    %s107 = ssub.s32 %s16, %s28
    %s108 = ssub.s32 %s17, %s24
    %s109 = sor.u32 %s107, %s108
    %p110 = scmp.eq.s32.totalorder %s109, 0
    %s112 = sadd.s32 %s111, 1
    %s113 = scalar_select %p110, %s111, %s112
    %p116 = pneg %p110
    %p117 = scmp.eq.s32.totalorder %s9, 1
    %p118 = por %p116, %p117
    %p119 = scmp.ne.s32.totalorder %s111, %s114
    %p120 = scmp.eq.s32.totalorder %s9, 0
    %p121 = por %p119, %p120
    %p122 = scmp.ne.s32.totalorder %s111, %s114
    %p123 = scmp.eq.s32.totalorder %s14, 1
    %p124 = por %p122, %p123
    %p125 = scmp.ne.s32.totalorder %s114, %s115
    %p126 = scmp.eq.s32.totalorder %s14, 0
    %p127 = por %p125, %p126
    %p128 = scmp.ne.s32.totalorder %s114, %s115
    %p129 = scmp.eq.s32.totalorder %s15, 1
    %p130 = por %p128, %p129
    %p132 = scmp.ne.s32.totalorder %s115, %s131
    %p133 = scmp.eq.s32.totalorder %s15, 0
    %p134 = por %p132, %p133
    %p135 = scmp.le.s32.totalorder 1, %s9
    %p136 = scmp.lt.s32.totalorder %s9, 3
    %p137 = pnand %p135, %p136
    %p138 = pneg %p137
    // Predicated region
    $region9: #{inception_b.6} parent=5 // pred_check
      _
    $region10: #{inception_b.6} parent=5 // pred_check_branch
      %140 = sbr.rel (%p137) target = $region12
    $region11: #{inception_b.6} parent=5 // pred_region
      %s141 = ssub.s32 %s9, 1
      // Predicated region
      $region13: #{inception_b.6} parent=11 // pred_check
        %p142 = pneg %p73
      $region14: #{inception_b.6} parent=11 // pred_check_branch
        %144 = sbr.rel (%p142) target = $region16
      $region15: #{inception_b.6} parent=11 // pred_region
        %p145 = scmp.lt.s32.totalorder %s19, 0
        %s146 = scalar_select %p145, %s19, 0
        %s147 = smul.addr %s146, 4
        %s148 = scalar_lea.vmem %s1, %s147
      $region16: #{inception_b.6} parent=11 // pred_fallthru
        _
      // Predicated region
      $region17: #{inception_b.6} parent=11 // pred_check
        %p149 = pneg %p99
      $region18: #{inception_b.6} parent=11 // pred_check_branch
        %151 = sbr.rel (%p149) target = $region20
      $region19: #{inception_b.6} parent=11 // pred_region
        %p152 = scmp.lt.s32.totalorder %s19, 0
        %s153 = scalar_select %p152, %s19, 0
        %s154 = scalar_lea.vmem %s2, %s153
      $region20: #{inception_b.6} parent=11 // pred_fallthru
        _
    $region12: #{inception_b.6} parent=5 // pred_fallthru
      _
    %p155 = scmp.lt.s32.totalorder %s9, 2
    // Predicated region
    $region21: #{inception_b.6} parent=5 // pred_check
      %p156 = pneg %p155
    $region22: #{inception_b.6} parent=5 // pred_check_branch
      %158 = sbr.rel (%p156) target = $region24
    $region23: #{inception_b.6} parent=5 // pred_region
      // Predicated region
      $region25: #{inception_b.6} parent=23 // pred_check
        %p159 = pneg %p41
      $region26: #{inception_b.6} parent=23 // pred_check_branch
        %161 = sbr.rel (%p159) target = $region28
      $region27: #{inception_b.6} parent=23 // pred_region
        %s162 = smul.u32 32, %s16
        %p163 = scmp.lt.s32.totalorder %s162, 63
        %s164 = scalar_select %p163, %s162, 63
        %s165 = smul.addr %s164, 4
        %s166 = scalar_lea.vmem %s0, %s165
        %s167 = smul.u32 32, %s16
      $region28: #{inception_b.6} parent=23 // pred_fallthru
        _
    $region24: #{inception_b.6} parent=5 // pred_fallthru
      _
    %p168 = scmp.le.s32.totalorder 1, %s9
    %p169 = scmp.lt.s32.totalorder %s9, 3
    %p170 = pnand %p168, %p169
    %p171 = pneg %p170
    // Predicated region
    $region29: #{inception_b.6} parent=5 // pred_check
      _
    $region30: #{inception_b.6} parent=5 // pred_check_branch
      %173 = sbr.rel (%p170) target = $region32
    $region31: #{inception_b.6} parent=5 // pred_region
      %s174 = ssub.s32 %s9, 1
      %s175 = smul.u32 32, %s18
      %p176 = scmp.lt.s32.totalorder %s175, 63
      %s177 = scalar_select %p176, %s175, 63
      %s178 = smul.addr %s177, 4
      %s179 = scalar_lea.vmem %s0, %s178
      %p180 = pneg %p47
      %p181 = pneg %p44
      %p182 = scmp.lt.s32.totalorder %s19, 0
      %s183 = scalar_select %p182, %s19, 0
      %s184 = smul.addr %s183, 4
      %s185 = scalar_lea.vmem %s1, %s184
      %p186 = pneg %p73
      %p187 = pneg %p70
      %p188 = scmp.lt.s32.totalorder %s19, 0
      %s189 = scalar_select %p188, %s19, 0
      %s190 = scalar_lea.vmem %s2, %s189
      %p191 = pneg %p99
      %p192 = pneg %p96
      %p193 = pneg %p127
      %p194 = pneg %p124
      %s195 = smul.u32 32, %s18
      %p196 = scmp.lt.s32.totalorder %s195, 63
      %s197 = scalar_select %p196, %s195, 63
      %p198 = scmp.lt.s32.totalorder %s19, 0
      %s199 = scalar_select %p198, %s19, 0
      %s200 = sadd.s32 %s199, %s197
      %s201 = smul.addr %s200, 4
      %s202 = scalar_lea.vmem %s3, %s201
      %s203 = smul.u32 32, %s18
      %p204 = scmp.lt.s32.totalorder %s203, 63
      %s205 = scalar_select %p204, %s203, 63
      %s206 = smul.addr %s205, 4
      %s207 = scalar_lea.vmem %s0, %s206
      %s208 = smul.u32 32, %s18
      %p209 = scmp.lt.s32.totalorder %s19, 0
      %s210 = scalar_select %p209, %s19, 0
      %s211 = smul.addr %s210, 4
      %s212 = scalar_lea.vmem %s1, %s211
      %p213 = scmp.lt.s32.totalorder %s19, 0
      %s214 = scalar_select %p213, %s19, 0
      %s215 = scalar_lea.vmem %s2, %s214
      %s216 = smul.u32 32, %s18
      %p217 = scmp.lt.s32.totalorder %s216, 63
      %s218 = scalar_select %p217, %s216, 63
      %p219 = scmp.lt.s32.totalorder %s19, 0
      %s220 = scalar_select %p219, %s19, 0
      %s221 = sadd.s32 %s220, %s218
      %s222 = smul.addr %s221, 4
      %s223 = scalar_lea.vmem %s3, %s222
      %s224 = smul.u32 32, %s18
      %v226 = vld [vmem:[%s207] sm:$0xf]
      %v227 = vld [vmem:[%s207 + $0x4] sm:$0xf]
      %v228 = vld [vmem:[%s207 + $0x8] sm:$0xf]
      %v229 = vld [vmem:[%s207 + $0xc] sm:$0xf]
      %v230 = vld [vmem:[%s207 + $0x10] sm:$0xf]
      %v231 = vld [vmem:[%s207 + $0x14] sm:$0xf]
      %v232 = vld [vmem:[%s207 + $0x18] sm:$0xf]
      %v233 = vld [vmem:[%s207 + $0x1c] sm:$0xf]
      %v234 = vld [vmem:[%s207 + $0x20] sm:$0xf]
      %v235 = vld [vmem:[%s207 + $0x24] sm:$0xf]
      %v236 = vld [vmem:[%s207 + $0x28] sm:$0xf]
      %v237 = vld [vmem:[%s207 + $0x2c] sm:$0xf]
      %v238 = vld [vmem:[%s207 + $0x30] sm:$0xf]
      %v239 = vld [vmem:[%s207 + $0x34] sm:$0xf]
      %v240 = vld [vmem:[%s207 + $0x38] sm:$0xf]
      %v241 = vld [vmem:[%s207 + $0x3c] sm:$0xf]
      %v242 = vld [vmem:[%s207 + $0x40] sm:$0xf]
      %v243 = vld [vmem:[%s207 + $0x44] sm:$0xf]
      %v244 = vld [vmem:[%s207 + $0x48] sm:$0xf]
      %v245 = vld [vmem:[%s207 + $0x4c] sm:$0xf]
      %v246 = vld [vmem:[%s207 + $0x50] sm:$0xf]
      %v247 = vld [vmem:[%s207 + $0x54] sm:$0xf]
      %v248 = vld [vmem:[%s207 + $0x58] sm:$0xf]
      %v249 = vld [vmem:[%s207 + $0x5c] sm:$0xf]
      %v250 = vld [vmem:[%s207 + $0x60] sm:$0xf]
      %v251 = vld [vmem:[%s207 + $0x64] sm:$0xf]
      %v252 = vld [vmem:[%s207 + $0x68] sm:$0xf]
      %v253 = vld [vmem:[%s207 + $0x6c] sm:$0xf]
      %v254 = vld [vmem:[%s207 + $0x70] sm:$0xf]
      %v255 = vld [vmem:[%s207 + $0x74] sm:$0xf]
      %v256 = vld [vmem:[%s207 + $0x78] sm:$0xf]
      %v257 = vld [vmem:[%s207 + $0x7c] sm:$0xf]
      %v258 = vld [vmem:[%s212] sm:$0xf]
      %v259 = vld [vmem:[%s215] sm:$0x1]
      %v261 = vperm.slane %v259, 0
      %v295 = vunpack.c.l.b16 %v226
      %v296 = vunpack.c.l.b16 %v227
      %v297 = vunpack.c.l.b16 %v228
      %v298 = vunpack.c.l.b16 %v229
      %v299 = vunpack.c.l.b16 %v230
      %v300 = vunpack.c.l.b16 %v231
      %v301 = vunpack.c.l.b16 %v232
      %v302 = vunpack.c.l.b16 %v233
      %v303 = vunpack.c.l.b16 %v234
      %v304 = vunpack.c.l.b16 %v235
      %v305 = vunpack.c.l.b16 %v236
      %v306 = vunpack.c.l.b16 %v237
      %v307 = vunpack.c.l.b16 %v238
      %v308 = vunpack.c.l.b16 %v239
      %v309 = vunpack.c.l.b16 %v240
      %v310 = vunpack.c.l.b16 %v241
      %v311 = vunpack.c.l.b16 %v242
      %v312 = vunpack.c.l.b16 %v243
      %v313 = vunpack.c.l.b16 %v244
      %v314 = vunpack.c.l.b16 %v245
      %v315 = vunpack.c.l.b16 %v246
      %v316 = vunpack.c.l.b16 %v247
      %v317 = vunpack.c.l.b16 %v248
      %v318 = vunpack.c.l.b16 %v249
      %v319 = vunpack.c.l.b16 %v250
      %v320 = vunpack.c.l.b16 %v251
      %v321 = vunpack.c.l.b16 %v252
      %v322 = vunpack.c.l.b16 %v253
      %v323 = vunpack.c.l.b16 %v254
      %v324 = vunpack.c.l.b16 %v255
      %v325 = vunpack.c.l.b16 %v256
      %v326 = vunpack.c.l.b16 %v257
      %v327 = vpack.c.b16 %v296, %v295
      %v328 = vpack.c.b16 %v298, %v297
      %v329 = vpack.c.b16 %v300, %v299
      %v330 = vpack.c.b16 %v302, %v301
      %v331 = vpack.c.b16 %v304, %v303
      %v332 = vpack.c.b16 %v306, %v305
      %v333 = vpack.c.b16 %v308, %v307
      %v334 = vpack.c.b16 %v310, %v309
      %v335 = vpack.c.b16 %v312, %v311
      %v336 = vpack.c.b16 %v314, %v313
      %v337 = vpack.c.b16 %v316, %v315
      %v338 = vpack.c.b16 %v318, %v317
      %v339 = vpack.c.b16 %v320, %v319
      %v340 = vpack.c.b16 %v322, %v321
      %v341 = vpack.c.b16 %v324, %v323
      %v342 = vpack.c.b16 %v326, %v325
      %vm343 = vcmask 64512
      %v345 = vsel %vm343, %v327, 0
      %v348 = vsel %vm343, %v328, 0
      %v351 = vsel %vm343, %v329, 0
      %v354 = vsel %vm343, %v330, 0
      %v357 = vsel %vm343, %v331, 0
      %v360 = vsel %vm343, %v332, 0
      %v363 = vsel %vm343, %v333, 0
      %v366 = vsel %vm343, %v334, 0
      %v369 = vsel %vm343, %v335, 0
      %v372 = vsel %vm343, %v336, 0
      %v375 = vsel %vm343, %v337, 0
      %v378 = vsel %vm343, %v338, 0
      %v381 = vsel %vm343, %v339, 0
      %v384 = vsel %vm343, %v340, 0
      %v387 = vsel %vm343, %v341, 0
      %v390 = vsel %vm343, %v342, 0
      %vm392 = vcmask 1043456
      %v394 = vsel %vm392, %v258, 0
      %396 = vmatpush.bf16.msra.mxu0 0
      %397 = vmatpush.bf16.msra.mxu0 0
      %398 = vmatpush.bf16.msra.mxu0 0
      %399 = vmatpush.bf16.msra.mxu0 0
      %400 = vmatpush.bf16.msra.mxu0 0
      %401 = vmatpush.bf16.msra.mxu0 0
      %402 = vmatpush.bf16.msra.mxu0 0
      %403 = vmatpush.bf16.msra.mxu0 %v394
      %404 = vmatmul.bf16.gmra.mxu0 %v345
      %v405 = vpop.f32.mrf.mxu0
      %v406 = vadd.f32 %v261, %v405
      %v407 = vpop.f32.mrf.mxu0
      %v408 = vadd.f32 %v261, %v407
      %409 = vmatmul.bf16.gmra.mxu0 %v348
      %v410 = vpop.f32.mrf.mxu0
      %v411 = vadd.f32 %v261, %v410
      %v412 = vpop.f32.mrf.mxu0
      %v413 = vadd.f32 %v261, %v412
      %414 = vmatmul.bf16.gmra.mxu0 %v351
      %v415 = vpop.f32.mrf.mxu0
      %v416 = vadd.f32 %v261, %v415
      %v417 = vpop.f32.mrf.mxu0
      %v418 = vadd.f32 %v261, %v417
      %419 = vmatmul.bf16.gmra.mxu0 %v354
      %v420 = vpop.f32.mrf.mxu0
      %v421 = vadd.f32 %v261, %v420
      %v422 = vpop.f32.mrf.mxu0
      %v423 = vadd.f32 %v261, %v422
      %424 = vmatmul.bf16.gmra.mxu0 %v357
      %v425 = vpop.f32.mrf.mxu0
      %v426 = vadd.f32 %v261, %v425
      %v427 = vpop.f32.mrf.mxu0
      %v428 = vadd.f32 %v261, %v427
      %429 = vmatmul.bf16.gmra.mxu0 %v360
      %v430 = vpop.f32.mrf.mxu0
      %v431 = vadd.f32 %v261, %v430
      %v432 = vpop.f32.mrf.mxu0
      %v433 = vadd.f32 %v261, %v432
      %434 = vmatmul.bf16.gmra.mxu0 %v363
      %v435 = vpop.f32.mrf.mxu0
      %v436 = vadd.f32 %v261, %v435
      %v437 = vpop.f32.mrf.mxu0
      %v438 = vadd.f32 %v261, %v437
      %439 = vmatmul.bf16.gmra.mxu0 %v366
      %v440 = vpop.f32.mrf.mxu0
      %v441 = vadd.f32 %v261, %v440
      %v442 = vpop.f32.mrf.mxu0
      %v443 = vadd.f32 %v261, %v442
      %444 = vmatmul.bf16.gmra.mxu0 %v369
      %v445 = vpop.f32.mrf.mxu0
      %v446 = vadd.f32 %v261, %v445
      %v447 = vpop.f32.mrf.mxu0
      %v448 = vadd.f32 %v261, %v447
      %449 = vmatmul.bf16.gmra.mxu0 %v372
      %v450 = vpop.f32.mrf.mxu0
      %v451 = vadd.f32 %v261, %v450
      %v452 = vpop.f32.mrf.mxu0
      %v453 = vadd.f32 %v261, %v452
      %454 = vmatmul.bf16.gmra.mxu0 %v375
      %v455 = vpop.f32.mrf.mxu0
      %v456 = vadd.f32 %v261, %v455
      %v457 = vpop.f32.mrf.mxu0
      %v458 = vadd.f32 %v261, %v457
      %459 = vmatmul.bf16.gmra.mxu0 %v378
      %v460 = vpop.f32.mrf.mxu0
      %v461 = vadd.f32 %v261, %v460
      %v462 = vpop.f32.mrf.mxu0
      %v463 = vadd.f32 %v261, %v462
      %464 = vmatmul.bf16.gmra.mxu0 %v381
      %v465 = vpop.f32.mrf.mxu0
      %v466 = vadd.f32 %v261, %v465
      %v467 = vpop.f32.mrf.mxu0
      %v468 = vadd.f32 %v261, %v467
      %469 = vmatmul.bf16.gmra.mxu0 %v384
      %v470 = vpop.f32.mrf.mxu0
      %v471 = vadd.f32 %v261, %v470
      %v472 = vpop.f32.mrf.mxu0
      %v473 = vadd.f32 %v261, %v472
      %474 = vmatmul.bf16.gmra.mxu0 %v387
      %v475 = vpop.f32.mrf.mxu0
      %v476 = vadd.f32 %v261, %v475
      %v477 = vpop.f32.mrf.mxu0
      %v478 = vadd.f32 %v261, %v477
      %479 = vmatmul.bf16.gmra.mxu0 %v390
      %v480 = vpop.f32.mrf.mxu0
      %v481 = vadd.f32 %v261, %v480
      %v482 = vpop.f32.mrf.mxu0
      %v483 = vadd.f32 %v261, %v482
      %484 = vdwg.mxu0
      %v485 = vmax.f32 %v406, 0.0
      %v486 = vmax.f32 %v408, 0.0
      %v487 = vmax.f32 %v411, 0.0
      %v488 = vmax.f32 %v413, 0.0
      %v489 = vmax.f32 %v416, 0.0
      %v490 = vmax.f32 %v418, 0.0
      %v491 = vmax.f32 %v421, 0.0
      %v492 = vmax.f32 %v423, 0.0
      %v493 = vmax.f32 %v426, 0.0
      %v494 = vmax.f32 %v428, 0.0
      %v495 = vmax.f32 %v431, 0.0
      %v496 = vmax.f32 %v433, 0.0
      %v497 = vmax.f32 %v436, 0.0
      %v498 = vmax.f32 %v438, 0.0
      %v499 = vmax.f32 %v441, 0.0
      %v500 = vmax.f32 %v443, 0.0
      %v501 = vmax.f32 %v446, 0.0
      %v502 = vmax.f32 %v448, 0.0
      %v503 = vmax.f32 %v451, 0.0
      %v504 = vmax.f32 %v453, 0.0
      %v505 = vmax.f32 %v456, 0.0
      %v506 = vmax.f32 %v458, 0.0
      %v507 = vmax.f32 %v461, 0.0
      %v508 = vmax.f32 %v463, 0.0
      %v509 = vmax.f32 %v466, 0.0
      %v510 = vmax.f32 %v468, 0.0
      %v511 = vmax.f32 %v471, 0.0
      %v512 = vmax.f32 %v473, 0.0
      %v513 = vmax.f32 %v476, 0.0
      %v514 = vmax.f32 %v478, 0.0
      %v515 = vmax.f32 %v481, 0.0
      %v516 = vmax.f32 %v483, 0.0
      %v517 = vpack.c.bf16 %v485, %v485
      %v518 = vpack.c.bf16 %v486, %v486
      %v519 = vpack.c.bf16 %v487, %v487
      %v520 = vpack.c.bf16 %v488, %v488
      %v521 = vpack.c.bf16 %v489, %v489
      %v522 = vpack.c.bf16 %v490, %v490
      %v523 = vpack.c.bf16 %v491, %v491
      %v524 = vpack.c.bf16 %v492, %v492
      %v525 = vpack.c.bf16 %v493, %v493
      %v526 = vpack.c.bf16 %v494, %v494
      %v527 = vpack.c.bf16 %v495, %v495
      %v528 = vpack.c.bf16 %v496, %v496
      %v529 = vpack.c.bf16 %v497, %v497
      %v530 = vpack.c.bf16 %v498, %v498
      %v531 = vpack.c.bf16 %v499, %v499
      %v532 = vpack.c.bf16 %v500, %v500
      %v533 = vpack.c.bf16 %v501, %v501
      %v534 = vpack.c.bf16 %v502, %v502
      %v535 = vpack.c.bf16 %v503, %v503
      %v536 = vpack.c.bf16 %v504, %v504
      %v537 = vpack.c.bf16 %v505, %v505
      %v538 = vpack.c.bf16 %v506, %v506
      %v539 = vpack.c.bf16 %v507, %v507
      %v540 = vpack.c.bf16 %v508, %v508
      %v541 = vpack.c.bf16 %v509, %v509
      %v542 = vpack.c.bf16 %v510, %v510
      %v543 = vpack.c.bf16 %v511, %v511
      %v544 = vpack.c.bf16 %v512, %v512
      %v545 = vpack.c.bf16 %v513, %v513
      %v546 = vpack.c.bf16 %v514, %v514
      %v547 = vpack.c.bf16 %v515, %v515
      %v548 = vpack.c.bf16 %v516, %v516
      %549 = vst [vmem:[%s223] sm:$0xf] %v517
      %550 = vst [vmem:[%s223 + $0x4] sm:$0xf] %v518
      %551 = vst [vmem:[%s223 + $0x8] sm:$0xf] %v519
      %552 = vst [vmem:[%s223 + $0xc] sm:$0xf] %v520
      %553 = vst [vmem:[%s223 + $0x10] sm:$0xf] %v521
      %554 = vst [vmem:[%s223 + $0x14] sm:$0xf] %v522
      %555 = vst [vmem:[%s223 + $0x18] sm:$0xf] %v523
      %556 = vst [vmem:[%s223 + $0x1c] sm:$0xf] %v524
      %557 = vst [vmem:[%s223 + $0x20] sm:$0xf] %v525
      %558 = vst [vmem:[%s223 + $0x24] sm:$0xf] %v526
      %559 = vst [vmem:[%s223 + $0x28] sm:$0xf] %v527
      %560 = vst [vmem:[%s223 + $0x2c] sm:$0xf] %v528
      %561 = vst [vmem:[%s223 + $0x30] sm:$0xf] %v529
      %562 = vst [vmem:[%s223 + $0x34] sm:$0xf] %v530
      %563 = vst [vmem:[%s223 + $0x38] sm:$0xf] %v531
      %564 = vst [vmem:[%s223 + $0x3c] sm:$0xf] %v532
      %565 = vst [vmem:[%s223 + $0x40] sm:$0xf] %v533
      %566 = vst [vmem:[%s223 + $0x44] sm:$0xf] %v534
      %567 = vst [vmem:[%s223 + $0x48] sm:$0xf] %v535
      %568 = vst [vmem:[%s223 + $0x4c] sm:$0xf] %v536
      %569 = vst [vmem:[%s223 + $0x50] sm:$0xf] %v537
      %570 = vst [vmem:[%s223 + $0x54] sm:$0xf] %v538
      %571 = vst [vmem:[%s223 + $0x58] sm:$0xf] %v539
      %572 = vst [vmem:[%s223 + $0x5c] sm:$0xf] %v540
      %573 = vst [vmem:[%s223 + $0x60] sm:$0xf] %v541
      %574 = vst [vmem:[%s223 + $0x64] sm:$0xf] %v542
      %575 = vst [vmem:[%s223 + $0x68] sm:$0xf] %v543
      %576 = vst [vmem:[%s223 + $0x6c] sm:$0xf] %v544
      %577 = vst [vmem:[%s223 + $0x70] sm:$0xf] %v545
      %578 = vst [vmem:[%s223 + $0x74] sm:$0xf] %v546
      %579 = vst [vmem:[%s223 + $0x78] sm:$0xf] %v547
      %580 = vst [vmem:[%s223 + $0x7c] sm:$0xf] %v548
      %s581 = smul.u32 32, %s18
      %p582 = scmp.lt.s32.totalorder %s581, 63
      %s583 = scalar_select %p582, %s581, 63
      %p584 = scmp.lt.s32.totalorder %s19, 0
      %s585 = scalar_select %p584, %s19, 0
      %s586 = sadd.s32 %s585, %s583
      %s587 = smul.addr %s586, 4
      %s588 = scalar_lea.vmem %s3, %s587
      // Predicated region
      $region33: #{inception_b.6} parent=31 // pred_check
        %p589 = pneg %p124
      $region34: #{inception_b.6} parent=31 // pred_check_branch
        %591 = sbr.rel (%p589) target = $region36
      $region35: #{inception_b.6} parent=31 // pred_region
        %s592 = smul.u32 32, %s18
      $region36: #{inception_b.6} parent=31 // pred_fallthru
        _
    $region32: #{inception_b.6} parent=5 // pred_fallthru
      _
    %p593 = scmp.le.s32.totalorder 2, %s9
    // Predicated region
    $region37: #{inception_b.6} parent=5 // pred_check
      %p594 = pneg %p593
    $region38: #{inception_b.6} parent=5 // pred_check_branch
      %596 = sbr.rel (%p594) target = $region40
    $region39: #{inception_b.6} parent=5 // pred_region
      %s597 = ssub.s32 %s9, 2
      // Predicated region
      $region41: #{inception_b.6} parent=39 // pred_check
        %p598 = pneg %p130
      $region42: #{inception_b.6} parent=39 // pred_check_branch
        %600 = sbr.rel (%p598) target = $region44
      $region43: #{inception_b.6} parent=39 // pred_region
        %s601 = smul.u32 32, %s20
        %p602 = scmp.lt.s32.totalorder %s601, 63
        %s603 = scalar_select %p602, %s601, 63
        %p604 = scmp.lt.s32.totalorder %s21, 0
        %s605 = scalar_select %p604, %s21, 0
        %s606 = sadd.s32 %s605, %s603
        %s607 = smul.addr %s606, 4
        %s608 = scalar_lea.vmem %s3, %s607
      $region44: #{inception_b.6} parent=39 // pred_fallthru
        _
    $region40: #{inception_b.6} parent=5 // pred_fallthru
      _
  $region6: #{inception_b.6} parent=0 // loop_footer
    %s13 = sadd.s32 1, %s9
  $region7: #{inception_b.6} parent=0 // loop_footer_branch
    %8 = sbr.rel target = $region3
  $region8: #{inception_b.6} parent=0 // loop_exit
    _

// kernel: inception_b.7
$region0: #{inception_b.7}
  #allocation0 [shape = 'u32[]', space=smem, size = 0x4, offset = 0x4, fixed_abs, tag = 'smem constant byte address 0x4 - core index']
  #allocation1 [shape = 'u32[72,128]{1,0:T(1,128)}', space=vmem, size = 0x9000, scoped, tag = 'internal scratch']
  %s0 = inlined_call_operand.vmem [shape: bf16[2,324,128], index: 0, kind: input, shape index: {}]
  %s1 = inlined_call_operand.vmem [shape: bf16[9,128,128], index: 1, kind: input, shape index: {}]
  %s2 = inlined_call_operand.vmem [shape: f32[1,128], index: 2, kind: input, shape index: {}]
  %s3 = inlined_call_operand.vmem [shape: bf16[2,286,128], index: 3, kind: output, shape index: {}]
  %s4 = sld [smem:[#allocation0]]
  $region45: #{inception_b.7} parent=0
    _
  %s6 = ssub.s32 1, %s4
  %s7 = scalar_select 0, %s6, %s4
  loop: start=0, step=1, limit=4
  $region2: #{inception_b.7} parent=0 // loop_pre_header
    _
  $region3: #{inception_b.7} parent=0 // loop_header
    %s9 = sphi 0, %s13
    %p10 = scmp.ge.s32.totalorder %s9, 4
    %s16 = sphi 0, %s28
    %s17 = sphi 0, %s24
    %s18 = sphi 0, %s16
    %s19 = sphi 0, %s17
    %s20 = sphi 0, %s18
    %s21 = sphi 0, %s19
    %s31 = sphi 0, %s33
    %s34 = sphi 0, %s31
    %s35 = sphi 0, %s34
    %s51 = sphi 0, %s35
    %s57 = sphi 0, %s59
    %s60 = sphi 0, %s57
    %s61 = sphi 0, %s60
    %s77 = sphi 0, %s61
    %s83 = sphi 0, %s85
    %s86 = sphi 0, %s83
    %s87 = sphi 0, %s86
    %s103 = sphi 0, %s87
    %s111 = sphi 0, %s113
    %s114 = sphi 0, %s111
    %s115 = sphi 0, %s114
    %s131 = sphi 0, %s115
  $region4: #{inception_b.7} parent=0 // loop_header_branch
    %12 = sbr.rel (%p10) target = $region8
  $region5: #{inception_b.7} parent=0 // loop_body
    %s14 = ssub.s32 %s9, 1
    %s15 = ssub.s32 %s9, 2
    %s22 = sadd.s32 1, %s17
    %p23 = scmp.ge.s32.totalorder %s22, 1
    %s24 = scalar_select %p23, 0, %s22
    %s25 = sadd.s32 1, %s16
    %s26 = scalar_select %p23, %s25, %s16
    %p27 = scmp.ge.s32.totalorder %s26, 2
    %s28 = scalar_select %p27, 0, %s26
    %s29 = ssub.s32 %s16, %s28
    %p30 = scmp.eq.s32.totalorder %s29, 0
    %s32 = sadd.s32 %s31, 1
    %s33 = scalar_select %p30, %s31, %s32
    %p36 = pneg %p30
    %p37 = scmp.eq.s32.totalorder %s9, 1
    %p38 = por %p36, %p37
    %p39 = scmp.ne.s32.totalorder %s31, %s34
    %p40 = scmp.eq.s32.totalorder %s9, 0
    %p41 = por %p39, %p40
    %p42 = scmp.ne.s32.totalorder %s31, %s34
    %p43 = scmp.eq.s32.totalorder %s14, 1
    %p44 = por %p42, %p43
    %p45 = scmp.ne.s32.totalorder %s34, %s35
    %p46 = scmp.eq.s32.totalorder %s14, 0
    %p47 = por %p45, %p46
    %p48 = scmp.ne.s32.totalorder %s34, %s35
    %p49 = scmp.eq.s32.totalorder %s15, 1
    %p50 = por %p48, %p49
    %p52 = scmp.ne.s32.totalorder %s35, %s51
    %p53 = scmp.eq.s32.totalorder %s15, 0
    %p54 = por %p52, %p53
    %s55 = ssub.s32 %s17, %s24
    %p56 = scmp.eq.s32.totalorder %s55, 0
    %s58 = sadd.s32 %s57, 1
    %s59 = scalar_select %p56, %s57, %s58
    %p62 = pneg %p56
    %p63 = scmp.eq.s32.totalorder %s9, 1
    %p64 = por %p62, %p63
    %p65 = scmp.ne.s32.totalorder %s57, %s60
    %p66 = scmp.eq.s32.totalorder %s9, 0
    %p67 = por %p65, %p66
    %p68 = scmp.ne.s32.totalorder %s57, %s60
    %p69 = scmp.eq.s32.totalorder %s14, 1
    %p70 = por %p68, %p69
    %p71 = scmp.ne.s32.totalorder %s60, %s61
    %p72 = scmp.eq.s32.totalorder %s14, 0
    %p73 = por %p71, %p72
    %p74 = scmp.ne.s32.totalorder %s60, %s61
    %p75 = scmp.eq.s32.totalorder %s15, 1
    %p76 = por %p74, %p75
    %p78 = scmp.ne.s32.totalorder %s61, %s77
    %p79 = scmp.eq.s32.totalorder %s15, 0
    %p80 = por %p78, %p79
    %s81 = ssub.s32 %s17, %s24
    %p82 = scmp.eq.s32.totalorder %s81, 0
    %s84 = sadd.s32 %s83, 1
    %s85 = scalar_select %p82, %s83, %s84
    %p88 = pneg %p82
    %p89 = scmp.eq.s32.totalorder %s9, 1
    %p90 = por %p88, %p89
    %p91 = scmp.ne.s32.totalorder %s83, %s86
    %p92 = scmp.eq.s32.totalorder %s9, 0
    %p93 = por %p91, %p92
    %p94 = scmp.ne.s32.totalorder %s83, %s86
    %p95 = scmp.eq.s32.totalorder %s14, 1
    %p96 = por %p94, %p95
    %p97 = scmp.ne.s32.totalorder %s86, %s87
    %p98 = scmp.eq.s32.totalorder %s14, 0
    %p99 = por %p97, %p98
    %p100 = scmp.ne.s32.totalorder %s86, %s87
    %p101 = scmp.eq.s32.totalorder %s15, 1
    %p102 = por %p100, %p101
    %p104 = scmp.ne.s32.totalorder %s87, %s103
    %p105 = scmp.eq.s32.totalorder %s15, 0
    %p106 = por %p104, %p105
    %s107 = ssub.s32 %s16, %s28
    %s108 = ssub.s32 %s17, %s24
    %s109 = sor.u32 %s107, %s108
    %p110 = scmp.eq.s32.totalorder %s109, 0
    %s112 = sadd.s32 %s111, 1
    %s113 = scalar_select %p110, %s111, %s112
    %p116 = pneg %p110
    %p117 = scmp.eq.s32.totalorder %s9, 1
    %p118 = por %p116, %p117
    %p119 = scmp.ne.s32.totalorder %s111, %s114
    %p120 = scmp.eq.s32.totalorder %s9, 0
    %p121 = por %p119, %p120
    %p122 = scmp.ne.s32.totalorder %s111, %s114
    %p123 = scmp.eq.s32.totalorder %s14, 1
    %p124 = por %p122, %p123
    %p125 = scmp.ne.s32.totalorder %s114, %s115
    %p126 = scmp.eq.s32.totalorder %s14, 0
    %p127 = por %p125, %p126
    %p128 = scmp.ne.s32.totalorder %s114, %s115
    %p129 = scmp.eq.s32.totalorder %s15, 1
    %p130 = por %p128, %p129
    %p132 = scmp.ne.s32.totalorder %s115, %s131
    %p133 = scmp.eq.s32.totalorder %s15, 0
    %p134 = por %p132, %p133
    %p135 = scmp.le.s32.totalorder 1, %s9
    %p136 = scmp.lt.s32.totalorder %s9, 3
    %p137 = pnand %p135, %p136
    %p138 = pneg %p137
    // Predicated region
    $region9: #{inception_b.7} parent=5 // pred_check
      _
    $region10: #{inception_b.7} parent=5 // pred_check_branch
      %140 = sbr.rel (%p137) target = $region12
    $region11: #{inception_b.7} parent=5 // pred_region
      %s141 = ssub.s32 %s9, 1
      // Predicated region
      $region13: #{inception_b.7} parent=11 // pred_check
        %p142 = pneg %p73
      $region14: #{inception_b.7} parent=11 // pred_check_branch
        %144 = sbr.rel (%p142) target = $region16
      $region15: #{inception_b.7} parent=11 // pred_region
        %p145 = scmp.lt.s32.totalorder %s19, 0
        %s146 = scalar_select %p145, %s19, 0
        %s147 = smul.addr %s146, 4
        %s148 = scalar_lea.vmem %s1, %s147
      $region16: #{inception_b.7} parent=11 // pred_fallthru
        _
      // Predicated region
      $region17: #{inception_b.7} parent=11 // pred_check
        %p149 = pneg %p99
      $region18: #{inception_b.7} parent=11 // pred_check_branch
        %151 = sbr.rel (%p149) target = $region20
      $region19: #{inception_b.7} parent=11 // pred_region
        %p152 = scmp.lt.s32.totalorder %s19, 0
        %s153 = scalar_select %p152, %s19, 0
        %s154 = scalar_lea.vmem %s2, %s153
      $region20: #{inception_b.7} parent=11 // pred_fallthru
        _
    $region12: #{inception_b.7} parent=5 // pred_fallthru
      _
    %p155 = scmp.lt.s32.totalorder %s9, 2
    // Predicated region
    $region21: #{inception_b.7} parent=5 // pred_check
      %p156 = pneg %p155
    $region22: #{inception_b.7} parent=5 // pred_check_branch
      %158 = sbr.rel (%p156) target = $region24
    $region23: #{inception_b.7} parent=5 // pred_region
      // Predicated region
      $region25: #{inception_b.7} parent=23 // pred_check
        %p159 = pneg %p41
      $region26: #{inception_b.7} parent=23 // pred_check_branch
        %161 = sbr.rel (%p159) target = $region28
      $region27: #{inception_b.7} parent=23 // pred_region
        %p162 = scmp.lt.s32.totalorder %s16, 1
        %s163 = scalar_select %p162, %s16, 1
        %s164 = smul.addr %s163, 41
        %s165 = smul.addr %s164, 4
        %s166 = scalar_lea.vmem %s0, %s165
      $region28: #{inception_b.7} parent=23 // pred_fallthru
        _
    $region24: #{inception_b.7} parent=5 // pred_fallthru
      _
    %p167 = scmp.le.s32.totalorder 1, %s9
    %p168 = scmp.lt.s32.totalorder %s9, 3
    %p169 = pnand %p167, %p168
    %p170 = pneg %p169
    // Predicated region
    $region29: #{inception_b.7} parent=5 // pred_check
      _
    $region30: #{inception_b.7} parent=5 // pred_check_branch
      %172 = sbr.rel (%p169) target = $region32
    $region31: #{inception_b.7} parent=5 // pred_region
      %s173 = ssub.s32 %s9, 1
      %p174 = scmp.lt.s32.totalorder %s18, 1
      %s175 = scalar_select %p174, %s18, 1
      %s176 = smul.addr %s175, 41
      %s177 = smul.addr %s176, 4
      %s178 = scalar_lea.vmem %s0, %s177
      %p179 = pneg %p47
      %p180 = pneg %p44
      %p181 = scmp.lt.s32.totalorder %s19, 0
      %s182 = scalar_select %p181, %s19, 0
      %s183 = smul.addr %s182, 4
      %s184 = scalar_lea.vmem %s1, %s183
      %p185 = pneg %p73
      %p186 = pneg %p70
      %p187 = scmp.lt.s32.totalorder %s19, 0
      %s188 = scalar_select %p187, %s19, 0
      %s189 = scalar_lea.vmem %s2, %s188
      %p190 = pneg %p99
      %p191 = pneg %p96
      %p192 = pneg %p127
      %p193 = pneg %p124
      %p194 = scmp.lt.s32.totalorder %s18, 1
      %s195 = scalar_select %p194, %s18, 1
      %p196 = scmp.lt.s32.totalorder %s19, 0
      %s197 = scalar_select %p196, %s19, 0
      %s198 = smul.addr %s195, 36
      %s199 = sadd.s32 %s197, %s198
      %s200 = smul.addr %s199, 4
      %s201 = scalar_lea.vmem %s3, %s200
      %p202 = scmp.lt.s32.totalorder %s18, 1
      %s203 = scalar_select %p202, %s18, 1
      %s204 = smul.addr %s203, 41
      %s205 = smul.addr %s204, 4
      %s206 = scalar_lea.vmem %s0, %s205
      %p207 = scmp.lt.s32.totalorder %s19, 0
      %s208 = scalar_select %p207, %s19, 0
      %s209 = smul.addr %s208, 4
      %s210 = scalar_lea.vmem %s1, %s209
      %p211 = scmp.lt.s32.totalorder %s19, 0
      %s212 = scalar_select %p211, %s19, 0
      %s213 = scalar_lea.vmem %s2, %s212
      %p214 = scmp.lt.s32.totalorder %s18, 1
      %s215 = scalar_select %p214, %s18, 1
      %p216 = scmp.lt.s32.totalorder %s19, 0
      %s217 = scalar_select %p216, %s19, 0
      %s218 = smul.addr %s215, 36
      %s219 = sadd.s32 %s217, %s218
      %s220 = smul.addr %s219, 4
      %s221 = scalar_lea.vmem %s3, %s220
      %v222 = vld [vmem:[%s206] sm:$0xf]
      %v223 = vld [vmem:[%s206 + $0x4] sm:$0xf]
      %v224 = vld [vmem:[%s206 + $0x8] sm:$0xf]
      %v225 = vld [vmem:[%s206 + $0xc] sm:$0xf]
      %v226 = vld [vmem:[%s206 + $0x10] sm:$0xf]
      %v227 = vld [vmem:[%s206 + $0x14] sm:$0xf]
      %v228 = vld [vmem:[%s206 + $0x18] sm:$0xf]
      %v229 = vld [vmem:[%s206 + $0x1c] sm:$0xf]
      %v230 = vld [vmem:[%s206 + $0x20] sm:$0xf]
      %v231 = vld [vmem:[%s206 + $0x24] sm:$0xf]
      %v232 = vld [vmem:[%s206 + $0x28] sm:$0xf]
      %v233 = vld [vmem:[%s206 + $0x2c] sm:$0xf]
      %v234 = vld [vmem:[%s206 + $0x30] sm:$0xf]
      %v235 = vld [vmem:[%s206 + $0x34] sm:$0xf]
      %v236 = vld [vmem:[%s206 + $0x38] sm:$0xf]
      %v237 = vld [vmem:[%s206 + $0x3c] sm:$0xf]
      %v238 = vld [vmem:[%s206 + $0x40] sm:$0xf]
      %v239 = vld [vmem:[%s206 + $0x44] sm:$0xf]
      %v240 = vld [vmem:[%s206 + $0x48] sm:$0xf]
      %v241 = vld [vmem:[%s206 + $0x4c] sm:$0xf]
      %v242 = vld [vmem:[%s206 + $0x50] sm:$0xf]
      %v243 = vld [vmem:[%s206 + $0x54] sm:$0xf]
      %v244 = vld [vmem:[%s206 + $0x58] sm:$0xf]
      %v245 = vld [vmem:[%s206 + $0x5c] sm:$0xf]
      %v246 = vld [vmem:[%s206 + $0x60] sm:$0xf]
      %v247 = vld [vmem:[%s206 + $0x64] sm:$0xf]
      %v248 = vld [vmem:[%s206 + $0x68] sm:$0xf]
      %v249 = vld [vmem:[%s206 + $0x6c] sm:$0xf]
      %v250 = vld [vmem:[%s206 + $0x70] sm:$0xf]
      %v251 = vld [vmem:[%s206 + $0x74] sm:$0xf]
      %v252 = vld [vmem:[%s206 + $0x78] sm:$0xf]
      %v253 = vld [vmem:[%s206 + $0x7c] sm:$0xf]
      %v254 = vld [vmem:[%s206 + $0x80] sm:$0xf]
      %v255 = vld [vmem:[%s206 + $0x84] sm:$0xf]
      %v256 = vld [vmem:[%s206 + $0x88] sm:$0xf]
      %v257 = vld [vmem:[%s206 + $0x8c] sm:$0x7]
      %v258 = vld [vmem:[%s210] sm:$0xf]
      %v259 = vld [vmem:[%s210 + $0x4] sm:$0xf]
      %v260 = vld [vmem:[%s210 + $0x8] sm:$0xf]
      %v261 = vld [vmem:[%s210 + $0xc] sm:$0xf]
      %v262 = vld [vmem:[%s210 + $0x10] sm:$0xf]
      %v263 = vld [vmem:[%s210 + $0x14] sm:$0xf]
      %v264 = vld [vmem:[%s210 + $0x18] sm:$0xf]
      %v265 = vld [vmem:[%s210 + $0x1c] sm:$0xf]
      %v266 = vld [vmem:[%s210 + $0x20] sm:$0xf]
      %v267 = vld [vmem:[%s210 + $0x24] sm:$0xf]
      %v268 = vld [vmem:[%s210 + $0x28] sm:$0xf]
      %v269 = vld [vmem:[%s210 + $0x2c] sm:$0xf]
      %v270 = vld [vmem:[%s210 + $0x30] sm:$0xf]
      %v271 = vld [vmem:[%s210 + $0x34] sm:$0xf]
      %v272 = vld [vmem:[%s210 + $0x38] sm:$0xf]
      %v273 = vld [vmem:[%s210 + $0x3c] sm:$0xf]
      %v274 = vld [vmem:[%s206 + $0x8c] sm:$0xf]
      %s275 = scalar_lea.vmem %s210, 64
      %v276 = vld [vmem:[%s275] sm:$0xf]
      %v277 = vld [vmem:[%s275 + $0x4] sm:$0xf]
      %v278 = vld [vmem:[%s275 + $0x8] sm:$0xf]
      %v279 = vld [vmem:[%s275 + $0xc] sm:$0xf]
      %v280 = vld [vmem:[%s275 + $0x10] sm:$0xf]
      %v281 = vld [vmem:[%s275 + $0x14] sm:$0xf]
      %v282 = vld [vmem:[%s275 + $0x18] sm:$0xf]
      %v283 = vld [vmem:[%s275 + $0x1c] sm:$0xf]
      %v284 = vld [vmem:[%s275 + $0x20] sm:$0xf]
      %v285 = vld [vmem:[%s275 + $0x24] sm:$0xf]
      %v286 = vld [vmem:[%s275 + $0x28] sm:$0xf]
      %v287 = vld [vmem:[%s275 + $0x2c] sm:$0xf]
      %v288 = vld [vmem:[%s275 + $0x30] sm:$0xf]
      %v289 = vld [vmem:[%s275 + $0x34] sm:$0xf]
      %v290 = vld [vmem:[%s275 + $0x38] sm:$0xf]
      %v291 = vld [vmem:[%s275 + $0x3c] sm:$0xf]
      %v328 = vunpack.c.l.b16 %v222
      %v329 = vunpack.c.l.b16 %v223
      %v330 = vunpack.c.l.b16 %v224
      %v331 = vunpack.c.l.b16 %v225
      %v332 = vunpack.c.l.b16 %v226
      %v333 = vunpack.c.l.b16 %v227
      %v334 = vunpack.c.l.b16 %v228
      %v335 = vunpack.c.l.b16 %v229
      %v336 = vunpack.c.l.b16 %v230
      %v337 = vunpack.c.l.b16 %v231
      %v338 = vunpack.c.l.b16 %v232
      %v339 = vunpack.c.l.b16 %v233
      %v340 = vunpack.c.l.b16 %v234
      %v341 = vunpack.c.l.b16 %v235
      %v342 = vunpack.c.l.b16 %v236
      %v343 = vunpack.c.l.b16 %v237
      %v344 = vunpack.c.l.b16 %v238
      %v345 = vunpack.c.l.b16 %v239
      %v346 = vunpack.c.l.b16 %v240
      %v347 = vunpack.c.l.b16 %v241
      %v348 = vunpack.c.l.b16 %v242
      %v349 = vunpack.c.l.b16 %v243
      %v350 = vunpack.c.l.b16 %v244
      %v351 = vunpack.c.l.b16 %v245
      %v352 = vunpack.c.l.b16 %v246
      %v353 = vunpack.c.l.b16 %v247
      %v354 = vunpack.c.l.b16 %v248
      %v355 = vunpack.c.l.b16 %v249
      %v356 = vunpack.c.l.b16 %v250
      %v357 = vunpack.c.l.b16 %v251
      %v358 = vunpack.c.l.b16 %v252
      %v359 = vunpack.c.l.b16 %v253
      %v360 = vunpack.c.l.b16 %v254
      %v361 = vunpack.c.l.b16 %v255
      %v362 = vunpack.c.l.b16 %v256
      %v363 = vunpack.c.l.b16 %v274
      %v364 = vpack.c.b16 %v329, %v328
      %v365 = vpack.c.b16 %v331, %v330
      %v366 = vpack.c.b16 %v333, %v332
      %v367 = vpack.c.b16 %v335, %v334
      %v368 = vpack.c.b16 %v337, %v336
      %v369 = vpack.c.b16 %v339, %v338
      %v370 = vpack.c.b16 %v341, %v340
      %v371 = vpack.c.b16 %v343, %v342
      %v372 = vpack.c.b16 %v345, %v344
      %v373 = vpack.c.b16 %v347, %v346
      %v374 = vpack.c.b16 %v349, %v348
      %v375 = vpack.c.b16 %v351, %v350
      %v376 = vpack.c.b16 %v353, %v352
      %v377 = vpack.c.b16 %v355, %v354
      %v378 = vpack.c.b16 %v357, %v356
      %v379 = vpack.c.b16 %v359, %v358
      %v380 = vpack.c.b16 %v361, %v360
      %v381 = vpack.c.b16 %v363, %v362
      %vm382 = vsmask.f32 7424
      %v384 = vshrl.u32 %v364, 16
      %v386 = vshll.u32 %v364, 16
      %v388 = vrot.slane %v386, 1
      %v389 = vor.u32 %v384, %v388
      %v391 = vshll.u32 %v365, 16
      %v393 = vrot.slane %v391, 1
      %v394 = vsel %vm382, %v389, %v393
      %v395 = vshrl.u32 %v365, 16
      %v397 = vor.u32 %v395, %v393
      %v399 = vshll.u32 %v366, 16
      %v401 = vrot.slane %v399, 1
      %v402 = vsel %vm382, %v397, %v401
      %v403 = vshrl.u32 %v366, 16
      %v405 = vor.u32 %v403, %v401
      %v407 = vshll.u32 %v367, 16
      %v409 = vrot.slane %v407, 1
      %v410 = vsel %vm382, %v405, %v409
      %v411 = vshrl.u32 %v367, 16
      %v413 = vor.u32 %v411, %v409
      %v415 = vshll.u32 %v368, 16
      %v417 = vrot.slane %v415, 1
      %v418 = vsel %vm382, %v413, %v417
      %v419 = vshrl.u32 %v368, 16
      %v421 = vor.u32 %v419, %v417
      %v423 = vshll.u32 %v369, 16
      %v425 = vrot.slane %v423, 1
      %v426 = vsel %vm382, %v421, %v425
      %v427 = vshrl.u32 %v369, 16
      %v429 = vor.u32 %v427, %v425
      %v431 = vshll.u32 %v370, 16
      %v433 = vrot.slane %v431, 1
      %v434 = vsel %vm382, %v429, %v433
      %v435 = vshrl.u32 %v370, 16
      %v437 = vor.u32 %v435, %v433
      %v439 = vshll.u32 %v371, 16
      %v441 = vrot.slane %v439, 1
      %v442 = vsel %vm382, %v437, %v441
      %v443 = vshrl.u32 %v371, 16
      %v445 = vor.u32 %v443, %v441
      %v447 = vshll.u32 %v372, 16
      %v449 = vrot.slane %v447, 1
      %v450 = vsel %vm382, %v445, %v449
      %v451 = vshrl.u32 %v372, 16
      %v453 = vor.u32 %v451, %v449
      %v455 = vshll.u32 %v373, 16
      %v457 = vrot.slane %v455, 1
      %v458 = vsel %vm382, %v453, %v457
      %v459 = vshrl.u32 %v373, 16
      %v461 = vor.u32 %v459, %v457
      %v463 = vshll.u32 %v374, 16
      %v465 = vrot.slane %v463, 1
      %v466 = vsel %vm382, %v461, %v465
      %v467 = vshrl.u32 %v374, 16
      %v469 = vor.u32 %v467, %v465
      %v471 = vshll.u32 %v375, 16
      %v473 = vrot.slane %v471, 1
      %v474 = vsel %vm382, %v469, %v473
      %v475 = vshrl.u32 %v375, 16
      %v477 = vor.u32 %v475, %v473
      %v479 = vshll.u32 %v376, 16
      %v481 = vrot.slane %v479, 1
      %v482 = vsel %vm382, %v477, %v481
      %v483 = vshrl.u32 %v376, 16
      %v485 = vor.u32 %v483, %v481
      %v487 = vshll.u32 %v377, 16
      %v489 = vrot.slane %v487, 1
      %v490 = vsel %vm382, %v485, %v489
      %v491 = vshrl.u32 %v377, 16
      %v493 = vor.u32 %v491, %v489
      %v495 = vshll.u32 %v378, 16
      %v497 = vrot.slane %v495, 1
      %v498 = vsel %vm382, %v493, %v497
      %v499 = vshrl.u32 %v378, 16
      %v501 = vor.u32 %v499, %v497
      %v503 = vshll.u32 %v379, 16
      %v505 = vrot.slane %v503, 1
      %v506 = vsel %vm382, %v501, %v505
      %v507 = vshrl.u32 %v379, 16
      %v509 = vor.u32 %v507, %v505
      %v511 = vshll.u32 %v380, 16
      %v513 = vrot.slane %v511, 1
      %v514 = vsel %vm382, %v509, %v513
      %v515 = vshrl.u32 %v380, 16
      %v517 = vor.u32 %v515, %v513
      %v519 = vshll.u32 %v381, 16
      %v521 = vrot.slane %v519, 1
      %v522 = vsel %vm382, %v517, %v521
      %v523 = vshrl.u32 %v381, 16
      %v525 = vor.u32 %v523, %v521
      %v560 = vunpack.c.l.b16 %v276
      %v561 = vunpack.c.l.b16 %v277
      %v562 = vunpack.c.l.b16 %v278
      %v563 = vunpack.c.l.b16 %v279
      %v564 = vunpack.c.l.b16 %v280
      %v565 = vunpack.c.l.b16 %v281
      %v566 = vunpack.c.l.b16 %v282
      %v567 = vunpack.c.l.b16 %v283
      %v568 = vunpack.c.l.b16 %v284
      %v569 = vunpack.c.l.b16 %v285
      %v570 = vunpack.c.l.b16 %v286
      %v571 = vunpack.c.l.b16 %v287
      %v572 = vunpack.c.l.b16 %v288
      %v573 = vunpack.c.l.b16 %v289
      %v574 = vunpack.c.l.b16 %v290
      %v575 = vunpack.c.l.b16 %v291
      %v576 = vpack.c.b16 %v561, %v560
      %v577 = vpack.c.b16 %v563, %v562
      %v578 = vpack.c.b16 %v565, %v564
      %v579 = vpack.c.b16 %v567, %v566
      %v580 = vpack.c.b16 %v569, %v568
      %v581 = vpack.c.b16 %v571, %v570
      %v582 = vpack.c.b16 %v573, %v572
      %v583 = vpack.c.b16 %v575, %v574
      %592 = vmatpush.bf16.msra.mxu0 %v583
      %593 = vmatpush.bf16.msra.mxu0 %v582
      %594 = vmatpush.bf16.msra.mxu0 %v581
      %595 = vmatpush.bf16.msra.mxu0 %v580
      %596 = vmatpush.bf16.msra.mxu0 %v579
      %597 = vmatpush.bf16.msra.mxu0 %v578
      %598 = vmatpush.bf16.msra.mxu0 %v577
      %599 = vmatpush.bf16.msra.mxu0 %v576
      %600 = vmatmul.bf16.gmra.mxu0 %v394
      %v601 = vpop.f32.mrf.mxu0
      %v602 = vadd.f32 0.0, %v601
      %v603 = vpop.f32.mrf.mxu0
      %v604 = vadd.f32 0.0, %v603
      %605 = vmatmul.bf16.gmra.mxu0 %v402
      %v606 = vpop.f32.mrf.mxu0
      %v607 = vadd.f32 0.0, %v606
      %v608 = vpop.f32.mrf.mxu0
      %v609 = vadd.f32 0.0, %v608
      %610 = vmatmul.bf16.gmra.mxu0 %v410
      %v611 = vpop.f32.mrf.mxu0
      %v612 = vadd.f32 0.0, %v611
      %v613 = vpop.f32.mrf.mxu0
      %v614 = vadd.f32 0.0, %v613
      %615 = vmatmul.bf16.gmra.mxu0 %v418
      %v616 = vpop.f32.mrf.mxu0
      %v617 = vadd.f32 0.0, %v616
      %v618 = vpop.f32.mrf.mxu0
      %v619 = vadd.f32 0.0, %v618
      %620 = vmatmul.bf16.gmra.mxu0 %v426
      %v621 = vpop.f32.mrf.mxu0
      %v622 = vadd.f32 0.0, %v621
      %v623 = vpop.f32.mrf.mxu0
      %v624 = vadd.f32 0.0, %v623
      %625 = vmatmul.bf16.gmra.mxu0 %v434
      %v626 = vpop.f32.mrf.mxu0
      %v627 = vadd.f32 0.0, %v626
      %v628 = vpop.f32.mrf.mxu0
      %v629 = vadd.f32 0.0, %v628
      %630 = vmatmul.bf16.gmra.mxu0 %v442
      %v631 = vpop.f32.mrf.mxu0
      %v632 = vadd.f32 0.0, %v631
      %v633 = vpop.f32.mrf.mxu0
      %v634 = vadd.f32 0.0, %v633
      %635 = vmatmul.bf16.gmra.mxu0 %v450
      %v636 = vpop.f32.mrf.mxu0
      %v637 = vadd.f32 0.0, %v636
      %v638 = vpop.f32.mrf.mxu0
      %v639 = vadd.f32 0.0, %v638
      %640 = vmatmul.bf16.gmra.mxu0 %v458
      %v641 = vpop.f32.mrf.mxu0
      %v642 = vadd.f32 0.0, %v641
      %v643 = vpop.f32.mrf.mxu0
      %v644 = vadd.f32 0.0, %v643
      %645 = vmatmul.bf16.gmra.mxu0 %v466
      %v646 = vpop.f32.mrf.mxu0
      %v647 = vadd.f32 0.0, %v646
      %v648 = vpop.f32.mrf.mxu0
      %v649 = vadd.f32 0.0, %v648
      %650 = vmatmul.bf16.gmra.mxu0 %v474
      %v651 = vpop.f32.mrf.mxu0
      %v652 = vadd.f32 0.0, %v651
      %v653 = vpop.f32.mrf.mxu0
      %v654 = vadd.f32 0.0, %v653
      %655 = vmatmul.bf16.gmra.mxu0 %v482
      %v656 = vpop.f32.mrf.mxu0
      %v657 = vadd.f32 0.0, %v656
      %v658 = vpop.f32.mrf.mxu0
      %v659 = vadd.f32 0.0, %v658
      %660 = vmatmul.bf16.gmra.mxu0 %v490
      %v661 = vpop.f32.mrf.mxu0
      %v662 = vadd.f32 0.0, %v661
      %v663 = vpop.f32.mrf.mxu0
      %v664 = vadd.f32 0.0, %v663
      %665 = vmatmul.bf16.gmra.mxu0 %v498
      %v666 = vpop.f32.mrf.mxu0
      %v667 = vadd.f32 0.0, %v666
      %v668 = vpop.f32.mrf.mxu0
      %v669 = vadd.f32 0.0, %v668
      %670 = vmatmul.bf16.gmra.mxu0 %v506
      %v671 = vpop.f32.mrf.mxu0
      %v672 = vadd.f32 0.0, %v671
      %v673 = vpop.f32.mrf.mxu0
      %v674 = vadd.f32 0.0, %v673
      %675 = vmatmul.bf16.gmra.mxu0 %v514
      %v676 = vpop.f32.mrf.mxu0
      %v677 = vadd.f32 0.0, %v676
      %v678 = vpop.f32.mrf.mxu0
      %v679 = vadd.f32 0.0, %v678
      %680 = vmatmul.bf16.gmra.mxu0 %v522
      %v681 = vpop.f32.mrf.mxu0
      %v682 = vadd.f32 0.0, %v681
      %v683 = vpop.f32.mrf.mxu0
      %v684 = vadd.f32 0.0, %v683
      %685 = vmatmul.bf16.gmra.mxu0 %v525
      %v686 = vpop.f32.mrf.mxu0
      %v687 = vadd.f32 0.0, %v686
      %v688 = vpop.f32.mrf.mxu0
      %v689 = vadd.f32 0.0, %v688
      %690 = vdwg.mxu0
      %v692 = vunpack.c.l.b16 %v257
      %v693 = vpack.c.b16 %v692, %v362
      %v728 = vunpack.c.l.b16 %v258
      %v729 = vunpack.c.l.b16 %v259
      %v730 = vunpack.c.l.b16 %v260
      %v731 = vunpack.c.l.b16 %v261
      %v732 = vunpack.c.l.b16 %v262
      %v733 = vunpack.c.l.b16 %v263
      %v734 = vunpack.c.l.b16 %v264
      %v735 = vunpack.c.l.b16 %v265
      %v736 = vunpack.c.l.b16 %v266
      %v737 = vunpack.c.l.b16 %v267
      %v738 = vunpack.c.l.b16 %v268
      %v739 = vunpack.c.l.b16 %v269
      %v740 = vunpack.c.l.b16 %v270
      %v741 = vunpack.c.l.b16 %v271
      %v742 = vunpack.c.l.b16 %v272
      %v743 = vunpack.c.l.b16 %v273
      %v744 = vpack.c.b16 %v729, %v728
      %v745 = vpack.c.b16 %v731, %v730
      %v746 = vpack.c.b16 %v733, %v732
      %v747 = vpack.c.b16 %v735, %v734
      %v748 = vpack.c.b16 %v737, %v736
      %v749 = vpack.c.b16 %v739, %v738
      %v750 = vpack.c.b16 %v741, %v740
      %v751 = vpack.c.b16 %v743, %v742
      %760 = vmatpush.bf16.msra.mxu0 %v751
      %761 = vmatpush.bf16.msra.mxu0 %v750
      %762 = vmatpush.bf16.msra.mxu0 %v749
      %763 = vmatpush.bf16.msra.mxu0 %v748
      %764 = vmatpush.bf16.msra.mxu0 %v747
      %765 = vmatpush.bf16.msra.mxu0 %v746
      %766 = vmatpush.bf16.msra.mxu0 %v745
      %767 = vmatpush.bf16.msra.mxu0 %v744
      %768 = vmatmul.bf16.gmra.mxu0 %v364
      %v769 = vpop.f32.mrf.mxu0
      %v770 = vadd.f32 %v602, %v769
      %v771 = vpop.f32.mrf.mxu0
      %v772 = vadd.f32 %v604, %v771
      %773 = vmatmul.bf16.gmra.mxu0 %v365
      %v774 = vpop.f32.mrf.mxu0
      %v775 = vadd.f32 %v607, %v774
      %v776 = vpop.f32.mrf.mxu0
      %v777 = vadd.f32 %v609, %v776
      %778 = vmatmul.bf16.gmra.mxu0 %v366
      %v779 = vpop.f32.mrf.mxu0
      %v780 = vadd.f32 %v612, %v779
      %v781 = vpop.f32.mrf.mxu0
      %v782 = vadd.f32 %v614, %v781
      %783 = vmatmul.bf16.gmra.mxu0 %v367
      %v784 = vpop.f32.mrf.mxu0
      %v785 = vadd.f32 %v617, %v784
      %v786 = vpop.f32.mrf.mxu0
      %v787 = vadd.f32 %v619, %v786
      %788 = vmatmul.bf16.gmra.mxu0 %v368
      %v789 = vpop.f32.mrf.mxu0
      %v790 = vadd.f32 %v622, %v789
      %v791 = vpop.f32.mrf.mxu0
      %v792 = vadd.f32 %v624, %v791
      %793 = vmatmul.bf16.gmra.mxu0 %v369
      %v794 = vpop.f32.mrf.mxu0
      %v795 = vadd.f32 %v627, %v794
      %v796 = vpop.f32.mrf.mxu0
      %v797 = vadd.f32 %v629, %v796
      %798 = vmatmul.bf16.gmra.mxu0 %v370
      %v799 = vpop.f32.mrf.mxu0
      %v800 = vadd.f32 %v632, %v799
      %v801 = vpop.f32.mrf.mxu0
      %v802 = vadd.f32 %v634, %v801
      %803 = vmatmul.bf16.gmra.mxu0 %v371
      %v804 = vpop.f32.mrf.mxu0
      %v805 = vadd.f32 %v637, %v804
      %v806 = vpop.f32.mrf.mxu0
      %v807 = vadd.f32 %v639, %v806
      %808 = vmatmul.bf16.gmra.mxu0 %v372
      %v809 = vpop.f32.mrf.mxu0
      %v810 = vadd.f32 %v642, %v809
      %v811 = vpop.f32.mrf.mxu0
      %v812 = vadd.f32 %v644, %v811
      %813 = vmatmul.bf16.gmra.mxu0 %v373
      %v814 = vpop.f32.mrf.mxu0
      %v815 = vadd.f32 %v647, %v814
      %v816 = vpop.f32.mrf.mxu0
      %v817 = vadd.f32 %v649, %v816
      %818 = vmatmul.bf16.gmra.mxu0 %v374
      %v819 = vpop.f32.mrf.mxu0
      %v820 = vadd.f32 %v652, %v819
      %v821 = vpop.f32.mrf.mxu0
      %v822 = vadd.f32 %v654, %v821
      %823 = vmatmul.bf16.gmra.mxu0 %v375
      %v824 = vpop.f32.mrf.mxu0
      %v825 = vadd.f32 %v657, %v824
      %v826 = vpop.f32.mrf.mxu0
      %v827 = vadd.f32 %v659, %v826
      %828 = vmatmul.bf16.gmra.mxu0 %v376
      %v829 = vpop.f32.mrf.mxu0
      %v830 = vadd.f32 %v662, %v829
      %v831 = vpop.f32.mrf.mxu0
      %v832 = vadd.f32 %v664, %v831
      %833 = vmatmul.bf16.gmra.mxu0 %v377
      %v834 = vpop.f32.mrf.mxu0
      %v835 = vadd.f32 %v667, %v834
      %v836 = vpop.f32.mrf.mxu0
      %v837 = vadd.f32 %v669, %v836
      %838 = vmatmul.bf16.gmra.mxu0 %v378
      %v839 = vpop.f32.mrf.mxu0
      %v840 = vadd.f32 %v672, %v839
      %v841 = vpop.f32.mrf.mxu0
      %v842 = vadd.f32 %v674, %v841
      %843 = vmatmul.bf16.gmra.mxu0 %v379
      %v844 = vpop.f32.mrf.mxu0
      %v845 = vadd.f32 %v677, %v844
      %v846 = vpop.f32.mrf.mxu0
      %v847 = vadd.f32 %v679, %v846
      %848 = vmatmul.bf16.gmra.mxu0 %v380
      %v849 = vpop.f32.mrf.mxu0
      %v850 = vadd.f32 %v682, %v849
      %v851 = vpop.f32.mrf.mxu0
      %v852 = vadd.f32 %v684, %v851
      %853 = vmatmul.bf16.gmra.mxu0 %v693
      %v854 = vpop.f32.mrf.mxu0
      %v855 = vadd.f32 %v687, %v854
      %v856 = vpop.f32.mrf.mxu0
      %v857 = vadd.f32 %v689, %v856
      %858 = vdwg.mxu0
      %v859 = vld [vmem:[%s206] sm:$0xe]
      %s860 = scalar_lea.vmem %s210, 128
      %v861 = vld [vmem:[%s860] sm:$0xf]
      %v862 = vld [vmem:[%s860 + $0x4] sm:$0xf]
      %v863 = vld [vmem:[%s860 + $0x8] sm:$0xf]
      %v864 = vld [vmem:[%s860 + $0xc] sm:$0xf]
      %v865 = vld [vmem:[%s860 + $0x10] sm:$0xf]
      %v866 = vld [vmem:[%s860 + $0x14] sm:$0xf]
      %v867 = vld [vmem:[%s860 + $0x18] sm:$0xf]
      %v868 = vld [vmem:[%s860 + $0x1c] sm:$0xf]
      %v869 = vld [vmem:[%s860 + $0x20] sm:$0xf]
      %v870 = vld [vmem:[%s860 + $0x24] sm:$0xf]
      %v871 = vld [vmem:[%s860 + $0x28] sm:$0xf]
      %v872 = vld [vmem:[%s860 + $0x2c] sm:$0xf]
      %v873 = vld [vmem:[%s860 + $0x30] sm:$0xf]
      %v874 = vld [vmem:[%s860 + $0x34] sm:$0xf]
      %v875 = vld [vmem:[%s860 + $0x38] sm:$0xf]
      %v876 = vld [vmem:[%s860 + $0x3c] sm:$0xf]
      %v878 = vunpack.c.l.b16 %v859
      %v879 = vpack.c.b16 %v329, %v878
      %vm880 = vcmask 1046528
      %v881 = vrot.slane %v879, 1
      %v882 = vrot.slane %v365, 1
      %v883 = vsel %vm880, %v881, %v882
      %v884 = vrot.slane %v366, 1
      %v885 = vsel %vm880, %v882, %v884
      %v886 = vrot.slane %v367, 1
      %v887 = vsel %vm880, %v884, %v886
      %v888 = vrot.slane %v368, 1
      %v889 = vsel %vm880, %v886, %v888
      %v890 = vrot.slane %v369, 1
      %v891 = vsel %vm880, %v888, %v890
      %v892 = vrot.slane %v370, 1
      %v893 = vsel %vm880, %v890, %v892
      %v894 = vrot.slane %v371, 1
      %v895 = vsel %vm880, %v892, %v894
      %v896 = vrot.slane %v372, 1
      %v897 = vsel %vm880, %v894, %v896
      %v898 = vrot.slane %v373, 1
      %v899 = vsel %vm880, %v896, %v898
      %v900 = vrot.slane %v374, 1
      %v901 = vsel %vm880, %v898, %v900
      %v902 = vrot.slane %v375, 1
      %v903 = vsel %vm880, %v900, %v902
      %v904 = vrot.slane %v376, 1
      %v905 = vsel %vm880, %v902, %v904
      %v906 = vrot.slane %v377, 1
      %v907 = vsel %vm880, %v904, %v906
      %v908 = vrot.slane %v378, 1
      %v909 = vsel %vm880, %v906, %v908
      %v910 = vrot.slane %v379, 1
      %v911 = vsel %vm880, %v908, %v910
      %v912 = vrot.slane %v380, 1
      %v913 = vsel %vm880, %v910, %v912
      %v914 = vrot.slane %v381, 1
      %v915 = vsel %vm880, %v912, %v914
      %v950 = vunpack.c.l.b16 %v861
      %v951 = vunpack.c.l.b16 %v862
      %v952 = vunpack.c.l.b16 %v863
      %v953 = vunpack.c.l.b16 %v864
      %v954 = vunpack.c.l.b16 %v865
      %v955 = vunpack.c.l.b16 %v866
      %v956 = vunpack.c.l.b16 %v867
      %v957 = vunpack.c.l.b16 %v868
      %v958 = vunpack.c.l.b16 %v869
      %v959 = vunpack.c.l.b16 %v870
      %v960 = vunpack.c.l.b16 %v871
      %v961 = vunpack.c.l.b16 %v872
      %v962 = vunpack.c.l.b16 %v873
      %v963 = vunpack.c.l.b16 %v874
      %v964 = vunpack.c.l.b16 %v875
      %v965 = vunpack.c.l.b16 %v876
      %v966 = vpack.c.b16 %v951, %v950
      %v967 = vpack.c.b16 %v953, %v952
      %v968 = vpack.c.b16 %v955, %v954
      %v969 = vpack.c.b16 %v957, %v956
      %v970 = vpack.c.b16 %v959, %v958
      %v971 = vpack.c.b16 %v961, %v960
      %v972 = vpack.c.b16 %v963, %v962
      %v973 = vpack.c.b16 %v965, %v964
      %982 = vmatpush.bf16.msra.mxu0 %v973
      %983 = vmatpush.bf16.msra.mxu0 %v972
      %984 = vmatpush.bf16.msra.mxu0 %v971
      %985 = vmatpush.bf16.msra.mxu0 %v970
      %986 = vmatpush.bf16.msra.mxu0 %v969
      %987 = vmatpush.bf16.msra.mxu0 %v968
      %988 = vmatpush.bf16.msra.mxu0 %v967
      %989 = vmatpush.bf16.msra.mxu0 %v966
      %990 = vmatmul.bf16.gmra.mxu0 %v883
      %v991 = vpop.f32.mrf.mxu0
      %v992 = vadd.f32 0.0, %v991
      %v993 = vpop.f32.mrf.mxu0
      %v994 = vadd.f32 0.0, %v993
      %995 = vmatmul.bf16.gmra.mxu0 %v885
      %v996 = vpop.f32.mrf.mxu0
      %v997 = vadd.f32 0.0, %v996
      %v998 = vpop.f32.mrf.mxu0
      %v999 = vadd.f32 0.0, %v998
      %1000 = vmatmul.bf16.gmra.mxu0 %v887
      %v1001 = vpop.f32.mrf.mxu0
      %v1002 = vadd.f32 0.0, %v1001
      %v1003 = vpop.f32.mrf.mxu0
      %v1004 = vadd.f32 0.0, %v1003
      %1005 = vmatmul.bf16.gmra.mxu0 %v889
      %v1006 = vpop.f32.mrf.mxu0
      %v1007 = vadd.f32 0.0, %v1006
      %v1008 = vpop.f32.mrf.mxu0
      %v1009 = vadd.f32 0.0, %v1008
      %1010 = vmatmul.bf16.gmra.mxu0 %v891
      %v1011 = vpop.f32.mrf.mxu0
      %v1012 = vadd.f32 0.0, %v1011
      %v1013 = vpop.f32.mrf.mxu0
      %v1014 = vadd.f32 0.0, %v1013
      %1015 = vmatmul.bf16.gmra.mxu0 %v893
      %v1016 = vpop.f32.mrf.mxu0
      %v1017 = vadd.f32 0.0, %v1016
      %v1018 = vpop.f32.mrf.mxu0
      %v1019 = vadd.f32 0.0, %v1018
      %1020 = vmatmul.bf16.gmra.mxu0 %v895
      %v1021 = vpop.f32.mrf.mxu0
      %v1022 = vadd.f32 0.0, %v1021
      %v1023 = vpop.f32.mrf.mxu0
      %v1024 = vadd.f32 0.0, %v1023
      %1025 = vmatmul.bf16.gmra.mxu0 %v897
      %v1026 = vpop.f32.mrf.mxu0
      %v1027 = vadd.f32 0.0, %v1026
      %v1028 = vpop.f32.mrf.mxu0
      %v1029 = vadd.f32 0.0, %v1028
      %1030 = vmatmul.bf16.gmra.mxu0 %v899
      %v1031 = vpop.f32.mrf.mxu0
      %v1032 = vadd.f32 0.0, %v1031
      %v1033 = vpop.f32.mrf.mxu0
      %v1034 = vadd.f32 0.0, %v1033
      %1035 = vmatmul.bf16.gmra.mxu0 %v901
      %v1036 = vpop.f32.mrf.mxu0
      %v1037 = vadd.f32 0.0, %v1036
      %v1038 = vpop.f32.mrf.mxu0
      %v1039 = vadd.f32 0.0, %v1038
      %1040 = vmatmul.bf16.gmra.mxu0 %v903
      %v1041 = vpop.f32.mrf.mxu0
      %v1042 = vadd.f32 0.0, %v1041
      %v1043 = vpop.f32.mrf.mxu0
      %v1044 = vadd.f32 0.0, %v1043
      %1045 = vmatmul.bf16.gmra.mxu0 %v905
      %v1046 = vpop.f32.mrf.mxu0
      %v1047 = vadd.f32 0.0, %v1046
      %v1048 = vpop.f32.mrf.mxu0
      %v1049 = vadd.f32 0.0, %v1048
      %1050 = vmatmul.bf16.gmra.mxu0 %v907
      %v1051 = vpop.f32.mrf.mxu0
      %v1052 = vadd.f32 0.0, %v1051
      %v1053 = vpop.f32.mrf.mxu0
      %v1054 = vadd.f32 0.0, %v1053
      %1055 = vmatmul.bf16.gmra.mxu0 %v909
      %v1056 = vpop.f32.mrf.mxu0
      %v1057 = vadd.f32 0.0, %v1056
      %v1058 = vpop.f32.mrf.mxu0
      %v1059 = vadd.f32 0.0, %v1058
      %1060 = vmatmul.bf16.gmra.mxu0 %v911
      %v1061 = vpop.f32.mrf.mxu0
      %v1062 = vadd.f32 0.0, %v1061
      %v1063 = vpop.f32.mrf.mxu0
      %v1064 = vadd.f32 0.0, %v1063
      %1065 = vmatmul.bf16.gmra.mxu0 %v913
      %v1066 = vpop.f32.mrf.mxu0
      %v1067 = vadd.f32 0.0, %v1066
      %v1068 = vpop.f32.mrf.mxu0
      %v1069 = vadd.f32 0.0, %v1068
      %1070 = vmatmul.bf16.gmra.mxu0 %v915
      %v1071 = vpop.f32.mrf.mxu0
      %v1072 = vadd.f32 0.0, %v1071
      %v1073 = vpop.f32.mrf.mxu0
      %v1074 = vadd.f32 0.0, %v1073
      %1075 = vmatmul.bf16.gmra.mxu0 %v914
      %v1076 = vpop.f32.mrf.mxu0
      %v1077 = vadd.f32 0.0, %v1076
      %v1078 = vpop.f32.mrf.mxu0
      %v1079 = vadd.f32 0.0, %v1078
      %1080 = vdwg.mxu0
      %v1081 = vadd.f32 %v770, %v992
      %v1082 = vadd.f32 %v772, %v994
      %v1083 = vadd.f32 %v775, %v997
      %v1084 = vadd.f32 %v777, %v999
      %v1085 = vadd.f32 %v780, %v1002
      %v1086 = vadd.f32 %v782, %v1004
      %v1087 = vadd.f32 %v785, %v1007
      %v1088 = vadd.f32 %v787, %v1009
      %v1089 = vadd.f32 %v790, %v1012
      %v1090 = vadd.f32 %v792, %v1014
      %v1091 = vadd.f32 %v795, %v1017
      %v1092 = vadd.f32 %v797, %v1019
      %v1093 = vadd.f32 %v800, %v1022
      %v1094 = vadd.f32 %v802, %v1024
      %v1095 = vadd.f32 %v805, %v1027
      %v1096 = vadd.f32 %v807, %v1029
      %v1097 = vadd.f32 %v810, %v1032
      %v1098 = vadd.f32 %v812, %v1034
      %v1099 = vadd.f32 %v815, %v1037
      %v1100 = vadd.f32 %v817, %v1039
      %v1101 = vadd.f32 %v820, %v1042
      %v1102 = vadd.f32 %v822, %v1044
      %v1103 = vadd.f32 %v825, %v1047
      %v1104 = vadd.f32 %v827, %v1049
      %v1105 = vadd.f32 %v830, %v1052
      %v1106 = vadd.f32 %v832, %v1054
      %v1107 = vadd.f32 %v835, %v1057
      %v1108 = vadd.f32 %v837, %v1059
      %v1109 = vadd.f32 %v840, %v1062
      %v1110 = vadd.f32 %v842, %v1064
      %v1111 = vadd.f32 %v845, %v1067
      %v1112 = vadd.f32 %v847, %v1069
      %v1113 = vadd.f32 %v850, %v1072
      %v1114 = vadd.f32 %v852, %v1074
      %v1115 = vadd.f32 %v855, %v1077
      %v1116 = vadd.f32 %v857, %v1079
      %v1117 = vld [vmem:[%s206 + $0x8] sm:$0xe]
      %v1118 = vld [vmem:[%s206 + $0xc] sm:$0xf]
      %v1119 = vld [vmem:[%s206 + $0x10] sm:$0xf]
      %v1120 = vld [vmem:[%s206 + $0x14] sm:$0xf]
      %v1121 = vld [vmem:[%s206 + $0x18] sm:$0xf]
      %v1122 = vld [vmem:[%s206 + $0x1c] sm:$0xf]
      %v1123 = vld [vmem:[%s206 + $0x20] sm:$0xf]
      %v1124 = vld [vmem:[%s206 + $0x24] sm:$0xf]
      %v1125 = vld [vmem:[%s206 + $0x28] sm:$0xf]
      %v1126 = vld [vmem:[%s206 + $0x2c] sm:$0xf]
      %v1127 = vld [vmem:[%s206 + $0x30] sm:$0xf]
      %v1128 = vld [vmem:[%s206 + $0x34] sm:$0xf]
      %v1129 = vld [vmem:[%s206 + $0x38] sm:$0xf]
      %v1130 = vld [vmem:[%s206 + $0x3c] sm:$0xf]
      %v1131 = vld [vmem:[%s206 + $0x40] sm:$0xf]
      %v1132 = vld [vmem:[%s206 + $0x44] sm:$0xf]
      %v1133 = vld [vmem:[%s206 + $0x48] sm:$0xf]
      %v1134 = vld [vmem:[%s206 + $0x4c] sm:$0xf]
      %v1135 = vld [vmem:[%s206 + $0x50] sm:$0xf]
      %v1136 = vld [vmem:[%s206 + $0x54] sm:$0xf]
      %v1137 = vld [vmem:[%s206 + $0x58] sm:$0xf]
      %v1138 = vld [vmem:[%s206 + $0x5c] sm:$0xf]
      %v1139 = vld [vmem:[%s206 + $0x60] sm:$0xf]
      %v1140 = vld [vmem:[%s206 + $0x64] sm:$0xf]
      %v1141 = vld [vmem:[%s206 + $0x68] sm:$0xf]
      %v1142 = vld [vmem:[%s206 + $0x6c] sm:$0xf]
      %v1143 = vld [vmem:[%s206 + $0x70] sm:$0xf]
      %v1144 = vld [vmem:[%s206 + $0x74] sm:$0xf]
      %v1145 = vld [vmem:[%s206 + $0x78] sm:$0xf]
      %v1146 = vld [vmem:[%s206 + $0x7c] sm:$0xf]
      %v1147 = vld [vmem:[%s206 + $0x80] sm:$0xf]
      %v1148 = vld [vmem:[%s206 + $0x84] sm:$0xf]
      %v1149 = vld [vmem:[%s206 + $0x88] sm:$0xf]
      %v1150 = vld [vmem:[%s206 + $0x8c] sm:$0xf]
      %v1151 = vld [vmem:[%s206 + $0x90] sm:$0xf]
      %v1152 = vld [vmem:[%s206 + $0x94] sm:$0xf]
      %s1153 = scalar_lea.vmem %s210, 192
      %v1154 = vld [vmem:[%s1153] sm:$0xf]
      %v1155 = vld [vmem:[%s1153 + $0x4] sm:$0xf]
      %v1156 = vld [vmem:[%s1153 + $0x8] sm:$0xf]
      %v1157 = vld [vmem:[%s1153 + $0xc] sm:$0xf]
      %v1158 = vld [vmem:[%s1153 + $0x10] sm:$0xf]
      %v1159 = vld [vmem:[%s1153 + $0x14] sm:$0xf]
      %v1160 = vld [vmem:[%s1153 + $0x18] sm:$0xf]
      %v1161 = vld [vmem:[%s1153 + $0x1c] sm:$0xf]
      %v1162 = vld [vmem:[%s1153 + $0x20] sm:$0xf]
      %v1163 = vld [vmem:[%s1153 + $0x24] sm:$0xf]
      %v1164 = vld [vmem:[%s1153 + $0x28] sm:$0xf]
      %v1165 = vld [vmem:[%s1153 + $0x2c] sm:$0xf]
      %v1166 = vld [vmem:[%s1153 + $0x30] sm:$0xf]
      %v1167 = vld [vmem:[%s1153 + $0x34] sm:$0xf]
      %v1168 = vld [vmem:[%s1153 + $0x38] sm:$0xf]
      %v1169 = vld [vmem:[%s1153 + $0x3c] sm:$0xf]
      %v1206 = vunpack.c.l.b16 %v1117
      %v1207 = vunpack.c.l.b16 %v1118
      %v1208 = vunpack.c.l.b16 %v1119
      %v1209 = vunpack.c.l.b16 %v1120
      %v1210 = vunpack.c.l.b16 %v1121
      %v1211 = vunpack.c.l.b16 %v1122
      %v1212 = vunpack.c.l.b16 %v1123
      %v1213 = vunpack.c.l.b16 %v1124
      %v1214 = vunpack.c.l.b16 %v1125
      %v1215 = vunpack.c.l.b16 %v1126
      %v1216 = vunpack.c.l.b16 %v1127
      %v1217 = vunpack.c.l.b16 %v1128
      %v1218 = vunpack.c.l.b16 %v1129
      %v1219 = vunpack.c.l.b16 %v1130
      %v1220 = vunpack.c.l.b16 %v1131
      %v1221 = vunpack.c.l.b16 %v1132
      %v1222 = vunpack.c.l.b16 %v1133
      %v1223 = vunpack.c.l.b16 %v1134
      %v1224 = vunpack.c.l.b16 %v1135
      %v1225 = vunpack.c.l.b16 %v1136
      %v1226 = vunpack.c.l.b16 %v1137
      %v1227 = vunpack.c.l.b16 %v1138
      %v1228 = vunpack.c.l.b16 %v1139
      %v1229 = vunpack.c.l.b16 %v1140
      %v1230 = vunpack.c.l.b16 %v1141
      %v1231 = vunpack.c.l.b16 %v1142
      %v1232 = vunpack.c.l.b16 %v1143
      %v1233 = vunpack.c.l.b16 %v1144
      %v1234 = vunpack.c.l.b16 %v1145
      %v1235 = vunpack.c.l.b16 %v1146
      %v1236 = vunpack.c.l.b16 %v1147
      %v1237 = vunpack.c.l.b16 %v1148
      %v1238 = vunpack.c.l.b16 %v1149
      %v1239 = vunpack.c.l.b16 %v1150
      %v1240 = vunpack.c.l.b16 %v1151
      %v1241 = vunpack.c.l.b16 %v1152
      %v1242 = vpack.c.b16 %v1207, %v1206
      %v1243 = vpack.c.b16 %v1209, %v1208
      %v1244 = vpack.c.b16 %v1211, %v1210
      %v1245 = vpack.c.b16 %v1213, %v1212
      %v1246 = vpack.c.b16 %v1215, %v1214
      %v1247 = vpack.c.b16 %v1217, %v1216
      %v1248 = vpack.c.b16 %v1219, %v1218
      %v1249 = vpack.c.b16 %v1221, %v1220
      %v1250 = vpack.c.b16 %v1223, %v1222
      %v1251 = vpack.c.b16 %v1225, %v1224
      %v1252 = vpack.c.b16 %v1227, %v1226
      %v1253 = vpack.c.b16 %v1229, %v1228
      %v1254 = vpack.c.b16 %v1231, %v1230
      %v1255 = vpack.c.b16 %v1233, %v1232
      %v1256 = vpack.c.b16 %v1235, %v1234
      %v1257 = vpack.c.b16 %v1237, %v1236
      %v1258 = vpack.c.b16 %v1239, %v1238
      %v1259 = vpack.c.b16 %v1241, %v1240
      %v1260 = vrot.slane %v1242, 1
      %v1261 = vrot.slane %v1243, 1
      %v1262 = vsel %vm880, %v1260, %v1261
      %v1263 = vrot.slane %v1244, 1
      %v1264 = vsel %vm880, %v1261, %v1263
      %v1265 = vrot.slane %v1245, 1
      %v1266 = vsel %vm880, %v1263, %v1265
      %v1267 = vrot.slane %v1246, 1
      %v1268 = vsel %vm880, %v1265, %v1267
      %v1269 = vrot.slane %v1247, 1
      %v1270 = vsel %vm880, %v1267, %v1269
      %v1271 = vrot.slane %v1248, 1
      %v1272 = vsel %vm880, %v1269, %v1271
      %v1273 = vrot.slane %v1249, 1
      %v1274 = vsel %vm880, %v1271, %v1273
      %v1275 = vrot.slane %v1250, 1
      %v1276 = vsel %vm880, %v1273, %v1275
      %v1277 = vrot.slane %v1251, 1
      %v1278 = vsel %vm880, %v1275, %v1277
      %v1279 = vrot.slane %v1252, 1
      %v1280 = vsel %vm880, %v1277, %v1279
      %v1281 = vrot.slane %v1253, 1
      %v1282 = vsel %vm880, %v1279, %v1281
      %v1283 = vrot.slane %v1254, 1
      %v1284 = vsel %vm880, %v1281, %v1283
      %v1285 = vrot.slane %v1255, 1
      %v1286 = vsel %vm880, %v1283, %v1285
      %v1287 = vrot.slane %v1256, 1
      %v1288 = vsel %vm880, %v1285, %v1287
      %v1289 = vrot.slane %v1257, 1
      %v1290 = vsel %vm880, %v1287, %v1289
      %v1291 = vrot.slane %v1258, 1
      %v1292 = vsel %vm880, %v1289, %v1291
      %v1293 = vrot.slane %v1259, 1
      %v1294 = vsel %vm880, %v1291, %v1293
      %v1329 = vunpack.c.l.b16 %v1154
      %v1330 = vunpack.c.l.b16 %v1155
      %v1331 = vunpack.c.l.b16 %v1156
      %v1332 = vunpack.c.l.b16 %v1157
      %v1333 = vunpack.c.l.b16 %v1158
      %v1334 = vunpack.c.l.b16 %v1159
      %v1335 = vunpack.c.l.b16 %v1160
      %v1336 = vunpack.c.l.b16 %v1161
      %v1337 = vunpack.c.l.b16 %v1162
      %v1338 = vunpack.c.l.b16 %v1163
      %v1339 = vunpack.c.l.b16 %v1164
      %v1340 = vunpack.c.l.b16 %v1165
      %v1341 = vunpack.c.l.b16 %v1166
      %v1342 = vunpack.c.l.b16 %v1167
      %v1343 = vunpack.c.l.b16 %v1168
      %v1344 = vunpack.c.l.b16 %v1169
      %v1345 = vpack.c.b16 %v1330, %v1329
      %v1346 = vpack.c.b16 %v1332, %v1331
      %v1347 = vpack.c.b16 %v1334, %v1333
      %v1348 = vpack.c.b16 %v1336, %v1335
      %v1349 = vpack.c.b16 %v1338, %v1337
      %v1350 = vpack.c.b16 %v1340, %v1339
      %v1351 = vpack.c.b16 %v1342, %v1341
      %v1352 = vpack.c.b16 %v1344, %v1343
      %1361 = vmatpush.bf16.msra.mxu0 %v1352
      %1362 = vmatpush.bf16.msra.mxu0 %v1351
      %1363 = vmatpush.bf16.msra.mxu0 %v1350
      %1364 = vmatpush.bf16.msra.mxu0 %v1349
      %1365 = vmatpush.bf16.msra.mxu0 %v1348
      %1366 = vmatpush.bf16.msra.mxu0 %v1347
      %1367 = vmatpush.bf16.msra.mxu0 %v1346
      %1368 = vmatpush.bf16.msra.mxu0 %v1345
      %1369 = vmatmul.bf16.gmra.mxu0 %v1262
      %v1370 = vpop.f32.mrf.mxu0
      %v1371 = vadd.f32 0.0, %v1370
      %v1372 = vpop.f32.mrf.mxu0
      %v1373 = vadd.f32 0.0, %v1372
      %1374 = vmatmul.bf16.gmra.mxu0 %v1264
      %v1375 = vpop.f32.mrf.mxu0
      %v1376 = vadd.f32 0.0, %v1375
      %v1377 = vpop.f32.mrf.mxu0
      %v1378 = vadd.f32 0.0, %v1377
      %1379 = vmatmul.bf16.gmra.mxu0 %v1266
      %v1380 = vpop.f32.mrf.mxu0
      %v1381 = vadd.f32 0.0, %v1380
      %v1382 = vpop.f32.mrf.mxu0
      %v1383 = vadd.f32 0.0, %v1382
      %1384 = vmatmul.bf16.gmra.mxu0 %v1268
      %v1385 = vpop.f32.mrf.mxu0
      %v1386 = vadd.f32 0.0, %v1385
      %v1387 = vpop.f32.mrf.mxu0
      %v1388 = vadd.f32 0.0, %v1387
      %1389 = vmatmul.bf16.gmra.mxu0 %v1270
      %v1390 = vpop.f32.mrf.mxu0
      %v1391 = vadd.f32 0.0, %v1390
      %v1392 = vpop.f32.mrf.mxu0
      %v1393 = vadd.f32 0.0, %v1392
      %1394 = vmatmul.bf16.gmra.mxu0 %v1272
      %v1395 = vpop.f32.mrf.mxu0
      %v1396 = vadd.f32 0.0, %v1395
      %v1397 = vpop.f32.mrf.mxu0
      %v1398 = vadd.f32 0.0, %v1397
      %1399 = vmatmul.bf16.gmra.mxu0 %v1274
      %v1400 = vpop.f32.mrf.mxu0
      %v1401 = vadd.f32 0.0, %v1400
      %v1402 = vpop.f32.mrf.mxu0
      %v1403 = vadd.f32 0.0, %v1402
      %1404 = vmatmul.bf16.gmra.mxu0 %v1276
      %v1405 = vpop.f32.mrf.mxu0
      %v1406 = vadd.f32 0.0, %v1405
      %v1407 = vpop.f32.mrf.mxu0
      %v1408 = vadd.f32 0.0, %v1407
      %1409 = vmatmul.bf16.gmra.mxu0 %v1278
      %v1410 = vpop.f32.mrf.mxu0
      %v1411 = vadd.f32 0.0, %v1410
      %v1412 = vpop.f32.mrf.mxu0
      %v1413 = vadd.f32 0.0, %v1412
      %1414 = vmatmul.bf16.gmra.mxu0 %v1280
      %v1415 = vpop.f32.mrf.mxu0
      %v1416 = vadd.f32 0.0, %v1415
      %v1417 = vpop.f32.mrf.mxu0
      %v1418 = vadd.f32 0.0, %v1417
      %1419 = vmatmul.bf16.gmra.mxu0 %v1282
      %v1420 = vpop.f32.mrf.mxu0
      %v1421 = vadd.f32 0.0, %v1420
      %v1422 = vpop.f32.mrf.mxu0
      %v1423 = vadd.f32 0.0, %v1422
      %1424 = vmatmul.bf16.gmra.mxu0 %v1284
      %v1425 = vpop.f32.mrf.mxu0
      %v1426 = vadd.f32 0.0, %v1425
      %v1427 = vpop.f32.mrf.mxu0
      %v1428 = vadd.f32 0.0, %v1427
      %1429 = vmatmul.bf16.gmra.mxu0 %v1286
      %v1430 = vpop.f32.mrf.mxu0
      %v1431 = vadd.f32 0.0, %v1430
      %v1432 = vpop.f32.mrf.mxu0
      %v1433 = vadd.f32 0.0, %v1432
      %1434 = vmatmul.bf16.gmra.mxu0 %v1288
      %v1435 = vpop.f32.mrf.mxu0
      %v1436 = vadd.f32 0.0, %v1435
      %v1437 = vpop.f32.mrf.mxu0
      %v1438 = vadd.f32 0.0, %v1437
      %1439 = vmatmul.bf16.gmra.mxu0 %v1290
      %v1440 = vpop.f32.mrf.mxu0
      %v1441 = vadd.f32 0.0, %v1440
      %v1442 = vpop.f32.mrf.mxu0
      %v1443 = vadd.f32 0.0, %v1442
      %1444 = vmatmul.bf16.gmra.mxu0 %v1292
      %v1445 = vpop.f32.mrf.mxu0
      %v1446 = vadd.f32 0.0, %v1445
      %v1447 = vpop.f32.mrf.mxu0
      %v1448 = vadd.f32 0.0, %v1447
      %1449 = vmatmul.bf16.gmra.mxu0 %v1294
      %v1450 = vpop.f32.mrf.mxu0
      %v1451 = vadd.f32 0.0, %v1450
      %v1452 = vpop.f32.mrf.mxu0
      %v1453 = vadd.f32 0.0, %v1452
      %1454 = vmatmul.bf16.gmra.mxu0 %v1293
      %v1455 = vpop.f32.mrf.mxu0
      %v1456 = vadd.f32 0.0, %v1455
      %v1457 = vpop.f32.mrf.mxu0
      %v1458 = vadd.f32 0.0, %v1457
      %1459 = vdwg.mxu0
      %v1460 = vadd.f32 %v1081, %v1371
      %v1461 = vadd.f32 %v1082, %v1373
      %v1462 = vadd.f32 %v1083, %v1376
      %v1463 = vadd.f32 %v1084, %v1378
      %v1464 = vadd.f32 %v1085, %v1381
      %v1465 = vadd.f32 %v1086, %v1383
      %v1466 = vadd.f32 %v1087, %v1386
      %v1467 = vadd.f32 %v1088, %v1388
      %v1468 = vadd.f32 %v1089, %v1391
      %v1469 = vadd.f32 %v1090, %v1393
      %v1470 = vadd.f32 %v1091, %v1396
      %v1471 = vadd.f32 %v1092, %v1398
      %v1472 = vadd.f32 %v1093, %v1401
      %v1473 = vadd.f32 %v1094, %v1403
      %v1474 = vadd.f32 %v1095, %v1406
      %v1475 = vadd.f32 %v1096, %v1408
      %v1476 = vadd.f32 %v1097, %v1411
      %v1477 = vadd.f32 %v1098, %v1413
      %v1478 = vadd.f32 %v1099, %v1416
      %v1479 = vadd.f32 %v1100, %v1418
      %v1480 = vadd.f32 %v1101, %v1421
      %v1481 = vadd.f32 %v1102, %v1423
      %v1482 = vadd.f32 %v1103, %v1426
      %v1483 = vadd.f32 %v1104, %v1428
      %v1484 = vadd.f32 %v1105, %v1431
      %v1485 = vadd.f32 %v1106, %v1433
      %v1486 = vadd.f32 %v1107, %v1436
      %v1487 = vadd.f32 %v1108, %v1438
      %v1488 = vadd.f32 %v1109, %v1441
      %v1489 = vadd.f32 %v1110, %v1443
      %v1490 = vadd.f32 %v1111, %v1446
      %v1491 = vadd.f32 %v1112, %v1448
      %v1492 = vadd.f32 %v1113, %v1451
      %v1493 = vadd.f32 %v1114, %v1453
      %v1494 = vadd.f32 %v1115, %v1456
      %v1495 = vadd.f32 %v1116, %v1458
      %v1496 = vld [vmem:[%s206 + $0x8] sm:$0xe]
      %v1497 = vld [vmem:[%s206 + $0xc] sm:$0xf]
      %v1498 = vld [vmem:[%s206 + $0x10] sm:$0xf]
      %v1499 = vld [vmem:[%s206 + $0x14] sm:$0xf]
      %v1500 = vld [vmem:[%s206 + $0x18] sm:$0xf]
      %v1501 = vld [vmem:[%s206 + $0x1c] sm:$0xf]
      %v1502 = vld [vmem:[%s206 + $0x20] sm:$0xf]
      %v1503 = vld [vmem:[%s206 + $0x24] sm:$0xf]
      %v1504 = vld [vmem:[%s206 + $0x28] sm:$0xf]
      %v1505 = vld [vmem:[%s206 + $0x2c] sm:$0xf]
      %v1506 = vld [vmem:[%s206 + $0x30] sm:$0xf]
      %v1507 = vld [vmem:[%s206 + $0x34] sm:$0xf]
      %v1508 = vld [vmem:[%s206 + $0x38] sm:$0xf]
      %v1509 = vld [vmem:[%s206 + $0x3c] sm:$0xf]
      %v1510 = vld [vmem:[%s206 + $0x40] sm:$0xf]
      %v1511 = vld [vmem:[%s206 + $0x44] sm:$0xf]
      %v1512 = vld [vmem:[%s206 + $0x48] sm:$0xf]
      %v1513 = vld [vmem:[%s206 + $0x4c] sm:$0xf]
      %v1514 = vld [vmem:[%s206 + $0x50] sm:$0xf]
      %v1515 = vld [vmem:[%s206 + $0x54] sm:$0xf]
      %v1516 = vld [vmem:[%s206 + $0x58] sm:$0xf]
      %v1517 = vld [vmem:[%s206 + $0x5c] sm:$0xf]
      %v1518 = vld [vmem:[%s206 + $0x60] sm:$0xf]
      %v1519 = vld [vmem:[%s206 + $0x64] sm:$0xf]
      %v1520 = vld [vmem:[%s206 + $0x68] sm:$0xf]
      %v1521 = vld [vmem:[%s206 + $0x6c] sm:$0xf]
      %v1522 = vld [vmem:[%s206 + $0x70] sm:$0xf]
      %v1523 = vld [vmem:[%s206 + $0x74] sm:$0xf]
      %v1524 = vld [vmem:[%s206 + $0x78] sm:$0xf]
      %v1525 = vld [vmem:[%s206 + $0x7c] sm:$0xf]
      %v1526 = vld [vmem:[%s206 + $0x80] sm:$0xf]
      %v1527 = vld [vmem:[%s206 + $0x84] sm:$0xf]
      %v1528 = vld [vmem:[%s206 + $0x88] sm:$0xf]
      %v1529 = vld [vmem:[%s206 + $0x8c] sm:$0xf]
      %v1530 = vld [vmem:[%s206 + $0x90] sm:$0xf]
      %v1531 = vld [vmem:[%s206 + $0x94] sm:$0xf]
      %v1532 = vld [vmem:[%s206 + $0x98] sm:$0x1]
      %s1533 = scalar_lea.vmem %s210, 256
      %v1534 = vld [vmem:[%s1533] sm:$0xf]
      %v1535 = vld [vmem:[%s1533 + $0x4] sm:$0xf]
      %v1536 = vld [vmem:[%s1533 + $0x8] sm:$0xf]
      %v1537 = vld [vmem:[%s1533 + $0xc] sm:$0xf]
      %v1538 = vld [vmem:[%s1533 + $0x10] sm:$0xf]
      %v1539 = vld [vmem:[%s1533 + $0x14] sm:$0xf]
      %v1540 = vld [vmem:[%s1533 + $0x18] sm:$0xf]
      %v1541 = vld [vmem:[%s1533 + $0x1c] sm:$0xf]
      %v1542 = vld [vmem:[%s1533 + $0x20] sm:$0xf]
      %v1543 = vld [vmem:[%s1533 + $0x24] sm:$0xf]
      %v1544 = vld [vmem:[%s1533 + $0x28] sm:$0xf]
      %v1545 = vld [vmem:[%s1533 + $0x2c] sm:$0xf]
      %v1546 = vld [vmem:[%s1533 + $0x30] sm:$0xf]
      %v1547 = vld [vmem:[%s1533 + $0x34] sm:$0xf]
      %v1548 = vld [vmem:[%s1533 + $0x38] sm:$0xf]
      %v1549 = vld [vmem:[%s1533 + $0x3c] sm:$0xf]
      %v1587 = vunpack.c.l.b16 %v1496
      %v1588 = vunpack.c.l.b16 %v1497
      %v1589 = vunpack.c.l.b16 %v1498
      %v1590 = vunpack.c.l.b16 %v1499
      %v1591 = vunpack.c.l.b16 %v1500
      %v1592 = vunpack.c.l.b16 %v1501
      %v1593 = vunpack.c.l.b16 %v1502
      %v1594 = vunpack.c.l.b16 %v1503
      %v1595 = vunpack.c.l.b16 %v1504
      %v1596 = vunpack.c.l.b16 %v1505
      %v1597 = vunpack.c.l.b16 %v1506
      %v1598 = vunpack.c.l.b16 %v1507
      %v1599 = vunpack.c.l.b16 %v1508
      %v1600 = vunpack.c.l.b16 %v1509
      %v1601 = vunpack.c.l.b16 %v1510
      %v1602 = vunpack.c.l.b16 %v1511
      %v1603 = vunpack.c.l.b16 %v1512
      %v1604 = vunpack.c.l.b16 %v1513
      %v1605 = vunpack.c.l.b16 %v1514
      %v1606 = vunpack.c.l.b16 %v1515
      %v1607 = vunpack.c.l.b16 %v1516
      %v1608 = vunpack.c.l.b16 %v1517
      %v1609 = vunpack.c.l.b16 %v1518
      %v1610 = vunpack.c.l.b16 %v1519
      %v1611 = vunpack.c.l.b16 %v1520
      %v1612 = vunpack.c.l.b16 %v1521
      %v1613 = vunpack.c.l.b16 %v1522
      %v1614 = vunpack.c.l.b16 %v1523
      %v1615 = vunpack.c.l.b16 %v1524
      %v1616 = vunpack.c.l.b16 %v1525
      %v1617 = vunpack.c.l.b16 %v1526
      %v1618 = vunpack.c.l.b16 %v1527
      %v1619 = vunpack.c.l.b16 %v1528
      %v1620 = vunpack.c.l.b16 %v1529
      %v1621 = vunpack.c.l.b16 %v1530
      %v1622 = vunpack.c.l.b16 %v1531
      %v1623 = vunpack.c.l.b16 %v1532
      %v1624 = vpack.c.b16 %v1588, %v1587
      %v1625 = vpack.c.b16 %v1590, %v1589
      %v1626 = vpack.c.b16 %v1592, %v1591
      %v1627 = vpack.c.b16 %v1594, %v1593
      %v1628 = vpack.c.b16 %v1596, %v1595
      %v1629 = vpack.c.b16 %v1598, %v1597
      %v1630 = vpack.c.b16 %v1600, %v1599
      %v1631 = vpack.c.b16 %v1602, %v1601
      %v1632 = vpack.c.b16 %v1604, %v1603
      %v1633 = vpack.c.b16 %v1606, %v1605
      %v1634 = vpack.c.b16 %v1608, %v1607
      %v1635 = vpack.c.b16 %v1610, %v1609
      %v1636 = vpack.c.b16 %v1612, %v1611
      %v1637 = vpack.c.b16 %v1614, %v1613
      %v1638 = vpack.c.b16 %v1616, %v1615
      %v1639 = vpack.c.b16 %v1618, %v1617
      %v1640 = vpack.c.b16 %v1620, %v1619
      %v1641 = vpack.c.b16 %v1622, %v1621
      %v1642 = vpack.c.b16 %v1623, %v1623
      %vm1643 = vsmask.f32 6400
      %v1645 = vshrl.u32 %v1624, 16
      %v1647 = vrot.slane %v1645, 1
      %v1648 = vshll.u32 %v1624, 16
      %v1650 = vrot.slane %v1648, 2
      %v1651 = vor.u32 %v1647, %v1650
      %v1653 = vshrl.u32 %v1625, 16
      %v1655 = vrot.slane %v1653, 1
      %v1656 = vshll.u32 %v1625, 16
      %v1658 = vrot.slane %v1656, 2
      %v1659 = vor.u32 %v1655, %v1658
      %v1660 = vsel %vm1643, %v1651, %v1659
      %v1662 = vshrl.u32 %v1626, 16
      %v1664 = vrot.slane %v1662, 1
      %v1665 = vshll.u32 %v1626, 16
      %v1667 = vrot.slane %v1665, 2
      %v1668 = vor.u32 %v1664, %v1667
      %v1669 = vsel %vm1643, %v1659, %v1668
      %v1671 = vshrl.u32 %v1627, 16
      %v1673 = vrot.slane %v1671, 1
      %v1674 = vshll.u32 %v1627, 16
      %v1676 = vrot.slane %v1674, 2
      %v1677 = vor.u32 %v1673, %v1676
      %v1678 = vsel %vm1643, %v1668, %v1677
      %v1680 = vshrl.u32 %v1628, 16
      %v1682 = vrot.slane %v1680, 1
      %v1683 = vshll.u32 %v1628, 16
      %v1685 = vrot.slane %v1683, 2
      %v1686 = vor.u32 %v1682, %v1685
      %v1687 = vsel %vm1643, %v1677, %v1686
      %v1689 = vshrl.u32 %v1629, 16
      %v1691 = vrot.slane %v1689, 1
      %v1692 = vshll.u32 %v1629, 16
      %v1694 = vrot.slane %v1692, 2
      %v1695 = vor.u32 %v1691, %v1694
      %v1696 = vsel %vm1643, %v1686, %v1695
      %v1698 = vshrl.u32 %v1630, 16
      %v1700 = vrot.slane %v1698, 1
      %v1701 = vshll.u32 %v1630, 16
      %v1703 = vrot.slane %v1701, 2
      %v1704 = vor.u32 %v1700, %v1703
      %v1705 = vsel %vm1643, %v1695, %v1704
      %v1707 = vshrl.u32 %v1631, 16
      %v1709 = vrot.slane %v1707, 1
      %v1710 = vshll.u32 %v1631, 16
      %v1712 = vrot.slane %v1710, 2
      %v1713 = vor.u32 %v1709, %v1712
      %v1714 = vsel %vm1643, %v1704, %v1713
      %v1716 = vshrl.u32 %v1632, 16
      %v1718 = vrot.slane %v1716, 1
      %v1719 = vshll.u32 %v1632, 16
      %v1721 = vrot.slane %v1719, 2
      %v1722 = vor.u32 %v1718, %v1721
      %v1723 = vsel %vm1643, %v1713, %v1722
      %v1725 = vshrl.u32 %v1633, 16
      %v1727 = vrot.slane %v1725, 1
      %v1728 = vshll.u32 %v1633, 16
      %v1730 = vrot.slane %v1728, 2
      %v1731 = vor.u32 %v1727, %v1730
      %v1732 = vsel %vm1643, %v1722, %v1731
      %v1734 = vshrl.u32 %v1634, 16
      %v1736 = vrot.slane %v1734, 1
      %v1737 = vshll.u32 %v1634, 16
      %v1739 = vrot.slane %v1737, 2
      %v1740 = vor.u32 %v1736, %v1739
      %v1741 = vsel %vm1643, %v1731, %v1740
      %v1743 = vshrl.u32 %v1635, 16
      %v1745 = vrot.slane %v1743, 1
      %v1746 = vshll.u32 %v1635, 16
      %v1748 = vrot.slane %v1746, 2
      %v1749 = vor.u32 %v1745, %v1748
      %v1750 = vsel %vm1643, %v1740, %v1749
      %v1752 = vshrl.u32 %v1636, 16
      %v1754 = vrot.slane %v1752, 1
      %v1755 = vshll.u32 %v1636, 16
      %v1757 = vrot.slane %v1755, 2
      %v1758 = vor.u32 %v1754, %v1757
      %v1759 = vsel %vm1643, %v1749, %v1758
      %v1761 = vshrl.u32 %v1637, 16
      %v1763 = vrot.slane %v1761, 1
      %v1764 = vshll.u32 %v1637, 16
      %v1766 = vrot.slane %v1764, 2
      %v1767 = vor.u32 %v1763, %v1766
      %v1768 = vsel %vm1643, %v1758, %v1767
      %v1770 = vshrl.u32 %v1638, 16
      %v1772 = vrot.slane %v1770, 1
      %v1773 = vshll.u32 %v1638, 16
      %v1775 = vrot.slane %v1773, 2
      %v1776 = vor.u32 %v1772, %v1775
      %v1777 = vsel %vm1643, %v1767, %v1776
      %v1779 = vshrl.u32 %v1639, 16
      %v1781 = vrot.slane %v1779, 1
      %v1782 = vshll.u32 %v1639, 16
      %v1784 = vrot.slane %v1782, 2
      %v1785 = vor.u32 %v1781, %v1784
      %v1786 = vsel %vm1643, %v1776, %v1785
      %v1788 = vshrl.u32 %v1640, 16
      %v1790 = vrot.slane %v1788, 1
      %v1791 = vshll.u32 %v1640, 16
      %v1793 = vrot.slane %v1791, 2
      %v1794 = vor.u32 %v1790, %v1793
      %v1795 = vsel %vm1643, %v1785, %v1794
      %v1797 = vshrl.u32 %v1641, 16
      %v1799 = vrot.slane %v1797, 1
      %v1800 = vshll.u32 %v1641, 16
      %v1802 = vrot.slane %v1800, 2
      %v1803 = vor.u32 %v1799, %v1802
      %v1804 = vsel %vm1643, %v1794, %v1803
      %v1806 = vshll.u32 %v1642, 16
      %v1808 = vrot.slane %v1806, 2
      %v1809 = vsel %vm1643, %v1803, %v1808
      %v1844 = vunpack.c.l.b16 %v1534
      %v1845 = vunpack.c.l.b16 %v1535
      %v1846 = vunpack.c.l.b16 %v1536
      %v1847 = vunpack.c.l.b16 %v1537
      %v1848 = vunpack.c.l.b16 %v1538
      %v1849 = vunpack.c.l.b16 %v1539
      %v1850 = vunpack.c.l.b16 %v1540
      %v1851 = vunpack.c.l.b16 %v1541
      %v1852 = vunpack.c.l.b16 %v1542
      %v1853 = vunpack.c.l.b16 %v1543
      %v1854 = vunpack.c.l.b16 %v1544
      %v1855 = vunpack.c.l.b16 %v1545
      %v1856 = vunpack.c.l.b16 %v1546
      %v1857 = vunpack.c.l.b16 %v1547
      %v1858 = vunpack.c.l.b16 %v1548
      %v1859 = vunpack.c.l.b16 %v1549
      %v1860 = vpack.c.b16 %v1845, %v1844
      %v1861 = vpack.c.b16 %v1847, %v1846
      %v1862 = vpack.c.b16 %v1849, %v1848
      %v1863 = vpack.c.b16 %v1851, %v1850
      %v1864 = vpack.c.b16 %v1853, %v1852
      %v1865 = vpack.c.b16 %v1855, %v1854
      %v1866 = vpack.c.b16 %v1857, %v1856
      %v1867 = vpack.c.b16 %v1859, %v1858
      %1876 = vmatpush.bf16.msra.mxu0 %v1867
      %1877 = vmatpush.bf16.msra.mxu0 %v1866
      %1878 = vmatpush.bf16.msra.mxu0 %v1865
      %1879 = vmatpush.bf16.msra.mxu0 %v1864
      %1880 = vmatpush.bf16.msra.mxu0 %v1863
      %1881 = vmatpush.bf16.msra.mxu0 %v1862
      %1882 = vmatpush.bf16.msra.mxu0 %v1861
      %1883 = vmatpush.bf16.msra.mxu0 %v1860
      %1884 = vmatmul.bf16.gmra.mxu0 %v1660
      %v1885 = vpop.f32.mrf.mxu0
      %v1886 = vadd.f32 0.0, %v1885
      %v1887 = vpop.f32.mrf.mxu0
      %v1888 = vadd.f32 0.0, %v1887
      %1889 = vmatmul.bf16.gmra.mxu0 %v1669
      %v1890 = vpop.f32.mrf.mxu0
      %v1891 = vadd.f32 0.0, %v1890
      %v1892 = vpop.f32.mrf.mxu0
      %v1893 = vadd.f32 0.0, %v1892
      %1894 = vmatmul.bf16.gmra.mxu0 %v1678
      %v1895 = vpop.f32.mrf.mxu0
      %v1896 = vadd.f32 0.0, %v1895
      %v1897 = vpop.f32.mrf.mxu0
      %v1898 = vadd.f32 0.0, %v1897
      %1899 = vmatmul.bf16.gmra.mxu0 %v1687
      %v1900 = vpop.f32.mrf.mxu0
      %v1901 = vadd.f32 0.0, %v1900
      %v1902 = vpop.f32.mrf.mxu0
      %v1903 = vadd.f32 0.0, %v1902
      %1904 = vmatmul.bf16.gmra.mxu0 %v1696
      %v1905 = vpop.f32.mrf.mxu0
      %v1906 = vadd.f32 0.0, %v1905
      %v1907 = vpop.f32.mrf.mxu0
      %v1908 = vadd.f32 0.0, %v1907
      %1909 = vmatmul.bf16.gmra.mxu0 %v1705
      %v1910 = vpop.f32.mrf.mxu0
      %v1911 = vadd.f32 0.0, %v1910
      %v1912 = vpop.f32.mrf.mxu0
      %v1913 = vadd.f32 0.0, %v1912
      %1914 = vmatmul.bf16.gmra.mxu0 %v1714
      %v1915 = vpop.f32.mrf.mxu0
      %v1916 = vadd.f32 0.0, %v1915
      %v1917 = vpop.f32.mrf.mxu0
      %v1918 = vadd.f32 0.0, %v1917
      %1919 = vmatmul.bf16.gmra.mxu0 %v1723
      %v1920 = vpop.f32.mrf.mxu0
      %v1921 = vadd.f32 0.0, %v1920
      %v1922 = vpop.f32.mrf.mxu0
      %v1923 = vadd.f32 0.0, %v1922
      %1924 = vmatmul.bf16.gmra.mxu0 %v1732
      %v1925 = vpop.f32.mrf.mxu0
      %v1926 = vadd.f32 0.0, %v1925
      %v1927 = vpop.f32.mrf.mxu0
      %v1928 = vadd.f32 0.0, %v1927
      %1929 = vmatmul.bf16.gmra.mxu0 %v1741
      %v1930 = vpop.f32.mrf.mxu0
      %v1931 = vadd.f32 0.0, %v1930
      %v1932 = vpop.f32.mrf.mxu0
      %v1933 = vadd.f32 0.0, %v1932
      %1934 = vmatmul.bf16.gmra.mxu0 %v1750
      %v1935 = vpop.f32.mrf.mxu0
      %v1936 = vadd.f32 0.0, %v1935
      %v1937 = vpop.f32.mrf.mxu0
      %v1938 = vadd.f32 0.0, %v1937
      %1939 = vmatmul.bf16.gmra.mxu0 %v1759
      %v1940 = vpop.f32.mrf.mxu0
      %v1941 = vadd.f32 0.0, %v1940
      %v1942 = vpop.f32.mrf.mxu0
      %v1943 = vadd.f32 0.0, %v1942
      %1944 = vmatmul.bf16.gmra.mxu0 %v1768
      %v1945 = vpop.f32.mrf.mxu0
      %v1946 = vadd.f32 0.0, %v1945
      %v1947 = vpop.f32.mrf.mxu0
      %v1948 = vadd.f32 0.0, %v1947
      %1949 = vmatmul.bf16.gmra.mxu0 %v1777
      %v1950 = vpop.f32.mrf.mxu0
      %v1951 = vadd.f32 0.0, %v1950
      %v1952 = vpop.f32.mrf.mxu0
      %v1953 = vadd.f32 0.0, %v1952
      %1954 = vmatmul.bf16.gmra.mxu0 %v1786
      %v1955 = vpop.f32.mrf.mxu0
      %v1956 = vadd.f32 0.0, %v1955
      %v1957 = vpop.f32.mrf.mxu0
      %v1958 = vadd.f32 0.0, %v1957
      %1959 = vmatmul.bf16.gmra.mxu0 %v1795
      %v1960 = vpop.f32.mrf.mxu0
      %v1961 = vadd.f32 0.0, %v1960
      %v1962 = vpop.f32.mrf.mxu0
      %v1963 = vadd.f32 0.0, %v1962
      %1964 = vmatmul.bf16.gmra.mxu0 %v1804
      %v1965 = vpop.f32.mrf.mxu0
      %v1966 = vadd.f32 0.0, %v1965
      %v1967 = vpop.f32.mrf.mxu0
      %v1968 = vadd.f32 0.0, %v1967
      %1969 = vmatmul.bf16.gmra.mxu0 %v1809
      %v1970 = vpop.f32.mrf.mxu0
      %v1971 = vadd.f32 0.0, %v1970
      %v1972 = vpop.f32.mrf.mxu0
      %v1973 = vadd.f32 0.0, %v1972
      %1974 = vdwg.mxu0
      %v1975 = vadd.f32 %v1460, %v1886
      %v1976 = vadd.f32 %v1461, %v1888
      %v1977 = vadd.f32 %v1462, %v1891
      %v1978 = vadd.f32 %v1463, %v1893
      %v1979 = vadd.f32 %v1464, %v1896
      %v1980 = vadd.f32 %v1465, %v1898
      %v1981 = vadd.f32 %v1466, %v1901
      %v1982 = vadd.f32 %v1467, %v1903
      %v1983 = vadd.f32 %v1468, %v1906
      %v1984 = vadd.f32 %v1469, %v1908
      %v1985 = vadd.f32 %v1470, %v1911
      %v1986 = vadd.f32 %v1471, %v1913
      %v1987 = vadd.f32 %v1472, %v1916
      %v1988 = vadd.f32 %v1473, %v1918
      %v1989 = vadd.f32 %v1474, %v1921
      %v1990 = vadd.f32 %v1475, %v1923
      %v1991 = vadd.f32 %v1476, %v1926
      %v1992 = vadd.f32 %v1477, %v1928
      %v1993 = vadd.f32 %v1478, %v1931
      %v1994 = vadd.f32 %v1479, %v1933
      %v1995 = vadd.f32 %v1480, %v1936
      %v1996 = vadd.f32 %v1481, %v1938
      %v1997 = vadd.f32 %v1482, %v1941
      %v1998 = vadd.f32 %v1483, %v1943
      %v1999 = vadd.f32 %v1484, %v1946
      %v2000 = vadd.f32 %v1485, %v1948
      %v2001 = vadd.f32 %v1486, %v1951
      %v2002 = vadd.f32 %v1487, %v1953
      %v2003 = vadd.f32 %v1488, %v1956
      %v2004 = vadd.f32 %v1489, %v1958
      %v2005 = vadd.f32 %v1490, %v1961
      %v2006 = vadd.f32 %v1491, %v1963
      %v2007 = vadd.f32 %v1492, %v1966
      %v2008 = vadd.f32 %v1493, %v1968
      %v2009 = vadd.f32 %v1494, %v1971
      %v2010 = vadd.f32 %v1495, %v1973
      %v2011 = vld [vmem:[%s206 + $0x8] sm:$0xc]
      %s2012 = scalar_lea.vmem %s210, 320
      %v2013 = vld [vmem:[%s2012] sm:$0xf]
      %v2014 = vld [vmem:[%s2012 + $0x4] sm:$0xf]
      %v2015 = vld [vmem:[%s2012 + $0x8] sm:$0xf]
      %v2016 = vld [vmem:[%s2012 + $0xc] sm:$0xf]
      %v2017 = vld [vmem:[%s2012 + $0x10] sm:$0xf]
      %v2018 = vld [vmem:[%s2012 + $0x14] sm:$0xf]
      %v2019 = vld [vmem:[%s2012 + $0x18] sm:$0xf]
      %v2020 = vld [vmem:[%s2012 + $0x1c] sm:$0xf]
      %v2021 = vld [vmem:[%s2012 + $0x20] sm:$0xf]
      %v2022 = vld [vmem:[%s2012 + $0x24] sm:$0xf]
      %v2023 = vld [vmem:[%s2012 + $0x28] sm:$0xf]
      %v2024 = vld [vmem:[%s2012 + $0x2c] sm:$0xf]
      %v2025 = vld [vmem:[%s2012 + $0x30] sm:$0xf]
      %v2026 = vld [vmem:[%s2012 + $0x34] sm:$0xf]
      %v2027 = vld [vmem:[%s2012 + $0x38] sm:$0xf]
      %v2028 = vld [vmem:[%s2012 + $0x3c] sm:$0xf]
      %v2030 = vunpack.c.l.b16 %v2011
      %v2031 = vpack.c.b16 %v1588, %v2030
      %vm2032 = vcmask 1045504
      %v2033 = vrot.slane %v2031, 2
      %v2034 = vrot.slane %v1625, 2
      %v2035 = vsel %vm2032, %v2033, %v2034
      %v2036 = vrot.slane %v1626, 2
      %v2037 = vsel %vm2032, %v2034, %v2036
      %v2038 = vrot.slane %v1627, 2
      %v2039 = vsel %vm2032, %v2036, %v2038
      %v2040 = vrot.slane %v1628, 2
      %v2041 = vsel %vm2032, %v2038, %v2040
      %v2042 = vrot.slane %v1629, 2
      %v2043 = vsel %vm2032, %v2040, %v2042
      %v2044 = vrot.slane %v1630, 2
      %v2045 = vsel %vm2032, %v2042, %v2044
      %v2046 = vrot.slane %v1631, 2
      %v2047 = vsel %vm2032, %v2044, %v2046
      %v2048 = vrot.slane %v1632, 2
      %v2049 = vsel %vm2032, %v2046, %v2048
      %v2050 = vrot.slane %v1633, 2
      %v2051 = vsel %vm2032, %v2048, %v2050
      %v2052 = vrot.slane %v1634, 2
      %v2053 = vsel %vm2032, %v2050, %v2052
      %v2054 = vrot.slane %v1635, 2
      %v2055 = vsel %vm2032, %v2052, %v2054
      %v2056 = vrot.slane %v1636, 2
      %v2057 = vsel %vm2032, %v2054, %v2056
      %v2058 = vrot.slane %v1637, 2
      %v2059 = vsel %vm2032, %v2056, %v2058
      %v2060 = vrot.slane %v1638, 2
      %v2061 = vsel %vm2032, %v2058, %v2060
      %v2062 = vrot.slane %v1639, 2
      %v2063 = vsel %vm2032, %v2060, %v2062
      %v2064 = vrot.slane %v1640, 2
      %v2065 = vsel %vm2032, %v2062, %v2064
      %v2066 = vrot.slane %v1641, 2
      %v2067 = vsel %vm2032, %v2064, %v2066
      %v2068 = vrot.slane %v1642, 2
      %v2069 = vsel %vm2032, %v2066, %v2068
      %v2104 = vunpack.c.l.b16 %v2013
      %v2105 = vunpack.c.l.b16 %v2014
      %v2106 = vunpack.c.l.b16 %v2015
      %v2107 = vunpack.c.l.b16 %v2016
      %v2108 = vunpack.c.l.b16 %v2017
      %v2109 = vunpack.c.l.b16 %v2018
      %v2110 = vunpack.c.l.b16 %v2019
      %v2111 = vunpack.c.l.b16 %v2020
      %v2112 = vunpack.c.l.b16 %v2021
      %v2113 = vunpack.c.l.b16 %v2022
      %v2114 = vunpack.c.l.b16 %v2023
      %v2115 = vunpack.c.l.b16 %v2024
      %v2116 = vunpack.c.l.b16 %v2025
      %v2117 = vunpack.c.l.b16 %v2026
      %v2118 = vunpack.c.l.b16 %v2027
      %v2119 = vunpack.c.l.b16 %v2028
      %v2120 = vpack.c.b16 %v2105, %v2104
      %v2121 = vpack.c.b16 %v2107, %v2106
      %v2122 = vpack.c.b16 %v2109, %v2108
      %v2123 = vpack.c.b16 %v2111, %v2110
      %v2124 = vpack.c.b16 %v2113, %v2112
      %v2125 = vpack.c.b16 %v2115, %v2114
      %v2126 = vpack.c.b16 %v2117, %v2116
      %v2127 = vpack.c.b16 %v2119, %v2118
      %2136 = vmatpush.bf16.msra.mxu0 %v2127
      %2137 = vmatpush.bf16.msra.mxu0 %v2126
      %2138 = vmatpush.bf16.msra.mxu0 %v2125
      %2139 = vmatpush.bf16.msra.mxu0 %v2124
      %2140 = vmatpush.bf16.msra.mxu0 %v2123
      %2141 = vmatpush.bf16.msra.mxu0 %v2122
      %2142 = vmatpush.bf16.msra.mxu0 %v2121
      %2143 = vmatpush.bf16.msra.mxu0 %v2120
      %2144 = vmatmul.bf16.gmra.mxu0 %v2035
      %v2145 = vpop.f32.mrf.mxu0
      %v2146 = vadd.f32 0.0, %v2145
      %v2147 = vpop.f32.mrf.mxu0
      %v2148 = vadd.f32 0.0, %v2147
      %2149 = vmatmul.bf16.gmra.mxu0 %v2037
      %v2150 = vpop.f32.mrf.mxu0
      %v2151 = vadd.f32 0.0, %v2150
      %v2152 = vpop.f32.mrf.mxu0
      %v2153 = vadd.f32 0.0, %v2152
      %2154 = vmatmul.bf16.gmra.mxu0 %v2039
      %v2155 = vpop.f32.mrf.mxu0
      %v2156 = vadd.f32 0.0, %v2155
      %v2157 = vpop.f32.mrf.mxu0
      %v2158 = vadd.f32 0.0, %v2157
      %2159 = vmatmul.bf16.gmra.mxu0 %v2041
      %v2160 = vpop.f32.mrf.mxu0
      %v2161 = vadd.f32 0.0, %v2160
      %v2162 = vpop.f32.mrf.mxu0
      %v2163 = vadd.f32 0.0, %v2162
      %2164 = vmatmul.bf16.gmra.mxu0 %v2043
      %v2165 = vpop.f32.mrf.mxu0
      %v2166 = vadd.f32 0.0, %v2165
      %v2167 = vpop.f32.mrf.mxu0
      %v2168 = vadd.f32 0.0, %v2167
      %2169 = vmatmul.bf16.gmra.mxu0 %v2045
      %v2170 = vpop.f32.mrf.mxu0
      %v2171 = vadd.f32 0.0, %v2170
      %v2172 = vpop.f32.mrf.mxu0
      %v2173 = vadd.f32 0.0, %v2172
      %2174 = vmatmul.bf16.gmra.mxu0 %v2047
      %v2175 = vpop.f32.mrf.mxu0
      %v2176 = vadd.f32 0.0, %v2175
      %v2177 = vpop.f32.mrf.mxu0
      %v2178 = vadd.f32 0.0, %v2177
      %2179 = vmatmul.bf16.gmra.mxu0 %v2049
      %v2180 = vpop.f32.mrf.mxu0
      %v2181 = vadd.f32 0.0, %v2180
      %v2182 = vpop.f32.mrf.mxu0
      %v2183 = vadd.f32 0.0, %v2182
      %2184 = vmatmul.bf16.gmra.mxu0 %v2051
      %v2185 = vpop.f32.mrf.mxu0
      %v2186 = vadd.f32 0.0, %v2185
      %v2187 = vpop.f32.mrf.mxu0
      %v2188 = vadd.f32 0.0, %v2187
      %2189 = vmatmul.bf16.gmra.mxu0 %v2053
      %v2190 = vpop.f32.mrf.mxu0
      %v2191 = vadd.f32 0.0, %v2190
      %v2192 = vpop.f32.mrf.mxu0
      %v2193 = vadd.f32 0.0, %v2192
      %2194 = vmatmul.bf16.gmra.mxu0 %v2055
      %v2195 = vpop.f32.mrf.mxu0
      %v2196 = vadd.f32 0.0, %v2195
      %v2197 = vpop.f32.mrf.mxu0
      %v2198 = vadd.f32 0.0, %v2197
      %2199 = vmatmul.bf16.gmra.mxu0 %v2057
      %v2200 = vpop.f32.mrf.mxu0
      %v2201 = vadd.f32 0.0, %v2200
      %v2202 = vpop.f32.mrf.mxu0
      %v2203 = vadd.f32 0.0, %v2202
      %2204 = vmatmul.bf16.gmra.mxu0 %v2059
      %v2205 = vpop.f32.mrf.mxu0
      %v2206 = vadd.f32 0.0, %v2205
      %v2207 = vpop.f32.mrf.mxu0
      %v2208 = vadd.f32 0.0, %v2207
      %2209 = vmatmul.bf16.gmra.mxu0 %v2061
      %v2210 = vpop.f32.mrf.mxu0
      %v2211 = vadd.f32 0.0, %v2210
      %v2212 = vpop.f32.mrf.mxu0
      %v2213 = vadd.f32 0.0, %v2212
      %2214 = vmatmul.bf16.gmra.mxu0 %v2063
      %v2215 = vpop.f32.mrf.mxu0
      %v2216 = vadd.f32 0.0, %v2215
      %v2217 = vpop.f32.mrf.mxu0
      %v2218 = vadd.f32 0.0, %v2217
      %2219 = vmatmul.bf16.gmra.mxu0 %v2065
      %v2220 = vpop.f32.mrf.mxu0
      %v2221 = vadd.f32 0.0, %v2220
      %v2222 = vpop.f32.mrf.mxu0
      %v2223 = vadd.f32 0.0, %v2222
      %2224 = vmatmul.bf16.gmra.mxu0 %v2067
      %v2225 = vpop.f32.mrf.mxu0
      %v2226 = vadd.f32 0.0, %v2225
      %v2227 = vpop.f32.mrf.mxu0
      %v2228 = vadd.f32 0.0, %v2227
      %2229 = vmatmul.bf16.gmra.mxu0 %v2069
      %v2230 = vpop.f32.mrf.mxu0
      %v2231 = vadd.f32 0.0, %v2230
      %v2232 = vpop.f32.mrf.mxu0
      %v2233 = vadd.f32 0.0, %v2232
      %2234 = vdwg.mxu0
      %v2235 = vadd.f32 %v1975, %v2146
      %v2236 = vadd.f32 %v1976, %v2148
      %v2237 = vadd.f32 %v1977, %v2151
      %v2238 = vadd.f32 %v1978, %v2153
      %v2239 = vadd.f32 %v1979, %v2156
      %v2240 = vadd.f32 %v1980, %v2158
      %v2241 = vadd.f32 %v1981, %v2161
      %v2242 = vadd.f32 %v1982, %v2163
      %v2243 = vadd.f32 %v1983, %v2166
      %v2244 = vadd.f32 %v1984, %v2168
      %v2245 = vadd.f32 %v1985, %v2171
      %v2246 = vadd.f32 %v1986, %v2173
      %v2247 = vadd.f32 %v1987, %v2176
      %v2248 = vadd.f32 %v1988, %v2178
      %v2249 = vadd.f32 %v1989, %v2181
      %v2250 = vadd.f32 %v1990, %v2183
      %v2251 = vadd.f32 %v1991, %v2186
      %v2252 = vadd.f32 %v1992, %v2188
      %v2253 = vadd.f32 %v1993, %v2191
      %v2254 = vadd.f32 %v1994, %v2193
      %v2255 = vadd.f32 %v1995, %v2196
      %v2256 = vadd.f32 %v1996, %v2198
      %v2257 = vadd.f32 %v1997, %v2201
      %v2258 = vadd.f32 %v1998, %v2203
      %v2259 = vadd.f32 %v1999, %v2206
      %v2260 = vadd.f32 %v2000, %v2208
      %v2261 = vadd.f32 %v2001, %v2211
      %v2262 = vadd.f32 %v2002, %v2213
      %v2263 = vadd.f32 %v2003, %v2216
      %v2264 = vadd.f32 %v2004, %v2218
      %v2265 = vadd.f32 %v2005, %v2221
      %v2266 = vadd.f32 %v2006, %v2223
      %v2267 = vadd.f32 %v2007, %v2226
      %v2268 = vadd.f32 %v2008, %v2228
      %v2269 = vadd.f32 %v2009, %v2231
      %v2270 = vadd.f32 %v2010, %v2233
      %v2271 = vld [vmem:[%s206 + $0x10] sm:$0xc]
      %v2272 = vld [vmem:[%s206 + $0x14] sm:$0xf]
      %v2273 = vld [vmem:[%s206 + $0x18] sm:$0xf]
      %v2274 = vld [vmem:[%s206 + $0x1c] sm:$0xf]
      %v2275 = vld [vmem:[%s206 + $0x20] sm:$0xf]
      %v2276 = vld [vmem:[%s206 + $0x24] sm:$0xf]
      %v2277 = vld [vmem:[%s206 + $0x28] sm:$0xf]
      %v2278 = vld [vmem:[%s206 + $0x2c] sm:$0xf]
      %v2279 = vld [vmem:[%s206 + $0x30] sm:$0xf]
      %v2280 = vld [vmem:[%s206 + $0x34] sm:$0xf]
      %v2281 = vld [vmem:[%s206 + $0x38] sm:$0xf]
      %v2282 = vld [vmem:[%s206 + $0x3c] sm:$0xf]
      %v2283 = vld [vmem:[%s206 + $0x40] sm:$0xf]
      %v2284 = vld [vmem:[%s206 + $0x44] sm:$0xf]
      %v2285 = vld [vmem:[%s206 + $0x48] sm:$0xf]
      %v2286 = vld [vmem:[%s206 + $0x4c] sm:$0xf]
      %v2287 = vld [vmem:[%s206 + $0x50] sm:$0xf]
      %v2288 = vld [vmem:[%s206 + $0x54] sm:$0xf]
      %v2289 = vld [vmem:[%s206 + $0x58] sm:$0xf]
      %v2290 = vld [vmem:[%s206 + $0x5c] sm:$0xf]
      %v2291 = vld [vmem:[%s206 + $0x60] sm:$0xf]
      %v2292 = vld [vmem:[%s206 + $0x64] sm:$0xf]
      %v2293 = vld [vmem:[%s206 + $0x68] sm:$0xf]
      %v2294 = vld [vmem:[%s206 + $0x6c] sm:$0xf]
      %v2295 = vld [vmem:[%s206 + $0x70] sm:$0xf]
      %v2296 = vld [vmem:[%s206 + $0x74] sm:$0xf]
      %v2297 = vld [vmem:[%s206 + $0x78] sm:$0xf]
      %v2298 = vld [vmem:[%s206 + $0x7c] sm:$0xf]
      %v2299 = vld [vmem:[%s206 + $0x80] sm:$0xf]
      %v2300 = vld [vmem:[%s206 + $0x84] sm:$0xf]
      %v2301 = vld [vmem:[%s206 + $0x88] sm:$0xf]
      %v2302 = vld [vmem:[%s206 + $0x8c] sm:$0xf]
      %v2303 = vld [vmem:[%s206 + $0x90] sm:$0xf]
      %v2304 = vld [vmem:[%s206 + $0x94] sm:$0xf]
      %v2305 = vld [vmem:[%s206 + $0x98] sm:$0xf]
      %v2306 = vld [vmem:[%s206 + $0x9c] sm:$0xf]
      %v2307 = vld [vmem:[%s206 + $0xa0] sm:$0x1]
      %s2308 = scalar_lea.vmem %s210, 384
      %v2309 = vld [vmem:[%s2308] sm:$0xf]
      %v2310 = vld [vmem:[%s2308 + $0x4] sm:$0xf]
      %v2311 = vld [vmem:[%s2308 + $0x8] sm:$0xf]
      %v2312 = vld [vmem:[%s2308 + $0xc] sm:$0xf]
      %v2313 = vld [vmem:[%s2308 + $0x10] sm:$0xf]
      %v2314 = vld [vmem:[%s2308 + $0x14] sm:$0xf]
      %v2315 = vld [vmem:[%s2308 + $0x18] sm:$0xf]
      %v2316 = vld [vmem:[%s2308 + $0x1c] sm:$0xf]
      %v2317 = vld [vmem:[%s2308 + $0x20] sm:$0xf]
      %v2318 = vld [vmem:[%s2308 + $0x24] sm:$0xf]
      %v2319 = vld [vmem:[%s2308 + $0x28] sm:$0xf]
      %v2320 = vld [vmem:[%s2308 + $0x2c] sm:$0xf]
      %v2321 = vld [vmem:[%s2308 + $0x30] sm:$0xf]
      %v2322 = vld [vmem:[%s2308 + $0x34] sm:$0xf]
      %v2323 = vld [vmem:[%s2308 + $0x38] sm:$0xf]
      %v2324 = vld [vmem:[%s2308 + $0x3c] sm:$0xf]
      %v2362 = vunpack.c.l.b16 %v2271
      %v2363 = vunpack.c.l.b16 %v2272
      %v2364 = vunpack.c.l.b16 %v2273
      %v2365 = vunpack.c.l.b16 %v2274
      %v2366 = vunpack.c.l.b16 %v2275
      %v2367 = vunpack.c.l.b16 %v2276
      %v2368 = vunpack.c.l.b16 %v2277
      %v2369 = vunpack.c.l.b16 %v2278
      %v2370 = vunpack.c.l.b16 %v2279
      %v2371 = vunpack.c.l.b16 %v2280
      %v2372 = vunpack.c.l.b16 %v2281
      %v2373 = vunpack.c.l.b16 %v2282
      %v2374 = vunpack.c.l.b16 %v2283
      %v2375 = vunpack.c.l.b16 %v2284
      %v2376 = vunpack.c.l.b16 %v2285
      %v2377 = vunpack.c.l.b16 %v2286
      %v2378 = vunpack.c.l.b16 %v2287
      %v2379 = vunpack.c.l.b16 %v2288
      %v2380 = vunpack.c.l.b16 %v2289
      %v2381 = vunpack.c.l.b16 %v2290
      %v2382 = vunpack.c.l.b16 %v2291
      %v2383 = vunpack.c.l.b16 %v2292
      %v2384 = vunpack.c.l.b16 %v2293
      %v2385 = vunpack.c.l.b16 %v2294
      %v2386 = vunpack.c.l.b16 %v2295
      %v2387 = vunpack.c.l.b16 %v2296
      %v2388 = vunpack.c.l.b16 %v2297
      %v2389 = vunpack.c.l.b16 %v2298
      %v2390 = vunpack.c.l.b16 %v2299
      %v2391 = vunpack.c.l.b16 %v2300
      %v2392 = vunpack.c.l.b16 %v2301
      %v2393 = vunpack.c.l.b16 %v2302
      %v2394 = vunpack.c.l.b16 %v2303
      %v2395 = vunpack.c.l.b16 %v2304
      %v2396 = vunpack.c.l.b16 %v2305
      %v2397 = vunpack.c.l.b16 %v2306
      %v2398 = vunpack.c.l.b16 %v2307
      %v2399 = vpack.c.b16 %v2363, %v2362
      %v2400 = vpack.c.b16 %v2365, %v2364
      %v2401 = vpack.c.b16 %v2367, %v2366
      %v2402 = vpack.c.b16 %v2369, %v2368
      %v2403 = vpack.c.b16 %v2371, %v2370
      %v2404 = vpack.c.b16 %v2373, %v2372
      %v2405 = vpack.c.b16 %v2375, %v2374
      %v2406 = vpack.c.b16 %v2377, %v2376
      %v2407 = vpack.c.b16 %v2379, %v2378
      %v2408 = vpack.c.b16 %v2381, %v2380
      %v2409 = vpack.c.b16 %v2383, %v2382
      %v2410 = vpack.c.b16 %v2385, %v2384
      %v2411 = vpack.c.b16 %v2387, %v2386
      %v2412 = vpack.c.b16 %v2389, %v2388
      %v2413 = vpack.c.b16 %v2391, %v2390
      %v2414 = vpack.c.b16 %v2393, %v2392
      %v2415 = vpack.c.b16 %v2395, %v2394
      %v2416 = vpack.c.b16 %v2397, %v2396
      %v2417 = vpack.c.b16 %v2398, %v2398
      %v2418 = vrot.slane %v2399, 2
      %v2419 = vrot.slane %v2400, 2
      %v2420 = vsel %vm2032, %v2418, %v2419
      %v2421 = vrot.slane %v2401, 2
      %v2422 = vsel %vm2032, %v2419, %v2421
      %v2423 = vrot.slane %v2402, 2
      %v2424 = vsel %vm2032, %v2421, %v2423
      %v2425 = vrot.slane %v2403, 2
      %v2426 = vsel %vm2032, %v2423, %v2425
      %v2427 = vrot.slane %v2404, 2
      %v2428 = vsel %vm2032, %v2425, %v2427
      %v2429 = vrot.slane %v2405, 2
      %v2430 = vsel %vm2032, %v2427, %v2429
      %v2431 = vrot.slane %v2406, 2
      %v2432 = vsel %vm2032, %v2429, %v2431
      %v2433 = vrot.slane %v2407, 2
      %v2434 = vsel %vm2032, %v2431, %v2433
      %v2435 = vrot.slane %v2408, 2
      %v2436 = vsel %vm2032, %v2433, %v2435
      %v2437 = vrot.slane %v2409, 2
      %v2438 = vsel %vm2032, %v2435, %v2437
      %v2439 = vrot.slane %v2410, 2
      %v2440 = vsel %vm2032, %v2437, %v2439
      %v2441 = vrot.slane %v2411, 2
      %v2442 = vsel %vm2032, %v2439, %v2441
      %v2443 = vrot.slane %v2412, 2
      %v2444 = vsel %vm2032, %v2441, %v2443
      %v2445 = vrot.slane %v2413, 2
      %v2446 = vsel %vm2032, %v2443, %v2445
      %v2447 = vrot.slane %v2414, 2
      %v2448 = vsel %vm2032, %v2445, %v2447
      %v2449 = vrot.slane %v2415, 2
      %v2450 = vsel %vm2032, %v2447, %v2449
      %v2451 = vrot.slane %v2416, 2
      %v2452 = vsel %vm2032, %v2449, %v2451
      %v2453 = vrot.slane %v2417, 2
      %v2454 = vsel %vm2032, %v2451, %v2453
      %v2489 = vunpack.c.l.b16 %v2309
      %v2490 = vunpack.c.l.b16 %v2310
      %v2491 = vunpack.c.l.b16 %v2311
      %v2492 = vunpack.c.l.b16 %v2312
      %v2493 = vunpack.c.l.b16 %v2313
      %v2494 = vunpack.c.l.b16 %v2314
      %v2495 = vunpack.c.l.b16 %v2315
      %v2496 = vunpack.c.l.b16 %v2316
      %v2497 = vunpack.c.l.b16 %v2317
      %v2498 = vunpack.c.l.b16 %v2318
      %v2499 = vunpack.c.l.b16 %v2319
      %v2500 = vunpack.c.l.b16 %v2320
      %v2501 = vunpack.c.l.b16 %v2321
      %v2502 = vunpack.c.l.b16 %v2322
      %v2503 = vunpack.c.l.b16 %v2323
      %v2504 = vunpack.c.l.b16 %v2324
      %v2505 = vpack.c.b16 %v2490, %v2489
      %v2506 = vpack.c.b16 %v2492, %v2491
      %v2507 = vpack.c.b16 %v2494, %v2493
      %v2508 = vpack.c.b16 %v2496, %v2495
      %v2509 = vpack.c.b16 %v2498, %v2497
      %v2510 = vpack.c.b16 %v2500, %v2499
      %v2511 = vpack.c.b16 %v2502, %v2501
      %v2512 = vpack.c.b16 %v2504, %v2503
      %2521 = vmatpush.bf16.msra.mxu0 %v2512
      %2522 = vmatpush.bf16.msra.mxu0 %v2511
      %2523 = vmatpush.bf16.msra.mxu0 %v2510
      %2524 = vmatpush.bf16.msra.mxu0 %v2509
      %2525 = vmatpush.bf16.msra.mxu0 %v2508
      %2526 = vmatpush.bf16.msra.mxu0 %v2507
      %2527 = vmatpush.bf16.msra.mxu0 %v2506
      %2528 = vmatpush.bf16.msra.mxu0 %v2505
      %2529 = vmatmul.bf16.gmra.mxu0 %v2420
      %v2530 = vpop.f32.mrf.mxu0
      %v2531 = vadd.f32 0.0, %v2530
      %v2532 = vpop.f32.mrf.mxu0
      %v2533 = vadd.f32 0.0, %v2532
      %2534 = vmatmul.bf16.gmra.mxu0 %v2422
      %v2535 = vpop.f32.mrf.mxu0
      %v2536 = vadd.f32 0.0, %v2535
      %v2537 = vpop.f32.mrf.mxu0
      %v2538 = vadd.f32 0.0, %v2537
      %2539 = vmatmul.bf16.gmra.mxu0 %v2424
      %v2540 = vpop.f32.mrf.mxu0
      %v2541 = vadd.f32 0.0, %v2540
      %v2542 = vpop.f32.mrf.mxu0
      %v2543 = vadd.f32 0.0, %v2542
      %2544 = vmatmul.bf16.gmra.mxu0 %v2426
      %v2545 = vpop.f32.mrf.mxu0
      %v2546 = vadd.f32 0.0, %v2545
      %v2547 = vpop.f32.mrf.mxu0
      %v2548 = vadd.f32 0.0, %v2547
      %2549 = vmatmul.bf16.gmra.mxu0 %v2428
      %v2550 = vpop.f32.mrf.mxu0
      %v2551 = vadd.f32 0.0, %v2550
      %v2552 = vpop.f32.mrf.mxu0
      %v2553 = vadd.f32 0.0, %v2552
      %2554 = vmatmul.bf16.gmra.mxu0 %v2430
      %v2555 = vpop.f32.mrf.mxu0
      %v2556 = vadd.f32 0.0, %v2555
      %v2557 = vpop.f32.mrf.mxu0
      %v2558 = vadd.f32 0.0, %v2557
      %2559 = vmatmul.bf16.gmra.mxu0 %v2432
      %v2560 = vpop.f32.mrf.mxu0
      %v2561 = vadd.f32 0.0, %v2560
      %v2562 = vpop.f32.mrf.mxu0
      %v2563 = vadd.f32 0.0, %v2562
      %2564 = vmatmul.bf16.gmra.mxu0 %v2434
      %v2565 = vpop.f32.mrf.mxu0
      %v2566 = vadd.f32 0.0, %v2565
      %v2567 = vpop.f32.mrf.mxu0
      %v2568 = vadd.f32 0.0, %v2567
      %2569 = vmatmul.bf16.gmra.mxu0 %v2436
      %v2570 = vpop.f32.mrf.mxu0
      %v2571 = vadd.f32 0.0, %v2570
      %v2572 = vpop.f32.mrf.mxu0
      %v2573 = vadd.f32 0.0, %v2572
      %2574 = vmatmul.bf16.gmra.mxu0 %v2438
      %v2575 = vpop.f32.mrf.mxu0
      %v2576 = vadd.f32 0.0, %v2575
      %v2577 = vpop.f32.mrf.mxu0
      %v2578 = vadd.f32 0.0, %v2577
      %2579 = vmatmul.bf16.gmra.mxu0 %v2440
      %v2580 = vpop.f32.mrf.mxu0
      %v2581 = vadd.f32 0.0, %v2580
      %v2582 = vpop.f32.mrf.mxu0
      %v2583 = vadd.f32 0.0, %v2582
      %2584 = vmatmul.bf16.gmra.mxu0 %v2442
      %v2585 = vpop.f32.mrf.mxu0
      %v2586 = vadd.f32 0.0, %v2585
      %v2587 = vpop.f32.mrf.mxu0
      %v2588 = vadd.f32 0.0, %v2587
      %2589 = vmatmul.bf16.gmra.mxu0 %v2444
      %v2590 = vpop.f32.mrf.mxu0
      %v2591 = vadd.f32 0.0, %v2590
      %v2592 = vpop.f32.mrf.mxu0
      %v2593 = vadd.f32 0.0, %v2592
      %2594 = vmatmul.bf16.gmra.mxu0 %v2446
      %v2595 = vpop.f32.mrf.mxu0
      %v2596 = vadd.f32 0.0, %v2595
      %v2597 = vpop.f32.mrf.mxu0
      %v2598 = vadd.f32 0.0, %v2597
      %2599 = vmatmul.bf16.gmra.mxu0 %v2448
      %v2600 = vpop.f32.mrf.mxu0
      %v2601 = vadd.f32 0.0, %v2600
      %v2602 = vpop.f32.mrf.mxu0
      %v2603 = vadd.f32 0.0, %v2602
      %2604 = vmatmul.bf16.gmra.mxu0 %v2450
      %v2605 = vpop.f32.mrf.mxu0
      %v2606 = vadd.f32 0.0, %v2605
      %v2607 = vpop.f32.mrf.mxu0
      %v2608 = vadd.f32 0.0, %v2607
      %2609 = vmatmul.bf16.gmra.mxu0 %v2452
      %v2610 = vpop.f32.mrf.mxu0
      %v2611 = vadd.f32 0.0, %v2610
      %v2612 = vpop.f32.mrf.mxu0
      %v2613 = vadd.f32 0.0, %v2612
      %2614 = vmatmul.bf16.gmra.mxu0 %v2454
      %v2615 = vpop.f32.mrf.mxu0
      %v2616 = vadd.f32 0.0, %v2615
      %v2617 = vpop.f32.mrf.mxu0
      %v2618 = vadd.f32 0.0, %v2617
      %2619 = vdwg.mxu0
      %v2620 = vadd.f32 %v2235, %v2531
      %v2621 = vadd.f32 %v2236, %v2533
      %v2622 = vadd.f32 %v2237, %v2536
      %v2623 = vadd.f32 %v2238, %v2538
      %v2624 = vadd.f32 %v2239, %v2541
      %v2625 = vadd.f32 %v2240, %v2543
      %v2626 = vadd.f32 %v2241, %v2546
      %v2627 = vadd.f32 %v2242, %v2548
      %v2628 = vadd.f32 %v2243, %v2551
      %v2629 = vadd.f32 %v2244, %v2553
      %v2630 = vadd.f32 %v2245, %v2556
      %v2631 = vadd.f32 %v2246, %v2558
      %v2632 = vadd.f32 %v2247, %v2561
      %v2633 = vadd.f32 %v2248, %v2563
      %v2634 = vadd.f32 %v2249, %v2566
      %v2635 = vadd.f32 %v2250, %v2568
      %v2636 = vadd.f32 %v2251, %v2571
      %v2637 = vadd.f32 %v2252, %v2573
      %v2638 = vadd.f32 %v2253, %v2576
      %v2639 = vadd.f32 %v2254, %v2578
      %v2640 = vadd.f32 %v2255, %v2581
      %v2641 = vadd.f32 %v2256, %v2583
      %v2642 = vadd.f32 %v2257, %v2586
      %v2643 = vadd.f32 %v2258, %v2588
      %v2644 = vadd.f32 %v2259, %v2591
      %v2645 = vadd.f32 %v2260, %v2593
      %v2646 = vadd.f32 %v2261, %v2596
      %v2647 = vadd.f32 %v2262, %v2598
      %v2648 = vadd.f32 %v2263, %v2601
      %v2649 = vadd.f32 %v2264, %v2603
      %v2650 = vadd.f32 %v2265, %v2606
      %v2651 = vadd.f32 %v2266, %v2608
      %v2652 = vadd.f32 %v2267, %v2611
      %v2653 = vadd.f32 %v2268, %v2613
      %v2654 = vadd.f32 %v2269, %v2616
      %v2655 = vadd.f32 %v2270, %v2618
      %v2656 = vld [vmem:[%s206 + $0xa0] sm:$0x3]
      %s2657 = scalar_lea.vmem %s210, 448
      %v2658 = vld [vmem:[%s2657] sm:$0xf]
      %v2659 = vld [vmem:[%s2657 + $0x4] sm:$0xf]
      %v2660 = vld [vmem:[%s2657 + $0x8] sm:$0xf]
      %v2661 = vld [vmem:[%s2657 + $0xc] sm:$0xf]
      %v2662 = vld [vmem:[%s2657 + $0x10] sm:$0xf]
      %v2663 = vld [vmem:[%s2657 + $0x14] sm:$0xf]
      %v2664 = vld [vmem:[%s2657 + $0x18] sm:$0xf]
      %v2665 = vld [vmem:[%s2657 + $0x1c] sm:$0xf]
      %v2666 = vld [vmem:[%s2657 + $0x20] sm:$0xf]
      %v2667 = vld [vmem:[%s2657 + $0x24] sm:$0xf]
      %v2668 = vld [vmem:[%s2657 + $0x28] sm:$0xf]
      %v2669 = vld [vmem:[%s2657 + $0x2c] sm:$0xf]
      %v2670 = vld [vmem:[%s2657 + $0x30] sm:$0xf]
      %v2671 = vld [vmem:[%s2657 + $0x34] sm:$0xf]
      %v2672 = vld [vmem:[%s2657 + $0x38] sm:$0xf]
      %v2673 = vld [vmem:[%s2657 + $0x3c] sm:$0xf]
      %v2675 = vunpack.c.l.b16 %v2656
      %v2676 = vpack.c.b16 %v2675, %v2675
      %vm2677 = vsmask.f32 5376
      %v2679 = vshrl.u32 %v2399, 16
      %v2681 = vrot.slane %v2679, 2
      %v2682 = vshll.u32 %v2399, 16
      %v2684 = vrot.slane %v2682, 3
      %v2685 = vor.u32 %v2681, %v2684
      %v2687 = vshrl.u32 %v2400, 16
      %v2689 = vrot.slane %v2687, 2
      %v2690 = vshll.u32 %v2400, 16
      %v2692 = vrot.slane %v2690, 3
      %v2693 = vor.u32 %v2689, %v2692
      %v2694 = vsel %vm2677, %v2685, %v2693
      %v2696 = vshrl.u32 %v2401, 16
      %v2698 = vrot.slane %v2696, 2
      %v2699 = vshll.u32 %v2401, 16
      %v2701 = vrot.slane %v2699, 3
      %v2702 = vor.u32 %v2698, %v2701
      %v2703 = vsel %vm2677, %v2693, %v2702
      %v2705 = vshrl.u32 %v2402, 16
      %v2707 = vrot.slane %v2705, 2
      %v2708 = vshll.u32 %v2402, 16
      %v2710 = vrot.slane %v2708, 3
      %v2711 = vor.u32 %v2707, %v2710
      %v2712 = vsel %vm2677, %v2702, %v2711
      %v2714 = vshrl.u32 %v2403, 16
      %v2716 = vrot.slane %v2714, 2
      %v2717 = vshll.u32 %v2403, 16
      %v2719 = vrot.slane %v2717, 3
      %v2720 = vor.u32 %v2716, %v2719
      %v2721 = vsel %vm2677, %v2711, %v2720
      %v2723 = vshrl.u32 %v2404, 16
      %v2725 = vrot.slane %v2723, 2
      %v2726 = vshll.u32 %v2404, 16
      %v2728 = vrot.slane %v2726, 3
      %v2729 = vor.u32 %v2725, %v2728
      %v2730 = vsel %vm2677, %v2720, %v2729
      %v2732 = vshrl.u32 %v2405, 16
      %v2734 = vrot.slane %v2732, 2
      %v2735 = vshll.u32 %v2405, 16
      %v2737 = vrot.slane %v2735, 3
      %v2738 = vor.u32 %v2734, %v2737
      %v2739 = vsel %vm2677, %v2729, %v2738
      %v2741 = vshrl.u32 %v2406, 16
      %v2743 = vrot.slane %v2741, 2
      %v2744 = vshll.u32 %v2406, 16
      %v2746 = vrot.slane %v2744, 3
      %v2747 = vor.u32 %v2743, %v2746
      %v2748 = vsel %vm2677, %v2738, %v2747
      %v2750 = vshrl.u32 %v2407, 16
      %v2752 = vrot.slane %v2750, 2
      %v2753 = vshll.u32 %v2407, 16
      %v2755 = vrot.slane %v2753, 3
      %v2756 = vor.u32 %v2752, %v2755
      %v2757 = vsel %vm2677, %v2747, %v2756
      %v2759 = vshrl.u32 %v2408, 16
      %v2761 = vrot.slane %v2759, 2
      %v2762 = vshll.u32 %v2408, 16
      %v2764 = vrot.slane %v2762, 3
      %v2765 = vor.u32 %v2761, %v2764
      %v2766 = vsel %vm2677, %v2756, %v2765
      %v2768 = vshrl.u32 %v2409, 16
      %v2770 = vrot.slane %v2768, 2
      %v2771 = vshll.u32 %v2409, 16
      %v2773 = vrot.slane %v2771, 3
      %v2774 = vor.u32 %v2770, %v2773
      %v2775 = vsel %vm2677, %v2765, %v2774
      %v2777 = vshrl.u32 %v2410, 16
      %v2779 = vrot.slane %v2777, 2
      %v2780 = vshll.u32 %v2410, 16
      %v2782 = vrot.slane %v2780, 3
      %v2783 = vor.u32 %v2779, %v2782
      %v2784 = vsel %vm2677, %v2774, %v2783
      %v2786 = vshrl.u32 %v2411, 16
      %v2788 = vrot.slane %v2786, 2
      %v2789 = vshll.u32 %v2411, 16
      %v2791 = vrot.slane %v2789, 3
      %v2792 = vor.u32 %v2788, %v2791
      %v2793 = vsel %vm2677, %v2783, %v2792
      %v2795 = vshrl.u32 %v2412, 16
      %v2797 = vrot.slane %v2795, 2
      %v2798 = vshll.u32 %v2412, 16
      %v2800 = vrot.slane %v2798, 3
      %v2801 = vor.u32 %v2797, %v2800
      %v2802 = vsel %vm2677, %v2792, %v2801
      %v2804 = vshrl.u32 %v2413, 16
      %v2806 = vrot.slane %v2804, 2
      %v2807 = vshll.u32 %v2413, 16
      %v2809 = vrot.slane %v2807, 3
      %v2810 = vor.u32 %v2806, %v2809
      %v2811 = vsel %vm2677, %v2801, %v2810
      %v2813 = vshrl.u32 %v2414, 16
      %v2815 = vrot.slane %v2813, 2
      %v2816 = vshll.u32 %v2414, 16
      %v2818 = vrot.slane %v2816, 3
      %v2819 = vor.u32 %v2815, %v2818
      %v2820 = vsel %vm2677, %v2810, %v2819
      %v2822 = vshrl.u32 %v2415, 16
      %v2824 = vrot.slane %v2822, 2
      %v2825 = vshll.u32 %v2415, 16
      %v2827 = vrot.slane %v2825, 3
      %v2828 = vor.u32 %v2824, %v2827
      %v2829 = vsel %vm2677, %v2819, %v2828
      %v2831 = vshrl.u32 %v2416, 16
      %v2833 = vrot.slane %v2831, 2
      %v2834 = vshll.u32 %v2416, 16
      %v2836 = vrot.slane %v2834, 3
      %v2837 = vor.u32 %v2833, %v2836
      %v2838 = vsel %vm2677, %v2828, %v2837
      %v2840 = vshrl.u32 %v2676, 16
      %v2842 = vrot.slane %v2840, 2
      %v2843 = vshll.u32 %v2676, 16
      %v2845 = vrot.slane %v2843, 3
      %v2846 = vor.u32 %v2842, %v2845
      %v2847 = vsel %vm2677, %v2837, %v2846
      %v2882 = vunpack.c.l.b16 %v2658
      %v2883 = vunpack.c.l.b16 %v2659
      %v2884 = vunpack.c.l.b16 %v2660
      %v2885 = vunpack.c.l.b16 %v2661
      %v2886 = vunpack.c.l.b16 %v2662
      %v2887 = vunpack.c.l.b16 %v2663
      %v2888 = vunpack.c.l.b16 %v2664
      %v2889 = vunpack.c.l.b16 %v2665
      %v2890 = vunpack.c.l.b16 %v2666
      %v2891 = vunpack.c.l.b16 %v2667
      %v2892 = vunpack.c.l.b16 %v2668
      %v2893 = vunpack.c.l.b16 %v2669
      %v2894 = vunpack.c.l.b16 %v2670
      %v2895 = vunpack.c.l.b16 %v2671
      %v2896 = vunpack.c.l.b16 %v2672
      %v2897 = vunpack.c.l.b16 %v2673
      %v2898 = vpack.c.b16 %v2883, %v2882
      %v2899 = vpack.c.b16 %v2885, %v2884
      %v2900 = vpack.c.b16 %v2887, %v2886
      %v2901 = vpack.c.b16 %v2889, %v2888
      %v2902 = vpack.c.b16 %v2891, %v2890
      %v2903 = vpack.c.b16 %v2893, %v2892
      %v2904 = vpack.c.b16 %v2895, %v2894
      %v2905 = vpack.c.b16 %v2897, %v2896
      %2914 = vmatpush.bf16.msra.mxu0 %v2905
      %2915 = vmatpush.bf16.msra.mxu0 %v2904
      %2916 = vmatpush.bf16.msra.mxu0 %v2903
      %2917 = vmatpush.bf16.msra.mxu0 %v2902
      %2918 = vmatpush.bf16.msra.mxu0 %v2901
      %2919 = vmatpush.bf16.msra.mxu0 %v2900
      %2920 = vmatpush.bf16.msra.mxu0 %v2899
      %2921 = vmatpush.bf16.msra.mxu0 %v2898
      %2922 = vmatmul.bf16.gmra.mxu0 %v2694
      %v2923 = vpop.f32.mrf.mxu0
      %v2924 = vadd.f32 0.0, %v2923
      %v2925 = vpop.f32.mrf.mxu0
      %v2926 = vadd.f32 0.0, %v2925
      %2927 = vmatmul.bf16.gmra.mxu0 %v2703
      %v2928 = vpop.f32.mrf.mxu0
      %v2929 = vadd.f32 0.0, %v2928
      %v2930 = vpop.f32.mrf.mxu0
      %v2931 = vadd.f32 0.0, %v2930
      %2932 = vmatmul.bf16.gmra.mxu0 %v2712
      %v2933 = vpop.f32.mrf.mxu0
      %v2934 = vadd.f32 0.0, %v2933
      %v2935 = vpop.f32.mrf.mxu0
      %v2936 = vadd.f32 0.0, %v2935
      %2937 = vmatmul.bf16.gmra.mxu0 %v2721
      %v2938 = vpop.f32.mrf.mxu0
      %v2939 = vadd.f32 0.0, %v2938
      %v2940 = vpop.f32.mrf.mxu0
      %v2941 = vadd.f32 0.0, %v2940
      %2942 = vmatmul.bf16.gmra.mxu0 %v2730
      %v2943 = vpop.f32.mrf.mxu0
      %v2944 = vadd.f32 0.0, %v2943
      %v2945 = vpop.f32.mrf.mxu0
      %v2946 = vadd.f32 0.0, %v2945
      %2947 = vmatmul.bf16.gmra.mxu0 %v2739
      %v2948 = vpop.f32.mrf.mxu0
      %v2949 = vadd.f32 0.0, %v2948
      %v2950 = vpop.f32.mrf.mxu0
      %v2951 = vadd.f32 0.0, %v2950
      %2952 = vmatmul.bf16.gmra.mxu0 %v2748
      %v2953 = vpop.f32.mrf.mxu0
      %v2954 = vadd.f32 0.0, %v2953
      %v2955 = vpop.f32.mrf.mxu0
      %v2956 = vadd.f32 0.0, %v2955
      %2957 = vmatmul.bf16.gmra.mxu0 %v2757
      %v2958 = vpop.f32.mrf.mxu0
      %v2959 = vadd.f32 0.0, %v2958
      %v2960 = vpop.f32.mrf.mxu0
      %v2961 = vadd.f32 0.0, %v2960
      %2962 = vmatmul.bf16.gmra.mxu0 %v2766
      %v2963 = vpop.f32.mrf.mxu0
      %v2964 = vadd.f32 0.0, %v2963
      %v2965 = vpop.f32.mrf.mxu0
      %v2966 = vadd.f32 0.0, %v2965
      %2967 = vmatmul.bf16.gmra.mxu0 %v2775
      %v2968 = vpop.f32.mrf.mxu0
      %v2969 = vadd.f32 0.0, %v2968
      %v2970 = vpop.f32.mrf.mxu0
      %v2971 = vadd.f32 0.0, %v2970
      %2972 = vmatmul.bf16.gmra.mxu0 %v2784
      %v2973 = vpop.f32.mrf.mxu0
      %v2974 = vadd.f32 0.0, %v2973
      %v2975 = vpop.f32.mrf.mxu0
      %v2976 = vadd.f32 0.0, %v2975
      %2977 = vmatmul.bf16.gmra.mxu0 %v2793
      %v2978 = vpop.f32.mrf.mxu0
      %v2979 = vadd.f32 0.0, %v2978
      %v2980 = vpop.f32.mrf.mxu0
      %v2981 = vadd.f32 0.0, %v2980
      %2982 = vmatmul.bf16.gmra.mxu0 %v2802
      %v2983 = vpop.f32.mrf.mxu0
      %v2984 = vadd.f32 0.0, %v2983
      %v2985 = vpop.f32.mrf.mxu0
      %v2986 = vadd.f32 0.0, %v2985
      %2987 = vmatmul.bf16.gmra.mxu0 %v2811
      %v2988 = vpop.f32.mrf.mxu0
      %v2989 = vadd.f32 0.0, %v2988
      %v2990 = vpop.f32.mrf.mxu0
      %v2991 = vadd.f32 0.0, %v2990
      %2992 = vmatmul.bf16.gmra.mxu0 %v2820
      %v2993 = vpop.f32.mrf.mxu0
      %v2994 = vadd.f32 0.0, %v2993
      %v2995 = vpop.f32.mrf.mxu0
      %v2996 = vadd.f32 0.0, %v2995
      %2997 = vmatmul.bf16.gmra.mxu0 %v2829
      %v2998 = vpop.f32.mrf.mxu0
      %v2999 = vadd.f32 0.0, %v2998
      %v3000 = vpop.f32.mrf.mxu0
      %v3001 = vadd.f32 0.0, %v3000
      %3002 = vmatmul.bf16.gmra.mxu0 %v2838
      %v3003 = vpop.f32.mrf.mxu0
      %v3004 = vadd.f32 0.0, %v3003
      %v3005 = vpop.f32.mrf.mxu0
      %v3006 = vadd.f32 0.0, %v3005
      %3007 = vmatmul.bf16.gmra.mxu0 %v2847
      %v3008 = vpop.f32.mrf.mxu0
      %v3009 = vadd.f32 0.0, %v3008
      %v3010 = vpop.f32.mrf.mxu0
      %v3011 = vadd.f32 0.0, %v3010
      %3012 = vdwg.mxu0
      %v3013 = vadd.f32 %v2620, %v2924
      %v3014 = vadd.f32 %v2621, %v2926
      %v3015 = vadd.f32 %v2622, %v2929
      %v3016 = vadd.f32 %v2623, %v2931
      %v3017 = vadd.f32 %v2624, %v2934
      %v3018 = vadd.f32 %v2625, %v2936
      %v3019 = vadd.f32 %v2626, %v2939
      %v3020 = vadd.f32 %v2627, %v2941
      %v3021 = vadd.f32 %v2628, %v2944
      %v3022 = vadd.f32 %v2629, %v2946
      %v3023 = vadd.f32 %v2630, %v2949
      %v3024 = vadd.f32 %v2631, %v2951
      %v3025 = vadd.f32 %v2632, %v2954
      %v3026 = vadd.f32 %v2633, %v2956
      %v3027 = vadd.f32 %v2634, %v2959
      %v3028 = vadd.f32 %v2635, %v2961
      %v3029 = vadd.f32 %v2636, %v2964
      %v3030 = vadd.f32 %v2637, %v2966
      %v3031 = vadd.f32 %v2638, %v2969
      %v3032 = vadd.f32 %v2639, %v2971
      %v3033 = vadd.f32 %v2640, %v2974
      %v3034 = vadd.f32 %v2641, %v2976
      %v3035 = vadd.f32 %v2642, %v2979
      %v3036 = vadd.f32 %v2643, %v2981
      %v3037 = vadd.f32 %v2644, %v2984
      %v3038 = vadd.f32 %v2645, %v2986
      %v3039 = vadd.f32 %v2646, %v2989
      %v3040 = vadd.f32 %v2647, %v2991
      %v3041 = vadd.f32 %v2648, %v2994
      %v3042 = vadd.f32 %v2649, %v2996
      %v3043 = vadd.f32 %v2650, %v2999
      %v3044 = vadd.f32 %v2651, %v3001
      %v3045 = vadd.f32 %v2652, %v3004
      %v3046 = vadd.f32 %v2653, %v3006
      %v3047 = vadd.f32 %v2654, %v3009
      %v3048 = vadd.f32 %v2655, %v3011
      %v3049 = vld [vmem:[%s206 + $0x10] sm:$0x8]
      %s3050 = scalar_lea.vmem %s210, 512
      %v3051 = vld [vmem:[%s3050] sm:$0xf]
      %v3052 = vld [vmem:[%s3050 + $0x4] sm:$0xf]
      %v3053 = vld [vmem:[%s3050 + $0x8] sm:$0xf]
      %v3054 = vld [vmem:[%s3050 + $0xc] sm:$0xf]
      %v3055 = vld [vmem:[%s3050 + $0x10] sm:$0xf]
      %v3056 = vld [vmem:[%s3050 + $0x14] sm:$0xf]
      %v3057 = vld [vmem:[%s3050 + $0x18] sm:$0xf]
      %v3058 = vld [vmem:[%s3050 + $0x1c] sm:$0xf]
      %v3059 = vld [vmem:[%s3050 + $0x20] sm:$0xf]
      %v3060 = vld [vmem:[%s3050 + $0x24] sm:$0xf]
      %v3061 = vld [vmem:[%s3050 + $0x28] sm:$0xf]
      %v3062 = vld [vmem:[%s3050 + $0x2c] sm:$0xf]
      %v3063 = vld [vmem:[%s3050 + $0x30] sm:$0xf]
      %v3064 = vld [vmem:[%s3050 + $0x34] sm:$0xf]
      %v3065 = vld [vmem:[%s3050 + $0x38] sm:$0xf]
      %v3066 = vld [vmem:[%s3050 + $0x3c] sm:$0xf]
      %v3068 = vunpack.c.l.b16 %v3049
      %v3069 = vpack.c.b16 %v2363, %v3068
      %vm3070 = vcmask 1044480
      %v3071 = vrot.slane %v3069, 3
      %v3072 = vrot.slane %v2400, 3
      %v3073 = vsel %vm3070, %v3071, %v3072
      %v3074 = vrot.slane %v2401, 3
      %v3075 = vsel %vm3070, %v3072, %v3074
      %v3076 = vrot.slane %v2402, 3
      %v3077 = vsel %vm3070, %v3074, %v3076
      %v3078 = vrot.slane %v2403, 3
      %v3079 = vsel %vm3070, %v3076, %v3078
      %v3080 = vrot.slane %v2404, 3
      %v3081 = vsel %vm3070, %v3078, %v3080
      %v3082 = vrot.slane %v2405, 3
      %v3083 = vsel %vm3070, %v3080, %v3082
      %v3084 = vrot.slane %v2406, 3
      %v3085 = vsel %vm3070, %v3082, %v3084
      %v3086 = vrot.slane %v2407, 3
      %v3087 = vsel %vm3070, %v3084, %v3086
      %v3088 = vrot.slane %v2408, 3
      %v3089 = vsel %vm3070, %v3086, %v3088
      %v3090 = vrot.slane %v2409, 3
      %v3091 = vsel %vm3070, %v3088, %v3090
      %v3092 = vrot.slane %v2410, 3
      %v3093 = vsel %vm3070, %v3090, %v3092
      %v3094 = vrot.slane %v2411, 3
      %v3095 = vsel %vm3070, %v3092, %v3094
      %v3096 = vrot.slane %v2412, 3
      %v3097 = vsel %vm3070, %v3094, %v3096
      %v3098 = vrot.slane %v2413, 3
      %v3099 = vsel %vm3070, %v3096, %v3098
      %v3100 = vrot.slane %v2414, 3
      %v3101 = vsel %vm3070, %v3098, %v3100
      %v3102 = vrot.slane %v2415, 3
      %v3103 = vsel %vm3070, %v3100, %v3102
      %v3104 = vrot.slane %v2416, 3
      %v3105 = vsel %vm3070, %v3102, %v3104
      %v3106 = vrot.slane %v2676, 3
      %v3107 = vsel %vm3070, %v3104, %v3106
      %v3142 = vunpack.c.l.b16 %v3051
      %v3143 = vunpack.c.l.b16 %v3052
      %v3144 = vunpack.c.l.b16 %v3053
      %v3145 = vunpack.c.l.b16 %v3054
      %v3146 = vunpack.c.l.b16 %v3055
      %v3147 = vunpack.c.l.b16 %v3056
      %v3148 = vunpack.c.l.b16 %v3057
      %v3149 = vunpack.c.l.b16 %v3058
      %v3150 = vunpack.c.l.b16 %v3059
      %v3151 = vunpack.c.l.b16 %v3060
      %v3152 = vunpack.c.l.b16 %v3061
      %v3153 = vunpack.c.l.b16 %v3062
      %v3154 = vunpack.c.l.b16 %v3063
      %v3155 = vunpack.c.l.b16 %v3064
      %v3156 = vunpack.c.l.b16 %v3065
      %v3157 = vunpack.c.l.b16 %v3066
      %v3158 = vpack.c.b16 %v3143, %v3142
      %v3159 = vpack.c.b16 %v3145, %v3144
      %v3160 = vpack.c.b16 %v3147, %v3146
      %v3161 = vpack.c.b16 %v3149, %v3148
      %v3162 = vpack.c.b16 %v3151, %v3150
      %v3163 = vpack.c.b16 %v3153, %v3152
      %v3164 = vpack.c.b16 %v3155, %v3154
      %v3165 = vpack.c.b16 %v3157, %v3156
      %3174 = vmatpush.bf16.msra.mxu0 %v3165
      %3175 = vmatpush.bf16.msra.mxu0 %v3164
      %3176 = vmatpush.bf16.msra.mxu0 %v3163
      %3177 = vmatpush.bf16.msra.mxu0 %v3162
      %3178 = vmatpush.bf16.msra.mxu0 %v3161
      %3179 = vmatpush.bf16.msra.mxu0 %v3160
      %3180 = vmatpush.bf16.msra.mxu0 %v3159
      %3181 = vmatpush.bf16.msra.mxu0 %v3158
      %3182 = vmatmul.bf16.gmra.mxu0 %v3073
      %v3183 = vpop.f32.mrf.mxu0
      %v3184 = vadd.f32 0.0, %v3183
      %v3185 = vpop.f32.mrf.mxu0
      %v3186 = vadd.f32 0.0, %v3185
      %3187 = vmatmul.bf16.gmra.mxu0 %v3075
      %v3188 = vpop.f32.mrf.mxu0
      %v3189 = vadd.f32 0.0, %v3188
      %v3190 = vpop.f32.mrf.mxu0
      %v3191 = vadd.f32 0.0, %v3190
      %3192 = vmatmul.bf16.gmra.mxu0 %v3077
      %v3193 = vpop.f32.mrf.mxu0
      %v3194 = vadd.f32 0.0, %v3193
      %v3195 = vpop.f32.mrf.mxu0
      %v3196 = vadd.f32 0.0, %v3195
      %3197 = vmatmul.bf16.gmra.mxu0 %v3079
      %v3198 = vpop.f32.mrf.mxu0
      %v3199 = vadd.f32 0.0, %v3198
      %v3200 = vpop.f32.mrf.mxu0
      %v3201 = vadd.f32 0.0, %v3200
      %3202 = vmatmul.bf16.gmra.mxu0 %v3081
      %v3203 = vpop.f32.mrf.mxu0
      %v3204 = vadd.f32 0.0, %v3203
      %v3205 = vpop.f32.mrf.mxu0
      %v3206 = vadd.f32 0.0, %v3205
      %3207 = vmatmul.bf16.gmra.mxu0 %v3083
      %v3208 = vpop.f32.mrf.mxu0
      %v3209 = vadd.f32 0.0, %v3208
      %v3210 = vpop.f32.mrf.mxu0
      %v3211 = vadd.f32 0.0, %v3210
      %3212 = vmatmul.bf16.gmra.mxu0 %v3085
      %v3213 = vpop.f32.mrf.mxu0
      %v3214 = vadd.f32 0.0, %v3213
      %v3215 = vpop.f32.mrf.mxu0
      %v3216 = vadd.f32 0.0, %v3215
      %3217 = vmatmul.bf16.gmra.mxu0 %v3087
      %v3218 = vpop.f32.mrf.mxu0
      %v3219 = vadd.f32 0.0, %v3218
      %v3220 = vpop.f32.mrf.mxu0
      %v3221 = vadd.f32 0.0, %v3220
      %3222 = vmatmul.bf16.gmra.mxu0 %v3089
      %v3223 = vpop.f32.mrf.mxu0
      %v3224 = vadd.f32 0.0, %v3223
      %v3225 = vpop.f32.mrf.mxu0
      %v3226 = vadd.f32 0.0, %v3225
      %3227 = vmatmul.bf16.gmra.mxu0 %v3091
      %v3228 = vpop.f32.mrf.mxu0
      %v3229 = vadd.f32 0.0, %v3228
      %v3230 = vpop.f32.mrf.mxu0
      %v3231 = vadd.f32 0.0, %v3230
      %3232 = vmatmul.bf16.gmra.mxu0 %v3093
      %v3233 = vpop.f32.mrf.mxu0
      %v3234 = vadd.f32 0.0, %v3233
      %v3235 = vpop.f32.mrf.mxu0
      %v3236 = vadd.f32 0.0, %v3235
      %3237 = vmatmul.bf16.gmra.mxu0 %v3095
      %v3238 = vpop.f32.mrf.mxu0
      %v3239 = vadd.f32 0.0, %v3238
      %v3240 = vpop.f32.mrf.mxu0
      %v3241 = vadd.f32 0.0, %v3240
      %3242 = vmatmul.bf16.gmra.mxu0 %v3097
      %v3243 = vpop.f32.mrf.mxu0
      %v3244 = vadd.f32 0.0, %v3243
      %v3245 = vpop.f32.mrf.mxu0
      %v3246 = vadd.f32 0.0, %v3245
      %3247 = vmatmul.bf16.gmra.mxu0 %v3099
      %v3248 = vpop.f32.mrf.mxu0
      %v3249 = vadd.f32 0.0, %v3248
      %v3250 = vpop.f32.mrf.mxu0
      %v3251 = vadd.f32 0.0, %v3250
      %3252 = vmatmul.bf16.gmra.mxu0 %v3101
      %v3253 = vpop.f32.mrf.mxu0
      %v3254 = vadd.f32 0.0, %v3253
      %v3255 = vpop.f32.mrf.mxu0
      %v3256 = vadd.f32 0.0, %v3255
      %3257 = vmatmul.bf16.gmra.mxu0 %v3103
      %v3258 = vpop.f32.mrf.mxu0
      %v3259 = vadd.f32 0.0, %v3258
      %v3260 = vpop.f32.mrf.mxu0
      %v3261 = vadd.f32 0.0, %v3260
      %3262 = vmatmul.bf16.gmra.mxu0 %v3105
      %v3263 = vpop.f32.mrf.mxu0
      %v3264 = vadd.f32 0.0, %v3263
      %v3265 = vpop.f32.mrf.mxu0
      %v3266 = vadd.f32 0.0, %v3265
      %3267 = vmatmul.bf16.gmra.mxu0 %v3107
      %v3268 = vpop.f32.mrf.mxu0
      %v3269 = vadd.f32 0.0, %v3268
      %v3270 = vpop.f32.mrf.mxu0
      %v3271 = vadd.f32 0.0, %v3270
      %3272 = vdwg.mxu0
      %v3273 = vadd.f32 %v3013, %v3184
      %v3274 = vadd.f32 %v3014, %v3186
      %v3275 = vadd.f32 %v3015, %v3189
      %v3276 = vadd.f32 %v3016, %v3191
      %v3277 = vadd.f32 %v3017, %v3194
      %v3278 = vadd.f32 %v3018, %v3196
      %v3279 = vadd.f32 %v3019, %v3199
      %v3280 = vadd.f32 %v3020, %v3201
      %v3281 = vadd.f32 %v3021, %v3204
      %v3282 = vadd.f32 %v3022, %v3206
      %v3283 = vadd.f32 %v3023, %v3209
      %v3284 = vadd.f32 %v3024, %v3211
      %v3285 = vadd.f32 %v3025, %v3214
      %v3286 = vadd.f32 %v3026, %v3216
      %v3287 = vadd.f32 %v3027, %v3219
      %v3288 = vadd.f32 %v3028, %v3221
      %v3289 = vadd.f32 %v3029, %v3224
      %v3290 = vadd.f32 %v3030, %v3226
      %v3291 = vadd.f32 %v3031, %v3229
      %v3292 = vadd.f32 %v3032, %v3231
      %v3293 = vadd.f32 %v3033, %v3234
      %v3294 = vadd.f32 %v3034, %v3236
      %v3295 = vadd.f32 %v3035, %v3239
      %v3296 = vadd.f32 %v3036, %v3241
      %v3297 = vadd.f32 %v3037, %v3244
      %v3298 = vadd.f32 %v3038, %v3246
      %v3299 = vadd.f32 %v3039, %v3249
      %v3300 = vadd.f32 %v3040, %v3251
      %v3301 = vadd.f32 %v3041, %v3254
      %v3302 = vadd.f32 %v3042, %v3256
      %v3303 = vadd.f32 %v3043, %v3259
      %v3304 = vadd.f32 %v3044, %v3261
      %v3305 = vadd.f32 %v3045, %v3264
      %v3306 = vadd.f32 %v3046, %v3266
      %v3307 = vadd.f32 %v3047, %v3269
      %v3308 = vadd.f32 %v3048, %v3271
      %v3309 = vld [vmem:[%s213] sm:$0x1]
      %v3311 = vperm.slane %v3309, 0
      %v3313 = vadd.f32 %v3273, %v3311
      %v3314 = vadd.f32 %v3274, %v3311
      %v3315 = vadd.f32 %v3275, %v3311
      %v3316 = vadd.f32 %v3276, %v3311
      %v3317 = vadd.f32 %v3277, %v3311
      %v3318 = vadd.f32 %v3278, %v3311
      %v3319 = vadd.f32 %v3279, %v3311
      %v3320 = vadd.f32 %v3280, %v3311
      %v3321 = vadd.f32 %v3281, %v3311
      %v3322 = vadd.f32 %v3282, %v3311
      %v3323 = vadd.f32 %v3283, %v3311
      %v3324 = vadd.f32 %v3284, %v3311
      %v3325 = vadd.f32 %v3285, %v3311
      %v3326 = vadd.f32 %v3286, %v3311
      %v3327 = vadd.f32 %v3287, %v3311
      %v3328 = vadd.f32 %v3288, %v3311
      %v3329 = vadd.f32 %v3289, %v3311
      %v3330 = vadd.f32 %v3290, %v3311
      %v3331 = vadd.f32 %v3291, %v3311
      %v3332 = vadd.f32 %v3292, %v3311
      %v3333 = vadd.f32 %v3293, %v3311
      %v3334 = vadd.f32 %v3294, %v3311
      %v3335 = vadd.f32 %v3295, %v3311
      %v3336 = vadd.f32 %v3296, %v3311
      %v3337 = vadd.f32 %v3297, %v3311
      %v3338 = vadd.f32 %v3298, %v3311
      %v3339 = vadd.f32 %v3299, %v3311
      %v3340 = vadd.f32 %v3300, %v3311
      %v3341 = vadd.f32 %v3301, %v3311
      %v3342 = vadd.f32 %v3302, %v3311
      %v3343 = vadd.f32 %v3303, %v3311
      %v3344 = vadd.f32 %v3304, %v3311
      %v3345 = vadd.f32 %v3305, %v3311
      %v3346 = vadd.f32 %v3306, %v3311
      %v3347 = vadd.f32 %v3307, %v3311
      %v3348 = vadd.f32 %v3308, %v3311
      %v3349 = vmax.f32 %v3313, 0.0
      %v3350 = vmax.f32 %v3314, 0.0
      %v3351 = vmax.f32 %v3315, 0.0
      %v3352 = vmax.f32 %v3316, 0.0
      %v3353 = vmax.f32 %v3317, 0.0
      %v3354 = vmax.f32 %v3318, 0.0
      %v3355 = vmax.f32 %v3319, 0.0
      %v3356 = vmax.f32 %v3320, 0.0
      %v3357 = vmax.f32 %v3321, 0.0
      %v3358 = vmax.f32 %v3322, 0.0
      %v3359 = vmax.f32 %v3323, 0.0
      %v3360 = vmax.f32 %v3324, 0.0
      %v3361 = vmax.f32 %v3325, 0.0
      %v3362 = vmax.f32 %v3326, 0.0
      %v3363 = vmax.f32 %v3327, 0.0
      %v3364 = vmax.f32 %v3328, 0.0
      %v3365 = vmax.f32 %v3329, 0.0
      %v3366 = vmax.f32 %v3330, 0.0
      %v3367 = vmax.f32 %v3331, 0.0
      %v3368 = vmax.f32 %v3332, 0.0
      %v3369 = vmax.f32 %v3333, 0.0
      %v3370 = vmax.f32 %v3334, 0.0
      %v3371 = vmax.f32 %v3335, 0.0
      %v3372 = vmax.f32 %v3336, 0.0
      %v3373 = vmax.f32 %v3337, 0.0
      %v3374 = vmax.f32 %v3338, 0.0
      %v3375 = vmax.f32 %v3339, 0.0
      %v3376 = vmax.f32 %v3340, 0.0
      %v3377 = vmax.f32 %v3341, 0.0
      %v3378 = vmax.f32 %v3342, 0.0
      %v3379 = vmax.f32 %v3343, 0.0
      %v3380 = vmax.f32 %v3344, 0.0
      %v3381 = vmax.f32 %v3345, 0.0
      %v3382 = vmax.f32 %v3346, 0.0
      %v3383 = vmax.f32 %v3347, 0.0
      %v3384 = vmax.f32 %v3348, 0.0
      %v3385 = vpack.c.bf16 %v3349, %v3349
      %v3386 = vpack.c.bf16 %v3350, %v3350
      %v3387 = vpack.c.bf16 %v3351, %v3351
      %v3388 = vpack.c.bf16 %v3352, %v3352
      %v3389 = vpack.c.bf16 %v3353, %v3353
      %v3390 = vpack.c.bf16 %v3354, %v3354
      %v3391 = vpack.c.bf16 %v3355, %v3355
      %v3392 = vpack.c.bf16 %v3356, %v3356
      %v3393 = vpack.c.bf16 %v3357, %v3357
      %v3394 = vpack.c.bf16 %v3358, %v3358
      %v3395 = vpack.c.bf16 %v3359, %v3359
      %v3396 = vpack.c.bf16 %v3360, %v3360
      %v3397 = vpack.c.bf16 %v3361, %v3361
      %v3398 = vpack.c.bf16 %v3362, %v3362
      %v3399 = vpack.c.bf16 %v3363, %v3363
      %v3400 = vpack.c.bf16 %v3364, %v3364
      %v3401 = vpack.c.bf16 %v3365, %v3365
      %v3402 = vpack.c.bf16 %v3366, %v3366
      %v3403 = vpack.c.bf16 %v3367, %v3367
      %v3404 = vpack.c.bf16 %v3368, %v3368
      %v3405 = vpack.c.bf16 %v3369, %v3369
      %v3406 = vpack.c.bf16 %v3370, %v3370
      %v3407 = vpack.c.bf16 %v3371, %v3371
      %v3408 = vpack.c.bf16 %v3372, %v3372
      %v3409 = vpack.c.bf16 %v3373, %v3373
      %v3410 = vpack.c.bf16 %v3374, %v3374
      %v3411 = vpack.c.bf16 %v3375, %v3375
      %v3412 = vpack.c.bf16 %v3376, %v3376
      %v3413 = vpack.c.bf16 %v3377, %v3377
      %v3414 = vpack.c.bf16 %v3378, %v3378
      %v3415 = vpack.c.bf16 %v3379, %v3379
      %v3416 = vpack.c.bf16 %v3380, %v3380
      %v3417 = vpack.c.bf16 %v3381, %v3381
      %v3418 = vpack.c.bf16 %v3382, %v3382
      %v3419 = vpack.c.bf16 %v3383, %v3383
      %v3420 = vpack.c.bf16 %v3384, %v3384
      %3421 = vst [vmem:[%s221] sm:$0xf] %v3385
      %3422 = vst [vmem:[%s221 + $0x4] sm:$0xf] %v3386
      %3423 = vst [vmem:[%s221 + $0x8] sm:$0xf] %v3387
      %3424 = vst [vmem:[%s221 + $0xc] sm:$0xf] %v3388
      %3425 = vst [vmem:[%s221 + $0x10] sm:$0xf] %v3389
      %3426 = vst [vmem:[%s221 + $0x14] sm:$0xf] %v3390
      %3427 = vst [vmem:[%s221 + $0x18] sm:$0xf] %v3391
      %3428 = vst [vmem:[%s221 + $0x1c] sm:$0xf] %v3392
      %3429 = vst [vmem:[%s221 + $0x20] sm:$0xf] %v3393
      %3430 = vst [vmem:[%s221 + $0x24] sm:$0xf] %v3394
      %3431 = vst [vmem:[%s221 + $0x28] sm:$0xf] %v3395
      %3432 = vst [vmem:[%s221 + $0x2c] sm:$0xf] %v3396
      %3433 = vst [vmem:[%s221 + $0x30] sm:$0xf] %v3397
      %3434 = vst [vmem:[%s221 + $0x34] sm:$0xf] %v3398
      %3435 = vst [vmem:[%s221 + $0x38] sm:$0xf] %v3399
      %3436 = vst [vmem:[%s221 + $0x3c] sm:$0xf] %v3400
      %3437 = vst [vmem:[%s221 + $0x40] sm:$0xf] %v3401
      %3438 = vst [vmem:[%s221 + $0x44] sm:$0xf] %v3402
      %3439 = vst [vmem:[%s221 + $0x48] sm:$0xf] %v3403
      %3440 = vst [vmem:[%s221 + $0x4c] sm:$0xf] %v3404
      %3441 = vst [vmem:[%s221 + $0x50] sm:$0xf] %v3405
      %3442 = vst [vmem:[%s221 + $0x54] sm:$0xf] %v3406
      %3443 = vst [vmem:[%s221 + $0x58] sm:$0xf] %v3407
      %3444 = vst [vmem:[%s221 + $0x5c] sm:$0xf] %v3408
      %3445 = vst [vmem:[%s221 + $0x60] sm:$0xf] %v3409
      %3446 = vst [vmem:[%s221 + $0x64] sm:$0xf] %v3410
      %3447 = vst [vmem:[%s221 + $0x68] sm:$0xf] %v3411
      %3448 = vst [vmem:[%s221 + $0x6c] sm:$0xf] %v3412
      %3449 = vst [vmem:[%s221 + $0x70] sm:$0xf] %v3413
      %3450 = vst [vmem:[%s221 + $0x74] sm:$0xf] %v3414
      %3451 = vst [vmem:[%s221 + $0x78] sm:$0xf] %v3415
      %3452 = vst [vmem:[%s221 + $0x7c] sm:$0xf] %v3416
      %3453 = vst [vmem:[%s221 + $0x80] sm:$0xf] %v3417
      %3454 = vst [vmem:[%s221 + $0x84] sm:$0xf] %v3418
      %3455 = vst [vmem:[%s221 + $0x88] sm:$0xf] %v3419
      %3456 = vst [vmem:[%s221 + $0x8c] sm:$0x7] %v3420
      %p3457 = scmp.lt.s32.totalorder %s18, 1
      %s3458 = scalar_select %p3457, %s18, 1
      %p3459 = scmp.lt.s32.totalorder %s19, 0
      %s3460 = scalar_select %p3459, %s19, 0
      %s3461 = smul.addr %s3458, 36
      %s3462 = sadd.s32 %s3460, %s3461
      %s3463 = smul.addr %s3462, 4
      %s3464 = scalar_lea.vmem %s3, %s3463
      // Predicated region
      $region33: #{inception_b.7} parent=31 // pred_check
        %p3465 = pneg %p124
      $region34: #{inception_b.7} parent=31 // pred_check_branch
        %3467 = sbr.rel (%p3465) target = $region36
      $region35: #{inception_b.7} parent=31 // pred_region
        _
      $region36: #{inception_b.7} parent=31 // pred_fallthru
        _
    $region32: #{inception_b.7} parent=5 // pred_fallthru
      _
    %p3468 = scmp.le.s32.totalorder 2, %s9
    // Predicated region
    $region37: #{inception_b.7} parent=5 // pred_check
      %p3469 = pneg %p3468
    $region38: #{inception_b.7} parent=5 // pred_check_branch
      %3471 = sbr.rel (%p3469) target = $region40
    $region39: #{inception_b.7} parent=5 // pred_region
      %s3472 = ssub.s32 %s9, 2
      // Predicated region
      $region41: #{inception_b.7} parent=39 // pred_check
        %p3473 = pneg %p130
      $region42: #{inception_b.7} parent=39 // pred_check_branch
        %3475 = sbr.rel (%p3473) target = $region44
      $region43: #{inception_b.7} parent=39 // pred_region
        %p3476 = scmp.lt.s32.totalorder %s20, 1
        %s3477 = scalar_select %p3476, %s20, 1
        %p3478 = scmp.lt.s32.totalorder %s21, 0
        %s3479 = scalar_select %p3478, %s21, 0
        %s3480 = smul.addr %s3477, 36
        %s3481 = sadd.s32 %s3479, %s3480
        %s3482 = smul.addr %s3481, 4
        %s3483 = scalar_lea.vmem %s3, %s3482
      $region44: #{inception_b.7} parent=39 // pred_fallthru
        _
    $region40: #{inception_b.7} parent=5 // pred_fallthru
      _
  $region6: #{inception_b.7} parent=0 // loop_footer
    %s13 = sadd.s32 1, %s9
  $region7: #{inception_b.7} parent=0 // loop_footer_branch
    %8 = sbr.rel target = $region3
  $region8: #{inception_b.7} parent=0 // loop_exit
    _

// kernel: inception_b.8
$region0: #{inception_b.8}
  #allocation0 [shape = 'u32[]', space=smem, size = 0x4, offset = 0x4, fixed_abs, tag = 'smem constant byte address 0x4 - core index']
  #allocation1 [shape = 'u32[72,128]{1,0:T(1,128)}', space=vmem, size = 0x9000, scoped, tag = 'internal scratch']
  %s0 = inlined_call_operand.vmem [shape: bf16[2,72,128], index: 0, kind: input, shape index: {}]
  %s1 = inlined_call_operand.vmem [shape: bf16[2,72,128], index: 1, kind: input, shape index: {}]
  %s2 = inlined_call_operand.vmem [shape: bf16[2,72,128], index: 2, kind: input, shape index: {}]
  %s3 = inlined_call_operand.vmem [shape: bf16[2,72,128], index: 3, kind: input, shape index: {}]
  %s4 = inlined_call_operand.vmem [shape: bf16[9,128,128], index: 4, kind: input, shape index: {}]
  %s5 = inlined_call_operand.vmem [shape: f32[1,128], index: 5, kind: input, shape index: {}]
  %s6 = inlined_call_operand.vmem [shape: bf16[2,62,128], index: 6, kind: output, shape index: {}]
  %s7 = sld [smem:[#allocation0]]
  $region57: #{inception_b.8} parent=0
    _
  %s9 = ssub.s32 1, %s7
  %s10 = scalar_select 0, %s9, %s7
  loop: start=0, step=1, limit=4
  $region2: #{inception_b.8} parent=0 // loop_pre_header
    _
  $region3: #{inception_b.8} parent=0 // loop_header
    %s12 = sphi 0, %s16
    %p13 = scmp.ge.s32.totalorder %s12, 4
    %s19 = sphi 0, %s31
    %s20 = sphi 0, %s27
    %s21 = sphi 0, %s19
    %s22 = sphi 0, %s20
    %s23 = sphi 0, %s21
    %s24 = sphi 0, %s22
    %s34 = sphi 0, %s36
    %s37 = sphi 0, %s34
    %s38 = sphi 0, %s37
    %s54 = sphi 0, %s38
    %s60 = sphi 0, %s62
    %s63 = sphi 0, %s60
    %s64 = sphi 0, %s63
    %s80 = sphi 0, %s64
    %s86 = sphi 0, %s88
    %s89 = sphi 0, %s86
    %s90 = sphi 0, %s89
    %s106 = sphi 0, %s90
    %s112 = sphi 0, %s114
    %s115 = sphi 0, %s112
    %s116 = sphi 0, %s115
    %s132 = sphi 0, %s116
    %s138 = sphi 0, %s140
    %s141 = sphi 0, %s138
    %s142 = sphi 0, %s141
    %s158 = sphi 0, %s142
    %s164 = sphi 0, %s166
    %s167 = sphi 0, %s164
    %s168 = sphi 0, %s167
    %s184 = sphi 0, %s168
    %s192 = sphi 0, %s194
    %s195 = sphi 0, %s192
    %s196 = sphi 0, %s195
    %s212 = sphi 0, %s196
  $region4: #{inception_b.8} parent=0 // loop_header_branch
    %15 = sbr.rel (%p13) target = $region8
  $region5: #{inception_b.8} parent=0 // loop_body
    %s17 = ssub.s32 %s12, 1
    %s18 = ssub.s32 %s12, 2
    %s25 = sadd.s32 1, %s20
    %p26 = scmp.ge.s32.totalorder %s25, 1
    %s27 = scalar_select %p26, 0, %s25
    %s28 = sadd.s32 1, %s19
    %s29 = scalar_select %p26, %s28, %s19
    %p30 = scmp.ge.s32.totalorder %s29, 2
    %s31 = scalar_select %p30, 0, %s29
    %s32 = ssub.s32 %s19, %s31
    %p33 = scmp.eq.s32.totalorder %s32, 0
    %s35 = sadd.s32 %s34, 1
    %s36 = scalar_select %p33, %s34, %s35
    %p39 = pneg %p33
    %p40 = scmp.eq.s32.totalorder %s12, 1
    %p41 = por %p39, %p40
    %p42 = scmp.ne.s32.totalorder %s34, %s37
    %p43 = scmp.eq.s32.totalorder %s12, 0
    %p44 = por %p42, %p43
    %p45 = scmp.ne.s32.totalorder %s34, %s37
    %p46 = scmp.eq.s32.totalorder %s17, 1
    %p47 = por %p45, %p46
    %p48 = scmp.ne.s32.totalorder %s37, %s38
    %p49 = scmp.eq.s32.totalorder %s17, 0
    %p50 = por %p48, %p49
    %p51 = scmp.ne.s32.totalorder %s37, %s38
    %p52 = scmp.eq.s32.totalorder %s18, 1
    %p53 = por %p51, %p52
    %p55 = scmp.ne.s32.totalorder %s38, %s54
    %p56 = scmp.eq.s32.totalorder %s18, 0
    %p57 = por %p55, %p56
    %s58 = ssub.s32 %s19, %s31
    %p59 = scmp.eq.s32.totalorder %s58, 0
    %s61 = sadd.s32 %s60, 1
    %s62 = scalar_select %p59, %s60, %s61
    %p65 = pneg %p59
    %p66 = scmp.eq.s32.totalorder %s12, 1
    %p67 = por %p65, %p66
    %p68 = scmp.ne.s32.totalorder %s60, %s63
    %p69 = scmp.eq.s32.totalorder %s12, 0
    %p70 = por %p68, %p69
    %p71 = scmp.ne.s32.totalorder %s60, %s63
    %p72 = scmp.eq.s32.totalorder %s17, 1
    %p73 = por %p71, %p72
    %p74 = scmp.ne.s32.totalorder %s63, %s64
    %p75 = scmp.eq.s32.totalorder %s17, 0
    %p76 = por %p74, %p75
    %p77 = scmp.ne.s32.totalorder %s63, %s64
    %p78 = scmp.eq.s32.totalorder %s18, 1
    %p79 = por %p77, %p78
    %p81 = scmp.ne.s32.totalorder %s64, %s80
    %p82 = scmp.eq.s32.totalorder %s18, 0
    %p83 = por %p81, %p82
    %s84 = ssub.s32 %s19, %s31
    %p85 = scmp.eq.s32.totalorder %s84, 0
    %s87 = sadd.s32 %s86, 1
    %s88 = scalar_select %p85, %s86, %s87
    %p91 = pneg %p85
    %p92 = scmp.eq.s32.totalorder %s12, 1
    %p93 = por %p91, %p92
    %p94 = scmp.ne.s32.totalorder %s86, %s89
    %p95 = scmp.eq.s32.totalorder %s12, 0
    %p96 = por %p94, %p95
    %p97 = scmp.ne.s32.totalorder %s86, %s89
    %p98 = scmp.eq.s32.totalorder %s17, 1
    %p99 = por %p97, %p98
    %p100 = scmp.ne.s32.totalorder %s89, %s90
    %p101 = scmp.eq.s32.totalorder %s17, 0
    %p102 = por %p100, %p101
    %p103 = scmp.ne.s32.totalorder %s89, %s90
    %p104 = scmp.eq.s32.totalorder %s18, 1
    %p105 = por %p103, %p104
    %p107 = scmp.ne.s32.totalorder %s90, %s106
    %p108 = scmp.eq.s32.totalorder %s18, 0
    %p109 = por %p107, %p108
    %s110 = ssub.s32 %s19, %s31
    %p111 = scmp.eq.s32.totalorder %s110, 0
    %s113 = sadd.s32 %s112, 1
    %s114 = scalar_select %p111, %s112, %s113
    %p117 = pneg %p111
    %p118 = scmp.eq.s32.totalorder %s12, 1
    %p119 = por %p117, %p118
    %p120 = scmp.ne.s32.totalorder %s112, %s115
    %p121 = scmp.eq.s32.totalorder %s12, 0
    %p122 = por %p120, %p121
    %p123 = scmp.ne.s32.totalorder %s112, %s115
    %p124 = scmp.eq.s32.totalorder %s17, 1
    %p125 = por %p123, %p124
    %p126 = scmp.ne.s32.totalorder %s115, %s116
    %p127 = scmp.eq.s32.totalorder %s17, 0
    %p128 = por %p126, %p127
    %p129 = scmp.ne.s32.totalorder %s115, %s116
    %p130 = scmp.eq.s32.totalorder %s18, 1
    %p131 = por %p129, %p130
    %p133 = scmp.ne.s32.totalorder %s116, %s132
    %p134 = scmp.eq.s32.totalorder %s18, 0
    %p135 = por %p133, %p134
    %s136 = ssub.s32 %s20, %s27
    %p137 = scmp.eq.s32.totalorder %s136, 0
    %s139 = sadd.s32 %s138, 1
    %s140 = scalar_select %p137, %s138, %s139
    %p143 = pneg %p137
    %p144 = scmp.eq.s32.totalorder %s12, 1
    %p145 = por %p143, %p144
    %p146 = scmp.ne.s32.totalorder %s138, %s141
    %p147 = scmp.eq.s32.totalorder %s12, 0
    %p148 = por %p146, %p147
    %p149 = scmp.ne.s32.totalorder %s138, %s141
    %p150 = scmp.eq.s32.totalorder %s17, 1
    %p151 = por %p149, %p150
    %p152 = scmp.ne.s32.totalorder %s141, %s142
    %p153 = scmp.eq.s32.totalorder %s17, 0
    %p154 = por %p152, %p153
    %p155 = scmp.ne.s32.totalorder %s141, %s142
    %p156 = scmp.eq.s32.totalorder %s18, 1
    %p157 = por %p155, %p156
    %p159 = scmp.ne.s32.totalorder %s142, %s158
    %p160 = scmp.eq.s32.totalorder %s18, 0
    %p161 = por %p159, %p160
    %s162 = ssub.s32 %s20, %s27
    %p163 = scmp.eq.s32.totalorder %s162, 0
    %s165 = sadd.s32 %s164, 1
    %s166 = scalar_select %p163, %s164, %s165
    %p169 = pneg %p163
    %p170 = scmp.eq.s32.totalorder %s12, 1
    %p171 = por %p169, %p170
    %p172 = scmp.ne.s32.totalorder %s164, %s167
    %p173 = scmp.eq.s32.totalorder %s12, 0
    %p174 = por %p172, %p173
    %p175 = scmp.ne.s32.totalorder %s164, %s167
    %p176 = scmp.eq.s32.totalorder %s17, 1
    %p177 = por %p175, %p176
    %p178 = scmp.ne.s32.totalorder %s167, %s168
    %p179 = scmp.eq.s32.totalorder %s17, 0
    %p180 = por %p178, %p179
    %p181 = scmp.ne.s32.totalorder %s167, %s168
    %p182 = scmp.eq.s32.totalorder %s18, 1
    %p183 = por %p181, %p182
    %p185 = scmp.ne.s32.totalorder %s168, %s184
    %p186 = scmp.eq.s32.totalorder %s18, 0
    %p187 = por %p185, %p186
    %s188 = ssub.s32 %s19, %s31
    %s189 = ssub.s32 %s20, %s27
    %s190 = sor.u32 %s188, %s189
    %p191 = scmp.eq.s32.totalorder %s190, 0
    %s193 = sadd.s32 %s192, 1
    %s194 = scalar_select %p191, %s192, %s193
    %p197 = pneg %p191
    %p198 = scmp.eq.s32.totalorder %s12, 1
    %p199 = por %p197, %p198
    %p200 = scmp.ne.s32.totalorder %s192, %s195
    %p201 = scmp.eq.s32.totalorder %s12, 0
    %p202 = por %p200, %p201
    %p203 = scmp.ne.s32.totalorder %s192, %s195
    %p204 = scmp.eq.s32.totalorder %s17, 1
    %p205 = por %p203, %p204
    %p206 = scmp.ne.s32.totalorder %s195, %s196
    %p207 = scmp.eq.s32.totalorder %s17, 0
    %p208 = por %p206, %p207
    %p209 = scmp.ne.s32.totalorder %s195, %s196
    %p210 = scmp.eq.s32.totalorder %s18, 1
    %p211 = por %p209, %p210
    %p213 = scmp.ne.s32.totalorder %s196, %s212
    %p214 = scmp.eq.s32.totalorder %s18, 0
    %p215 = por %p213, %p214
    %p216 = scmp.le.s32.totalorder 1, %s12
    %p217 = scmp.lt.s32.totalorder %s12, 3
    %p218 = pnand %p216, %p217
    %p219 = pneg %p218
    // Predicated region
    $region9: #{inception_b.8} parent=5 // pred_check
      _
    $region10: #{inception_b.8} parent=5 // pred_check_branch
      %221 = sbr.rel (%p218) target = $region12
    $region11: #{inception_b.8} parent=5 // pred_region
      %s222 = ssub.s32 %s12, 1
      // Predicated region
      $region13: #{inception_b.8} parent=11 // pred_check
        %p223 = pneg %p154
      $region14: #{inception_b.8} parent=11 // pred_check_branch
        %225 = sbr.rel (%p223) target = $region16
      $region15: #{inception_b.8} parent=11 // pred_region
        %p226 = scmp.lt.s32.totalorder %s22, 0
        %s227 = scalar_select %p226, %s22, 0
        %s228 = smul.addr %s227, 4
        %s229 = scalar_lea.vmem %s4, %s228
      $region16: #{inception_b.8} parent=11 // pred_fallthru
        _
      // Predicated region
      $region17: #{inception_b.8} parent=11 // pred_check
        %p230 = pneg %p180
      $region18: #{inception_b.8} parent=11 // pred_check_branch
        %232 = sbr.rel (%p230) target = $region20
      $region19: #{inception_b.8} parent=11 // pred_region
        %p233 = scmp.lt.s32.totalorder %s22, 0
        %s234 = scalar_select %p233, %s22, 0
        %s235 = scalar_lea.vmem %s5, %s234
      $region20: #{inception_b.8} parent=11 // pred_fallthru
        _
    $region12: #{inception_b.8} parent=5 // pred_fallthru
      _
    %p236 = scmp.lt.s32.totalorder %s12, 2
    // Predicated region
    $region21: #{inception_b.8} parent=5 // pred_check
      %p237 = pneg %p236
    $region22: #{inception_b.8} parent=5 // pred_check_branch
      %239 = sbr.rel (%p237) target = $region24
    $region23: #{inception_b.8} parent=5 // pred_region
      // Predicated region
      $region25: #{inception_b.8} parent=23 // pred_check
        %p240 = pneg %p44
      $region26: #{inception_b.8} parent=23 // pred_check_branch
        %242 = sbr.rel (%p240) target = $region28
      $region27: #{inception_b.8} parent=23 // pred_region
        %p243 = scmp.lt.s32.totalorder %s19, 1
        %s244 = scalar_select %p243, %s19, 1
        %s245 = smul.addr %s244, 9
        %s246 = smul.addr %s245, 4
        %s247 = scalar_lea.vmem %s0, %s246
      $region28: #{inception_b.8} parent=23 // pred_fallthru
        _
      // Predicated region
      $region29: #{inception_b.8} parent=23 // pred_check
        %p248 = pneg %p70
      $region30: #{inception_b.8} parent=23 // pred_check_branch
        %250 = sbr.rel (%p248) target = $region32
      $region31: #{inception_b.8} parent=23 // pred_region
        %p251 = scmp.lt.s32.totalorder %s19, 1
        %s252 = scalar_select %p251, %s19, 1
        %s253 = smul.addr %s252, 9
        %s254 = smul.addr %s253, 4
        %s255 = scalar_lea.vmem %s1, %s254
      $region32: #{inception_b.8} parent=23 // pred_fallthru
        _
      // Predicated region
      $region33: #{inception_b.8} parent=23 // pred_check
        %p256 = pneg %p96
      $region34: #{inception_b.8} parent=23 // pred_check_branch
        %258 = sbr.rel (%p256) target = $region36
      $region35: #{inception_b.8} parent=23 // pred_region
        %p259 = scmp.lt.s32.totalorder %s19, 1
        %s260 = scalar_select %p259, %s19, 1
        %s261 = smul.addr %s260, 9
        %s262 = smul.addr %s261, 4
        %s263 = scalar_lea.vmem %s2, %s262
      $region36: #{inception_b.8} parent=23 // pred_fallthru
        _
      // Predicated region
      $region37: #{inception_b.8} parent=23 // pred_check
        %p264 = pneg %p122
      $region38: #{inception_b.8} parent=23 // pred_check_branch
        %266 = sbr.rel (%p264) target = $region40
      $region39: #{inception_b.8} parent=23 // pred_region
        %p267 = scmp.lt.s32.totalorder %s19, 1
        %s268 = scalar_select %p267, %s19, 1
        %s269 = smul.addr %s268, 9
        %s270 = smul.addr %s269, 4
        %s271 = scalar_lea.vmem %s3, %s270
      $region40: #{inception_b.8} parent=23 // pred_fallthru
        _
    $region24: #{inception_b.8} parent=5 // pred_fallthru
      _
    %p272 = scmp.le.s32.totalorder 1, %s12
    %p273 = scmp.lt.s32.totalorder %s12, 3
    %p274 = pnand %p272, %p273
    %p275 = pneg %p274
    // Predicated region
    $region41: #{inception_b.8} parent=5 // pred_check
      _
    $region42: #{inception_b.8} parent=5 // pred_check_branch
      %277 = sbr.rel (%p274) target = $region44
    $region43: #{inception_b.8} parent=5 // pred_region
      %s278 = ssub.s32 %s12, 1
      %p279 = scmp.lt.s32.totalorder %s21, 1
      %s280 = scalar_select %p279, %s21, 1
      %s281 = smul.addr %s280, 9
      %s282 = smul.addr %s281, 4
      %s283 = scalar_lea.vmem %s0, %s282
      %p284 = pneg %p50
      %p285 = pneg %p47
      %p286 = scmp.lt.s32.totalorder %s21, 1
      %s287 = scalar_select %p286, %s21, 1
      %s288 = smul.addr %s287, 9
      %s289 = smul.addr %s288, 4
      %s290 = scalar_lea.vmem %s1, %s289
      %p291 = pneg %p76
      %p292 = pneg %p73
      %p293 = scmp.lt.s32.totalorder %s21, 1
      %s294 = scalar_select %p293, %s21, 1
      %s295 = smul.addr %s294, 9
      %s296 = smul.addr %s295, 4
      %s297 = scalar_lea.vmem %s2, %s296
      %p298 = pneg %p102
      %p299 = pneg %p99
      %p300 = scmp.lt.s32.totalorder %s21, 1
      %s301 = scalar_select %p300, %s21, 1
      %s302 = smul.addr %s301, 9
      %s303 = smul.addr %s302, 4
      %s304 = scalar_lea.vmem %s3, %s303
      %p305 = pneg %p128
      %p306 = pneg %p125
      %p307 = scmp.lt.s32.totalorder %s22, 0
      %s308 = scalar_select %p307, %s22, 0
      %s309 = smul.addr %s308, 4
      %s310 = scalar_lea.vmem %s4, %s309
      %p311 = pneg %p154
      %p312 = pneg %p151
      %p313 = scmp.lt.s32.totalorder %s22, 0
      %s314 = scalar_select %p313, %s22, 0
      %s315 = scalar_lea.vmem %s5, %s314
      %p316 = pneg %p180
      %p317 = pneg %p177
      %p318 = pneg %p208
      %p319 = pneg %p205
      %p320 = scmp.lt.s32.totalorder %s21, 1
      %s321 = scalar_select %p320, %s21, 1
      %p322 = scmp.lt.s32.totalorder %s22, 0
      %s323 = scalar_select %p322, %s22, 0
      %s324 = smul.addr %s321, 8
      %s325 = sadd.s32 %s323, %s324
      %s326 = smul.addr %s325, 4
      %s327 = scalar_lea.vmem %s6, %s326
      %p328 = scmp.lt.s32.totalorder %s21, 1
      %s329 = scalar_select %p328, %s21, 1
      %s330 = smul.addr %s329, 9
      %s331 = smul.addr %s330, 4
      %s332 = scalar_lea.vmem %s0, %s331
      %p333 = scmp.lt.s32.totalorder %s21, 1
      %s334 = scalar_select %p333, %s21, 1
      %s335 = smul.addr %s334, 9
      %s336 = smul.addr %s335, 4
      %s337 = scalar_lea.vmem %s1, %s336
      %p338 = scmp.lt.s32.totalorder %s21, 1
      %s339 = scalar_select %p338, %s21, 1
      %s340 = smul.addr %s339, 9
      %s341 = smul.addr %s340, 4
      %s342 = scalar_lea.vmem %s2, %s341
      %p343 = scmp.lt.s32.totalorder %s21, 1
      %s344 = scalar_select %p343, %s21, 1
      %s345 = smul.addr %s344, 9
      %s346 = smul.addr %s345, 4
      %s347 = scalar_lea.vmem %s3, %s346
      %p348 = scmp.lt.s32.totalorder %s22, 0
      %s349 = scalar_select %p348, %s22, 0
      %s350 = smul.addr %s349, 4
      %s351 = scalar_lea.vmem %s4, %s350
      %p352 = scmp.lt.s32.totalorder %s22, 0
      %s353 = scalar_select %p352, %s22, 0
      %s354 = scalar_lea.vmem %s5, %s353
      %p355 = scmp.lt.s32.totalorder %s21, 1
      %s356 = scalar_select %p355, %s21, 1
      %p357 = scmp.lt.s32.totalorder %s22, 0
      %s358 = scalar_select %p357, %s22, 0
      %s359 = smul.addr %s356, 8
      %s360 = sadd.s32 %s358, %s359
      %s361 = smul.addr %s360, 4
      %s362 = scalar_lea.vmem %s6, %s361
      %v363 = vld [vmem:[%s332] sm:$0xf]
      %v364 = vld [vmem:[%s332 + $0x4] sm:$0xf]
      %v365 = vld [vmem:[%s332 + $0x8] sm:$0xf]
      %v366 = vld [vmem:[%s332 + $0xc] sm:$0xf]
      %v367 = vld [vmem:[%s332 + $0x10] sm:$0xf]
      %v368 = vld [vmem:[%s332 + $0x14] sm:$0xf]
      %v369 = vld [vmem:[%s332 + $0x18] sm:$0xf]
      %v370 = vld [vmem:[%s332 + $0x1c] sm:$0x7]
      %v371 = vld [vmem:[%s351] sm:$0xf]
      %v372 = vld [vmem:[%s351 + $0x4] sm:$0xf]
      %v373 = vld [vmem:[%s351 + $0x8] sm:$0xf]
      %v374 = vld [vmem:[%s351 + $0xc] sm:$0xf]
      %v375 = vld [vmem:[%s351 + $0x10] sm:$0xf]
      %v376 = vld [vmem:[%s351 + $0x14] sm:$0xf]
      %v377 = vld [vmem:[%s351 + $0x18] sm:$0xf]
      %v378 = vld [vmem:[%s351 + $0x1c] sm:$0xf]
      %v379 = vld [vmem:[%s351 + $0x20] sm:$0xf]
      %v380 = vld [vmem:[%s351 + $0x24] sm:$0xf]
      %v381 = vld [vmem:[%s351 + $0x28] sm:$0xf]
      %v382 = vld [vmem:[%s351 + $0x2c] sm:$0xf]
      %v383 = vld [vmem:[%s351 + $0x30] sm:$0xf]
      %v384 = vld [vmem:[%s351 + $0x34] sm:$0xf]
      %v385 = vld [vmem:[%s351 + $0x38] sm:$0xf]
      %v386 = vld [vmem:[%s351 + $0x3c] sm:$0xf]
      %v387 = vld [vmem:[%s337] sm:$0xf]
      %v388 = vld [vmem:[%s337 + $0x4] sm:$0xf]
      %v389 = vld [vmem:[%s337 + $0x8] sm:$0xf]
      %v390 = vld [vmem:[%s337 + $0xc] sm:$0xf]
      %v391 = vld [vmem:[%s337 + $0x10] sm:$0xf]
      %v392 = vld [vmem:[%s337 + $0x14] sm:$0xf]
      %v393 = vld [vmem:[%s337 + $0x18] sm:$0xf]
      %v394 = vld [vmem:[%s337 + $0x1c] sm:$0x7]
      %s395 = scalar_lea.vmem %s351, 64
      %v396 = vld [vmem:[%s395] sm:$0xf]
      %v397 = vld [vmem:[%s395 + $0x4] sm:$0xf]
      %v398 = vld [vmem:[%s395 + $0x8] sm:$0xf]
      %v399 = vld [vmem:[%s395 + $0xc] sm:$0xf]
      %v400 = vld [vmem:[%s395 + $0x10] sm:$0xf]
      %v401 = vld [vmem:[%s395 + $0x14] sm:$0xf]
      %v402 = vld [vmem:[%s395 + $0x18] sm:$0xf]
      %v403 = vld [vmem:[%s395 + $0x1c] sm:$0xf]
      %v404 = vld [vmem:[%s395 + $0x20] sm:$0xf]
      %v405 = vld [vmem:[%s395 + $0x24] sm:$0xf]
      %v406 = vld [vmem:[%s395 + $0x28] sm:$0xf]
      %v407 = vld [vmem:[%s395 + $0x2c] sm:$0xf]
      %v408 = vld [vmem:[%s395 + $0x30] sm:$0xf]
      %v409 = vld [vmem:[%s395 + $0x34] sm:$0xf]
      %v410 = vld [vmem:[%s395 + $0x38] sm:$0xf]
      %v411 = vld [vmem:[%s395 + $0x3c] sm:$0xf]
      %v420 = vunpack.c.l.b16 %v387
      %v421 = vunpack.c.l.b16 %v388
      %v422 = vunpack.c.l.b16 %v389
      %v423 = vunpack.c.l.b16 %v390
      %v424 = vunpack.c.l.b16 %v391
      %v425 = vunpack.c.l.b16 %v392
      %v426 = vunpack.c.l.b16 %v393
      %v427 = vunpack.c.l.b16 %v394
      %v428 = vpack.c.b16 %v421, %v420
      %v429 = vpack.c.b16 %v423, %v422
      %v430 = vpack.c.b16 %v425, %v424
      %v431 = vpack.c.b16 %v427, %v426
      %v452 = vunpack.c.l.b16 %v396
      %v453 = vunpack.c.l.b16 %v397
      %v454 = vunpack.c.l.b16 %v398
      %v455 = vunpack.c.l.b16 %v399
      %v456 = vunpack.c.l.b16 %v400
      %v457 = vunpack.c.l.b16 %v401
      %v458 = vunpack.c.l.b16 %v402
      %v459 = vunpack.c.l.b16 %v403
      %v460 = vunpack.c.l.b16 %v404
      %v461 = vunpack.c.l.b16 %v405
      %v462 = vunpack.c.l.b16 %v406
      %v463 = vunpack.c.l.b16 %v407
      %v464 = vunpack.c.l.b16 %v408
      %v465 = vunpack.c.l.b16 %v409
      %v466 = vunpack.c.l.b16 %v410
      %v467 = vunpack.c.l.b16 %v411
      %v468 = vpack.c.b16 %v453, %v452
      %v469 = vpack.c.b16 %v455, %v454
      %v470 = vpack.c.b16 %v457, %v456
      %v471 = vpack.c.b16 %v459, %v458
      %v472 = vpack.c.b16 %v461, %v460
      %v473 = vpack.c.b16 %v463, %v462
      %v474 = vpack.c.b16 %v465, %v464
      %v475 = vpack.c.b16 %v467, %v466
      %484 = vmatpush.bf16.msra.mxu0 %v475
      %485 = vmatpush.bf16.msra.mxu0 %v474
      %486 = vmatpush.bf16.msra.mxu0 %v473
      %487 = vmatpush.bf16.msra.mxu0 %v472
      %488 = vmatpush.bf16.msra.mxu0 %v471
      %489 = vmatpush.bf16.msra.mxu0 %v470
      %490 = vmatpush.bf16.msra.mxu0 %v469
      %491 = vmatpush.bf16.msra.mxu0 %v468
      %492 = vmatmul.bf16.gmra.mxu0 %v428
      %v493 = vpop.f32.mrf.mxu0
      %v494 = vadd.f32 0.0, %v493
      %v495 = vpop.f32.mrf.mxu0
      %v496 = vadd.f32 0.0, %v495
      %497 = vmatmul.bf16.gmra.mxu0 %v429
      %v498 = vpop.f32.mrf.mxu0
      %v499 = vadd.f32 0.0, %v498
      %v500 = vpop.f32.mrf.mxu0
      %v501 = vadd.f32 0.0, %v500
      %502 = vmatmul.bf16.gmra.mxu0 %v430
      %v503 = vpop.f32.mrf.mxu0
      %v504 = vadd.f32 0.0, %v503
      %v505 = vpop.f32.mrf.mxu0
      %v506 = vadd.f32 0.0, %v505
      %507 = vmatmul.bf16.gmra.mxu0 %v431
      %v508 = vpop.f32.mrf.mxu0
      %v509 = vadd.f32 0.0, %v508
      %v510 = vpop.f32.mrf.mxu0
      %v511 = vadd.f32 0.0, %v510
      %512 = vdwg.mxu0
      %v521 = vunpack.c.l.b16 %v363
      %v522 = vunpack.c.l.b16 %v364
      %v523 = vunpack.c.l.b16 %v365
      %v524 = vunpack.c.l.b16 %v366
      %v525 = vunpack.c.l.b16 %v367
      %v526 = vunpack.c.l.b16 %v368
      %v527 = vunpack.c.l.b16 %v369
      %v528 = vunpack.c.l.b16 %v370
      %v529 = vpack.c.b16 %v522, %v521
      %v530 = vpack.c.b16 %v524, %v523
      %v531 = vpack.c.b16 %v526, %v525
      %v532 = vpack.c.b16 %v528, %v527
      %v553 = vunpack.c.l.b16 %v371
      %v554 = vunpack.c.l.b16 %v372
      %v555 = vunpack.c.l.b16 %v373
      %v556 = vunpack.c.l.b16 %v374
      %v557 = vunpack.c.l.b16 %v375
      %v558 = vunpack.c.l.b16 %v376
      %v559 = vunpack.c.l.b16 %v377
      %v560 = vunpack.c.l.b16 %v378
      %v561 = vunpack.c.l.b16 %v379
      %v562 = vunpack.c.l.b16 %v380
      %v563 = vunpack.c.l.b16 %v381
      %v564 = vunpack.c.l.b16 %v382
      %v565 = vunpack.c.l.b16 %v383
      %v566 = vunpack.c.l.b16 %v384
      %v567 = vunpack.c.l.b16 %v385
      %v568 = vunpack.c.l.b16 %v386
      %v569 = vpack.c.b16 %v554, %v553
      %v570 = vpack.c.b16 %v556, %v555
      %v571 = vpack.c.b16 %v558, %v557
      %v572 = vpack.c.b16 %v560, %v559
      %v573 = vpack.c.b16 %v562, %v561
      %v574 = vpack.c.b16 %v564, %v563
      %v575 = vpack.c.b16 %v566, %v565
      %v576 = vpack.c.b16 %v568, %v567
      %585 = vmatpush.bf16.msra.mxu0 %v576
      %586 = vmatpush.bf16.msra.mxu0 %v575
      %587 = vmatpush.bf16.msra.mxu0 %v574
      %588 = vmatpush.bf16.msra.mxu0 %v573
      %589 = vmatpush.bf16.msra.mxu0 %v572
      %590 = vmatpush.bf16.msra.mxu0 %v571
      %591 = vmatpush.bf16.msra.mxu0 %v570
      %592 = vmatpush.bf16.msra.mxu0 %v569
      %593 = vmatmul.bf16.gmra.mxu0 %v529
      %v594 = vpop.f32.mrf.mxu0
      %v595 = vadd.f32 %v494, %v594
      %v596 = vpop.f32.mrf.mxu0
      %v597 = vadd.f32 %v496, %v596
      %598 = vmatmul.bf16.gmra.mxu0 %v530
      %v599 = vpop.f32.mrf.mxu0
      %v600 = vadd.f32 %v499, %v599
      %v601 = vpop.f32.mrf.mxu0
      %v602 = vadd.f32 %v501, %v601
      %603 = vmatmul.bf16.gmra.mxu0 %v531
      %v604 = vpop.f32.mrf.mxu0
      %v605 = vadd.f32 %v504, %v604
      %v606 = vpop.f32.mrf.mxu0
      %v607 = vadd.f32 %v506, %v606
      %608 = vmatmul.bf16.gmra.mxu0 %v532
      %v609 = vpop.f32.mrf.mxu0
      %v610 = vadd.f32 %v509, %v609
      %v611 = vpop.f32.mrf.mxu0
      %v612 = vadd.f32 %v511, %v611
      %613 = vdwg.mxu0
      %v614 = vld [vmem:[%s332 + $0x1c] sm:$0xf]
      %s615 = scalar_lea.vmem %s351, 128
      %v616 = vld [vmem:[%s615] sm:$0xf]
      %v617 = vld [vmem:[%s615 + $0x4] sm:$0xf]
      %v618 = vld [vmem:[%s615 + $0x8] sm:$0xf]
      %v619 = vld [vmem:[%s615 + $0xc] sm:$0xf]
      %v620 = vld [vmem:[%s615 + $0x10] sm:$0xf]
      %v621 = vld [vmem:[%s615 + $0x14] sm:$0xf]
      %v622 = vld [vmem:[%s615 + $0x18] sm:$0xf]
      %v623 = vld [vmem:[%s615 + $0x1c] sm:$0xf]
      %v624 = vld [vmem:[%s615 + $0x20] sm:$0xf]
      %v625 = vld [vmem:[%s615 + $0x24] sm:$0xf]
      %v626 = vld [vmem:[%s615 + $0x28] sm:$0xf]
      %v627 = vld [vmem:[%s615 + $0x2c] sm:$0xf]
      %v628 = vld [vmem:[%s615 + $0x30] sm:$0xf]
      %v629 = vld [vmem:[%s615 + $0x34] sm:$0xf]
      %v630 = vld [vmem:[%s615 + $0x38] sm:$0xf]
      %v631 = vld [vmem:[%s615 + $0x3c] sm:$0xf]
      %v633 = vunpack.c.l.b16 %v614
      %v634 = vpack.c.b16 %v633, %v527
      %vm635 = vsmask.f32 7424
      %v637 = vshrl.u32 %v529, 16
      %v639 = vshll.u32 %v529, 16
      %v641 = vrot.slane %v639, 1
      %v642 = vor.u32 %v637, %v641
      %v644 = vshll.u32 %v530, 16
      %v646 = vrot.slane %v644, 1
      %v647 = vsel %vm635, %v642, %v646
      %v648 = vshrl.u32 %v530, 16
      %v650 = vor.u32 %v648, %v646
      %v652 = vshll.u32 %v531, 16
      %v654 = vrot.slane %v652, 1
      %v655 = vsel %vm635, %v650, %v654
      %v656 = vshrl.u32 %v531, 16
      %v658 = vor.u32 %v656, %v654
      %v660 = vshll.u32 %v634, 16
      %v662 = vrot.slane %v660, 1
      %v663 = vsel %vm635, %v658, %v662
      %v664 = vshrl.u32 %v634, 16
      %v666 = vor.u32 %v664, %v662
      %v687 = vunpack.c.l.b16 %v616
      %v688 = vunpack.c.l.b16 %v617
      %v689 = vunpack.c.l.b16 %v618
      %v690 = vunpack.c.l.b16 %v619
      %v691 = vunpack.c.l.b16 %v620
      %v692 = vunpack.c.l.b16 %v621
      %v693 = vunpack.c.l.b16 %v622
      %v694 = vunpack.c.l.b16 %v623
      %v695 = vunpack.c.l.b16 %v624
      %v696 = vunpack.c.l.b16 %v625
      %v697 = vunpack.c.l.b16 %v626
      %v698 = vunpack.c.l.b16 %v627
      %v699 = vunpack.c.l.b16 %v628
      %v700 = vunpack.c.l.b16 %v629
      %v701 = vunpack.c.l.b16 %v630
      %v702 = vunpack.c.l.b16 %v631
      %v703 = vpack.c.b16 %v688, %v687
      %v704 = vpack.c.b16 %v690, %v689
      %v705 = vpack.c.b16 %v692, %v691
      %v706 = vpack.c.b16 %v694, %v693
      %v707 = vpack.c.b16 %v696, %v695
      %v708 = vpack.c.b16 %v698, %v697
      %v709 = vpack.c.b16 %v700, %v699
      %v710 = vpack.c.b16 %v702, %v701
      %719 = vmatpush.bf16.msra.mxu0 %v710
      %720 = vmatpush.bf16.msra.mxu0 %v709
      %721 = vmatpush.bf16.msra.mxu0 %v708
      %722 = vmatpush.bf16.msra.mxu0 %v707
      %723 = vmatpush.bf16.msra.mxu0 %v706
      %724 = vmatpush.bf16.msra.mxu0 %v705
      %725 = vmatpush.bf16.msra.mxu0 %v704
      %726 = vmatpush.bf16.msra.mxu0 %v703
      %727 = vmatmul.bf16.gmra.mxu0 %v647
      %v728 = vpop.f32.mrf.mxu0
      %v729 = vadd.f32 0.0, %v728
      %v730 = vpop.f32.mrf.mxu0
      %v731 = vadd.f32 0.0, %v730
      %732 = vmatmul.bf16.gmra.mxu0 %v655
      %v733 = vpop.f32.mrf.mxu0
      %v734 = vadd.f32 0.0, %v733
      %v735 = vpop.f32.mrf.mxu0
      %v736 = vadd.f32 0.0, %v735
      %737 = vmatmul.bf16.gmra.mxu0 %v663
      %v738 = vpop.f32.mrf.mxu0
      %v739 = vadd.f32 0.0, %v738
      %v740 = vpop.f32.mrf.mxu0
      %v741 = vadd.f32 0.0, %v740
      %742 = vmatmul.bf16.gmra.mxu0 %v666
      %v743 = vpop.f32.mrf.mxu0
      %v744 = vadd.f32 0.0, %v743
      %v745 = vpop.f32.mrf.mxu0
      %v746 = vadd.f32 0.0, %v745
      %747 = vdwg.mxu0
      %v748 = vadd.f32 %v595, %v729
      %v749 = vadd.f32 %v597, %v731
      %v750 = vadd.f32 %v600, %v734
      %v751 = vadd.f32 %v602, %v736
      %v752 = vadd.f32 %v605, %v739
      %v753 = vadd.f32 %v607, %v741
      %v754 = vadd.f32 %v610, %v744
      %v755 = vadd.f32 %v612, %v746
      %v756 = vld [vmem:[%s342] sm:$0xf]
      %v757 = vld [vmem:[%s342 + $0x4] sm:$0xf]
      %v758 = vld [vmem:[%s342 + $0x8] sm:$0xf]
      %v759 = vld [vmem:[%s342 + $0xc] sm:$0xf]
      %v760 = vld [vmem:[%s342 + $0x10] sm:$0xf]
      %v761 = vld [vmem:[%s342 + $0x14] sm:$0xf]
      %v762 = vld [vmem:[%s342 + $0x18] sm:$0xf]
      %v763 = vld [vmem:[%s342 + $0x1c] sm:$0x7]
      %s764 = scalar_lea.vmem %s351, 192
      %v765 = vld [vmem:[%s764] sm:$0xf]
      %v766 = vld [vmem:[%s764 + $0x4] sm:$0xf]
      %v767 = vld [vmem:[%s764 + $0x8] sm:$0xf]
      %v768 = vld [vmem:[%s764 + $0xc] sm:$0xf]
      %v769 = vld [vmem:[%s764 + $0x10] sm:$0xf]
      %v770 = vld [vmem:[%s764 + $0x14] sm:$0xf]
      %v771 = vld [vmem:[%s764 + $0x18] sm:$0xf]
      %v772 = vld [vmem:[%s764 + $0x1c] sm:$0xf]
      %v773 = vld [vmem:[%s764 + $0x20] sm:$0xf]
      %v774 = vld [vmem:[%s764 + $0x24] sm:$0xf]
      %v775 = vld [vmem:[%s764 + $0x28] sm:$0xf]
      %v776 = vld [vmem:[%s764 + $0x2c] sm:$0xf]
      %v777 = vld [vmem:[%s764 + $0x30] sm:$0xf]
      %v778 = vld [vmem:[%s764 + $0x34] sm:$0xf]
      %v779 = vld [vmem:[%s764 + $0x38] sm:$0xf]
      %v780 = vld [vmem:[%s764 + $0x3c] sm:$0xf]
      %v789 = vunpack.c.l.b16 %v756
      %v790 = vunpack.c.l.b16 %v757
      %v791 = vunpack.c.l.b16 %v758
      %v792 = vunpack.c.l.b16 %v759
      %v793 = vunpack.c.l.b16 %v760
      %v794 = vunpack.c.l.b16 %v761
      %v795 = vunpack.c.l.b16 %v762
      %v796 = vunpack.c.l.b16 %v763
      %v797 = vpack.c.b16 %v790, %v789
      %v798 = vpack.c.b16 %v792, %v791
      %v799 = vpack.c.b16 %v794, %v793
      %v800 = vpack.c.b16 %v796, %v795
      %v821 = vunpack.c.l.b16 %v765
      %v822 = vunpack.c.l.b16 %v766
      %v823 = vunpack.c.l.b16 %v767
      %v824 = vunpack.c.l.b16 %v768
      %v825 = vunpack.c.l.b16 %v769
      %v826 = vunpack.c.l.b16 %v770
      %v827 = vunpack.c.l.b16 %v771
      %v828 = vunpack.c.l.b16 %v772
      %v829 = vunpack.c.l.b16 %v773
      %v830 = vunpack.c.l.b16 %v774
      %v831 = vunpack.c.l.b16 %v775
      %v832 = vunpack.c.l.b16 %v776
      %v833 = vunpack.c.l.b16 %v777
      %v834 = vunpack.c.l.b16 %v778
      %v835 = vunpack.c.l.b16 %v779
      %v836 = vunpack.c.l.b16 %v780
      %v837 = vpack.c.b16 %v822, %v821
      %v838 = vpack.c.b16 %v824, %v823
      %v839 = vpack.c.b16 %v826, %v825
      %v840 = vpack.c.b16 %v828, %v827
      %v841 = vpack.c.b16 %v830, %v829
      %v842 = vpack.c.b16 %v832, %v831
      %v843 = vpack.c.b16 %v834, %v833
      %v844 = vpack.c.b16 %v836, %v835
      %853 = vmatpush.bf16.msra.mxu0 %v844
      %854 = vmatpush.bf16.msra.mxu0 %v843
      %855 = vmatpush.bf16.msra.mxu0 %v842
      %856 = vmatpush.bf16.msra.mxu0 %v841
      %857 = vmatpush.bf16.msra.mxu0 %v840
      %858 = vmatpush.bf16.msra.mxu0 %v839
      %859 = vmatpush.bf16.msra.mxu0 %v838
      %860 = vmatpush.bf16.msra.mxu0 %v837
      %861 = vmatmul.bf16.gmra.mxu0 %v797
      %v862 = vpop.f32.mrf.mxu0
      %v863 = vadd.f32 0.0, %v862
      %v864 = vpop.f32.mrf.mxu0
      %v865 = vadd.f32 0.0, %v864
      %866 = vmatmul.bf16.gmra.mxu0 %v798
      %v867 = vpop.f32.mrf.mxu0
      %v868 = vadd.f32 0.0, %v867
      %v869 = vpop.f32.mrf.mxu0
      %v870 = vadd.f32 0.0, %v869
      %871 = vmatmul.bf16.gmra.mxu0 %v799
      %v872 = vpop.f32.mrf.mxu0
      %v873 = vadd.f32 0.0, %v872
      %v874 = vpop.f32.mrf.mxu0
      %v875 = vadd.f32 0.0, %v874
      %876 = vmatmul.bf16.gmra.mxu0 %v800
      %v877 = vpop.f32.mrf.mxu0
      %v878 = vadd.f32 0.0, %v877
      %v879 = vpop.f32.mrf.mxu0
      %v880 = vadd.f32 0.0, %v879
      %881 = vdwg.mxu0
      %v882 = vadd.f32 %v748, %v863
      %v883 = vadd.f32 %v749, %v865
      %v884 = vadd.f32 %v750, %v868
      %v885 = vadd.f32 %v751, %v870
      %v886 = vadd.f32 %v752, %v873
      %v887 = vadd.f32 %v753, %v875
      %v888 = vadd.f32 %v754, %v878
      %v889 = vadd.f32 %v755, %v880
      %v890 = vld [vmem:[%s347] sm:$0xf]
      %v891 = vld [vmem:[%s347 + $0x4] sm:$0xf]
      %v892 = vld [vmem:[%s347 + $0x8] sm:$0xf]
      %v893 = vld [vmem:[%s347 + $0xc] sm:$0xf]
      %v894 = vld [vmem:[%s347 + $0x10] sm:$0xf]
      %v895 = vld [vmem:[%s347 + $0x14] sm:$0xf]
      %v896 = vld [vmem:[%s347 + $0x18] sm:$0xf]
      %v897 = vld [vmem:[%s347 + $0x1c] sm:$0x7]
      %s898 = scalar_lea.vmem %s351, 256
      %v899 = vld [vmem:[%s898] sm:$0xf]
      %v900 = vld [vmem:[%s898 + $0x4] sm:$0xf]
      %v901 = vld [vmem:[%s898 + $0x8] sm:$0xf]
      %v902 = vld [vmem:[%s898 + $0xc] sm:$0xf]
      %v903 = vld [vmem:[%s898 + $0x10] sm:$0xf]
      %v904 = vld [vmem:[%s898 + $0x14] sm:$0xf]
      %v905 = vld [vmem:[%s898 + $0x18] sm:$0xf]
      %v906 = vld [vmem:[%s898 + $0x1c] sm:$0xf]
      %v907 = vld [vmem:[%s898 + $0x20] sm:$0xf]
      %v908 = vld [vmem:[%s898 + $0x24] sm:$0xf]
      %v909 = vld [vmem:[%s898 + $0x28] sm:$0xf]
      %v910 = vld [vmem:[%s898 + $0x2c] sm:$0xf]
      %v911 = vld [vmem:[%s898 + $0x30] sm:$0xf]
      %v912 = vld [vmem:[%s898 + $0x34] sm:$0xf]
      %v913 = vld [vmem:[%s898 + $0x38] sm:$0xf]
      %v914 = vld [vmem:[%s898 + $0x3c] sm:$0xf]
      %v923 = vunpack.c.l.b16 %v890
      %v924 = vunpack.c.l.b16 %v891
      %v925 = vunpack.c.l.b16 %v892
      %v926 = vunpack.c.l.b16 %v893
      %v927 = vunpack.c.l.b16 %v894
      %v928 = vunpack.c.l.b16 %v895
      %v929 = vunpack.c.l.b16 %v896
      %v930 = vunpack.c.l.b16 %v897
      %v931 = vpack.c.b16 %v924, %v923
      %v932 = vpack.c.b16 %v926, %v925
      %v933 = vpack.c.b16 %v928, %v927
      %v934 = vpack.c.b16 %v930, %v929
      %v955 = vunpack.c.l.b16 %v899
      %v956 = vunpack.c.l.b16 %v900
      %v957 = vunpack.c.l.b16 %v901
      %v958 = vunpack.c.l.b16 %v902
      %v959 = vunpack.c.l.b16 %v903
      %v960 = vunpack.c.l.b16 %v904
      %v961 = vunpack.c.l.b16 %v905
      %v962 = vunpack.c.l.b16 %v906
      %v963 = vunpack.c.l.b16 %v907
      %v964 = vunpack.c.l.b16 %v908
      %v965 = vunpack.c.l.b16 %v909
      %v966 = vunpack.c.l.b16 %v910
      %v967 = vunpack.c.l.b16 %v911
      %v968 = vunpack.c.l.b16 %v912
      %v969 = vunpack.c.l.b16 %v913
      %v970 = vunpack.c.l.b16 %v914
      %v971 = vpack.c.b16 %v956, %v955
      %v972 = vpack.c.b16 %v958, %v957
      %v973 = vpack.c.b16 %v960, %v959
      %v974 = vpack.c.b16 %v962, %v961
      %v975 = vpack.c.b16 %v964, %v963
      %v976 = vpack.c.b16 %v966, %v965
      %v977 = vpack.c.b16 %v968, %v967
      %v978 = vpack.c.b16 %v970, %v969
      %987 = vmatpush.bf16.msra.mxu0 %v978
      %988 = vmatpush.bf16.msra.mxu0 %v977
      %989 = vmatpush.bf16.msra.mxu0 %v976
      %990 = vmatpush.bf16.msra.mxu0 %v975
      %991 = vmatpush.bf16.msra.mxu0 %v974
      %992 = vmatpush.bf16.msra.mxu0 %v973
      %993 = vmatpush.bf16.msra.mxu0 %v972
      %994 = vmatpush.bf16.msra.mxu0 %v971
      %995 = vmatmul.bf16.gmra.mxu0 %v931
      %v996 = vpop.f32.mrf.mxu0
      %v997 = vadd.f32 0.0, %v996
      %v998 = vpop.f32.mrf.mxu0
      %v999 = vadd.f32 0.0, %v998
      %1000 = vmatmul.bf16.gmra.mxu0 %v932
      %v1001 = vpop.f32.mrf.mxu0
      %v1002 = vadd.f32 0.0, %v1001
      %v1003 = vpop.f32.mrf.mxu0
      %v1004 = vadd.f32 0.0, %v1003
      %1005 = vmatmul.bf16.gmra.mxu0 %v933
      %v1006 = vpop.f32.mrf.mxu0
      %v1007 = vadd.f32 0.0, %v1006
      %v1008 = vpop.f32.mrf.mxu0
      %v1009 = vadd.f32 0.0, %v1008
      %1010 = vmatmul.bf16.gmra.mxu0 %v934
      %v1011 = vpop.f32.mrf.mxu0
      %v1012 = vadd.f32 0.0, %v1011
      %v1013 = vpop.f32.mrf.mxu0
      %v1014 = vadd.f32 0.0, %v1013
      %1015 = vdwg.mxu0
      %v1016 = vadd.f32 %v882, %v997
      %v1017 = vadd.f32 %v883, %v999
      %v1018 = vadd.f32 %v884, %v1002
      %v1019 = vadd.f32 %v885, %v1004
      %v1020 = vadd.f32 %v886, %v1007
      %v1021 = vadd.f32 %v887, %v1009
      %v1022 = vadd.f32 %v888, %v1012
      %v1023 = vadd.f32 %v889, %v1014
      %v1024 = vld [vmem:[%s342 + $0x1c] sm:$0xf]
      %s1025 = scalar_lea.vmem %s351, 320
      %v1026 = vld [vmem:[%s1025] sm:$0xf]
      %v1027 = vld [vmem:[%s1025 + $0x4] sm:$0xf]
      %v1028 = vld [vmem:[%s1025 + $0x8] sm:$0xf]
      %v1029 = vld [vmem:[%s1025 + $0xc] sm:$0xf]
      %v1030 = vld [vmem:[%s1025 + $0x10] sm:$0xf]
      %v1031 = vld [vmem:[%s1025 + $0x14] sm:$0xf]
      %v1032 = vld [vmem:[%s1025 + $0x18] sm:$0xf]
      %v1033 = vld [vmem:[%s1025 + $0x1c] sm:$0xf]
      %v1034 = vld [vmem:[%s1025 + $0x20] sm:$0xf]
      %v1035 = vld [vmem:[%s1025 + $0x24] sm:$0xf]
      %v1036 = vld [vmem:[%s1025 + $0x28] sm:$0xf]
      %v1037 = vld [vmem:[%s1025 + $0x2c] sm:$0xf]
      %v1038 = vld [vmem:[%s1025 + $0x30] sm:$0xf]
      %v1039 = vld [vmem:[%s1025 + $0x34] sm:$0xf]
      %v1040 = vld [vmem:[%s1025 + $0x38] sm:$0xf]
      %v1041 = vld [vmem:[%s1025 + $0x3c] sm:$0xf]
      %v1043 = vunpack.c.l.b16 %v1024
      %v1044 = vpack.c.b16 %v1043, %v795
      %v1046 = vshrl.u32 %v797, 16
      %v1048 = vshll.u32 %v797, 16
      %v1050 = vrot.slane %v1048, 1
      %v1051 = vor.u32 %v1046, %v1050
      %v1053 = vshll.u32 %v798, 16
      %v1055 = vrot.slane %v1053, 1
      %v1056 = vsel %vm635, %v1051, %v1055
      %v1057 = vshrl.u32 %v798, 16
      %v1059 = vor.u32 %v1057, %v1055
      %v1061 = vshll.u32 %v799, 16
      %v1063 = vrot.slane %v1061, 1
      %v1064 = vsel %vm635, %v1059, %v1063
      %v1065 = vshrl.u32 %v799, 16
      %v1067 = vor.u32 %v1065, %v1063
      %v1069 = vshll.u32 %v1044, 16
      %v1071 = vrot.slane %v1069, 1
      %v1072 = vsel %vm635, %v1067, %v1071
      %v1073 = vshrl.u32 %v1044, 16
      %v1075 = vor.u32 %v1073, %v1071
      %v1096 = vunpack.c.l.b16 %v1026
      %v1097 = vunpack.c.l.b16 %v1027
      %v1098 = vunpack.c.l.b16 %v1028
      %v1099 = vunpack.c.l.b16 %v1029
      %v1100 = vunpack.c.l.b16 %v1030
      %v1101 = vunpack.c.l.b16 %v1031
      %v1102 = vunpack.c.l.b16 %v1032
      %v1103 = vunpack.c.l.b16 %v1033
      %v1104 = vunpack.c.l.b16 %v1034
      %v1105 = vunpack.c.l.b16 %v1035
      %v1106 = vunpack.c.l.b16 %v1036
      %v1107 = vunpack.c.l.b16 %v1037
      %v1108 = vunpack.c.l.b16 %v1038
      %v1109 = vunpack.c.l.b16 %v1039
      %v1110 = vunpack.c.l.b16 %v1040
      %v1111 = vunpack.c.l.b16 %v1041
      %v1112 = vpack.c.b16 %v1097, %v1096
      %v1113 = vpack.c.b16 %v1099, %v1098
      %v1114 = vpack.c.b16 %v1101, %v1100
      %v1115 = vpack.c.b16 %v1103, %v1102
      %v1116 = vpack.c.b16 %v1105, %v1104
      %v1117 = vpack.c.b16 %v1107, %v1106
      %v1118 = vpack.c.b16 %v1109, %v1108
      %v1119 = vpack.c.b16 %v1111, %v1110
      %1128 = vmatpush.bf16.msra.mxu0 %v1119
      %1129 = vmatpush.bf16.msra.mxu0 %v1118
      %1130 = vmatpush.bf16.msra.mxu0 %v1117
      %1131 = vmatpush.bf16.msra.mxu0 %v1116
      %1132 = vmatpush.bf16.msra.mxu0 %v1115
      %1133 = vmatpush.bf16.msra.mxu0 %v1114
      %1134 = vmatpush.bf16.msra.mxu0 %v1113
      %1135 = vmatpush.bf16.msra.mxu0 %v1112
      %1136 = vmatmul.bf16.gmra.mxu0 %v1056
      %v1137 = vpop.f32.mrf.mxu0
      %v1138 = vadd.f32 0.0, %v1137
      %v1139 = vpop.f32.mrf.mxu0
      %v1140 = vadd.f32 0.0, %v1139
      %1141 = vmatmul.bf16.gmra.mxu0 %v1064
      %v1142 = vpop.f32.mrf.mxu0
      %v1143 = vadd.f32 0.0, %v1142
      %v1144 = vpop.f32.mrf.mxu0
      %v1145 = vadd.f32 0.0, %v1144
      %1146 = vmatmul.bf16.gmra.mxu0 %v1072
      %v1147 = vpop.f32.mrf.mxu0
      %v1148 = vadd.f32 0.0, %v1147
      %v1149 = vpop.f32.mrf.mxu0
      %v1150 = vadd.f32 0.0, %v1149
      %1151 = vmatmul.bf16.gmra.mxu0 %v1075
      %v1152 = vpop.f32.mrf.mxu0
      %v1153 = vadd.f32 0.0, %v1152
      %v1154 = vpop.f32.mrf.mxu0
      %v1155 = vadd.f32 0.0, %v1154
      %1156 = vdwg.mxu0
      %v1157 = vadd.f32 %v1016, %v1138
      %v1158 = vadd.f32 %v1017, %v1140
      %v1159 = vadd.f32 %v1018, %v1143
      %v1160 = vadd.f32 %v1019, %v1145
      %v1161 = vadd.f32 %v1020, %v1148
      %v1162 = vadd.f32 %v1021, %v1150
      %v1163 = vadd.f32 %v1022, %v1153
      %v1164 = vadd.f32 %v1023, %v1155
      %v1165 = vld [vmem:[%s332 + $0x4] sm:$0xf]
      %v1166 = vld [vmem:[%s332 + $0x8] sm:$0xf]
      %v1167 = vld [vmem:[%s332 + $0xc] sm:$0xf]
      %v1168 = vld [vmem:[%s332 + $0x10] sm:$0xf]
      %v1169 = vld [vmem:[%s332 + $0x14] sm:$0xf]
      %v1170 = vld [vmem:[%s332 + $0x18] sm:$0xf]
      %v1171 = vld [vmem:[%s332 + $0x1c] sm:$0xf]
      %v1172 = vld [vmem:[%s332 + $0x20] sm:$0xf]
      %s1173 = scalar_lea.vmem %s351, 384
      %v1174 = vld [vmem:[%s1173] sm:$0xf]
      %v1175 = vld [vmem:[%s1173 + $0x4] sm:$0xf]
      %v1176 = vld [vmem:[%s1173 + $0x8] sm:$0xf]
      %v1177 = vld [vmem:[%s1173 + $0xc] sm:$0xf]
      %v1178 = vld [vmem:[%s1173 + $0x10] sm:$0xf]
      %v1179 = vld [vmem:[%s1173 + $0x14] sm:$0xf]
      %v1180 = vld [vmem:[%s1173 + $0x18] sm:$0xf]
      %v1181 = vld [vmem:[%s1173 + $0x1c] sm:$0xf]
      %v1182 = vld [vmem:[%s1173 + $0x20] sm:$0xf]
      %v1183 = vld [vmem:[%s1173 + $0x24] sm:$0xf]
      %v1184 = vld [vmem:[%s1173 + $0x28] sm:$0xf]
      %v1185 = vld [vmem:[%s1173 + $0x2c] sm:$0xf]
      %v1186 = vld [vmem:[%s1173 + $0x30] sm:$0xf]
      %v1187 = vld [vmem:[%s1173 + $0x34] sm:$0xf]
      %v1188 = vld [vmem:[%s1173 + $0x38] sm:$0xf]
      %v1189 = vld [vmem:[%s1173 + $0x3c] sm:$0xf]
      %v1198 = vunpack.c.l.b16 %v1165
      %v1199 = vunpack.c.l.b16 %v1166
      %v1200 = vunpack.c.l.b16 %v1167
      %v1201 = vunpack.c.l.b16 %v1168
      %v1202 = vunpack.c.l.b16 %v1169
      %v1203 = vunpack.c.l.b16 %v1170
      %v1204 = vunpack.c.l.b16 %v1171
      %v1205 = vunpack.c.l.b16 %v1172
      %v1206 = vpack.c.b16 %v1199, %v1198
      %v1207 = vpack.c.b16 %v1201, %v1200
      %v1208 = vpack.c.b16 %v1203, %v1202
      %v1209 = vpack.c.b16 %v1205, %v1204
      %v1211 = vshrl.u32 %v1206, 16
      %v1213 = vshll.u32 %v1206, 16
      %v1215 = vrot.slane %v1213, 1
      %v1216 = vor.u32 %v1211, %v1215
      %v1218 = vshll.u32 %v1207, 16
      %v1220 = vrot.slane %v1218, 1
      %v1221 = vsel %vm635, %v1216, %v1220
      %v1222 = vshrl.u32 %v1207, 16
      %v1224 = vor.u32 %v1222, %v1220
      %v1226 = vshll.u32 %v1208, 16
      %v1228 = vrot.slane %v1226, 1
      %v1229 = vsel %vm635, %v1224, %v1228
      %v1230 = vshrl.u32 %v1208, 16
      %v1232 = vor.u32 %v1230, %v1228
      %v1234 = vshll.u32 %v1209, 16
      %v1236 = vrot.slane %v1234, 1
      %v1237 = vsel %vm635, %v1232, %v1236
      %v1238 = vshrl.u32 %v1209, 16
      %v1240 = vor.u32 %v1238, %v1236
      %v1261 = vunpack.c.l.b16 %v1174
      %v1262 = vunpack.c.l.b16 %v1175
      %v1263 = vunpack.c.l.b16 %v1176
      %v1264 = vunpack.c.l.b16 %v1177
      %v1265 = vunpack.c.l.b16 %v1178
      %v1266 = vunpack.c.l.b16 %v1179
      %v1267 = vunpack.c.l.b16 %v1180
      %v1268 = vunpack.c.l.b16 %v1181
      %v1269 = vunpack.c.l.b16 %v1182
      %v1270 = vunpack.c.l.b16 %v1183
      %v1271 = vunpack.c.l.b16 %v1184
      %v1272 = vunpack.c.l.b16 %v1185
      %v1273 = vunpack.c.l.b16 %v1186
      %v1274 = vunpack.c.l.b16 %v1187
      %v1275 = vunpack.c.l.b16 %v1188
      %v1276 = vunpack.c.l.b16 %v1189
      %v1277 = vpack.c.b16 %v1262, %v1261
      %v1278 = vpack.c.b16 %v1264, %v1263
      %v1279 = vpack.c.b16 %v1266, %v1265
      %v1280 = vpack.c.b16 %v1268, %v1267
      %v1281 = vpack.c.b16 %v1270, %v1269
      %v1282 = vpack.c.b16 %v1272, %v1271
      %v1283 = vpack.c.b16 %v1274, %v1273
      %v1284 = vpack.c.b16 %v1276, %v1275
      %1293 = vmatpush.bf16.msra.mxu0 %v1284
      %1294 = vmatpush.bf16.msra.mxu0 %v1283
      %1295 = vmatpush.bf16.msra.mxu0 %v1282
      %1296 = vmatpush.bf16.msra.mxu0 %v1281
      %1297 = vmatpush.bf16.msra.mxu0 %v1280
      %1298 = vmatpush.bf16.msra.mxu0 %v1279
      %1299 = vmatpush.bf16.msra.mxu0 %v1278
      %1300 = vmatpush.bf16.msra.mxu0 %v1277
      %1301 = vmatmul.bf16.gmra.mxu0 %v1221
      %v1302 = vpop.f32.mrf.mxu0
      %v1303 = vadd.f32 0.0, %v1302
      %v1304 = vpop.f32.mrf.mxu0
      %v1305 = vadd.f32 0.0, %v1304
      %1306 = vmatmul.bf16.gmra.mxu0 %v1229
      %v1307 = vpop.f32.mrf.mxu0
      %v1308 = vadd.f32 0.0, %v1307
      %v1309 = vpop.f32.mrf.mxu0
      %v1310 = vadd.f32 0.0, %v1309
      %1311 = vmatmul.bf16.gmra.mxu0 %v1237
      %v1312 = vpop.f32.mrf.mxu0
      %v1313 = vadd.f32 0.0, %v1312
      %v1314 = vpop.f32.mrf.mxu0
      %v1315 = vadd.f32 0.0, %v1314
      %1316 = vmatmul.bf16.gmra.mxu0 %v1240
      %v1317 = vpop.f32.mrf.mxu0
      %v1318 = vadd.f32 0.0, %v1317
      %v1319 = vpop.f32.mrf.mxu0
      %v1320 = vadd.f32 0.0, %v1319
      %1321 = vdwg.mxu0
      %v1322 = vadd.f32 %v1157, %v1303
      %v1323 = vadd.f32 %v1158, %v1305
      %v1324 = vadd.f32 %v1159, %v1308
      %v1325 = vadd.f32 %v1160, %v1310
      %v1326 = vadd.f32 %v1161, %v1313
      %v1327 = vadd.f32 %v1162, %v1315
      %v1328 = vadd.f32 %v1163, %v1318
      %v1329 = vadd.f32 %v1164, %v1320
      %v1330 = vld [vmem:[%s337 + $0x4] sm:$0xf]
      %v1331 = vld [vmem:[%s337 + $0x8] sm:$0xf]
      %v1332 = vld [vmem:[%s337 + $0xc] sm:$0xf]
      %v1333 = vld [vmem:[%s337 + $0x10] sm:$0xf]
      %v1334 = vld [vmem:[%s337 + $0x14] sm:$0xf]
      %v1335 = vld [vmem:[%s337 + $0x18] sm:$0xf]
      %v1336 = vld [vmem:[%s337 + $0x1c] sm:$0xf]
      %v1337 = vld [vmem:[%s337 + $0x20] sm:$0xf]
      %s1338 = scalar_lea.vmem %s351, 448
      %v1339 = vld [vmem:[%s1338] sm:$0xf]
      %v1340 = vld [vmem:[%s1338 + $0x4] sm:$0xf]
      %v1341 = vld [vmem:[%s1338 + $0x8] sm:$0xf]
      %v1342 = vld [vmem:[%s1338 + $0xc] sm:$0xf]
      %v1343 = vld [vmem:[%s1338 + $0x10] sm:$0xf]
      %v1344 = vld [vmem:[%s1338 + $0x14] sm:$0xf]
      %v1345 = vld [vmem:[%s1338 + $0x18] sm:$0xf]
      %v1346 = vld [vmem:[%s1338 + $0x1c] sm:$0xf]
      %v1347 = vld [vmem:[%s1338 + $0x20] sm:$0xf]
      %v1348 = vld [vmem:[%s1338 + $0x24] sm:$0xf]
      %v1349 = vld [vmem:[%s1338 + $0x28] sm:$0xf]
      %v1350 = vld [vmem:[%s1338 + $0x2c] sm:$0xf]
      %v1351 = vld [vmem:[%s1338 + $0x30] sm:$0xf]
      %v1352 = vld [vmem:[%s1338 + $0x34] sm:$0xf]
      %v1353 = vld [vmem:[%s1338 + $0x38] sm:$0xf]
      %v1354 = vld [vmem:[%s1338 + $0x3c] sm:$0xf]
      %v1363 = vunpack.c.l.b16 %v1330
      %v1364 = vunpack.c.l.b16 %v1331
      %v1365 = vunpack.c.l.b16 %v1332
      %v1366 = vunpack.c.l.b16 %v1333
      %v1367 = vunpack.c.l.b16 %v1334
      %v1368 = vunpack.c.l.b16 %v1335
      %v1369 = vunpack.c.l.b16 %v1336
      %v1370 = vunpack.c.l.b16 %v1337
      %v1371 = vpack.c.b16 %v1364, %v1363
      %v1372 = vpack.c.b16 %v1366, %v1365
      %v1373 = vpack.c.b16 %v1368, %v1367
      %v1374 = vpack.c.b16 %v1370, %v1369
      %v1376 = vshrl.u32 %v1371, 16
      %v1378 = vshll.u32 %v1371, 16
      %v1380 = vrot.slane %v1378, 1
      %v1381 = vor.u32 %v1376, %v1380
      %v1383 = vshll.u32 %v1372, 16
      %v1385 = vrot.slane %v1383, 1
      %v1386 = vsel %vm635, %v1381, %v1385
      %v1387 = vshrl.u32 %v1372, 16
      %v1389 = vor.u32 %v1387, %v1385
      %v1391 = vshll.u32 %v1373, 16
      %v1393 = vrot.slane %v1391, 1
      %v1394 = vsel %vm635, %v1389, %v1393
      %v1395 = vshrl.u32 %v1373, 16
      %v1397 = vor.u32 %v1395, %v1393
      %v1399 = vshll.u32 %v1374, 16
      %v1401 = vrot.slane %v1399, 1
      %v1402 = vsel %vm635, %v1397, %v1401
      %v1403 = vshrl.u32 %v1374, 16
      %v1405 = vor.u32 %v1403, %v1401
      %v1426 = vunpack.c.l.b16 %v1339
      %v1427 = vunpack.c.l.b16 %v1340
      %v1428 = vunpack.c.l.b16 %v1341
      %v1429 = vunpack.c.l.b16 %v1342
      %v1430 = vunpack.c.l.b16 %v1343
      %v1431 = vunpack.c.l.b16 %v1344
      %v1432 = vunpack.c.l.b16 %v1345
      %v1433 = vunpack.c.l.b16 %v1346
      %v1434 = vunpack.c.l.b16 %v1347
      %v1435 = vunpack.c.l.b16 %v1348
      %v1436 = vunpack.c.l.b16 %v1349
      %v1437 = vunpack.c.l.b16 %v1350
      %v1438 = vunpack.c.l.b16 %v1351
      %v1439 = vunpack.c.l.b16 %v1352
      %v1440 = vunpack.c.l.b16 %v1353
      %v1441 = vunpack.c.l.b16 %v1354
      %v1442 = vpack.c.b16 %v1427, %v1426
      %v1443 = vpack.c.b16 %v1429, %v1428
      %v1444 = vpack.c.b16 %v1431, %v1430
      %v1445 = vpack.c.b16 %v1433, %v1432
      %v1446 = vpack.c.b16 %v1435, %v1434
      %v1447 = vpack.c.b16 %v1437, %v1436
      %v1448 = vpack.c.b16 %v1439, %v1438
      %v1449 = vpack.c.b16 %v1441, %v1440
      %1458 = vmatpush.bf16.msra.mxu0 %v1449
      %1459 = vmatpush.bf16.msra.mxu0 %v1448
      %1460 = vmatpush.bf16.msra.mxu0 %v1447
      %1461 = vmatpush.bf16.msra.mxu0 %v1446
      %1462 = vmatpush.bf16.msra.mxu0 %v1445
      %1463 = vmatpush.bf16.msra.mxu0 %v1444
      %1464 = vmatpush.bf16.msra.mxu0 %v1443
      %1465 = vmatpush.bf16.msra.mxu0 %v1442
      %1466 = vmatmul.bf16.gmra.mxu0 %v1386
      %v1467 = vpop.f32.mrf.mxu0
      %v1468 = vadd.f32 0.0, %v1467
      %v1469 = vpop.f32.mrf.mxu0
      %v1470 = vadd.f32 0.0, %v1469
      %1471 = vmatmul.bf16.gmra.mxu0 %v1394
      %v1472 = vpop.f32.mrf.mxu0
      %v1473 = vadd.f32 0.0, %v1472
      %v1474 = vpop.f32.mrf.mxu0
      %v1475 = vadd.f32 0.0, %v1474
      %1476 = vmatmul.bf16.gmra.mxu0 %v1402
      %v1477 = vpop.f32.mrf.mxu0
      %v1478 = vadd.f32 0.0, %v1477
      %v1479 = vpop.f32.mrf.mxu0
      %v1480 = vadd.f32 0.0, %v1479
      %1481 = vmatmul.bf16.gmra.mxu0 %v1405
      %v1482 = vpop.f32.mrf.mxu0
      %v1483 = vadd.f32 0.0, %v1482
      %v1484 = vpop.f32.mrf.mxu0
      %v1485 = vadd.f32 0.0, %v1484
      %1486 = vdwg.mxu0
      %v1487 = vadd.f32 %v1322, %v1468
      %v1488 = vadd.f32 %v1323, %v1470
      %v1489 = vadd.f32 %v1324, %v1473
      %v1490 = vadd.f32 %v1325, %v1475
      %v1491 = vadd.f32 %v1326, %v1478
      %v1492 = vadd.f32 %v1327, %v1480
      %v1493 = vadd.f32 %v1328, %v1483
      %v1494 = vadd.f32 %v1329, %v1485
      %v1495 = vld [vmem:[%s332 + $0x4] sm:$0xe]
      %s1496 = scalar_lea.vmem %s351, 512
      %v1497 = vld [vmem:[%s1496] sm:$0xf]
      %v1498 = vld [vmem:[%s1496 + $0x4] sm:$0xf]
      %v1499 = vld [vmem:[%s1496 + $0x8] sm:$0xf]
      %v1500 = vld [vmem:[%s1496 + $0xc] sm:$0xf]
      %v1501 = vld [vmem:[%s1496 + $0x10] sm:$0xf]
      %v1502 = vld [vmem:[%s1496 + $0x14] sm:$0xf]
      %v1503 = vld [vmem:[%s1496 + $0x18] sm:$0xf]
      %v1504 = vld [vmem:[%s1496 + $0x1c] sm:$0xf]
      %v1505 = vld [vmem:[%s1496 + $0x20] sm:$0xf]
      %v1506 = vld [vmem:[%s1496 + $0x24] sm:$0xf]
      %v1507 = vld [vmem:[%s1496 + $0x28] sm:$0xf]
      %v1508 = vld [vmem:[%s1496 + $0x2c] sm:$0xf]
      %v1509 = vld [vmem:[%s1496 + $0x30] sm:$0xf]
      %v1510 = vld [vmem:[%s1496 + $0x34] sm:$0xf]
      %v1511 = vld [vmem:[%s1496 + $0x38] sm:$0xf]
      %v1512 = vld [vmem:[%s1496 + $0x3c] sm:$0xf]
      %v1514 = vunpack.c.l.b16 %v1495
      %v1515 = vpack.c.b16 %v1199, %v1514
      %vm1516 = vcmask 1046528
      %v1517 = vrot.slane %v1515, 1
      %v1518 = vrot.slane %v1207, 1
      %v1519 = vsel %vm1516, %v1517, %v1518
      %v1520 = vrot.slane %v1208, 1
      %v1521 = vsel %vm1516, %v1518, %v1520
      %v1522 = vrot.slane %v1209, 1
      %v1523 = vsel %vm1516, %v1520, %v1522
      %v1544 = vunpack.c.l.b16 %v1497
      %v1545 = vunpack.c.l.b16 %v1498
      %v1546 = vunpack.c.l.b16 %v1499
      %v1547 = vunpack.c.l.b16 %v1500
      %v1548 = vunpack.c.l.b16 %v1501
      %v1549 = vunpack.c.l.b16 %v1502
      %v1550 = vunpack.c.l.b16 %v1503
      %v1551 = vunpack.c.l.b16 %v1504
      %v1552 = vunpack.c.l.b16 %v1505
      %v1553 = vunpack.c.l.b16 %v1506
      %v1554 = vunpack.c.l.b16 %v1507
      %v1555 = vunpack.c.l.b16 %v1508
      %v1556 = vunpack.c.l.b16 %v1509
      %v1557 = vunpack.c.l.b16 %v1510
      %v1558 = vunpack.c.l.b16 %v1511
      %v1559 = vunpack.c.l.b16 %v1512
      %v1560 = vpack.c.b16 %v1545, %v1544
      %v1561 = vpack.c.b16 %v1547, %v1546
      %v1562 = vpack.c.b16 %v1549, %v1548
      %v1563 = vpack.c.b16 %v1551, %v1550
      %v1564 = vpack.c.b16 %v1553, %v1552
      %v1565 = vpack.c.b16 %v1555, %v1554
      %v1566 = vpack.c.b16 %v1557, %v1556
      %v1567 = vpack.c.b16 %v1559, %v1558
      %1576 = vmatpush.bf16.msra.mxu0 %v1567
      %1577 = vmatpush.bf16.msra.mxu0 %v1566
      %1578 = vmatpush.bf16.msra.mxu0 %v1565
      %1579 = vmatpush.bf16.msra.mxu0 %v1564
      %1580 = vmatpush.bf16.msra.mxu0 %v1563
      %1581 = vmatpush.bf16.msra.mxu0 %v1562
      %1582 = vmatpush.bf16.msra.mxu0 %v1561
      %1583 = vmatpush.bf16.msra.mxu0 %v1560
      %1584 = vmatmul.bf16.gmra.mxu0 %v1519
      %v1585 = vpop.f32.mrf.mxu0
      %v1586 = vadd.f32 0.0, %v1585
      %v1587 = vpop.f32.mrf.mxu0
      %v1588 = vadd.f32 0.0, %v1587
      %1589 = vmatmul.bf16.gmra.mxu0 %v1521
      %v1590 = vpop.f32.mrf.mxu0
      %v1591 = vadd.f32 0.0, %v1590
      %v1592 = vpop.f32.mrf.mxu0
      %v1593 = vadd.f32 0.0, %v1592
      %1594 = vmatmul.bf16.gmra.mxu0 %v1523
      %v1595 = vpop.f32.mrf.mxu0
      %v1596 = vadd.f32 0.0, %v1595
      %v1597 = vpop.f32.mrf.mxu0
      %v1598 = vadd.f32 0.0, %v1597
      %1599 = vmatmul.bf16.gmra.mxu0 %v1522
      %v1600 = vpop.f32.mrf.mxu0
      %v1601 = vadd.f32 0.0, %v1600
      %v1602 = vpop.f32.mrf.mxu0
      %v1603 = vadd.f32 0.0, %v1602
      %1604 = vdwg.mxu0
      %v1605 = vadd.f32 %v1487, %v1586
      %v1606 = vadd.f32 %v1488, %v1588
      %v1607 = vadd.f32 %v1489, %v1591
      %v1608 = vadd.f32 %v1490, %v1593
      %v1609 = vadd.f32 %v1491, %v1596
      %v1610 = vadd.f32 %v1492, %v1598
      %v1611 = vadd.f32 %v1493, %v1601
      %v1612 = vadd.f32 %v1494, %v1603
      %v1613 = vld [vmem:[%s354] sm:$0x1]
      %v1615 = vperm.slane %v1613, 0
      %v1617 = vadd.f32 %v1605, %v1615
      %v1618 = vadd.f32 %v1606, %v1615
      %v1619 = vadd.f32 %v1607, %v1615
      %v1620 = vadd.f32 %v1608, %v1615
      %v1621 = vadd.f32 %v1609, %v1615
      %v1622 = vadd.f32 %v1610, %v1615
      %v1623 = vadd.f32 %v1611, %v1615
      %v1624 = vadd.f32 %v1612, %v1615
      %v1625 = vmax.f32 %v1617, 0.0
      %v1626 = vmax.f32 %v1618, 0.0
      %v1627 = vmax.f32 %v1619, 0.0
      %v1628 = vmax.f32 %v1620, 0.0
      %v1629 = vmax.f32 %v1621, 0.0
      %v1630 = vmax.f32 %v1622, 0.0
      %v1631 = vmax.f32 %v1623, 0.0
      %v1632 = vmax.f32 %v1624, 0.0
      %v1633 = vpack.c.bf16 %v1625, %v1625
      %v1634 = vpack.c.bf16 %v1626, %v1626
      %v1635 = vpack.c.bf16 %v1627, %v1627
      %v1636 = vpack.c.bf16 %v1628, %v1628
      %v1637 = vpack.c.bf16 %v1629, %v1629
      %v1638 = vpack.c.bf16 %v1630, %v1630
      %v1639 = vpack.c.bf16 %v1631, %v1631
      %v1640 = vpack.c.bf16 %v1632, %v1632
      %1641 = vst [vmem:[%s362] sm:$0xf] %v1633
      %1642 = vst [vmem:[%s362 + $0x4] sm:$0xf] %v1634
      %1643 = vst [vmem:[%s362 + $0x8] sm:$0xf] %v1635
      %1644 = vst [vmem:[%s362 + $0xc] sm:$0xf] %v1636
      %1645 = vst [vmem:[%s362 + $0x10] sm:$0xf] %v1637
      %1646 = vst [vmem:[%s362 + $0x14] sm:$0xf] %v1638
      %1647 = vst [vmem:[%s362 + $0x18] sm:$0xf] %v1639
      %1648 = vst [vmem:[%s362 + $0x1c] sm:$0x7] %v1640
      %p1649 = scmp.lt.s32.totalorder %s21, 1
      %s1650 = scalar_select %p1649, %s21, 1
      %p1651 = scmp.lt.s32.totalorder %s22, 0
      %s1652 = scalar_select %p1651, %s22, 0
      %s1653 = smul.addr %s1650, 8
      %s1654 = sadd.s32 %s1652, %s1653
      %s1655 = smul.addr %s1654, 4
      %s1656 = scalar_lea.vmem %s6, %s1655
      // Predicated region
      $region45: #{inception_b.8} parent=43 // pred_check
        %p1657 = pneg %p205
      $region46: #{inception_b.8} parent=43 // pred_check_branch
        %1659 = sbr.rel (%p1657) target = $region48
      $region47: #{inception_b.8} parent=43 // pred_region
        _
      $region48: #{inception_b.8} parent=43 // pred_fallthru
        _
    $region44: #{inception_b.8} parent=5 // pred_fallthru
      _
    %p1660 = scmp.le.s32.totalorder 2, %s12
    // Predicated region
    $region49: #{inception_b.8} parent=5 // pred_check
      %p1661 = pneg %p1660
    $region50: #{inception_b.8} parent=5 // pred_check_branch
      %1663 = sbr.rel (%p1661) target = $region52
    $region51: #{inception_b.8} parent=5 // pred_region
      %s1664 = ssub.s32 %s12, 2
      // Predicated region
      $region53: #{inception_b.8} parent=51 // pred_check
        %p1665 = pneg %p211
      $region54: #{inception_b.8} parent=51 // pred_check_branch
        %1667 = sbr.rel (%p1665) target = $region56
      $region55: #{inception_b.8} parent=51 // pred_region
        %p1668 = scmp.lt.s32.totalorder %s23, 1
        %s1669 = scalar_select %p1668, %s23, 1
        %p1670 = scmp.lt.s32.totalorder %s24, 0
        %s1671 = scalar_select %p1670, %s24, 0
        %s1672 = smul.addr %s1669, 8
        %s1673 = sadd.s32 %s1671, %s1672
        %s1674 = smul.addr %s1673, 4
        %s1675 = scalar_lea.vmem %s6, %s1674
      $region56: #{inception_b.8} parent=51 // pred_fallthru
        _
    $region52: #{inception_b.8} parent=5 // pred_fallthru
      _
  $region6: #{inception_b.8} parent=0 // loop_footer
    %s16 = sadd.s32 1, %s12
  $region7: #{inception_b.8} parent=0 // loop_footer_branch
    %11 = sbr.rel target = $region3
  $region8: #{inception_b.8} parent=0 // loop_exit
    _

// kernel: inception_b.5
$region0: #{inception_b.5}
  #allocation0 [shape = 'u32[]', space=smem, size = 0x4, offset = 0x4, fixed_abs, tag = 'smem constant byte address 0x4 - core index']
  #allocation1 [shape = 'u32[72,128]{1,0:T(1,128)}', space=vmem, size = 0x9000, scoped, tag = 'internal scratch']
  %s0 = inlined_call_operand.vmem [shape: bf16[2,72,8], index: 0, kind: input, shape index: {}]
  %s1 = inlined_call_operand.vmem [shape: bf16[2,72,8], index: 1, kind: input, shape index: {}]
  %s2 = inlined_call_operand.vmem [shape: bf16[2,72,8], index: 2, kind: input, shape index: {}]
  %s3 = inlined_call_operand.vmem [shape: bf16[2,72,8], index: 3, kind: input, shape index: {}]
  %s4 = inlined_call_operand.vmem [shape: bf16[9,8,384], index: 4, kind: input, shape index: {}]
  %s5 = inlined_call_operand.vmem [shape: f32[1,384], index: 5, kind: input, shape index: {}]
  %s6 = inlined_call_operand.vmem [shape: bf16[2,62,384], index: 6, kind: output, shape index: {}]
  %s7 = sld [smem:[#allocation0]]
  $region135: #{inception_b.5} parent=0
    _
  %s9 = ssub.s32 1, %s7
  %s10 = scalar_select 0, %s9, %s7
  $region1: #{inception_b.5} parent=0
    #allocation2 [shape = 'u8[36864]{0}', space=vmem, size = 0x9000, scoped, tag = 'input window, operand 4']
    #allocation3 [shape = 'u8[32768]{0}', space=vmem, size = 0x8000, scoped, tag = 'output window, operand 0']
    loop: start=0, step=1, limit=8
    $region2: #{inception_b.5} parent=1 // loop_pre_header
      _
    $region3: #{inception_b.5} parent=1 // loop_header
      %s12 = sphi 0, %s16
      %p13 = scmp.ge.s32.totalorder %s12, 8
      %s19 = sphi 0, %s31
      %s20 = sphi 0, %s27
      %s21 = sphi 0, %s19
      %s22 = sphi 0, %s20
      %s23 = sphi 0, %s21
      %s24 = sphi 0, %s22
      %s34 = sphi 0, %s36
      %s37 = sphi 0, %s34
      %s38 = sphi 0, %s37
      %s54 = sphi 0, %s38
      %s60 = sphi 0, %s62
      %s63 = sphi 0, %s60
      %s64 = sphi 0, %s63
      %s80 = sphi 0, %s64
      %s86 = sphi 0, %s88
      %s89 = sphi 0, %s86
      %s90 = sphi 0, %s89
      %s106 = sphi 0, %s90
      %s112 = sphi 0, %s114
      %s115 = sphi 0, %s112
      %s116 = sphi 0, %s115
      %s132 = sphi 0, %s116
      %s138 = sphi 0, %s140
      %s141 = sphi 0, %s138
      %s142 = sphi 0, %s141
      %s158 = sphi 0, %s142
      %s164 = sphi 0, %s166
      %s167 = sphi 0, %s164
      %s168 = sphi 0, %s167
      %s184 = sphi 0, %s168
      %s192 = sphi 0, %s194
      %s195 = sphi 0, %s192
      %s196 = sphi 0, %s195
      %s212 = sphi 0, %s196
    $region4: #{inception_b.5} parent=1 // loop_header_branch
      %15 = sbr.rel (%p13) target = $region8
    $region5: #{inception_b.5} parent=1 // loop_body
      %s17 = ssub.s32 %s12, 1
      %s18 = ssub.s32 %s12, 2
      %s25 = sadd.s32 1, %s20
      %p26 = scmp.ge.s32.totalorder %s25, 3
      %s27 = scalar_select %p26, 0, %s25
      %s28 = sadd.s32 1, %s19
      %s29 = scalar_select %p26, %s28, %s19
      %p30 = scmp.ge.s32.totalorder %s29, 2
      %s31 = scalar_select %p30, 0, %s29
      %s32 = ssub.s32 %s19, %s31
      %p33 = scmp.eq.s32.totalorder %s32, 0
      %s35 = sadd.s32 %s34, 1
      %s36 = scalar_select %p33, %s34, %s35
      %p39 = pneg %p33
      %p40 = scmp.eq.s32.totalorder %s12, 5
      %p41 = por %p39, %p40
      %p42 = scmp.ne.s32.totalorder %s34, %s37
      %p43 = scmp.eq.s32.totalorder %s12, 0
      %p44 = por %p42, %p43
      %p45 = scmp.ne.s32.totalorder %s34, %s37
      %p46 = scmp.eq.s32.totalorder %s17, 5
      %p47 = por %p45, %p46
      %p48 = scmp.ne.s32.totalorder %s37, %s38
      %p49 = scmp.eq.s32.totalorder %s17, 0
      %p50 = por %p48, %p49
      %p51 = scmp.ne.s32.totalorder %s37, %s38
      %p52 = scmp.eq.s32.totalorder %s18, 5
      %p53 = por %p51, %p52
      %p55 = scmp.ne.s32.totalorder %s38, %s54
      %p56 = scmp.eq.s32.totalorder %s18, 0
      %p57 = por %p55, %p56
      %s58 = ssub.s32 %s19, %s31
      %p59 = scmp.eq.s32.totalorder %s58, 0
      %s61 = sadd.s32 %s60, 1
      %s62 = scalar_select %p59, %s60, %s61
      %p65 = pneg %p59
      %p66 = scmp.eq.s32.totalorder %s12, 5
      %p67 = por %p65, %p66
      %p68 = scmp.ne.s32.totalorder %s60, %s63
      %p69 = scmp.eq.s32.totalorder %s12, 0
      %p70 = por %p68, %p69
      %p71 = scmp.ne.s32.totalorder %s60, %s63
      %p72 = scmp.eq.s32.totalorder %s17, 5
      %p73 = por %p71, %p72
      %p74 = scmp.ne.s32.totalorder %s63, %s64
      %p75 = scmp.eq.s32.totalorder %s17, 0
      %p76 = por %p74, %p75
      %p77 = scmp.ne.s32.totalorder %s63, %s64
      %p78 = scmp.eq.s32.totalorder %s18, 5
      %p79 = por %p77, %p78
      %p81 = scmp.ne.s32.totalorder %s64, %s80
      %p82 = scmp.eq.s32.totalorder %s18, 0
      %p83 = por %p81, %p82
      %s84 = ssub.s32 %s19, %s31
      %p85 = scmp.eq.s32.totalorder %s84, 0
      %s87 = sadd.s32 %s86, 1
      %s88 = scalar_select %p85, %s86, %s87
      %p91 = pneg %p85
      %p92 = scmp.eq.s32.totalorder %s12, 5
      %p93 = por %p91, %p92
      %p94 = scmp.ne.s32.totalorder %s86, %s89
      %p95 = scmp.eq.s32.totalorder %s12, 0
      %p96 = por %p94, %p95
      %p97 = scmp.ne.s32.totalorder %s86, %s89
      %p98 = scmp.eq.s32.totalorder %s17, 5
      %p99 = por %p97, %p98
      %p100 = scmp.ne.s32.totalorder %s89, %s90
      %p101 = scmp.eq.s32.totalorder %s17, 0
      %p102 = por %p100, %p101
      %p103 = scmp.ne.s32.totalorder %s89, %s90
      %p104 = scmp.eq.s32.totalorder %s18, 5
      %p105 = por %p103, %p104
      %p107 = scmp.ne.s32.totalorder %s90, %s106
      %p108 = scmp.eq.s32.totalorder %s18, 0
      %p109 = por %p107, %p108
      %s110 = ssub.s32 %s19, %s31
      %p111 = scmp.eq.s32.totalorder %s110, 0
      %s113 = sadd.s32 %s112, 1
      %s114 = scalar_select %p111, %s112, %s113
      %p117 = pneg %p111
      %p118 = scmp.eq.s32.totalorder %s12, 5
      %p119 = por %p117, %p118
      %p120 = scmp.ne.s32.totalorder %s112, %s115
      %p121 = scmp.eq.s32.totalorder %s12, 0
      %p122 = por %p120, %p121
      %p123 = scmp.ne.s32.totalorder %s112, %s115
      %p124 = scmp.eq.s32.totalorder %s17, 5
      %p125 = por %p123, %p124
      %p126 = scmp.ne.s32.totalorder %s115, %s116
      %p127 = scmp.eq.s32.totalorder %s17, 0
      %p128 = por %p126, %p127
      %p129 = scmp.ne.s32.totalorder %s115, %s116
      %p130 = scmp.eq.s32.totalorder %s18, 5
      %p131 = por %p129, %p130
      %p133 = scmp.ne.s32.totalorder %s116, %s132
      %p134 = scmp.eq.s32.totalorder %s18, 0
      %p135 = por %p133, %p134
      %s136 = ssub.s32 %s20, %s27
      %p137 = scmp.eq.s32.totalorder %s136, 0
      %s139 = sadd.s32 %s138, 1
      %s140 = scalar_select %p137, %s138, %s139
      %p143 = pneg %p137
      %p144 = scmp.eq.s32.totalorder %s12, 5
      %p145 = por %p143, %p144
      %p146 = scmp.ne.s32.totalorder %s138, %s141
      %p147 = scmp.eq.s32.totalorder %s12, 0
      %p148 = por %p146, %p147
      %p149 = scmp.ne.s32.totalorder %s138, %s141
      %p150 = scmp.eq.s32.totalorder %s17, 5
      %p151 = por %p149, %p150
      %p152 = scmp.ne.s32.totalorder %s141, %s142
      %p153 = scmp.eq.s32.totalorder %s17, 0
      %p154 = por %p152, %p153
      %p155 = scmp.ne.s32.totalorder %s141, %s142
      %p156 = scmp.eq.s32.totalorder %s18, 5
      %p157 = por %p155, %p156
      %p159 = scmp.ne.s32.totalorder %s142, %s158
      %p160 = scmp.eq.s32.totalorder %s18, 0
      %p161 = por %p159, %p160
      %s162 = ssub.s32 %s20, %s27
      %p163 = scmp.eq.s32.totalorder %s162, 0
      %s165 = sadd.s32 %s164, 1
      %s166 = scalar_select %p163, %s164, %s165
      %p169 = pneg %p163
      %p170 = scmp.eq.s32.totalorder %s12, 5
      %p171 = por %p169, %p170
      %p172 = scmp.ne.s32.totalorder %s164, %s167
      %p173 = scmp.eq.s32.totalorder %s12, 0
      %p174 = por %p172, %p173
      %p175 = scmp.ne.s32.totalorder %s164, %s167
      %p176 = scmp.eq.s32.totalorder %s17, 5
      %p177 = por %p175, %p176
      %p178 = scmp.ne.s32.totalorder %s167, %s168
      %p179 = scmp.eq.s32.totalorder %s17, 0
      %p180 = por %p178, %p179
      %p181 = scmp.ne.s32.totalorder %s167, %s168
      %p182 = scmp.eq.s32.totalorder %s18, 5
      %p183 = por %p181, %p182
      %p185 = scmp.ne.s32.totalorder %s168, %s184
      %p186 = scmp.eq.s32.totalorder %s18, 0
      %p187 = por %p185, %p186
      %s188 = ssub.s32 %s19, %s31
      %s189 = ssub.s32 %s20, %s27
      %s190 = sor.u32 %s188, %s189
      %p191 = scmp.eq.s32.totalorder %s190, 0
      %s193 = sadd.s32 %s192, 1
      %s194 = scalar_select %p191, %s192, %s193
      %p197 = pneg %p191
      %p198 = scmp.eq.s32.totalorder %s12, 5
      %p199 = por %p197, %p198
      %p200 = scmp.ne.s32.totalorder %s192, %s195
      %p201 = scmp.eq.s32.totalorder %s12, 0
      %p202 = por %p200, %p201
      %p203 = scmp.ne.s32.totalorder %s192, %s195
      %p204 = scmp.eq.s32.totalorder %s17, 5
      %p205 = por %p203, %p204
      %p206 = scmp.ne.s32.totalorder %s195, %s196
      %p207 = scmp.eq.s32.totalorder %s17, 0
      %p208 = por %p206, %p207
      %p209 = scmp.ne.s32.totalorder %s195, %s196
      %p210 = scmp.eq.s32.totalorder %s18, 5
      %p211 = por %p209, %p210
      %p213 = scmp.ne.s32.totalorder %s196, %s212
      %p214 = scmp.eq.s32.totalorder %s18, 0
      %p215 = por %p213, %p214
      %p216 = scmp.le.s32.totalorder 1, %s12
      %p217 = scmp.lt.s32.totalorder %s12, 7
      %p218 = pnand %p216, %p217
      %p219 = pneg %p218
      // Predicated region
      $region9: #{inception_b.5} parent=5 // pred_check
        _
      $region10: #{inception_b.5} parent=5 // pred_check_branch
        %221 = sbr.rel (%p218) target = $region12
      $region11: #{inception_b.5} parent=5 // pred_region
        %s222 = ssub.s32 %s12, 1
      $region12: #{inception_b.5} parent=5 // pred_fallthru
        _
      %p223 = scmp.lt.s32.totalorder %s12, 6
      // Predicated region
      $region13: #{inception_b.5} parent=5 // pred_check
        %p224 = pneg %p223
      $region14: #{inception_b.5} parent=5 // pred_check_branch
        %226 = sbr.rel (%p224) target = $region16
      $region15: #{inception_b.5} parent=5 // pred_region
        // Predicated region
        $region17: #{inception_b.5} parent=15 // pred_check
          %p227 = pneg %p44
        $region18: #{inception_b.5} parent=15 // pred_check_branch
          %229 = sbr.rel (%p227) target = $region20
        $region19: #{inception_b.5} parent=15 // pred_region
          %p230 = scmp.lt.s32.totalorder %s19, 1
          %s231 = scalar_select %p230, %s19, 1
          %s232 = smul.addr %s231, 9
          %s233 = smul.addr %s232, 4
          %s234 = scalar_lea.vmem %s0, %s233
        $region20: #{inception_b.5} parent=15 // pred_fallthru
          _
        // Predicated region
        $region21: #{inception_b.5} parent=15 // pred_check
          %p235 = pneg %p70
        $region22: #{inception_b.5} parent=15 // pred_check_branch
          %237 = sbr.rel (%p235) target = $region24
        $region23: #{inception_b.5} parent=15 // pred_region
          %p238 = scmp.lt.s32.totalorder %s19, 1
          %s239 = scalar_select %p238, %s19, 1
          %s240 = smul.addr %s239, 9
          %s241 = smul.addr %s240, 4
          %s242 = scalar_lea.vmem %s1, %s241
        $region24: #{inception_b.5} parent=15 // pred_fallthru
          _
        // Predicated region
        $region25: #{inception_b.5} parent=15 // pred_check
          %p243 = pneg %p96
        $region26: #{inception_b.5} parent=15 // pred_check_branch
          %245 = sbr.rel (%p243) target = $region28
        $region27: #{inception_b.5} parent=15 // pred_region
          %p246 = scmp.lt.s32.totalorder %s19, 1
          %s247 = scalar_select %p246, %s19, 1
          %s248 = smul.addr %s247, 9
          %s249 = smul.addr %s248, 4
          %s250 = scalar_lea.vmem %s2, %s249
        $region28: #{inception_b.5} parent=15 // pred_fallthru
          _
        // Predicated region
        $region29: #{inception_b.5} parent=15 // pred_check
          %p251 = pneg %p122
        $region30: #{inception_b.5} parent=15 // pred_check_branch
          %253 = sbr.rel (%p251) target = $region32
        $region31: #{inception_b.5} parent=15 // pred_region
          %p254 = scmp.lt.s32.totalorder %s19, 1
          %s255 = scalar_select %p254, %s19, 1
          %s256 = smul.addr %s255, 9
          %s257 = smul.addr %s256, 4
          %s258 = scalar_lea.vmem %s3, %s257
        $region32: #{inception_b.5} parent=15 // pred_fallthru
          _
        // Predicated region
        $region33: #{inception_b.5} parent=15 // pred_check
          %p259 = pneg %p148
        $region34: #{inception_b.5} parent=15 // pred_check_branch
          %261 = sbr.rel (%p259) target = $region36
        $region35: #{inception_b.5} parent=15 // pred_region
          %s262 = sand.u32 %s138, 1
          %s263 = sand.u32 %s138, 1
          %s264 = smul.addr %s263, 36
          %s265 = scalar_lea.vmem [#allocation2], %s264
          %s266 = smul.addr %s20, 4
          %s267 = scalar_lea.vmem %s4, %s266
          // Predicated region
          $region37: #{inception_b.5} parent=35 // pred_check
            _
          $region38: #{inception_b.5} parent=35 // pred_check_branch
            %269 = sbr.rel (0) target = $region40
          $region39: #{inception_b.5} parent=35 // pred_region
            // Predicated region
            $region41: #{inception_b.5} parent=39 // pred_check
              _
            $region42: #{inception_b.5} parent=39 // pred_check_branch
              %271 = sbr.rel target = $region44
            $region43: #{inception_b.5} parent=39 // pred_region
              // Predicated region
              $region56: #{inception_b.5} parent=43 // pred_check
                _
              $region57: #{inception_b.5} parent=43 // pred_check_branch
                %303 = sbr.rel (0) target = $region59
              $region58: #{inception_b.5} parent=43 // pred_region
                loop: start=0, step=1, limit=1
                $region60: #{inception_b.5} parent=58 // loop_pre_header
                  _
                $region61: #{inception_b.5} parent=58 // loop_header
                  %s305 = sphi 0, %s309
                  %p306 = scmp.ge.s32.totalorder %s305, 1
                  %s310 = sphi %s267, %s267
                  %s311 = sphi %s265, %s265
                $region62: #{inception_b.5} parent=58 // loop_header_branch
                  %308 = sbr.rel (%p306) target = $region66
                $region63: #{inception_b.5} parent=58 // loop_body
                  _
                $region64: #{inception_b.5} parent=58 // loop_footer
                  %s309 = sadd.s32 1, %s305
                $region65: #{inception_b.5} parent=58 // loop_footer_branch
                  %304 = sbr.rel target = $region61
                $region66: #{inception_b.5} parent=58 // loop_exit
                  _
                %s313 = ssub.s32 16, 1
                loop: start=0, step=1, limit=1
                $region67: #{inception_b.5} parent=58 // loop_pre_header
                  _
                $region68: #{inception_b.5} parent=58 // loop_header
                  %s315 = sphi 0, %s319
                  %p316 = scmp.ge.s32.totalorder %s315, 1
                  %s320 = sphi %s267, %s267
                  %s321 = sphi %s265, %s265
                $region69: #{inception_b.5} parent=58 // loop_header_branch
                  %318 = sbr.rel (%p316) target = $region73
                $region70: #{inception_b.5} parent=58 // loop_body
                  %v322 = vld [vmem:[%s320] sm:%s313]
                  %323 = vst [vmem:[%s321] sm:%s313] %v322
                  %v324 = vld [vmem:[%s320 + $0xc] sm:%s313]
                  %325 = vst [vmem:[%s321 + $0x4] sm:%s313] %v324
                  %v326 = vld [vmem:[%s320 + $0x18] sm:%s313]
                  %327 = vst [vmem:[%s321 + $0x8] sm:%s313] %v326
                  %v328 = vld [vmem:[%s320 + $0x24] sm:%s313]
                  %329 = vst [vmem:[%s321 + $0xc] sm:%s313] %v328
                  %v330 = vld [vmem:[%s320 + $0x30] sm:%s313]
                  %331 = vst [vmem:[%s321 + $0x10] sm:%s313] %v330
                  %v332 = vld [vmem:[%s320 + $0x3c] sm:%s313]
                  %333 = vst [vmem:[%s321 + $0x14] sm:%s313] %v332
                  %v334 = vld [vmem:[%s320 + $0x48] sm:%s313]
                  %335 = vst [vmem:[%s321 + $0x18] sm:%s313] %v334
                  %v336 = vld [vmem:[%s320 + $0x54] sm:%s313]
                  %337 = vst [vmem:[%s321 + $0x1c] sm:%s313] %v336
                  %v338 = vld [vmem:[%s320 + $0x60] sm:%s313]
                  %339 = vst [vmem:[%s321 + $0x20] sm:%s313] %v338
                $region71: #{inception_b.5} parent=58 // loop_footer
                  %s319 = sadd.s32 1, %s315
                $region72: #{inception_b.5} parent=58 // loop_footer_branch
                  %314 = sbr.rel target = $region68
                $region73: #{inception_b.5} parent=58 // loop_exit
                  _
              $region59: #{inception_b.5} parent=43 // pred_fallthru
                _
            $region44: #{inception_b.5} parent=39 // pred_fallthru
              _
            // Predicated region
            $region45: #{inception_b.5} parent=39 // pred_check
              _
            $region46: #{inception_b.5} parent=39 // pred_check_branch
              %273 = sbr.rel (0) target = $region48
            $region47: #{inception_b.5} parent=39 // pred_region
              %s275 = ssub.s32 16, 1
              loop: start=0, step=1, limit=1
              $region49: #{inception_b.5} parent=47 // loop_pre_header
                _
              $region50: #{inception_b.5} parent=47 // loop_header
                %s277 = sphi 0, %s281
                %p278 = scmp.ge.s32.totalorder %s277, 1
                %s282 = sphi %s267, %s267
                %s283 = sphi %s265, %s265
              $region51: #{inception_b.5} parent=47 // loop_header_branch
                %280 = sbr.rel (%p278) target = $region55
              $region52: #{inception_b.5} parent=47 // loop_body
                %v284 = vld [vmem:[%s282] sm:%s275]
                %285 = vst [vmem:[%s283] sm:%s275] %v284
                %v286 = vld [vmem:[%s282 + $0xc] sm:%s275]
                %287 = vst [vmem:[%s283 + $0x4] sm:%s275] %v286
                %v288 = vld [vmem:[%s282 + $0x18] sm:%s275]
                %289 = vst [vmem:[%s283 + $0x8] sm:%s275] %v288
                %v290 = vld [vmem:[%s282 + $0x24] sm:%s275]
                %291 = vst [vmem:[%s283 + $0xc] sm:%s275] %v290
                %v292 = vld [vmem:[%s282 + $0x30] sm:%s275]
                %293 = vst [vmem:[%s283 + $0x10] sm:%s275] %v292
                %v294 = vld [vmem:[%s282 + $0x3c] sm:%s275]
                %295 = vst [vmem:[%s283 + $0x14] sm:%s275] %v294
                %v296 = vld [vmem:[%s282 + $0x48] sm:%s275]
                %297 = vst [vmem:[%s283 + $0x18] sm:%s275] %v296
                %v298 = vld [vmem:[%s282 + $0x54] sm:%s275]
                %299 = vst [vmem:[%s283 + $0x1c] sm:%s275] %v298
                %v300 = vld [vmem:[%s282 + $0x60] sm:%s275]
                %301 = vst [vmem:[%s283 + $0x20] sm:%s275] %v300
              $region53: #{inception_b.5} parent=47 // loop_footer
                %s281 = sadd.s32 1, %s277
              $region54: #{inception_b.5} parent=47 // loop_footer_branch
                %276 = sbr.rel target = $region50
              $region55: #{inception_b.5} parent=47 // loop_exit
                _
            $region48: #{inception_b.5} parent=39 // pred_fallthru
              _
          $region40: #{inception_b.5} parent=35 // pred_fallthru
            _
          %340 = vnop
        $region36: #{inception_b.5} parent=15 // pred_fallthru
          _
        // Predicated region
        $region74: #{inception_b.5} parent=15 // pred_check
          %p341 = pneg %p174
        $region75: #{inception_b.5} parent=15 // pred_check_branch
          %343 = sbr.rel (%p341) target = $region77
        $region76: #{inception_b.5} parent=15 // pred_region
          %p344 = scmp.lt.s32.totalorder %s20, 2
          %s345 = scalar_select %p344, %s20, 2
          %s346 = scalar_lea.vmem %s5, %s345
        $region77: #{inception_b.5} parent=15 // pred_fallthru
          _
      $region16: #{inception_b.5} parent=5 // pred_fallthru
        _
      %p347 = scmp.le.s32.totalorder 1, %s12
      %p348 = scmp.lt.s32.totalorder %s12, 7
      %p349 = pnand %p347, %p348
      %p350 = pneg %p349
      // Predicated region
      $region78: #{inception_b.5} parent=5 // pred_check
        _
      $region79: #{inception_b.5} parent=5 // pred_check_branch
        %352 = sbr.rel (%p349) target = $region81
      $region80: #{inception_b.5} parent=5 // pred_region
        %s353 = ssub.s32 %s12, 1
        %s354 = sand.u32 %s141, 1
        %s355 = sand.u32 %s141, 1
        %s356 = smul.addr %s355, 36
        %s357 = scalar_lea.vmem [#allocation2], %s356
        // Predicated region
        $region82: #{inception_b.5} parent=80 // pred_check
          %p358 = pneg %p154
        $region83: #{inception_b.5} parent=80 // pred_check_branch
          %360 = sbr.rel (%p358) target = $region85
        $region84: #{inception_b.5} parent=80 // pred_region
          _
        $region85: #{inception_b.5} parent=80 // pred_fallthru
          _
        %p361 = scmp.lt.s32.totalorder %s21, 1
        %s362 = scalar_select %p361, %s21, 1
        %s363 = smul.addr %s362, 9
        %s364 = smul.addr %s363, 4
        %s365 = scalar_lea.vmem %s0, %s364
        %p366 = pneg %p50
        %p367 = pneg %p47
        %p368 = scmp.lt.s32.totalorder %s21, 1
        %s369 = scalar_select %p368, %s21, 1
        %s370 = smul.addr %s369, 9
        %s371 = smul.addr %s370, 4
        %s372 = scalar_lea.vmem %s1, %s371
        %p373 = pneg %p76
        %p374 = pneg %p73
        %p375 = scmp.lt.s32.totalorder %s21, 1
        %s376 = scalar_select %p375, %s21, 1
        %s377 = smul.addr %s376, 9
        %s378 = smul.addr %s377, 4
        %s379 = scalar_lea.vmem %s2, %s378
        %p380 = pneg %p102
        %p381 = pneg %p99
        %p382 = scmp.lt.s32.totalorder %s21, 1
        %s383 = scalar_select %p382, %s21, 1
        %s384 = smul.addr %s383, 9
        %s385 = smul.addr %s384, 4
        %s386 = scalar_lea.vmem %s3, %s385
        %p387 = pneg %p128
        %p388 = pneg %p125
        %s389 = sand.u32 %s141, 1
        %s390 = sand.u32 %s141, 1
        %s391 = smul.addr %s390, 36
        %s392 = scalar_lea.vmem [#allocation2], %s391
        %p393 = pneg %p154
        %p394 = pneg %p151
        %p395 = scmp.lt.s32.totalorder %s22, 2
        %s396 = scalar_select %p395, %s22, 2
        %s397 = scalar_lea.vmem %s5, %s396
        %p398 = pneg %p180
        %p399 = pneg %p177
        %p400 = pneg %p208
        %p401 = pneg %p205
        %s402 = sand.u32 %s195, 1
        %s403 = sand.u32 %s195, 1
        %s404 = smul.addr %s403, 32
        %s405 = scalar_lea.vmem [#allocation3], %s404
        %p406 = scmp.lt.s32.totalorder %s21, 1
        %s407 = scalar_select %p406, %s21, 1
        %s408 = smul.addr %s407, 9
        %s409 = smul.addr %s408, 4
        %s410 = scalar_lea.vmem %s0, %s409
        %p411 = scmp.lt.s32.totalorder %s21, 1
        %s412 = scalar_select %p411, %s21, 1
        %s413 = smul.addr %s412, 9
        %s414 = smul.addr %s413, 4
        %s415 = scalar_lea.vmem %s1, %s414
        %p416 = scmp.lt.s32.totalorder %s21, 1
        %s417 = scalar_select %p416, %s21, 1
        %s418 = smul.addr %s417, 9
        %s419 = smul.addr %s418, 4
        %s420 = scalar_lea.vmem %s2, %s419
        %p421 = scmp.lt.s32.totalorder %s21, 1
        %s422 = scalar_select %p421, %s21, 1
        %s423 = smul.addr %s422, 9
        %s424 = smul.addr %s423, 4
        %s425 = scalar_lea.vmem %s3, %s424
        %p426 = scmp.lt.s32.totalorder %s22, 2
        %s427 = scalar_select %p426, %s22, 2
        %s428 = scalar_lea.vmem %s5, %s427
        %v430 = vld [vmem:[%s410] sm:$0xf]
        %v431 = vld [vmem:[%s410 + $0x4] sm:$0xf]
        %v432 = vld [vmem:[%s410 + $0x8] sm:$0xf]
        %v433 = vld [vmem:[%s410 + $0xc] sm:$0xf]
        %v434 = vld [vmem:[%s410 + $0x10] sm:$0xf]
        %v435 = vld [vmem:[%s410 + $0x14] sm:$0xf]
        %v436 = vld [vmem:[%s410 + $0x18] sm:$0xf]
        %v437 = vld [vmem:[%s410 + $0x1c] sm:$0x7]
        %v438 = vld [vmem:[%s357] sm:$0xf]
        %v439 = vld [vmem:[%s415] sm:$0xf]
        %v440 = vld [vmem:[%s415 + $0x4] sm:$0xf]
        %v441 = vld [vmem:[%s415 + $0x8] sm:$0xf]
        %v442 = vld [vmem:[%s415 + $0xc] sm:$0xf]
        %v443 = vld [vmem:[%s415 + $0x10] sm:$0xf]
        %v444 = vld [vmem:[%s415 + $0x14] sm:$0xf]
        %v445 = vld [vmem:[%s415 + $0x18] sm:$0xf]
        %v446 = vld [vmem:[%s415 + $0x1c] sm:$0x7]
        %s447 = scalar_lea.vmem %s357, 4 [#allocation2]
        %v448 = vld [vmem:[%s447] sm:$0xf]
        %v457 = vunpack.c.l.b16 %v439
        %v458 = vunpack.c.l.b16 %v440
        %v459 = vunpack.c.l.b16 %v441
        %v460 = vunpack.c.l.b16 %v442
        %v461 = vunpack.c.l.b16 %v443
        %v462 = vunpack.c.l.b16 %v444
        %v463 = vunpack.c.l.b16 %v445
        %v464 = vunpack.c.l.b16 %v446
        %v465 = vpack.c.b16 %v458, %v457
        %v466 = vpack.c.b16 %v460, %v459
        %v467 = vpack.c.b16 %v462, %v461
        %v468 = vpack.c.b16 %v464, %v463
        %vm469 = vcmask 64512
        %v471 = vsel %vm469, %v465, 0
        %v474 = vsel %vm469, %v466, 0
        %v477 = vsel %vm469, %v467, 0
        %v480 = vsel %vm469, %v468, 0
        %vm482 = vcmask 1043456
        %v484 = vsel %vm482, %v448, 0
        %486 = vmatpush.bf16.msra.mxu0 0
        %487 = vmatpush.bf16.msra.mxu0 0
        %488 = vmatpush.bf16.msra.mxu0 0
        %489 = vmatpush.bf16.msra.mxu0 0
        %490 = vmatpush.bf16.msra.mxu0 0
        %491 = vmatpush.bf16.msra.mxu0 0
        %492 = vmatpush.bf16.msra.mxu0 0
        %493 = vmatpush.bf16.msra.mxu0 %v484
        %494 = vmatmul.bf16.gmra.mxu0 %v471
        %v495 = vpop.f32.mrf.mxu0
        %v496 = vadd.f32 0.0, %v495
        %v497 = vpop.f32.mrf.mxu0
        %v498 = vadd.f32 0.0, %v497
        %499 = vmatmul.bf16.gmra.mxu0 %v474
        %v500 = vpop.f32.mrf.mxu0
        %v501 = vadd.f32 0.0, %v500
        %v502 = vpop.f32.mrf.mxu0
        %v503 = vadd.f32 0.0, %v502
        %504 = vmatmul.bf16.gmra.mxu0 %v477
        %v505 = vpop.f32.mrf.mxu0
        %v506 = vadd.f32 0.0, %v505
        %v507 = vpop.f32.mrf.mxu0
        %v508 = vadd.f32 0.0, %v507
        %509 = vmatmul.bf16.gmra.mxu0 %v480
        %v510 = vpop.f32.mrf.mxu0
        %v511 = vadd.f32 0.0, %v510
        %v512 = vpop.f32.mrf.mxu0
        %v513 = vadd.f32 0.0, %v512
        %514 = vdwg.mxu0
        %v523 = vunpack.c.l.b16 %v430
        %v524 = vunpack.c.l.b16 %v431
        %v525 = vunpack.c.l.b16 %v432
        %v526 = vunpack.c.l.b16 %v433
        %v527 = vunpack.c.l.b16 %v434
        %v528 = vunpack.c.l.b16 %v435
        %v529 = vunpack.c.l.b16 %v436
        %v530 = vunpack.c.l.b16 %v437
        %v531 = vpack.c.b16 %v524, %v523
        %v532 = vpack.c.b16 %v526, %v525
        %v533 = vpack.c.b16 %v528, %v527
        %v534 = vpack.c.b16 %v530, %v529
        %v536 = vsel %vm469, %v531, 0
        %v539 = vsel %vm469, %v532, 0
        %v542 = vsel %vm469, %v533, 0
        %v545 = vsel %vm469, %v534, 0
        %v548 = vsel %vm482, %v438, 0
        %550 = vmatpush.bf16.msra.mxu0 0
        %551 = vmatpush.bf16.msra.mxu0 0
        %552 = vmatpush.bf16.msra.mxu0 0
        %553 = vmatpush.bf16.msra.mxu0 0
        %554 = vmatpush.bf16.msra.mxu0 0
        %555 = vmatpush.bf16.msra.mxu0 0
        %556 = vmatpush.bf16.msra.mxu0 0
        %557 = vmatpush.bf16.msra.mxu0 %v548
        %558 = vmatmul.bf16.gmra.mxu0 %v536
        %v559 = vpop.f32.mrf.mxu0
        %v560 = vadd.f32 %v496, %v559
        %v561 = vpop.f32.mrf.mxu0
        %v562 = vadd.f32 %v498, %v561
        %563 = vmatmul.bf16.gmra.mxu0 %v539
        %v564 = vpop.f32.mrf.mxu0
        %v565 = vadd.f32 %v501, %v564
        %v566 = vpop.f32.mrf.mxu0
        %v567 = vadd.f32 %v503, %v566
        %568 = vmatmul.bf16.gmra.mxu0 %v542
        %v569 = vpop.f32.mrf.mxu0
        %v570 = vadd.f32 %v506, %v569
        %v571 = vpop.f32.mrf.mxu0
        %v572 = vadd.f32 %v508, %v571
        %573 = vmatmul.bf16.gmra.mxu0 %v545
        %v574 = vpop.f32.mrf.mxu0
        %v575 = vadd.f32 %v511, %v574
        %v576 = vpop.f32.mrf.mxu0
        %v577 = vadd.f32 %v513, %v576
        %578 = vdwg.mxu0
        %v579 = vld [vmem:[%s410 + $0x1c] sm:$0xf]
        %s580 = scalar_lea.vmem %s357, 8 [#allocation2]
        %v581 = vld [vmem:[%s580] sm:$0xf]
        %v583 = vunpack.c.l.b16 %v579
        %v584 = vpack.c.b16 %v583, %v529
        %vm585 = vsmask.f32 7424
        %v586 = vshrl.u32 %v531, 16
        %v588 = vshll.u32 %v531, 16
        %v590 = vrot.slane %v588, 1
        %v591 = vor.u32 %v586, %v590
        %v592 = vshll.u32 %v532, 16
        %v594 = vrot.slane %v592, 1
        %v595 = vsel %vm585, %v591, %v594
        %v596 = vshrl.u32 %v532, 16
        %v598 = vor.u32 %v596, %v594
        %v599 = vshll.u32 %v533, 16
        %v601 = vrot.slane %v599, 1
        %v602 = vsel %vm585, %v598, %v601
        %v603 = vshrl.u32 %v533, 16
        %v605 = vor.u32 %v603, %v601
        %v607 = vshll.u32 %v584, 16
        %v609 = vrot.slane %v607, 1
        %v610 = vsel %vm585, %v605, %v609
        %v611 = vshrl.u32 %v584, 16
        %v613 = vor.u32 %v611, %v609
        %v615 = vsel %vm469, %v595, 0
        %v618 = vsel %vm469, %v602, 0
        %v621 = vsel %vm469, %v610, 0
        %v624 = vsel %vm469, %v613, 0
        %v627 = vsel %vm482, %v581, 0
        %629 = vmatpush.bf16.msra.mxu0 0
        %630 = vmatpush.bf16.msra.mxu0 0
        %631 = vmatpush.bf16.msra.mxu0 0
        %632 = vmatpush.bf16.msra.mxu0 0
        %633 = vmatpush.bf16.msra.mxu0 0
        %634 = vmatpush.bf16.msra.mxu0 0
        %635 = vmatpush.bf16.msra.mxu0 0
        %636 = vmatpush.bf16.msra.mxu0 %v627
        %637 = vmatmul.bf16.gmra.mxu0 %v615
        %v638 = vpop.f32.mrf.mxu0
        %v639 = vadd.f32 0.0, %v638
        %v640 = vpop.f32.mrf.mxu0
        %v641 = vadd.f32 0.0, %v640
        %642 = vmatmul.bf16.gmra.mxu0 %v618
        %v643 = vpop.f32.mrf.mxu0
        %v644 = vadd.f32 0.0, %v643
        %v645 = vpop.f32.mrf.mxu0
        %v646 = vadd.f32 0.0, %v645
        %647 = vmatmul.bf16.gmra.mxu0 %v621
        %v648 = vpop.f32.mrf.mxu0
        %v649 = vadd.f32 0.0, %v648
        %v650 = vpop.f32.mrf.mxu0
        %v651 = vadd.f32 0.0, %v650
        %652 = vmatmul.bf16.gmra.mxu0 %v624
        %v653 = vpop.f32.mrf.mxu0
        %v654 = vadd.f32 0.0, %v653
        %v655 = vpop.f32.mrf.mxu0
        %v656 = vadd.f32 0.0, %v655
        %657 = vdwg.mxu0
        %v658 = vadd.f32 %v560, %v639
        %v659 = vadd.f32 %v562, %v641
        %v660 = vadd.f32 %v565, %v644
        %v661 = vadd.f32 %v567, %v646
        %v662 = vadd.f32 %v570, %v649
        %v663 = vadd.f32 %v572, %v651
        %v664 = vadd.f32 %v575, %v654
        %v665 = vadd.f32 %v577, %v656
        %v666 = vld [vmem:[%s420] sm:$0xf]
        %v667 = vld [vmem:[%s420 + $0x4] sm:$0xf]
        %v668 = vld [vmem:[%s420 + $0x8] sm:$0xf]
        %v669 = vld [vmem:[%s420 + $0xc] sm:$0xf]
        %v670 = vld [vmem:[%s420 + $0x10] sm:$0xf]
        %v671 = vld [vmem:[%s420 + $0x14] sm:$0xf]
        %v672 = vld [vmem:[%s420 + $0x18] sm:$0xf]
        %v673 = vld [vmem:[%s420 + $0x1c] sm:$0x7]
        %s674 = scalar_lea.vmem %s357, 12 [#allocation2]
        %v675 = vld [vmem:[%s674] sm:$0xf]
        %v684 = vunpack.c.l.b16 %v666
        %v685 = vunpack.c.l.b16 %v667
        %v686 = vunpack.c.l.b16 %v668
        %v687 = vunpack.c.l.b16 %v669
        %v688 = vunpack.c.l.b16 %v670
        %v689 = vunpack.c.l.b16 %v671
        %v690 = vunpack.c.l.b16 %v672
        %v691 = vunpack.c.l.b16 %v673
        %v692 = vpack.c.b16 %v685, %v684
        %v693 = vpack.c.b16 %v687, %v686
        %v694 = vpack.c.b16 %v689, %v688
        %v695 = vpack.c.b16 %v691, %v690
        %v697 = vsel %vm469, %v692, 0
        %v700 = vsel %vm469, %v693, 0
        %v703 = vsel %vm469, %v694, 0
        %v706 = vsel %vm469, %v695, 0
        %v709 = vsel %vm482, %v675, 0
        %711 = vmatpush.bf16.msra.mxu0 0
        %712 = vmatpush.bf16.msra.mxu0 0
        %713 = vmatpush.bf16.msra.mxu0 0
        %714 = vmatpush.bf16.msra.mxu0 0
        %715 = vmatpush.bf16.msra.mxu0 0
        %716 = vmatpush.bf16.msra.mxu0 0
        %717 = vmatpush.bf16.msra.mxu0 0
        %718 = vmatpush.bf16.msra.mxu0 %v709
        %719 = vmatmul.bf16.gmra.mxu0 %v697
        %v720 = vpop.f32.mrf.mxu0
        %v721 = vadd.f32 0.0, %v720
        %v722 = vpop.f32.mrf.mxu0
        %v723 = vadd.f32 0.0, %v722
        %724 = vmatmul.bf16.gmra.mxu0 %v700
        %v725 = vpop.f32.mrf.mxu0
        %v726 = vadd.f32 0.0, %v725
        %v727 = vpop.f32.mrf.mxu0
        %v728 = vadd.f32 0.0, %v727
        %729 = vmatmul.bf16.gmra.mxu0 %v703
        %v730 = vpop.f32.mrf.mxu0
        %v731 = vadd.f32 0.0, %v730
        %v732 = vpop.f32.mrf.mxu0
        %v733 = vadd.f32 0.0, %v732
        %734 = vmatmul.bf16.gmra.mxu0 %v706
        %v735 = vpop.f32.mrf.mxu0
        %v736 = vadd.f32 0.0, %v735
        %v737 = vpop.f32.mrf.mxu0
        %v738 = vadd.f32 0.0, %v737
        %739 = vdwg.mxu0
        %v740 = vadd.f32 %v658, %v721
        %v741 = vadd.f32 %v659, %v723
        %v742 = vadd.f32 %v660, %v726
        %v743 = vadd.f32 %v661, %v728
        %v744 = vadd.f32 %v662, %v731
        %v745 = vadd.f32 %v663, %v733
        %v746 = vadd.f32 %v664, %v736
        %v747 = vadd.f32 %v665, %v738
        %v748 = vld [vmem:[%s425] sm:$0xf]
        %v749 = vld [vmem:[%s425 + $0x4] sm:$0xf]
        %v750 = vld [vmem:[%s425 + $0x8] sm:$0xf]
        %v751 = vld [vmem:[%s425 + $0xc] sm:$0xf]
        %v752 = vld [vmem:[%s425 + $0x10] sm:$0xf]
        %v753 = vld [vmem:[%s425 + $0x14] sm:$0xf]
        %v754 = vld [vmem:[%s425 + $0x18] sm:$0xf]
        %v755 = vld [vmem:[%s425 + $0x1c] sm:$0x7]
        %s756 = scalar_lea.vmem %s357, 16 [#allocation2]
        %v757 = vld [vmem:[%s756] sm:$0xf]
        %v766 = vunpack.c.l.b16 %v748
        %v767 = vunpack.c.l.b16 %v749
        %v768 = vunpack.c.l.b16 %v750
        %v769 = vunpack.c.l.b16 %v751
        %v770 = vunpack.c.l.b16 %v752
        %v771 = vunpack.c.l.b16 %v753
        %v772 = vunpack.c.l.b16 %v754
        %v773 = vunpack.c.l.b16 %v755
        %v774 = vpack.c.b16 %v767, %v766
        %v775 = vpack.c.b16 %v769, %v768
        %v776 = vpack.c.b16 %v771, %v770
        %v777 = vpack.c.b16 %v773, %v772
        %v779 = vsel %vm469, %v774, 0
        %v782 = vsel %vm469, %v775, 0
        %v785 = vsel %vm469, %v776, 0
        %v788 = vsel %vm469, %v777, 0
        %v791 = vsel %vm482, %v757, 0
        %793 = vmatpush.bf16.msra.mxu0 0
        %794 = vmatpush.bf16.msra.mxu0 0
        %795 = vmatpush.bf16.msra.mxu0 0
        %796 = vmatpush.bf16.msra.mxu0 0
        %797 = vmatpush.bf16.msra.mxu0 0
        %798 = vmatpush.bf16.msra.mxu0 0
        %799 = vmatpush.bf16.msra.mxu0 0
        %800 = vmatpush.bf16.msra.mxu0 %v791
        %801 = vmatmul.bf16.gmra.mxu0 %v779
        %v802 = vpop.f32.mrf.mxu0
        %v803 = vadd.f32 0.0, %v802
        %v804 = vpop.f32.mrf.mxu0
        %v805 = vadd.f32 0.0, %v804
        %806 = vmatmul.bf16.gmra.mxu0 %v782
        %v807 = vpop.f32.mrf.mxu0
        %v808 = vadd.f32 0.0, %v807
        %v809 = vpop.f32.mrf.mxu0
        %v810 = vadd.f32 0.0, %v809
        %811 = vmatmul.bf16.gmra.mxu0 %v785
        %v812 = vpop.f32.mrf.mxu0
        %v813 = vadd.f32 0.0, %v812
        %v814 = vpop.f32.mrf.mxu0
        %v815 = vadd.f32 0.0, %v814
        %816 = vmatmul.bf16.gmra.mxu0 %v788
        %v817 = vpop.f32.mrf.mxu0
        %v818 = vadd.f32 0.0, %v817
        %v819 = vpop.f32.mrf.mxu0
        %v820 = vadd.f32 0.0, %v819
        %821 = vdwg.mxu0
        %v822 = vadd.f32 %v740, %v803
        %v823 = vadd.f32 %v741, %v805
        %v824 = vadd.f32 %v742, %v808
        %v825 = vadd.f32 %v743, %v810
        %v826 = vadd.f32 %v744, %v813
        %v827 = vadd.f32 %v745, %v815
        %v828 = vadd.f32 %v746, %v818
        %v829 = vadd.f32 %v747, %v820
        %v830 = vld [vmem:[%s420 + $0x1c] sm:$0xf]
        %s831 = scalar_lea.vmem %s357, 20 [#allocation2]
        %v832 = vld [vmem:[%s831] sm:$0xf]
        %v834 = vunpack.c.l.b16 %v830
        %v835 = vpack.c.b16 %v834, %v690
        %v836 = vshrl.u32 %v692, 16
        %v838 = vshll.u32 %v692, 16
        %v840 = vrot.slane %v838, 1
        %v841 = vor.u32 %v836, %v840
        %v842 = vshll.u32 %v693, 16
        %v844 = vrot.slane %v842, 1
        %v845 = vsel %vm585, %v841, %v844
        %v846 = vshrl.u32 %v693, 16
        %v848 = vor.u32 %v846, %v844
        %v849 = vshll.u32 %v694, 16
        %v851 = vrot.slane %v849, 1
        %v852 = vsel %vm585, %v848, %v851
        %v853 = vshrl.u32 %v694, 16
        %v855 = vor.u32 %v853, %v851
        %v857 = vshll.u32 %v835, 16
        %v859 = vrot.slane %v857, 1
        %v860 = vsel %vm585, %v855, %v859
        %v861 = vshrl.u32 %v835, 16
        %v863 = vor.u32 %v861, %v859
        %v865 = vsel %vm469, %v845, 0
        %v868 = vsel %vm469, %v852, 0
        %v871 = vsel %vm469, %v860, 0
        %v874 = vsel %vm469, %v863, 0
        %v877 = vsel %vm482, %v832, 0
        %879 = vmatpush.bf16.msra.mxu0 0
        %880 = vmatpush.bf16.msra.mxu0 0
        %881 = vmatpush.bf16.msra.mxu0 0
        %882 = vmatpush.bf16.msra.mxu0 0
        %883 = vmatpush.bf16.msra.mxu0 0
        %884 = vmatpush.bf16.msra.mxu0 0
        %885 = vmatpush.bf16.msra.mxu0 0
        %886 = vmatpush.bf16.msra.mxu0 %v877
        %887 = vmatmul.bf16.gmra.mxu0 %v865
        %v888 = vpop.f32.mrf.mxu0
        %v889 = vadd.f32 0.0, %v888
        %v890 = vpop.f32.mrf.mxu0
        %v891 = vadd.f32 0.0, %v890
        %892 = vmatmul.bf16.gmra.mxu0 %v868
        %v893 = vpop.f32.mrf.mxu0
        %v894 = vadd.f32 0.0, %v893
        %v895 = vpop.f32.mrf.mxu0
        %v896 = vadd.f32 0.0, %v895
        %897 = vmatmul.bf16.gmra.mxu0 %v871
        %v898 = vpop.f32.mrf.mxu0
        %v899 = vadd.f32 0.0, %v898
        %v900 = vpop.f32.mrf.mxu0
        %v901 = vadd.f32 0.0, %v900
        %902 = vmatmul.bf16.gmra.mxu0 %v874
        %v903 = vpop.f32.mrf.mxu0
        %v904 = vadd.f32 0.0, %v903
        %v905 = vpop.f32.mrf.mxu0
        %v906 = vadd.f32 0.0, %v905
        %907 = vdwg.mxu0
        %v908 = vadd.f32 %v822, %v889
        %v909 = vadd.f32 %v823, %v891
        %v910 = vadd.f32 %v824, %v894
        %v911 = vadd.f32 %v825, %v896
        %v912 = vadd.f32 %v826, %v899
        %v913 = vadd.f32 %v827, %v901
        %v914 = vadd.f32 %v828, %v904
        %v915 = vadd.f32 %v829, %v906
        %v916 = vld [vmem:[%s410 + $0x4] sm:$0xf]
        %v917 = vld [vmem:[%s410 + $0x8] sm:$0xf]
        %v918 = vld [vmem:[%s410 + $0xc] sm:$0xf]
        %v919 = vld [vmem:[%s410 + $0x10] sm:$0xf]
        %v920 = vld [vmem:[%s410 + $0x14] sm:$0xf]
        %v921 = vld [vmem:[%s410 + $0x18] sm:$0xf]
        %v922 = vld [vmem:[%s410 + $0x1c] sm:$0xf]
        %v923 = vld [vmem:[%s410 + $0x20] sm:$0xf]
        %s924 = scalar_lea.vmem %s357, 24 [#allocation2]
        %v925 = vld [vmem:[%s924] sm:$0xf]
        %v934 = vunpack.c.l.b16 %v916
        %v935 = vunpack.c.l.b16 %v917
        %v936 = vunpack.c.l.b16 %v918
        %v937 = vunpack.c.l.b16 %v919
        %v938 = vunpack.c.l.b16 %v920
        %v939 = vunpack.c.l.b16 %v921
        %v940 = vunpack.c.l.b16 %v922
        %v941 = vunpack.c.l.b16 %v923
        %v942 = vpack.c.b16 %v935, %v934
        %v943 = vpack.c.b16 %v937, %v936
        %v944 = vpack.c.b16 %v939, %v938
        %v945 = vpack.c.b16 %v941, %v940
        %v947 = vshrl.u32 %v942, 16
        %v949 = vshll.u32 %v942, 16
        %v951 = vrot.slane %v949, 1
        %v952 = vor.u32 %v947, %v951
        %v954 = vshll.u32 %v943, 16
        %v956 = vrot.slane %v954, 1
        %v957 = vsel %vm585, %v952, %v956
        %v958 = vshrl.u32 %v943, 16
        %v960 = vor.u32 %v958, %v956
        %v962 = vshll.u32 %v944, 16
        %v964 = vrot.slane %v962, 1
        %v965 = vsel %vm585, %v960, %v964
        %v966 = vshrl.u32 %v944, 16
        %v968 = vor.u32 %v966, %v964
        %v970 = vshll.u32 %v945, 16
        %v972 = vrot.slane %v970, 1
        %v973 = vsel %vm585, %v968, %v972
        %v974 = vshrl.u32 %v945, 16
        %v976 = vor.u32 %v974, %v972
        %v978 = vsel %vm469, %v957, 0
        %v981 = vsel %vm469, %v965, 0
        %v984 = vsel %vm469, %v973, 0
        %v987 = vsel %vm469, %v976, 0
        %v990 = vsel %vm482, %v925, 0
        %992 = vmatpush.bf16.msra.mxu0 0
        %993 = vmatpush.bf16.msra.mxu0 0
        %994 = vmatpush.bf16.msra.mxu0 0
        %995 = vmatpush.bf16.msra.mxu0 0
        %996 = vmatpush.bf16.msra.mxu0 0
        %997 = vmatpush.bf16.msra.mxu0 0
        %998 = vmatpush.bf16.msra.mxu0 0
        %999 = vmatpush.bf16.msra.mxu0 %v990
        %1000 = vmatmul.bf16.gmra.mxu0 %v978
        %v1001 = vpop.f32.mrf.mxu0
        %v1002 = vadd.f32 0.0, %v1001
        %v1003 = vpop.f32.mrf.mxu0
        %v1004 = vadd.f32 0.0, %v1003
        %1005 = vmatmul.bf16.gmra.mxu0 %v981
        %v1006 = vpop.f32.mrf.mxu0
        %v1007 = vadd.f32 0.0, %v1006
        %v1008 = vpop.f32.mrf.mxu0
        %v1009 = vadd.f32 0.0, %v1008
        %1010 = vmatmul.bf16.gmra.mxu0 %v984
        %v1011 = vpop.f32.mrf.mxu0
        %v1012 = vadd.f32 0.0, %v1011
        %v1013 = vpop.f32.mrf.mxu0
        %v1014 = vadd.f32 0.0, %v1013
        %1015 = vmatmul.bf16.gmra.mxu0 %v987
        %v1016 = vpop.f32.mrf.mxu0
        %v1017 = vadd.f32 0.0, %v1016
        %v1018 = vpop.f32.mrf.mxu0
        %v1019 = vadd.f32 0.0, %v1018
        %1020 = vdwg.mxu0
        %v1021 = vadd.f32 %v908, %v1002
        %v1022 = vadd.f32 %v909, %v1004
        %v1023 = vadd.f32 %v910, %v1007
        %v1024 = vadd.f32 %v911, %v1009
        %v1025 = vadd.f32 %v912, %v1012
        %v1026 = vadd.f32 %v913, %v1014
        %v1027 = vadd.f32 %v914, %v1017
        %v1028 = vadd.f32 %v915, %v1019
        %v1029 = vld [vmem:[%s415 + $0x4] sm:$0xf]
        %v1030 = vld [vmem:[%s415 + $0x8] sm:$0xf]
        %v1031 = vld [vmem:[%s415 + $0xc] sm:$0xf]
        %v1032 = vld [vmem:[%s415 + $0x10] sm:$0xf]
        %v1033 = vld [vmem:[%s415 + $0x14] sm:$0xf]
        %v1034 = vld [vmem:[%s415 + $0x18] sm:$0xf]
        %v1035 = vld [vmem:[%s415 + $0x1c] sm:$0xf]
        %v1036 = vld [vmem:[%s415 + $0x20] sm:$0xf]
        %s1037 = scalar_lea.vmem %s357, 28 [#allocation2]
        %v1038 = vld [vmem:[%s1037] sm:$0xf]
        %v1047 = vunpack.c.l.b16 %v1029
        %v1048 = vunpack.c.l.b16 %v1030
        %v1049 = vunpack.c.l.b16 %v1031
        %v1050 = vunpack.c.l.b16 %v1032
        %v1051 = vunpack.c.l.b16 %v1033
        %v1052 = vunpack.c.l.b16 %v1034
        %v1053 = vunpack.c.l.b16 %v1035
        %v1054 = vunpack.c.l.b16 %v1036
        %v1055 = vpack.c.b16 %v1048, %v1047
        %v1056 = vpack.c.b16 %v1050, %v1049
        %v1057 = vpack.c.b16 %v1052, %v1051
        %v1058 = vpack.c.b16 %v1054, %v1053
        %v1060 = vshrl.u32 %v1055, 16
        %v1062 = vshll.u32 %v1055, 16
        %v1064 = vrot.slane %v1062, 1
        %v1065 = vor.u32 %v1060, %v1064
        %v1067 = vshll.u32 %v1056, 16
        %v1069 = vrot.slane %v1067, 1
        %v1070 = vsel %vm585, %v1065, %v1069
        %v1071 = vshrl.u32 %v1056, 16
        %v1073 = vor.u32 %v1071, %v1069
        %v1075 = vshll.u32 %v1057, 16
        %v1077 = vrot.slane %v1075, 1
        %v1078 = vsel %vm585, %v1073, %v1077
        %v1079 = vshrl.u32 %v1057, 16
        %v1081 = vor.u32 %v1079, %v1077
        %v1083 = vshll.u32 %v1058, 16
        %v1085 = vrot.slane %v1083, 1
        %v1086 = vsel %vm585, %v1081, %v1085
        %v1087 = vshrl.u32 %v1058, 16
        %v1089 = vor.u32 %v1087, %v1085
        %v1091 = vsel %vm469, %v1070, 0
        %v1094 = vsel %vm469, %v1078, 0
        %v1097 = vsel %vm469, %v1086, 0
        %v1100 = vsel %vm469, %v1089, 0
        %v1103 = vsel %vm482, %v1038, 0
        %1105 = vmatpush.bf16.msra.mxu0 0
        %1106 = vmatpush.bf16.msra.mxu0 0
        %1107 = vmatpush.bf16.msra.mxu0 0
        %1108 = vmatpush.bf16.msra.mxu0 0
        %1109 = vmatpush.bf16.msra.mxu0 0
        %1110 = vmatpush.bf16.msra.mxu0 0
        %1111 = vmatpush.bf16.msra.mxu0 0
        %1112 = vmatpush.bf16.msra.mxu0 %v1103
        %1113 = vmatmul.bf16.gmra.mxu0 %v1091
        %v1114 = vpop.f32.mrf.mxu0
        %v1115 = vadd.f32 0.0, %v1114
        %v1116 = vpop.f32.mrf.mxu0
        %v1117 = vadd.f32 0.0, %v1116
        %1118 = vmatmul.bf16.gmra.mxu0 %v1094
        %v1119 = vpop.f32.mrf.mxu0
        %v1120 = vadd.f32 0.0, %v1119
        %v1121 = vpop.f32.mrf.mxu0
        %v1122 = vadd.f32 0.0, %v1121
        %1123 = vmatmul.bf16.gmra.mxu0 %v1097
        %v1124 = vpop.f32.mrf.mxu0
        %v1125 = vadd.f32 0.0, %v1124
        %v1126 = vpop.f32.mrf.mxu0
        %v1127 = vadd.f32 0.0, %v1126
        %1128 = vmatmul.bf16.gmra.mxu0 %v1100
        %v1129 = vpop.f32.mrf.mxu0
        %v1130 = vadd.f32 0.0, %v1129
        %v1131 = vpop.f32.mrf.mxu0
        %v1132 = vadd.f32 0.0, %v1131
        %1133 = vdwg.mxu0
        %v1134 = vadd.f32 %v1021, %v1115
        %v1135 = vadd.f32 %v1022, %v1117
        %v1136 = vadd.f32 %v1023, %v1120
        %v1137 = vadd.f32 %v1024, %v1122
        %v1138 = vadd.f32 %v1025, %v1125
        %v1139 = vadd.f32 %v1026, %v1127
        %v1140 = vadd.f32 %v1027, %v1130
        %v1141 = vadd.f32 %v1028, %v1132
        %v1142 = vld [vmem:[%s410 + $0x4] sm:$0xe]
        %s1143 = scalar_lea.vmem %s357, 32 [#allocation2]
        %v1144 = vld [vmem:[%s1143] sm:$0xf]
        %v1146 = vunpack.c.l.b16 %v1142
        %v1147 = vpack.c.b16 %v935, %v1146
        %vm1148 = vcmask 1046528
        %v1149 = vrot.slane %v1147, 1
        %v1150 = vrot.slane %v943, 1
        %v1151 = vsel %vm1148, %v1149, %v1150
        %v1152 = vrot.slane %v944, 1
        %v1153 = vsel %vm1148, %v1150, %v1152
        %v1154 = vrot.slane %v945, 1
        %v1155 = vsel %vm1148, %v1152, %v1154
        %v1157 = vsel %vm469, %v1151, 0
        %v1160 = vsel %vm469, %v1153, 0
        %v1163 = vsel %vm469, %v1155, 0
        %v1166 = vsel %vm469, %v1154, 0
        %v1169 = vsel %vm482, %v1144, 0
        %1171 = vmatpush.bf16.msra.mxu0 0
        %1172 = vmatpush.bf16.msra.mxu0 0
        %1173 = vmatpush.bf16.msra.mxu0 0
        %1174 = vmatpush.bf16.msra.mxu0 0
        %1175 = vmatpush.bf16.msra.mxu0 0
        %1176 = vmatpush.bf16.msra.mxu0 0
        %1177 = vmatpush.bf16.msra.mxu0 0
        %1178 = vmatpush.bf16.msra.mxu0 %v1169
        %1179 = vmatmul.bf16.gmra.mxu0 %v1157
        %v1180 = vpop.f32.mrf.mxu0
        %v1181 = vadd.f32 0.0, %v1180
        %v1182 = vpop.f32.mrf.mxu0
        %v1183 = vadd.f32 0.0, %v1182
        %1184 = vmatmul.bf16.gmra.mxu0 %v1160
        %v1185 = vpop.f32.mrf.mxu0
        %v1186 = vadd.f32 0.0, %v1185
        %v1187 = vpop.f32.mrf.mxu0
        %v1188 = vadd.f32 0.0, %v1187
        %1189 = vmatmul.bf16.gmra.mxu0 %v1163
        %v1190 = vpop.f32.mrf.mxu0
        %v1191 = vadd.f32 0.0, %v1190
        %v1192 = vpop.f32.mrf.mxu0
        %v1193 = vadd.f32 0.0, %v1192
        %1194 = vmatmul.bf16.gmra.mxu0 %v1166
        %v1195 = vpop.f32.mrf.mxu0
        %v1196 = vadd.f32 0.0, %v1195
        %v1197 = vpop.f32.mrf.mxu0
        %v1198 = vadd.f32 0.0, %v1197
        %1199 = vdwg.mxu0
        %v1200 = vadd.f32 %v1134, %v1181
        %v1201 = vadd.f32 %v1135, %v1183
        %v1202 = vadd.f32 %v1136, %v1186
        %v1203 = vadd.f32 %v1137, %v1188
        %v1204 = vadd.f32 %v1138, %v1191
        %v1205 = vadd.f32 %v1139, %v1193
        %v1206 = vadd.f32 %v1140, %v1196
        %v1207 = vadd.f32 %v1141, %v1198
        %v1208 = vld [vmem:[%s428] sm:$0x1]
        %v1210 = vperm.slane %v1208, 0
        %v1212 = vadd.f32 %v1200, %v1210
        %v1213 = vadd.f32 %v1201, %v1210
        %v1214 = vadd.f32 %v1202, %v1210
        %v1215 = vadd.f32 %v1203, %v1210
        %v1216 = vadd.f32 %v1204, %v1210
        %v1217 = vadd.f32 %v1205, %v1210
        %v1218 = vadd.f32 %v1206, %v1210
        %v1219 = vadd.f32 %v1207, %v1210
        %v1220 = vmax.f32 %v1212, 0.0
        %v1221 = vmax.f32 %v1213, 0.0
        %v1222 = vmax.f32 %v1214, 0.0
        %v1223 = vmax.f32 %v1215, 0.0
        %v1224 = vmax.f32 %v1216, 0.0
        %v1225 = vmax.f32 %v1217, 0.0
        %v1226 = vmax.f32 %v1218, 0.0
        %v1227 = vmax.f32 %v1219, 0.0
        %v1228 = vpack.c.bf16 %v1220, %v1220
        %v1229 = vpack.c.bf16 %v1221, %v1221
        %v1230 = vpack.c.bf16 %v1222, %v1222
        %v1231 = vpack.c.bf16 %v1223, %v1223
        %v1232 = vpack.c.bf16 %v1224, %v1224
        %v1233 = vpack.c.bf16 %v1225, %v1225
        %v1234 = vpack.c.bf16 %v1226, %v1226
        %v1235 = vpack.c.bf16 %v1227, %v1227
        %1236 = vst [vmem:[%s405] sm:$0xf] %v1228
        %1237 = vst [vmem:[%s405 + $0x4] sm:$0xf] %v1229
        %1238 = vst [vmem:[%s405 + $0x8] sm:$0xf] %v1230
        %1239 = vst [vmem:[%s405 + $0xc] sm:$0xf] %v1231
        %1240 = vst [vmem:[%s405 + $0x10] sm:$0xf] %v1232
        %1241 = vst [vmem:[%s405 + $0x14] sm:$0xf] %v1233
        %1242 = vst [vmem:[%s405 + $0x18] sm:$0xf] %v1234
        %1243 = vst [vmem:[%s405 + $0x1c] sm:$0x7] %v1235
        %s1244 = sand.u32 %s195, 1
        %s1245 = sand.u32 %s195, 1
        %s1246 = smul.addr %s1245, 32
        %s1247 = scalar_lea.vmem [#allocation3], %s1246
        // Predicated region
        $region86: #{inception_b.5} parent=80 // pred_check
          %p1248 = pneg %p205
        $region87: #{inception_b.5} parent=80 // pred_check_branch
          %1250 = sbr.rel (%p1248) target = $region89
        $region88: #{inception_b.5} parent=80 // pred_region
          %s1251 = smul.addr %s21, 24
          %s1252 = sadd.s32 %s22, %s1251
          %s1253 = smul.addr %s1252, 4
          %s1254 = scalar_lea.vmem %s6, %s1253
          // Predicated region
          $region90: #{inception_b.5} parent=88 // pred_check
            _
          $region91: #{inception_b.5} parent=88 // pred_check_branch
            %1256 = sbr.rel (0) target = $region93
          $region92: #{inception_b.5} parent=88 // pred_region
            // Predicated region
            $region94: #{inception_b.5} parent=92 // pred_check
              _
            $region95: #{inception_b.5} parent=92 // pred_check_branch
              %1258 = sbr.rel target = $region97
            $region96: #{inception_b.5} parent=92 // pred_region
              // Predicated region
              $region109: #{inception_b.5} parent=96 // pred_check
                _
              $region110: #{inception_b.5} parent=96 // pred_check_branch
                %1288 = sbr.rel (0) target = $region112
              $region111: #{inception_b.5} parent=96 // pred_region
                loop: start=0, step=1, limit=1
                $region113: #{inception_b.5} parent=111 // loop_pre_header
                  _
                $region114: #{inception_b.5} parent=111 // loop_header
                  %s1290 = sphi 0, %s1294
                  %p1291 = scmp.ge.s32.totalorder %s1290, 1
                  %s1295 = sphi %s1247, %s1247
                  %s1296 = sphi %s1254, %s1254
                $region115: #{inception_b.5} parent=111 // loop_header_branch
                  %1293 = sbr.rel (%p1291) target = $region119
                $region116: #{inception_b.5} parent=111 // loop_body
                  _
                $region117: #{inception_b.5} parent=111 // loop_footer
                  %s1294 = sadd.s32 1, %s1290
                $region118: #{inception_b.5} parent=111 // loop_footer_branch
                  %1289 = sbr.rel target = $region114
                $region119: #{inception_b.5} parent=111 // loop_exit
                  _
                %s1298 = ssub.s32 16, 1
                loop: start=0, step=1, limit=1
                $region120: #{inception_b.5} parent=111 // loop_pre_header
                  _
                $region121: #{inception_b.5} parent=111 // loop_header
                  %s1300 = sphi 0, %s1304
                  %p1301 = scmp.ge.s32.totalorder %s1300, 1
                  %s1305 = sphi %s1247, %s1247
                  %s1306 = sphi %s1254, %s1254
                $region122: #{inception_b.5} parent=111 // loop_header_branch
                  %1303 = sbr.rel (%p1301) target = $region126
                $region123: #{inception_b.5} parent=111 // loop_body
                  %v1307 = vld [vmem:[%s1305] sm:%s1298]
                  %1308 = vst [vmem:[%s1306] sm:%s1298] %v1307
                  %v1309 = vld [vmem:[%s1305 + $0x4] sm:%s1298]
                  %1310 = vst [vmem:[%s1306 + $0xc] sm:%s1298] %v1309
                  %v1311 = vld [vmem:[%s1305 + $0x8] sm:%s1298]
                  %1312 = vst [vmem:[%s1306 + $0x18] sm:%s1298] %v1311
                  %v1313 = vld [vmem:[%s1305 + $0xc] sm:%s1298]
                  %1314 = vst [vmem:[%s1306 + $0x24] sm:%s1298] %v1313
                  %v1315 = vld [vmem:[%s1305 + $0x10] sm:%s1298]
                  %1316 = vst [vmem:[%s1306 + $0x30] sm:%s1298] %v1315
                  %v1317 = vld [vmem:[%s1305 + $0x14] sm:%s1298]
                  %1318 = vst [vmem:[%s1306 + $0x3c] sm:%s1298] %v1317
                  %v1319 = vld [vmem:[%s1305 + $0x18] sm:%s1298]
                  %1320 = vst [vmem:[%s1306 + $0x48] sm:%s1298] %v1319
                  %v1321 = vld [vmem:[%s1305 + $0x1c] sm:%s1298]
                  %1322 = vst [vmem:[%s1306 + $0x54] sm:%s1298] %v1321
                $region124: #{inception_b.5} parent=111 // loop_footer
                  %s1304 = sadd.s32 1, %s1300
                $region125: #{inception_b.5} parent=111 // loop_footer_branch
                  %1299 = sbr.rel target = $region121
                $region126: #{inception_b.5} parent=111 // loop_exit
                  _
              $region112: #{inception_b.5} parent=96 // pred_fallthru
                _
            $region97: #{inception_b.5} parent=92 // pred_fallthru
              _
            // Predicated region
            $region98: #{inception_b.5} parent=92 // pred_check
              _
            $region99: #{inception_b.5} parent=92 // pred_check_branch
              %1260 = sbr.rel (0) target = $region101
            $region100: #{inception_b.5} parent=92 // pred_region
              %s1262 = ssub.s32 16, 1
              loop: start=0, step=1, limit=1
              $region102: #{inception_b.5} parent=100 // loop_pre_header
                _
              $region103: #{inception_b.5} parent=100 // loop_header
                %s1264 = sphi 0, %s1268
                %p1265 = scmp.ge.s32.totalorder %s1264, 1
                %s1269 = sphi %s1247, %s1247
                %s1270 = sphi %s1254, %s1254
              $region104: #{inception_b.5} parent=100 // loop_header_branch
                %1267 = sbr.rel (%p1265) target = $region108
              $region105: #{inception_b.5} parent=100 // loop_body
                %v1271 = vld [vmem:[%s1269] sm:%s1262]
                %1272 = vst [vmem:[%s1270] sm:%s1262] %v1271
                %v1273 = vld [vmem:[%s1269 + $0x4] sm:%s1262]
                %1274 = vst [vmem:[%s1270 + $0xc] sm:%s1262] %v1273
                %v1275 = vld [vmem:[%s1269 + $0x8] sm:%s1262]
                %1276 = vst [vmem:[%s1270 + $0x18] sm:%s1262] %v1275
                %v1277 = vld [vmem:[%s1269 + $0xc] sm:%s1262]
                %1278 = vst [vmem:[%s1270 + $0x24] sm:%s1262] %v1277
                %v1279 = vld [vmem:[%s1269 + $0x10] sm:%s1262]
                %1280 = vst [vmem:[%s1270 + $0x30] sm:%s1262] %v1279
                %v1281 = vld [vmem:[%s1269 + $0x14] sm:%s1262]
                %1282 = vst [vmem:[%s1270 + $0x3c] sm:%s1262] %v1281
                %v1283 = vld [vmem:[%s1269 + $0x18] sm:%s1262]
                %1284 = vst [vmem:[%s1270 + $0x48] sm:%s1262] %v1283
                %v1285 = vld [vmem:[%s1269 + $0x1c] sm:%s1262]
                %1286 = vst [vmem:[%s1270 + $0x54] sm:%s1262] %v1285
              $region106: #{inception_b.5} parent=100 // loop_footer
                %s1268 = sadd.s32 1, %s1264
              $region107: #{inception_b.5} parent=100 // loop_footer_branch
                %1263 = sbr.rel target = $region103
              $region108: #{inception_b.5} parent=100 // loop_exit
                _
            $region101: #{inception_b.5} parent=92 // pred_fallthru
              _
          $region93: #{inception_b.5} parent=88 // pred_fallthru
            _
          %1323 = vnop
        $region89: #{inception_b.5} parent=80 // pred_fallthru
          _
      $region81: #{inception_b.5} parent=5 // pred_fallthru
        _
      %p1324 = scmp.le.s32.totalorder 2, %s12
      // Predicated region
      $region127: #{inception_b.5} parent=5 // pred_check
        %p1325 = pneg %p1324
      $region128: #{inception_b.5} parent=5 // pred_check_branch
        %1327 = sbr.rel (%p1325) target = $region130
      $region129: #{inception_b.5} parent=5 // pred_region
        %s1328 = ssub.s32 %s12, 2
        // Predicated region
        $region131: #{inception_b.5} parent=129 // pred_check
          %p1329 = pneg %p211
        $region132: #{inception_b.5} parent=129 // pred_check_branch
          %1331 = sbr.rel (%p1329) target = $region134
        $region133: #{inception_b.5} parent=129 // pred_region
          %s1332 = sand.u32 %s196, 1
          %s1333 = sand.u32 %s196, 1
          %s1334 = smul.addr %s1333, 32
          %s1335 = scalar_lea.vmem [#allocation3], %s1334
        $region134: #{inception_b.5} parent=129 // pred_fallthru
          _
      $region130: #{inception_b.5} parent=5 // pred_fallthru
        _
    $region6: #{inception_b.5} parent=1 // loop_footer
      %s16 = sadd.s32 1, %s12
    $region7: #{inception_b.5} parent=1 // loop_footer_branch
      %11 = sbr.rel target = $region3
    $region8: #{inception_b.5} parent=1 // loop_exit
      _

// kernel: inception_b.9
$region0: #{inception_b.9}
  #allocation0 [shape = 'u32[]', space=smem, size = 0x4, offset = 0x4, fixed_abs, tag = 'smem constant byte address 0x4 - core index']
  #allocation1 [shape = 'u32[72,128]{1,0:T(1,128)}', space=vmem, size = 0x9000, scoped, tag = 'internal scratch']
  %s0 = inlined_call_operand.vmem [shape: bf16[2,8,8,8], index: 0, kind: input, shape index: {}]
  %s1 = inlined_call_operand.vmem [shape: bf16[2,8,8,8], index: 1, kind: input, shape index: {}]
  %s2 = inlined_call_operand.vmem [shape: bf16[2,8,8,8], index: 2, kind: input, shape index: {}]
  %s3 = inlined_call_operand.vmem [shape: bf16[2,8,8,8], index: 3, kind: input, shape index: {}]
  %s4 = inlined_call_operand.vmem [shape: bf16[2,7,7,8], index: 4, kind: output, shape index: {}]
  %s5 = sld [smem:[#allocation0]]
  $region49: #{inception_b.9} parent=0
    _
  %s7 = ssub.s32 1, %s5
  %s8 = scalar_select 0, %s7, %s5
  loop: start=0, step=1, limit=4
  $region2: #{inception_b.9} parent=0 // loop_pre_header
    _
  $region3: #{inception_b.9} parent=0 // loop_header
    %s10 = sphi 0, %s14
    %p11 = scmp.ge.s32.totalorder %s10, 4
    %s20 = sphi 0, %s22
    %s23 = sphi 0, %s20
    %s24 = sphi 0, %s23
    %s40 = sphi 0, %s24
    %s46 = sphi 0, %s48
    %s49 = sphi 0, %s46
    %s50 = sphi 0, %s49
    %s66 = sphi 0, %s50
    %s72 = sphi 0, %s74
    %s75 = sphi 0, %s72
    %s76 = sphi 0, %s75
    %s92 = sphi 0, %s76
    %s98 = sphi 0, %s100
    %s101 = sphi 0, %s98
    %s102 = sphi 0, %s101
    %s118 = sphi 0, %s102
    %s124 = sphi 0, %s126
    %s127 = sphi 0, %s124
    %s128 = sphi 0, %s127
    %s144 = sphi 0, %s128
  $region4: #{inception_b.9} parent=0 // loop_header_branch
    %13 = sbr.rel (%p11) target = $region8
  $region5: #{inception_b.9} parent=0 // loop_body
    %s15 = ssub.s32 %s10, 1
    %s16 = ssub.s32 %s10, 2
    %s17 = sadd.s32 %s10, 1
    %s18 = ssub.s32 %s10, %s17
    %p19 = scmp.eq.s32.totalorder %s18, 0
    %s21 = sadd.s32 %s20, 1
    %s22 = scalar_select %p19, %s20, %s21
    %p25 = pneg %p19
    %p26 = scmp.eq.s32.totalorder %s10, 1
    %p27 = por %p25, %p26
    %p28 = scmp.ne.s32.totalorder %s20, %s23
    %p29 = scmp.eq.s32.totalorder %s10, 0
    %p30 = por %p28, %p29
    %p31 = scmp.ne.s32.totalorder %s20, %s23
    %p32 = scmp.eq.s32.totalorder %s15, 1
    %p33 = por %p31, %p32
    %p34 = scmp.ne.s32.totalorder %s23, %s24
    %p35 = scmp.eq.s32.totalorder %s15, 0
    %p36 = por %p34, %p35
    %p37 = scmp.ne.s32.totalorder %s23, %s24
    %p38 = scmp.eq.s32.totalorder %s16, 1
    %p39 = por %p37, %p38
    %p41 = scmp.ne.s32.totalorder %s24, %s40
    %p42 = scmp.eq.s32.totalorder %s16, 0
    %p43 = por %p41, %p42
    %s44 = ssub.s32 %s10, %s17
    %p45 = scmp.eq.s32.totalorder %s44, 0
    %s47 = sadd.s32 %s46, 1
    %s48 = scalar_select %p45, %s46, %s47
    %p51 = pneg %p45
    %p52 = scmp.eq.s32.totalorder %s10, 1
    %p53 = por %p51, %p52
    %p54 = scmp.ne.s32.totalorder %s46, %s49
    %p55 = scmp.eq.s32.totalorder %s10, 0
    %p56 = por %p54, %p55
    %p57 = scmp.ne.s32.totalorder %s46, %s49
    %p58 = scmp.eq.s32.totalorder %s15, 1
    %p59 = por %p57, %p58
    %p60 = scmp.ne.s32.totalorder %s49, %s50
    %p61 = scmp.eq.s32.totalorder %s15, 0
    %p62 = por %p60, %p61
    %p63 = scmp.ne.s32.totalorder %s49, %s50
    %p64 = scmp.eq.s32.totalorder %s16, 1
    %p65 = por %p63, %p64
    %p67 = scmp.ne.s32.totalorder %s50, %s66
    %p68 = scmp.eq.s32.totalorder %s16, 0
    %p69 = por %p67, %p68
    %s70 = ssub.s32 %s10, %s17
    %p71 = scmp.eq.s32.totalorder %s70, 0
    %s73 = sadd.s32 %s72, 1
    %s74 = scalar_select %p71, %s72, %s73
    %p77 = pneg %p71
    %p78 = scmp.eq.s32.totalorder %s10, 1
    %p79 = por %p77, %p78
    %p80 = scmp.ne.s32.totalorder %s72, %s75
    %p81 = scmp.eq.s32.totalorder %s10, 0
    %p82 = por %p80, %p81
    %p83 = scmp.ne.s32.totalorder %s72, %s75
    %p84 = scmp.eq.s32.totalorder %s15, 1
    %p85 = por %p83, %p84
    %p86 = scmp.ne.s32.totalorder %s75, %s76
    %p87 = scmp.eq.s32.totalorder %s15, 0
    %p88 = por %p86, %p87
    %p89 = scmp.ne.s32.totalorder %s75, %s76
    %p90 = scmp.eq.s32.totalorder %s16, 1
    %p91 = por %p89, %p90
    %p93 = scmp.ne.s32.totalorder %s76, %s92
    %p94 = scmp.eq.s32.totalorder %s16, 0
    %p95 = por %p93, %p94
    %s96 = ssub.s32 %s10, %s17
    %p97 = scmp.eq.s32.totalorder %s96, 0
    %s99 = sadd.s32 %s98, 1
    %s100 = scalar_select %p97, %s98, %s99
    %p103 = pneg %p97
    %p104 = scmp.eq.s32.totalorder %s10, 1
    %p105 = por %p103, %p104
    %p106 = scmp.ne.s32.totalorder %s98, %s101
    %p107 = scmp.eq.s32.totalorder %s10, 0
    %p108 = por %p106, %p107
    %p109 = scmp.ne.s32.totalorder %s98, %s101
    %p110 = scmp.eq.s32.totalorder %s15, 1
    %p111 = por %p109, %p110
    %p112 = scmp.ne.s32.totalorder %s101, %s102
    %p113 = scmp.eq.s32.totalorder %s15, 0
    %p114 = por %p112, %p113
    %p115 = scmp.ne.s32.totalorder %s101, %s102
    %p116 = scmp.eq.s32.totalorder %s16, 1
    %p117 = por %p115, %p116
    %p119 = scmp.ne.s32.totalorder %s102, %s118
    %p120 = scmp.eq.s32.totalorder %s16, 0
    %p121 = por %p119, %p120
    %s122 = ssub.s32 %s10, %s17
    %p123 = scmp.eq.s32.totalorder %s122, 0
    %s125 = sadd.s32 %s124, 1
    %s126 = scalar_select %p123, %s124, %s125
    %p129 = pneg %p123
    %p130 = scmp.eq.s32.totalorder %s10, 1
    %p131 = por %p129, %p130
    %p132 = scmp.ne.s32.totalorder %s124, %s127
    %p133 = scmp.eq.s32.totalorder %s10, 0
    %p134 = por %p132, %p133
    %p135 = scmp.ne.s32.totalorder %s124, %s127
    %p136 = scmp.eq.s32.totalorder %s15, 1
    %p137 = por %p135, %p136
    %p138 = scmp.ne.s32.totalorder %s127, %s128
    %p139 = scmp.eq.s32.totalorder %s15, 0
    %p140 = por %p138, %p139
    %p141 = scmp.ne.s32.totalorder %s127, %s128
    %p142 = scmp.eq.s32.totalorder %s16, 1
    %p143 = por %p141, %p142
    %p145 = scmp.ne.s32.totalorder %s128, %s144
    %p146 = scmp.eq.s32.totalorder %s16, 0
    %p147 = por %p145, %p146
    %p148 = scmp.le.s32.totalorder 1, %s10
    %p149 = scmp.lt.s32.totalorder %s10, 3
    %p150 = pnand %p148, %p149
    %p151 = pneg %p150
    // Predicated region
    $region9: #{inception_b.9} parent=5 // pred_check
      _
    $region10: #{inception_b.9} parent=5 // pred_check_branch
      %153 = sbr.rel (%p150) target = $region12
    $region11: #{inception_b.9} parent=5 // pred_region
      %s154 = ssub.s32 %s10, 1
    $region12: #{inception_b.9} parent=5 // pred_fallthru
      _
    %p155 = scmp.lt.s32.totalorder %s10, 2
    // Predicated region
    $region13: #{inception_b.9} parent=5 // pred_check
      %p156 = pneg %p155
    $region14: #{inception_b.9} parent=5 // pred_check_branch
      %158 = sbr.rel (%p156) target = $region16
    $region15: #{inception_b.9} parent=5 // pred_region
      // Predicated region
      $region17: #{inception_b.9} parent=15 // pred_check
        %p159 = pneg %p30
      $region18: #{inception_b.9} parent=15 // pred_check_branch
        %161 = sbr.rel (%p159) target = $region20
      $region19: #{inception_b.9} parent=15 // pred_region
        %p162 = scmp.lt.s32.totalorder %s10, 1
        %s163 = scalar_select %p162, %s10, 1
        %s164 = smul.addr %s163, 8
        %s165 = smul.addr %s164, 4
        %s166 = scalar_lea.vmem %s0, %s165
      $region20: #{inception_b.9} parent=15 // pred_fallthru
        _
      // Predicated region
      $region21: #{inception_b.9} parent=15 // pred_check
        %p167 = pneg %p56
      $region22: #{inception_b.9} parent=15 // pred_check_branch
        %169 = sbr.rel (%p167) target = $region24
      $region23: #{inception_b.9} parent=15 // pred_region
        %p170 = scmp.lt.s32.totalorder %s10, 1
        %s171 = scalar_select %p170, %s10, 1
        %s172 = smul.addr %s171, 8
        %s173 = smul.addr %s172, 4
        %s174 = scalar_lea.vmem %s1, %s173
      $region24: #{inception_b.9} parent=15 // pred_fallthru
        _
      // Predicated region
      $region25: #{inception_b.9} parent=15 // pred_check
        %p175 = pneg %p82
      $region26: #{inception_b.9} parent=15 // pred_check_branch
        %177 = sbr.rel (%p175) target = $region28
      $region27: #{inception_b.9} parent=15 // pred_region
        %p178 = scmp.lt.s32.totalorder %s10, 1
        %s179 = scalar_select %p178, %s10, 1
        %s180 = smul.addr %s179, 8
        %s181 = smul.addr %s180, 4
        %s182 = scalar_lea.vmem %s2, %s181
      $region28: #{inception_b.9} parent=15 // pred_fallthru
        _
      // Predicated region
      $region29: #{inception_b.9} parent=15 // pred_check
        %p183 = pneg %p108
      $region30: #{inception_b.9} parent=15 // pred_check_branch
        %185 = sbr.rel (%p183) target = $region32
      $region31: #{inception_b.9} parent=15 // pred_region
        %p186 = scmp.lt.s32.totalorder %s10, 1
        %s187 = scalar_select %p186, %s10, 1
        %s188 = smul.addr %s187, 8
        %s189 = smul.addr %s188, 4
        %s190 = scalar_lea.vmem %s3, %s189
      $region32: #{inception_b.9} parent=15 // pred_fallthru
        _
    $region16: #{inception_b.9} parent=5 // pred_fallthru
      _
    %p191 = scmp.le.s32.totalorder 1, %s10
    %p192 = scmp.lt.s32.totalorder %s10, 3
    %p193 = pnand %p191, %p192
    %p194 = pneg %p193
    // Predicated region
    $region33: #{inception_b.9} parent=5 // pred_check
      _
    $region34: #{inception_b.9} parent=5 // pred_check_branch
      %196 = sbr.rel (%p193) target = $region36
    $region35: #{inception_b.9} parent=5 // pred_region
      %s197 = ssub.s32 %s10, 1
      %p198 = scmp.lt.s32.totalorder %s15, 1
      %s199 = scalar_select %p198, %s15, 1
      %s200 = smul.addr %s199, 8
      %s201 = smul.addr %s200, 4
      %s202 = scalar_lea.vmem %s0, %s201
      %p203 = pneg %p36
      %p204 = pneg %p33
      %p205 = scmp.lt.s32.totalorder %s15, 1
      %s206 = scalar_select %p205, %s15, 1
      %s207 = smul.addr %s206, 8
      %s208 = smul.addr %s207, 4
      %s209 = scalar_lea.vmem %s1, %s208
      %p210 = pneg %p62
      %p211 = pneg %p59
      %p212 = scmp.lt.s32.totalorder %s15, 1
      %s213 = scalar_select %p212, %s15, 1
      %s214 = smul.addr %s213, 8
      %s215 = smul.addr %s214, 4
      %s216 = scalar_lea.vmem %s2, %s215
      %p217 = pneg %p88
      %p218 = pneg %p85
      %p219 = scmp.lt.s32.totalorder %s15, 1
      %s220 = scalar_select %p219, %s15, 1
      %s221 = smul.addr %s220, 8
      %s222 = smul.addr %s221, 4
      %s223 = scalar_lea.vmem %s3, %s222
      %p224 = pneg %p114
      %p225 = pneg %p111
      %p226 = pneg %p140
      %p227 = pneg %p137
      %p228 = scmp.lt.s32.totalorder %s15, 1
      %s229 = scalar_select %p228, %s15, 1
      %s230 = smul.addr %s229, 7
      %s231 = smul.addr %s230, 4
      %s232 = scalar_lea.vmem %s4, %s231
      %p233 = scmp.lt.s32.totalorder %s15, 1
      %s234 = scalar_select %p233, %s15, 1
      %s235 = smul.addr %s234, 8
      %s236 = smul.addr %s235, 4
      %s237 = scalar_lea.vmem %s0, %s236
      %p238 = scmp.lt.s32.totalorder %s15, 1
      %s239 = scalar_select %p238, %s15, 1
      %s240 = smul.addr %s239, 8
      %s241 = smul.addr %s240, 4
      %s242 = scalar_lea.vmem %s1, %s241
      %p243 = scmp.lt.s32.totalorder %s15, 1
      %s244 = scalar_select %p243, %s15, 1
      %s245 = smul.addr %s244, 8
      %s246 = smul.addr %s245, 4
      %s247 = scalar_lea.vmem %s2, %s246
      %p248 = scmp.lt.s32.totalorder %s15, 1
      %s249 = scalar_select %p248, %s15, 1
      %s250 = smul.addr %s249, 8
      %s251 = smul.addr %s250, 4
      %s252 = scalar_lea.vmem %s3, %s251
      %p253 = scmp.lt.s32.totalorder %s15, 1
      %s254 = scalar_select %p253, %s15, 1
      %s255 = smul.addr %s254, 7
      %s256 = smul.addr %s255, 4
      %s257 = scalar_lea.vmem %s4, %s256
      %v258 = vld [vmem:[%s237] sm:$0xf]
      %v259 = vld [vmem:[%s237 + $0x4] sm:$0xf]
      %v260 = vld [vmem:[%s237 + $0x8] sm:$0xf]
      %v261 = vld [vmem:[%s237 + $0xc] sm:$0xf]
      %v262 = vld [vmem:[%s237 + $0x10] sm:$0xf]
      %v263 = vld [vmem:[%s237 + $0x14] sm:$0xf]
      %v264 = vld [vmem:[%s237 + $0x18] sm:$0xf]
      %v265 = vld [vmem:[%s242] sm:$0xf]
      %v266 = vld [vmem:[%s242 + $0x4] sm:$0xf]
      %v267 = vld [vmem:[%s242 + $0x8] sm:$0xf]
      %v268 = vld [vmem:[%s242 + $0xc] sm:$0xf]
      %v269 = vld [vmem:[%s242 + $0x10] sm:$0xf]
      %v270 = vld [vmem:[%s242 + $0x14] sm:$0xf]
      %v271 = vld [vmem:[%s242 + $0x18] sm:$0xf]
      %v272 = vunpack.c.l.bf16 %v258
      %v273 = vunpack.c.l.bf16 %v259
      %v274 = vunpack.c.l.bf16 %v260
      %v275 = vunpack.c.l.bf16 %v261
      %v276 = vunpack.c.l.bf16 %v262
      %v277 = vunpack.c.l.bf16 %v263
      %v278 = vunpack.c.l.bf16 %v264
      %v279 = vunpack.c.l.bf16 %v265
      %v280 = vunpack.c.l.bf16 %v266
      %v281 = vunpack.c.l.bf16 %v267
      %v282 = vunpack.c.l.bf16 %v268
      %v283 = vunpack.c.l.bf16 %v269
      %v284 = vunpack.c.l.bf16 %v270
      %v285 = vunpack.c.l.bf16 %v271
      %v286 = vmax.f32 %v272, %v279
      %v287 = vmax.f32 %v273, %v280
      %v288 = vmax.f32 %v274, %v281
      %v289 = vmax.f32 %v275, %v282
      %v290 = vmax.f32 %v276, %v283
      %v291 = vmax.f32 %v277, %v284
      %v292 = vmax.f32 %v278, %v285
      %v293 = vpack.c.bf16 %v286, %v286
      %v294 = vpack.c.bf16 %v287, %v287
      %v295 = vpack.c.bf16 %v288, %v288
      %v296 = vpack.c.bf16 %v289, %v289
      %v297 = vpack.c.bf16 %v290, %v290
      %v298 = vpack.c.bf16 %v291, %v291
      %v299 = vpack.c.bf16 %v292, %v292
      %v300 = vunpack.c.l.bf16 %v293
      %v301 = vunpack.c.l.bf16 %v294
      %v302 = vunpack.c.l.bf16 %v295
      %v303 = vunpack.c.l.bf16 %v296
      %v304 = vunpack.c.l.bf16 %v297
      %v305 = vunpack.c.l.bf16 %v298
      %v306 = vunpack.c.l.bf16 %v299
      %v314 = vrot.slane %v272, 1
      %v315 = vrot.slane %v273, 1
      %v316 = vrot.slane %v274, 1
      %v317 = vrot.slane %v275, 1
      %v318 = vrot.slane %v276, 1
      %v319 = vrot.slane %v277, 1
      %v320 = vrot.slane %v278, 1
      %v328 = vmax.f32 %v300, %v314
      %v329 = vmax.f32 %v301, %v315
      %v330 = vmax.f32 %v302, %v316
      %v331 = vmax.f32 %v303, %v317
      %v332 = vmax.f32 %v304, %v318
      %v333 = vmax.f32 %v305, %v319
      %v334 = vmax.f32 %v306, %v320
      %v335 = vpack.c.bf16 %v328, %v328
      %v336 = vpack.c.bf16 %v329, %v329
      %v337 = vpack.c.bf16 %v330, %v330
      %v338 = vpack.c.bf16 %v331, %v331
      %v339 = vpack.c.bf16 %v332, %v332
      %v340 = vpack.c.bf16 %v333, %v333
      %v341 = vpack.c.bf16 %v334, %v334
      %v342 = vld [vmem:[%s247] sm:$0xf]
      %v343 = vld [vmem:[%s247 + $0x4] sm:$0xf]
      %v344 = vld [vmem:[%s247 + $0x8] sm:$0xf]
      %v345 = vld [vmem:[%s247 + $0xc] sm:$0xf]
      %v346 = vld [vmem:[%s247 + $0x10] sm:$0xf]
      %v347 = vld [vmem:[%s247 + $0x14] sm:$0xf]
      %v348 = vld [vmem:[%s247 + $0x18] sm:$0xf]
      %v349 = vunpack.c.l.bf16 %v335
      %v350 = vunpack.c.l.bf16 %v336
      %v351 = vunpack.c.l.bf16 %v337
      %v352 = vunpack.c.l.bf16 %v338
      %v353 = vunpack.c.l.bf16 %v339
      %v354 = vunpack.c.l.bf16 %v340
      %v355 = vunpack.c.l.bf16 %v341
      %v356 = vunpack.c.l.bf16 %v342
      %v357 = vunpack.c.l.bf16 %v343
      %v358 = vunpack.c.l.bf16 %v344
      %v359 = vunpack.c.l.bf16 %v345
      %v360 = vunpack.c.l.bf16 %v346
      %v361 = vunpack.c.l.bf16 %v347
      %v362 = vunpack.c.l.bf16 %v348
      %v363 = vmax.f32 %v349, %v356
      %v364 = vmax.f32 %v350, %v357
      %v365 = vmax.f32 %v351, %v358
      %v366 = vmax.f32 %v352, %v359
      %v367 = vmax.f32 %v353, %v360
      %v368 = vmax.f32 %v354, %v361
      %v369 = vmax.f32 %v355, %v362
      %v370 = vpack.c.bf16 %v363, %v363
      %v371 = vpack.c.bf16 %v364, %v364
      %v372 = vpack.c.bf16 %v365, %v365
      %v373 = vpack.c.bf16 %v366, %v366
      %v374 = vpack.c.bf16 %v367, %v367
      %v375 = vpack.c.bf16 %v368, %v368
      %v376 = vpack.c.bf16 %v369, %v369
      %v377 = vld [vmem:[%s252] sm:$0xf]
      %v378 = vld [vmem:[%s252 + $0x4] sm:$0xf]
      %v379 = vld [vmem:[%s252 + $0x8] sm:$0xf]
      %v380 = vld [vmem:[%s252 + $0xc] sm:$0xf]
      %v381 = vld [vmem:[%s252 + $0x10] sm:$0xf]
      %v382 = vld [vmem:[%s252 + $0x14] sm:$0xf]
      %v383 = vld [vmem:[%s252 + $0x18] sm:$0xf]
      %v384 = vunpack.c.l.bf16 %v370
      %v385 = vunpack.c.l.bf16 %v371
      %v386 = vunpack.c.l.bf16 %v372
      %v387 = vunpack.c.l.bf16 %v373
      %v388 = vunpack.c.l.bf16 %v374
      %v389 = vunpack.c.l.bf16 %v375
      %v390 = vunpack.c.l.bf16 %v376
      %v391 = vunpack.c.l.bf16 %v377
      %v392 = vunpack.c.l.bf16 %v378
      %v393 = vunpack.c.l.bf16 %v379
      %v394 = vunpack.c.l.bf16 %v380
      %v395 = vunpack.c.l.bf16 %v381
      %v396 = vunpack.c.l.bf16 %v382
      %v397 = vunpack.c.l.bf16 %v383
      %v398 = vmax.f32 %v384, %v391
      %v399 = vmax.f32 %v385, %v392
      %v400 = vmax.f32 %v386, %v393
      %v401 = vmax.f32 %v387, %v394
      %v402 = vmax.f32 %v388, %v395
      %v403 = vmax.f32 %v389, %v396
      %v404 = vmax.f32 %v390, %v397
      %v405 = vpack.c.bf16 %v398, %v398
      %v406 = vpack.c.bf16 %v399, %v399
      %v407 = vpack.c.bf16 %v400, %v400
      %v408 = vpack.c.bf16 %v401, %v401
      %v409 = vpack.c.bf16 %v402, %v402
      %v410 = vpack.c.bf16 %v403, %v403
      %v411 = vpack.c.bf16 %v404, %v404
      %v412 = vunpack.c.l.bf16 %v405
      %v413 = vunpack.c.l.bf16 %v406
      %v414 = vunpack.c.l.bf16 %v407
      %v415 = vunpack.c.l.bf16 %v408
      %v416 = vunpack.c.l.bf16 %v409
      %v417 = vunpack.c.l.bf16 %v410
      %v418 = vunpack.c.l.bf16 %v411
      %v426 = vrot.slane %v356, 1
      %v427 = vrot.slane %v357, 1
      %v428 = vrot.slane %v358, 1
      %v429 = vrot.slane %v359, 1
      %v430 = vrot.slane %v360, 1
      %v431 = vrot.slane %v361, 1
      %v432 = vrot.slane %v362, 1
      %v440 = vmax.f32 %v412, %v426
      %v441 = vmax.f32 %v413, %v427
      %v442 = vmax.f32 %v414, %v428
      %v443 = vmax.f32 %v415, %v429
      %v444 = vmax.f32 %v416, %v430
      %v445 = vmax.f32 %v417, %v431
      %v446 = vmax.f32 %v418, %v432
      %v447 = vpack.c.bf16 %v440, %v440
      %v448 = vpack.c.bf16 %v441, %v441
      %v449 = vpack.c.bf16 %v442, %v442
      %v450 = vpack.c.bf16 %v443, %v443
      %v451 = vpack.c.bf16 %v444, %v444
      %v452 = vpack.c.bf16 %v445, %v445
      %v453 = vpack.c.bf16 %v446, %v446
      %s454 = scalar_lea.vmem %s237, 4
      %v455 = vld [vmem:[%s454] sm:$0xf]
      %v456 = vld [vmem:[%s454 + $0x4] sm:$0xf]
      %v457 = vld [vmem:[%s454 + $0x8] sm:$0xf]
      %v458 = vld [vmem:[%s454 + $0xc] sm:$0xf]
      %v459 = vld [vmem:[%s454 + $0x10] sm:$0xf]
      %v460 = vld [vmem:[%s454 + $0x14] sm:$0xf]
      %v461 = vld [vmem:[%s454 + $0x18] sm:$0xf]
      %v462 = vunpack.c.l.bf16 %v447
      %v463 = vunpack.c.l.bf16 %v448
      %v464 = vunpack.c.l.bf16 %v449
      %v465 = vunpack.c.l.bf16 %v450
      %v466 = vunpack.c.l.bf16 %v451
      %v467 = vunpack.c.l.bf16 %v452
      %v468 = vunpack.c.l.bf16 %v453
      %v469 = vunpack.c.l.bf16 %v455
      %v470 = vunpack.c.l.bf16 %v456
      %v471 = vunpack.c.l.bf16 %v457
      %v472 = vunpack.c.l.bf16 %v458
      %v473 = vunpack.c.l.bf16 %v459
      %v474 = vunpack.c.l.bf16 %v460
      %v475 = vunpack.c.l.bf16 %v461
      %v476 = vmax.f32 %v462, %v469
      %v477 = vmax.f32 %v463, %v470
      %v478 = vmax.f32 %v464, %v471
      %v479 = vmax.f32 %v465, %v472
      %v480 = vmax.f32 %v466, %v473
      %v481 = vmax.f32 %v467, %v474
      %v482 = vmax.f32 %v468, %v475
      %v483 = vpack.c.bf16 %v476, %v476
      %v484 = vpack.c.bf16 %v477, %v477
      %v485 = vpack.c.bf16 %v478, %v478
      %v486 = vpack.c.bf16 %v479, %v479
      %v487 = vpack.c.bf16 %v480, %v480
      %v488 = vpack.c.bf16 %v481, %v481
      %v489 = vpack.c.bf16 %v482, %v482
      %s490 = scalar_lea.vmem %s242, 4
      %v491 = vld [vmem:[%s490] sm:$0xf]
      %v492 = vld [vmem:[%s490 + $0x4] sm:$0xf]
      %v493 = vld [vmem:[%s490 + $0x8] sm:$0xf]
      %v494 = vld [vmem:[%s490 + $0xc] sm:$0xf]
      %v495 = vld [vmem:[%s490 + $0x10] sm:$0xf]
      %v496 = vld [vmem:[%s490 + $0x14] sm:$0xf]
      %v497 = vld [vmem:[%s490 + $0x18] sm:$0xf]
      %v498 = vunpack.c.l.bf16 %v483
      %v499 = vunpack.c.l.bf16 %v484
      %v500 = vunpack.c.l.bf16 %v485
      %v501 = vunpack.c.l.bf16 %v486
      %v502 = vunpack.c.l.bf16 %v487
      %v503 = vunpack.c.l.bf16 %v488
      %v504 = vunpack.c.l.bf16 %v489
      %v505 = vunpack.c.l.bf16 %v491
      %v506 = vunpack.c.l.bf16 %v492
      %v507 = vunpack.c.l.bf16 %v493
      %v508 = vunpack.c.l.bf16 %v494
      %v509 = vunpack.c.l.bf16 %v495
      %v510 = vunpack.c.l.bf16 %v496
      %v511 = vunpack.c.l.bf16 %v497
      %v512 = vmax.f32 %v498, %v505
      %v513 = vmax.f32 %v499, %v506
      %v514 = vmax.f32 %v500, %v507
      %v515 = vmax.f32 %v501, %v508
      %v516 = vmax.f32 %v502, %v509
      %v517 = vmax.f32 %v503, %v510
      %v518 = vmax.f32 %v504, %v511
      %v519 = vpack.c.bf16 %v512, %v512
      %v520 = vpack.c.bf16 %v513, %v513
      %v521 = vpack.c.bf16 %v514, %v514
      %v522 = vpack.c.bf16 %v515, %v515
      %v523 = vpack.c.bf16 %v516, %v516
      %v524 = vpack.c.bf16 %v517, %v517
      %v525 = vpack.c.bf16 %v518, %v518
      %v526 = vunpack.c.l.bf16 %v519
      %v527 = vunpack.c.l.bf16 %v520
      %v528 = vunpack.c.l.bf16 %v521
      %v529 = vunpack.c.l.bf16 %v522
      %v530 = vunpack.c.l.bf16 %v523
      %v531 = vunpack.c.l.bf16 %v524
      %v532 = vunpack.c.l.bf16 %v525
      %v540 = vrot.slane %v469, 1
      %v541 = vrot.slane %v470, 1
      %v542 = vrot.slane %v471, 1
      %v543 = vrot.slane %v472, 1
      %v544 = vrot.slane %v473, 1
      %v545 = vrot.slane %v474, 1
      %v546 = vrot.slane %v475, 1
      %v554 = vmax.f32 %v526, %v540
      %v555 = vmax.f32 %v527, %v541
      %v556 = vmax.f32 %v528, %v542
      %v557 = vmax.f32 %v529, %v543
      %v558 = vmax.f32 %v530, %v544
      %v559 = vmax.f32 %v531, %v545
      %v560 = vmax.f32 %v532, %v546
      %v561 = vpack.c.bf16 %v554, %v554
      %v562 = vpack.c.bf16 %v555, %v555
      %v563 = vpack.c.bf16 %v556, %v556
      %v564 = vpack.c.bf16 %v557, %v557
      %v565 = vpack.c.bf16 %v558, %v558
      %v566 = vpack.c.bf16 %v559, %v559
      %v567 = vpack.c.bf16 %v560, %v560
      %vm568 = vcmask 60416
      %vm569 = vsmask.f32 3328
      %vm570 = vmand %vm568, %vm569
      %v571 = vld [vmem:[%s257] sm:$0xf]
      %v572 = vsel %vm570, %v561, %v571
      %573 = vst [vmem:[%s257] sm:$0xf] %v572
      %v574 = vld [vmem:[%s257 + $0x4] sm:$0xf]
      %v575 = vsel %vm570, %v562, %v574
      %576 = vst [vmem:[%s257 + $0x4] sm:$0xf] %v575
      %v577 = vld [vmem:[%s257 + $0x8] sm:$0xf]
      %v578 = vsel %vm570, %v563, %v577
      %579 = vst [vmem:[%s257 + $0x8] sm:$0xf] %v578
      %v580 = vld [vmem:[%s257 + $0xc] sm:$0xf]
      %v581 = vsel %vm570, %v564, %v580
      %582 = vst [vmem:[%s257 + $0xc] sm:$0xf] %v581
      %v583 = vld [vmem:[%s257 + $0x10] sm:$0xf]
      %v584 = vsel %vm570, %v565, %v583
      %585 = vst [vmem:[%s257 + $0x10] sm:$0xf] %v584
      %v586 = vld [vmem:[%s257 + $0x14] sm:$0xf]
      %v587 = vsel %vm570, %v566, %v586
      %588 = vst [vmem:[%s257 + $0x14] sm:$0xf] %v587
      %v589 = vld [vmem:[%s257 + $0x18] sm:$0xf]
      %v590 = vsel %vm570, %v567, %v589
      %591 = vst [vmem:[%s257 + $0x18] sm:$0xf] %v590
      %p592 = scmp.lt.s32.totalorder %s15, 1
      %s593 = scalar_select %p592, %s15, 1
      %s594 = smul.addr %s593, 7
      %s595 = smul.addr %s594, 4
      %s596 = scalar_lea.vmem %s4, %s595
      // Predicated region
      $region37: #{inception_b.9} parent=35 // pred_check
        %p597 = pneg %p137
      $region38: #{inception_b.9} parent=35 // pred_check_branch
        %599 = sbr.rel (%p597) target = $region40
      $region39: #{inception_b.9} parent=35 // pred_region
        _
      $region40: #{inception_b.9} parent=35 // pred_fallthru
        _
    $region36: #{inception_b.9} parent=5 // pred_fallthru
      _
    %p600 = scmp.le.s32.totalorder 2, %s10
    // Predicated region
    $region41: #{inception_b.9} parent=5 // pred_check
      %p601 = pneg %p600
    $region42: #{inception_b.9} parent=5 // pred_check_branch
      %603 = sbr.rel (%p601) target = $region44
    $region43: #{inception_b.9} parent=5 // pred_region
      %s604 = ssub.s32 %s10, 2
      // Predicated region
      $region45: #{inception_b.9} parent=43 // pred_check
        %p605 = pneg %p143
      $region46: #{inception_b.9} parent=43 // pred_check_branch
        %607 = sbr.rel (%p605) target = $region48
      $region47: #{inception_b.9} parent=43 // pred_region
        %p608 = scmp.lt.s32.totalorder %s16, 1
        %s609 = scalar_select %p608, %s16, 1
        %s610 = smul.addr %s609, 7
        %s611 = smul.addr %s610, 4
        %s612 = scalar_lea.vmem %s4, %s611
      $region48: #{inception_b.9} parent=43 // pred_fallthru
        _
    $region44: #{inception_b.9} parent=5 // pred_fallthru
      _
  $region6: #{inception_b.9} parent=0 // loop_footer
    %s14 = sadd.s32 1, %s10
  $region7: #{inception_b.9} parent=0 // loop_footer_branch
    %9 = sbr.rel target = $region3
  $region8: #{inception_b.9} parent=0 // loop_exit
    _

</llo_original>
